<compile_context>
chip_gen: v7x
topology: tpu7x:2x2x1
jax: 0.10.0
libtpu: 0.0.40
codegen_flags: <defaults>
</compile_context>

<pallas_src>
import functools
import math

import jax
import jax.numpy as jnp
from jax import lax
from jax.experimental import pallas as pl
from jax.experimental.pallas import tpu as pltpu


def _round_up(n, m):
    return ((n + m - 1) // m) * m


def _conv_out_size(size, k, s, p, d):
    return (size + 2 * p - (d * (k - 1) + 1)) // s + 1


def _build_sampling_tables(offset, h, w, kernel_size, stride, padding, dilation, p_pad):
    """Corner indices + bilinear weights for torchvision deform_conv2d semantics
    (mask=None, one offset group, offsets shared across the batch).

    Returns idx4 (4, K, p_pad) int32 and wts4 (4, K, p_pad) float32.  The 4
    corners are (y0,x0), (y0,x1), (y1,x0), (y1,x1); corners outside the image
    get weight 0 (zero padding) and a clamped (safe) index.
    """
    kh, kw = kernel_size
    sh, sw = stride
    ph, pw = padding
    dh, dw = dilation
    h2 = _conv_out_size(h, kh, sh, ph, dh)
    w2 = _conv_out_size(w, kw, sw, pw, dw)
    k = kh * kw
    p = h2 * w2

    # Offset channel layout: (1, 2*K, H2, W2); [2t] = dy, [2t+1] = dx, t = kh*KW + kw.
    off = offset[0].astype(jnp.float32).reshape(k, 2, h2, w2)
    off_y, off_x = off[:, 0], off[:, 1]                              # (K, H2, W2)

    ky = jnp.repeat(jnp.arange(kh, dtype=jnp.float32), kw)           # (K,)
    kx = jnp.tile(jnp.arange(kw, dtype=jnp.float32), kh)             # (K,)
    oh = jnp.arange(h2, dtype=jnp.float32)
    ow = jnp.arange(w2, dtype=jnp.float32)

    py = (ky * dh)[:, None, None] + (oh * sh - ph)[None, :, None] + off_y
    px = (kx * dw)[:, None, None] + (ow * sw - pw)[None, None, :] + off_x
    py = py.reshape(k, p)
    px = px.reshape(k, p)

    y0 = jnp.floor(py)
    x0 = jnp.floor(px)
    ly = py - y0
    lx = px - x0
    hy = 1.0 - ly
    hx = 1.0 - lx

    def corner(yi, xi, bw):
        valid = (yi >= 0) & (yi <= h - 1) & (xi >= 0) & (xi <= w - 1)
        yc = jnp.clip(yi, 0, h - 1).astype(jnp.int32)
        xc = jnp.clip(xi, 0, w - 1).astype(jnp.int32)
        return yc * w + xc, bw * valid.astype(jnp.float32)

    i00, w00 = corner(y0, x0, hy * hx)
    i01, w01 = corner(y0, x0 + 1.0, hy * lx)
    i10, w10 = corner(y0 + 1.0, x0, ly * hx)
    i11, w11 = corner(y0 + 1.0, x0 + 1.0, ly * lx)

    idx4 = jnp.stack([i00, i01, i10, i11], axis=0)                   # (4, K, P) int32
    wts4 = jnp.stack([w00, w01, w10, w11], axis=0)                   # (4, K, P) f32
    if p_pad != p:
        # Padding only these tiny tables — never an image-sized tensor.
        pad = ((0, 0), (0, 0), (0, p_pad - p))
        idx4 = jnp.pad(idx4, pad)
        wts4 = jnp.pad(wts4, pad)
    return idx4, wts4, h2, w2


def _deform_conv_kernel(x_ref, idx_ref, wts_ref, w_ref, b_ref, o_ref,
                        *, n_tap, c_out, hw, tp):
    # x_ref   : (1, Cin, HW)   bf16  -- per-batch image, VMEM-resident across P-tiles
    # idx_ref : (4, K, TP)     int32 -- bilinear corner indices into HW
    # wts_ref : (4, K, TP)     f32   -- bilinear corner weights (0 outside image)
    # w_ref   : (K*Cout, Cin)  bf16  -- conv weights, tap-major
    # b_ref   : (Cout, 1)      f32
    # o_ref   : (1, Cout, TP)  x.dtype
    x = x_ref[0]
    # Stage 1 (MXU): fold the conv weights into the per-batch image.
    a = jnp.dot(w_ref[...], x, preferred_element_type=jnp.float32)   # (K*Cout, HW) f32

    idx = idx_ref[...]
    wts = wts_ref[...]
    row = lax.broadcasted_iota(jnp.int32, (hw, tp), 0)

    acc = jnp.zeros((c_out, tp), jnp.float32)
    for k in range(n_tap):                       # static unroll over kernel taps
        # Stage 2 (VPU): deformable bilinear gather as a one-hot sampling matrix.
        s = jnp.zeros((hw, tp), jnp.float32)
        for c in range(4):
            s = s + jnp.where(row == idx[c, k:k + 1, :], wts[c, k:k + 1, :], 0.0)
        # Stage 3 (MXU): contract this tap's sampled columns into the output tile.
        a_k = a[k * c_out:(k + 1) * c_out, :].astype(jnp.bfloat16)
        acc = acc + jnp.dot(a_k, s.astype(jnp.bfloat16),
                            preferred_element_type=jnp.float32)
    o_ref[0] = (acc + b_ref[...]).astype(o_ref.dtype)


def _choose_tile_p(p, hw):
    # Lane tile for the output-position axis: as large as practical (fewer grid
    # steps, lane-dense stores) while keeping the in-kernel (HW, TP) one-hot,
    # int32 iota and temporaries comfortably inside VMEM on all generations
    # (v7x has 64 MiB total VMEM).  ~12 B/elem covers f32 one-hot + int32 iota + slack.
    tp = min(1024, _round_up(p, 128))
    budget = 24 * 1024 * 1024
    tp_cap = max(128, (budget // (hw * 12)) // 128 * 128)
    return max(128, min(tp, tp_cap))


@functools.partial(jax.jit, static_argnames=("stride", "padding", "dilation"))
def deform_conv2d_sphe(x, weight, bias, offset,
                       stride=(1, 1), padding=(0, 0), dilation=(1, 1)):
    """Forward of DeformConv2d_sphe: deform_conv2d(x, offset repeated over the
    batch, weight, bias), mask=None, groups=1, offset shape (1, 2*KH*KW, H2, W2)."""
    b, c_in, h, w = x.shape
    c_out, c_in_g, kh, kw = weight.shape
    assert c_in_g == c_in, "groups != 1 not supported"  # TODO(synk): grouped deform conv
    k = kh * kw
    hw = h * w

    h2 = _conv_out_size(h, kh, stride[0], padding[0], dilation[0])
    w2 = _conv_out_size(w, kw, stride[1], padding[1], dilation[1])
    p = h2 * w2
    tp = _choose_tile_p(p, hw)
    p_pad = _round_up(p, tp)

    idx4, wts4, _, _ = _build_sampling_tables(
        offset, h, w, (kh, kw), stride, padding, dilation, p_pad)

    x3 = x.reshape(b, c_in, hw).astype(jnp.bfloat16)       # bf16 into the kernel
    # Tap-major weight matrix: row (k*Cout + o), col c  ==  weight[o, c, k].
    w_tap = jnp.transpose(weight, (2, 3, 0, 1)).reshape(k * c_out, c_in)
    w_tap = w_tap.astype(jnp.bfloat16)
    bias2 = bias.astype(jnp.float32).reshape(c_out, 1)

    kernel = functools.partial(_deform_conv_kernel,
                               n_tap=k, c_out=c_out, hw=hw, tp=tp)

    out = pl.pallas_call(
        kernel,
        out_shape=jax.ShapeDtypeStruct((b, c_out, p_pad), x.dtype),
        grid=(b, p_pad // tp),
        in_specs=[
            # Per-batch image: re-fetched only when b changes (index_map ignores p).
            pl.BlockSpec((1, c_in, hw), lambda bi, pi: (bi, 0, 0)),
            pl.BlockSpec((4, k, tp), lambda bi, pi: (0, 0, pi)),
            pl.BlockSpec((4, k, tp), lambda bi, pi: (0, 0, pi)),
            # Resident weight / bias (constant index maps).
            pl.BlockSpec((k * c_out, c_in), lambda bi, pi: (0, 0)),
            pl.BlockSpec((c_out, 1), lambda bi, pi: (0, 0)),
        ],
        out_specs=pl.BlockSpec((1, c_out, tp), lambda bi, pi: (bi, 0, pi)),
        compiler_params=pltpu.CompilerParams(
            dimension_semantics=("parallel", "parallel"),
            vmem_limit_bytes=64 * 1024 * 1024),
    )(x3, idx4, wts4, w_tap, bias2)

    if p_pad != p:
        out = out[:, :, :p]
    return out.reshape(b, c_out, h2, w2)


def _reference_deform_conv(x, weight, bias, idx4, wts4, h2, w2):
    """Pure-f32 reference (direct gather + HIGHEST-precision einsum)."""
    b, c_in, h, w = x.shape
    c_out = weight.shape[0]
    k = weight.shape[2] * weight.shape[3]
    p = h2 * w2
    xf = x.reshape(b, c_in, h * w).astype(jnp.float32)
    cols = jnp.zeros((b, c_in, k * p), jnp.float32)
    for c in range(4):
        gathered = jnp.take(xf, idx4[c, :, :p].reshape(k * p), axis=2)
        cols = cols + gathered * wts4[c, :, :p].reshape(1, 1, k * p)
    cols = cols.reshape(b, c_in * k, p)
    ref = jnp.einsum("ok,bkp->bop",
                     weight.astype(jnp.float32).reshape(c_out, c_in * k), cols,
                     precision=lax.Precision.HIGHEST)
    ref = ref + bias.astype(jnp.float32).reshape(1, c_out, 1)
    return ref.reshape(b, c_out, h2, w2)


if __name__ == "__main__":
    # Mirrors DeformConv2d_sphe(in_channels=4, out_channels=8, kernel_size=3,
    #                           stride=1, padding=1) on a (2, 4, 16, 16) input.
    B, Cin, H, W = 2, 4, 16, 16
    Cout, ksz = 8, 3
    stride, padding, dilation = (1, 1), (1, 1), (1, 1)

    key = jax.random.PRNGKey(0)
    kx_, kw_, kb_, ko_ = jax.random.split(key, 4)

    x = jax.random.normal(kx_, (B, Cin, H, W), dtype=jnp.float32)

    # reset_parameters(): kaiming_uniform_(a=sqrt(5)) -> U(-1/sqrt(fan_in), +)
    fan_in = Cin * ksz * ksz
    bound = 1.0 / math.sqrt(fan_in)
    weight = jax.random.uniform(kw_, (Cout, Cin, ksz, ksz),
                                minval=-bound, maxval=bound, dtype=jnp.float32)
    bias = jax.random.uniform(kb_, (Cout,), minval=-bound, maxval=bound,
                              dtype=jnp.float32)

    # TODO(synk): real spherical offsets come from an external offset_*.pt file;
    # synthesize a deterministic (1, 2*k*k, H2, W2) tensor and mimic the
    # module's cast of the stored offsets to float16.
    H2 = _conv_out_size(H, ksz, stride[0], padding[0], dilation[0])
    W2 = _conv_out_size(W, ksz, stride[1], padding[1], dilation[1])
    offset_sphe = 1.5 * jax.random.normal(ko_, (1, 2 * ksz * ksz, H2, W2),
                                          dtype=jnp.float32)
    offset_sphe = offset_sphe.astype(jnp.float16).astype(jnp.float32)

    out = deform_conv2d_sphe(x, weight, bias, offset_sphe,
                             stride=stride, padding=padding, dilation=dilation)
    out = jax.block_until_ready(out)
    assert out.shape == (B, Cout, H2, W2)
    assert out.dtype == x.dtype

    # Correctness check against the TRUE float32 deform_conv2d semantics
    # (not a bf16-quantized copy of the kernel math).  Tolerance covers the
    # kernel's bf16 MXU inputs (x, weights, sampling matrix) with f32 accumulation.
    idx4, wts4, _, _ = _build_sampling_tables(
        offset_sphe, H, W, (ksz, ksz), stride, padding, dilation, H2 * W2)
    ref = _reference_deform_conv(x, weight, bias, idx4, wts4, H2, W2)
    max_err = float(jnp.max(jnp.abs(out.astype(jnp.float32) - ref)))
    assert max_err < 5e-2, f"max_err={max_err}"

    print("KERNEL_OK")
</pallas_src>

<mosaic_0001>
module attributes {stable_mosaic.version = 11 : i64} {
  func.func @_deform_conv_kernel(%arg0: i32, %arg1: i32, %arg2: memref<1x4x256xbf16, #tpu.memory_space<vmem>>, %arg3: memref<4x9x256xi32, #tpu.memory_space<vmem>>, %arg4: memref<4x9x256xf32, #tpu.memory_space<vmem>>, %arg5: memref<72x4xbf16, #tpu.memory_space<vmem>>, %arg6: memref<8x1xf32, #tpu.memory_space<vmem>>, %arg7: memref<1x8x256xf32, #tpu.memory_space<vmem>>) attributes {dimension_semantics = [#tpu.dimension_semantics<parallel>, #tpu.dimension_semantics<parallel>], iteration_bounds = array<i64: 2, 1>, scalar_prefetch = 0 : i64, scratch_operands = 0 : i64, tpu.core_type = #tpu.core_type<tc>, window_params = [{transform_indices = @transform_0, window_bounds = array<i64: 1, 4, 256>}, {transform_indices = @transform_1, window_bounds = array<i64: 4, 9, 256>}, {transform_indices = @transform_2, window_bounds = array<i64: 4, 9, 256>}, {pipeline_mode = #tpu.pipeline_mode<synchronous>, transform_indices = @transform_3, window_bounds = array<i64: 72, 4>}, {pipeline_mode = #tpu.pipeline_mode<synchronous>, transform_indices = @transform_4, window_bounds = array<i64: 8, 1>}, {transform_indices = @transform_5, window_bounds = array<i64: 1, 8, 256>}]} {
    %c0 = arith.constant 0 : index
    %c0_0 = arith.constant 0 : index
    %c0_1 = arith.constant 0 : index
    %0 = vector.load %arg2[%c0, %c0_0, %c0_1] : memref<1x4x256xbf16, #tpu.memory_space<vmem>>, vector<1x4x256xbf16>
    %1 = vector.shape_cast %0 : vector<1x4x256xbf16> to vector<4x256xbf16>
    %c0_2 = arith.constant 0 : index
    %c0_3 = arith.constant 0 : index
    %2 = vector.load %arg5[%c0_2, %c0_3] : memref<72x4xbf16, #tpu.memory_space<vmem>>, vector<72x4xbf16>
    %cst = arith.constant dense<0.000000e+00> : vector<72x256xf32>
    %3 = tpu.matmul %2, %1, %cst {dimension_numbers = #tpu.dot_dimension_numbers<[1], [0], [0], [1], [0, 0, 1, 1], [], []>} : vector<72x4xbf16>, vector<4x256xbf16>, vector<72x256xf32> -> vector<72x256xf32>
    %c0_4 = arith.constant 0 : index
    %c0_5 = arith.constant 0 : index
    %c0_6 = arith.constant 0 : index
    %4 = vector.load %arg3[%c0_4, %c0_5, %c0_6] : memref<4x9x256xi32, #tpu.memory_space<vmem>>, vector<4x9x256xi32>
    %c0_7 = arith.constant 0 : index
    %c0_8 = arith.constant 0 : index
    %c0_9 = arith.constant 0 : index
    %5 = vector.load %arg4[%c0_7, %c0_8, %c0_9] : memref<4x9x256xf32, #tpu.memory_space<vmem>>, vector<4x9x256xf32>
    %6 = tpu.iota {dimensions = array<i32: 0>} : vector<256x256xi32>
    %cst_10 = arith.constant 0.000000e+00 : f32
    %7 = vector.broadcast %cst_10 : f32 to vector<8x256xf32>
    %cst_11 = arith.constant 0.000000e+00 : f32
    %8 = vector.broadcast %cst_11 : f32 to vector<256x256xf32>
    %9 = vector.extract_strided_slice %4 {offsets = [0, 0, 0], sizes = [1, 1, 256], strides = [1, 1, 1]} : vector<4x9x256xi32> to vector<1x1x256xi32>
    %10 = vector.shape_cast %9 : vector<1x1x256xi32> to vector<1x256xi32>
    %11 = vector.broadcast %10 : vector<1x256xi32> to vector<256x256xi32>
    %12 = arith.cmpi eq, %6, %11 : vector<256x256xi32>
    %13 = vector.extract_strided_slice %5 {offsets = [0, 0, 0], sizes = [1, 1, 256], strides = [1, 1, 1]} : vector<4x9x256xf32> to vector<1x1x256xf32>
    %14 = vector.shape_cast %13 : vector<1x1x256xf32> to vector<1x256xf32>
    %cst_12 = arith.constant 0.000000e+00 : f32
    %15 = vector.shape_cast %14 : vector<1x256xf32> to vector<1x256xf32>
    %16 = vector.broadcast %15 : vector<1x256xf32> to vector<256x256xf32>
    %17 = vector.broadcast %cst_12 : f32 to vector<256x256xf32>
    %18 = arith.select %12, %16, %17 : vector<256x256xi1>, vector<256x256xf32>
    %19 = arith.addf %8, %18 : vector<256x256xf32>
    %20 = vector.extract_strided_slice %4 {offsets = [1, 0, 0], sizes = [1, 1, 256], strides = [1, 1, 1]} : vector<4x9x256xi32> to vector<1x1x256xi32>
    %21 = vector.shape_cast %20 : vector<1x1x256xi32> to vector<1x256xi32>
    %22 = vector.broadcast %21 : vector<1x256xi32> to vector<256x256xi32>
    %23 = arith.cmpi eq, %6, %22 : vector<256x256xi32>
    %24 = vector.extract_strided_slice %5 {offsets = [1, 0, 0], sizes = [1, 1, 256], strides = [1, 1, 1]} : vector<4x9x256xf32> to vector<1x1x256xf32>
    %25 = vector.shape_cast %24 : vector<1x1x256xf32> to vector<1x256xf32>
    %cst_13 = arith.constant 0.000000e+00 : f32
    %26 = vector.shape_cast %25 : vector<1x256xf32> to vector<1x256xf32>
    %27 = vector.broadcast %26 : vector<1x256xf32> to vector<256x256xf32>
    %28 = vector.broadcast %cst_13 : f32 to vector<256x256xf32>
    %29 = arith.select %23, %27, %28 : vector<256x256xi1>, vector<256x256xf32>
    %30 = arith.addf %19, %29 : vector<256x256xf32>
    %31 = vector.extract_strided_slice %4 {offsets = [2, 0, 0], sizes = [1, 1, 256], strides = [1, 1, 1]} : vector<4x9x256xi32> to vector<1x1x256xi32>
    %32 = vector.shape_cast %31 : vector<1x1x256xi32> to vector<1x256xi32>
    %33 = vector.broadcast %32 : vector<1x256xi32> to vector<256x256xi32>
    %34 = arith.cmpi eq, %6, %33 : vector<256x256xi32>
    %35 = vector.extract_strided_slice %5 {offsets = [2, 0, 0], sizes = [1, 1, 256], strides = [1, 1, 1]} : vector<4x9x256xf32> to vector<1x1x256xf32>
    %36 = vector.shape_cast %35 : vector<1x1x256xf32> to vector<1x256xf32>
    %cst_14 = arith.constant 0.000000e+00 : f32
    %37 = vector.shape_cast %36 : vector<1x256xf32> to vector<1x256xf32>
    %38 = vector.broadcast %37 : vector<1x256xf32> to vector<256x256xf32>
    %39 = vector.broadcast %cst_14 : f32 to vector<256x256xf32>
    %40 = arith.select %34, %38, %39 : vector<256x256xi1>, vector<256x256xf32>
    %41 = arith.addf %30, %40 : vector<256x256xf32>
    %42 = vector.extract_strided_slice %4 {offsets = [3, 0, 0], sizes = [1, 1, 256], strides = [1, 1, 1]} : vector<4x9x256xi32> to vector<1x1x256xi32>
    %43 = vector.shape_cast %42 : vector<1x1x256xi32> to vector<1x256xi32>
    %44 = vector.broadcast %43 : vector<1x256xi32> to vector<256x256xi32>
    %45 = arith.cmpi eq, %6, %44 : vector<256x256xi32>
    %46 = vector.extract_strided_slice %5 {offsets = [3, 0, 0], sizes = [1, 1, 256], strides = [1, 1, 1]} : vector<4x9x256xf32> to vector<1x1x256xf32>
    %47 = vector.shape_cast %46 : vector<1x1x256xf32> to vector<1x256xf32>
    %cst_15 = arith.constant 0.000000e+00 : f32
    %48 = vector.shape_cast %47 : vector<1x256xf32> to vector<1x256xf32>
    %49 = vector.broadcast %48 : vector<1x256xf32> to vector<256x256xf32>
    %50 = vector.broadcast %cst_15 : f32 to vector<256x256xf32>
    %51 = arith.select %45, %49, %50 : vector<256x256xi1>, vector<256x256xf32>
    %52 = arith.addf %41, %51 : vector<256x256xf32>
    %53 = vector.extract_strided_slice %3 {offsets = [0, 0], sizes = [8, 256], strides = [1, 1]} : vector<72x256xf32> to vector<8x256xf32>
    %54 = arith.truncf %53 : vector<8x256xf32> to vector<8x256xbf16>
    %55 = arith.truncf %52 : vector<256x256xf32> to vector<256x256xbf16>
    %cst_16 = arith.constant dense<0.000000e+00> : vector<8x256xf32>
    %56 = tpu.matmul %54, %55, %cst_16 {dimension_numbers = #tpu.dot_dimension_numbers<[1], [0], [0], [1], [0, 0, 1, 1], [], []>} : vector<8x256xbf16>, vector<256x256xbf16>, vector<8x256xf32> -> vector<8x256xf32>
    %57 = arith.addf %7, %56 : vector<8x256xf32>
    %cst_17 = arith.constant 0.000000e+00 : f32
    %58 = vector.broadcast %cst_17 : f32 to vector<256x256xf32>
    %59 = vector.extract_strided_slice %4 {offsets = [0, 1, 0], sizes = [1, 1, 256], strides = [1, 1, 1]} : vector<4x9x256xi32> to vector<1x1x256xi32>
    %60 = vector.shape_cast %59 : vector<1x1x256xi32> to vector<1x256xi32>
    %61 = vector.broadcast %60 : vector<1x256xi32> to vector<256x256xi32>
    %62 = arith.cmpi eq, %6, %61 : vector<256x256xi32>
    %63 = vector.extract_strided_slice %5 {offsets = [0, 1, 0], sizes = [1, 1, 256], strides = [1, 1, 1]} : vector<4x9x256xf32> to vector<1x1x256xf32>
    %64 = vector.shape_cast %63 : vector<1x1x256xf32> to vector<1x256xf32>
    %cst_18 = arith.constant 0.000000e+00 : f32
    %65 = vector.shape_cast %64 : vector<1x256xf32> to vector<1x256xf32>
    %66 = vector.broadcast %65 : vector<1x256xf32> to vector<256x256xf32>
    %67 = vector.broadcast %cst_18 : f32 to vector<256x256xf32>
    %68 = arith.select %62, %66, %67 : vector<256x256xi1>, vector<256x256xf32>
    %69 = arith.addf %58, %68 : vector<256x256xf32>
    %70 = vector.extract_strided_slice %4 {offsets = [1, 1, 0], sizes = [1, 1, 256], strides = [1, 1, 1]} : vector<4x9x256xi32> to vector<1x1x256xi32>
    %71 = vector.shape_cast %70 : vector<1x1x256xi32> to vector<1x256xi32>
    %72 = vector.broadcast %71 : vector<1x256xi32> to vector<256x256xi32>
    %73 = arith.cmpi eq, %6, %72 : vector<256x256xi32>
    %74 = vector.extract_strided_slice %5 {offsets = [1, 1, 0], sizes = [1, 1, 256], strides = [1, 1, 1]} : vector<4x9x256xf32> to vector<1x1x256xf32>
    %75 = vector.shape_cast %74 : vector<1x1x256xf32> to vector<1x256xf32>
    %cst_19 = arith.constant 0.000000e+00 : f32
    %76 = vector.shape_cast %75 : vector<1x256xf32> to vector<1x256xf32>
    %77 = vector.broadcast %76 : vector<1x256xf32> to vector<256x256xf32>
    %78 = vector.broadcast %cst_19 : f32 to vector<256x256xf32>
    %79 = arith.select %73, %77, %78 : vector<256x256xi1>, vector<256x256xf32>
    %80 = arith.addf %69, %79 : vector<256x256xf32>
    %81 = vector.extract_strided_slice %4 {offsets = [2, 1, 0], sizes = [1, 1, 256], strides = [1, 1, 1]} : vector<4x9x256xi32> to vector<1x1x256xi32>
    %82 = vector.shape_cast %81 : vector<1x1x256xi32> to vector<1x256xi32>
    %83 = vector.broadcast %82 : vector<1x256xi32> to vector<256x256xi32>
    %84 = arith.cmpi eq, %6, %83 : vector<256x256xi32>
    %85 = vector.extract_strided_slice %5 {offsets = [2, 1, 0], sizes = [1, 1, 256], strides = [1, 1, 1]} : vector<4x9x256xf32> to vector<1x1x256xf32>
    %86 = vector.shape_cast %85 : vector<1x1x256xf32> to vector<1x256xf32>
    %cst_20 = arith.constant 0.000000e+00 : f32
    %87 = vector.shape_cast %86 : vector<1x256xf32> to vector<1x256xf32>
    %88 = vector.broadcast %87 : vector<1x256xf32> to vector<256x256xf32>
    %89 = vector.broadcast %cst_20 : f32 to vector<256x256xf32>
    %90 = arith.select %84, %88, %89 : vector<256x256xi1>, vector<256x256xf32>
    %91 = arith.addf %80, %90 : vector<256x256xf32>
    %92 = vector.extract_strided_slice %4 {offsets = [3, 1, 0], sizes = [1, 1, 256], strides = [1, 1, 1]} : vector<4x9x256xi32> to vector<1x1x256xi32>
    %93 = vector.shape_cast %92 : vector<1x1x256xi32> to vector<1x256xi32>
    %94 = vector.broadcast %93 : vector<1x256xi32> to vector<256x256xi32>
    %95 = arith.cmpi eq, %6, %94 : vector<256x256xi32>
    %96 = vector.extract_strided_slice %5 {offsets = [3, 1, 0], sizes = [1, 1, 256], strides = [1, 1, 1]} : vector<4x9x256xf32> to vector<1x1x256xf32>
    %97 = vector.shape_cast %96 : vector<1x1x256xf32> to vector<1x256xf32>
    %cst_21 = arith.constant 0.000000e+00 : f32
    %98 = vector.shape_cast %97 : vector<1x256xf32> to vector<1x256xf32>
    %99 = vector.broadcast %98 : vector<1x256xf32> to vector<256x256xf32>
    %100 = vector.broadcast %cst_21 : f32 to vector<256x256xf32>
    %101 = arith.select %95, %99, %100 : vector<256x256xi1>, vector<256x256xf32>
    %102 = arith.addf %91, %101 : vector<256x256xf32>
    %103 = vector.extract_strided_slice %3 {offsets = [8, 0], sizes = [8, 256], strides = [1, 1]} : vector<72x256xf32> to vector<8x256xf32>
    %104 = arith.truncf %103 : vector<8x256xf32> to vector<8x256xbf16>
    %105 = arith.truncf %102 : vector<256x256xf32> to vector<256x256xbf16>
    %cst_22 = arith.constant dense<0.000000e+00> : vector<8x256xf32>
    %106 = tpu.matmul %104, %105, %cst_22 {dimension_numbers = #tpu.dot_dimension_numbers<[1], [0], [0], [1], [0, 0, 1, 1], [], []>} : vector<8x256xbf16>, vector<256x256xbf16>, vector<8x256xf32> -> vector<8x256xf32>
    %107 = arith.addf %57, %106 : vector<8x256xf32>
    %cst_23 = arith.constant 0.000000e+00 : f32
    %108 = vector.broadcast %cst_23 : f32 to vector<256x256xf32>
    %109 = vector.extract_strided_slice %4 {offsets = [0, 2, 0], sizes = [1, 1, 256], strides = [1, 1, 1]} : vector<4x9x256xi32> to vector<1x1x256xi32>
    %110 = vector.shape_cast %109 : vector<1x1x256xi32> to vector<1x256xi32>
    %111 = vector.broadcast %110 : vector<1x256xi32> to vector<256x256xi32>
    %112 = arith.cmpi eq, %6, %111 : vector<256x256xi32>
    %113 = vector.extract_strided_slice %5 {offsets = [0, 2, 0], sizes = [1, 1, 256], strides = [1, 1, 1]} : vector<4x9x256xf32> to vector<1x1x256xf32>
    %114 = vector.shape_cast %113 : vector<1x1x256xf32> to vector<1x256xf32>
    %cst_24 = arith.constant 0.000000e+00 : f32
    %115 = vector.shape_cast %114 : vector<1x256xf32> to vector<1x256xf32>
    %116 = vector.broadcast %115 : vector<1x256xf32> to vector<256x256xf32>
    %117 = vector.broadcast %cst_24 : f32 to vector<256x256xf32>
    %118 = arith.select %112, %116, %117 : vector<256x256xi1>, vector<256x256xf32>
    %119 = arith.addf %108, %118 : vector<256x256xf32>
    %120 = vector.extract_strided_slice %4 {offsets = [1, 2, 0], sizes = [1, 1, 256], strides = [1, 1, 1]} : vector<4x9x256xi32> to vector<1x1x256xi32>
    %121 = vector.shape_cast %120 : vector<1x1x256xi32> to vector<1x256xi32>
    %122 = vector.broadcast %121 : vector<1x256xi32> to vector<256x256xi32>
    %123 = arith.cmpi eq, %6, %122 : vector<256x256xi32>
    %124 = vector.extract_strided_slice %5 {offsets = [1, 2, 0], sizes = [1, 1, 256], strides = [1, 1, 1]} : vector<4x9x256xf32> to vector<1x1x256xf32>
    %125 = vector.shape_cast %124 : vector<1x1x256xf32> to vector<1x256xf32>
    %cst_25 = arith.constant 0.000000e+00 : f32
    %126 = vector.shape_cast %125 : vector<1x256xf32> to vector<1x256xf32>
    %127 = vector.broadcast %126 : vector<1x256xf32> to vector<256x256xf32>
    %128 = vector.broadcast %cst_25 : f32 to vector<256x256xf32>
    %129 = arith.select %123, %127, %128 : vector<256x256xi1>, vector<256x256xf32>
    %130 = arith.addf %119, %129 : vector<256x256xf32>
    %131 = vector.extract_strided_slice %4 {offsets = [2, 2, 0], sizes = [1, 1, 256], strides = [1, 1, 1]} : vector<4x9x256xi32> to vector<1x1x256xi32>
    %132 = vector.shape_cast %131 : vector<1x1x256xi32> to vector<1x256xi32>
    %133 = vector.broadcast %132 : vector<1x256xi32> to vector<256x256xi32>
    %134 = arith.cmpi eq, %6, %133 : vector<256x256xi32>
    %135 = vector.extract_strided_slice %5 {offsets = [2, 2, 0], sizes = [1, 1, 256], strides = [1, 1, 1]} : vector<4x9x256xf32> to vector<1x1x256xf32>
    %136 = vector.shape_cast %135 : vector<1x1x256xf32> to vector<1x256xf32>
    %cst_26 = arith.constant 0.000000e+00 : f32
    %137 = vector.shape_cast %136 : vector<1x256xf32> to vector<1x256xf32>
    %138 = vector.broadcast %137 : vector<1x256xf32> to vector<256x256xf32>
    %139 = vector.broadcast %cst_26 : f32 to vector<256x256xf32>
    %140 = arith.select %134, %138, %139 : vector<256x256xi1>, vector<256x256xf32>
    %141 = arith.addf %130, %140 : vector<256x256xf32>
    %142 = vector.extract_strided_slice %4 {offsets = [3, 2, 0], sizes = [1, 1, 256], strides = [1, 1, 1]} : vector<4x9x256xi32> to vector<1x1x256xi32>
    %143 = vector.shape_cast %142 : vector<1x1x256xi32> to vector<1x256xi32>
    %144 = vector.broadcast %143 : vector<1x256xi32> to vector<256x256xi32>
    %145 = arith.cmpi eq, %6, %144 : vector<256x256xi32>
    %146 = vector.extract_strided_slice %5 {offsets = [3, 2, 0], sizes = [1, 1, 256], strides = [1, 1, 1]} : vector<4x9x256xf32> to vector<1x1x256xf32>
    %147 = vector.shape_cast %146 : vector<1x1x256xf32> to vector<1x256xf32>
    %cst_27 = arith.constant 0.000000e+00 : f32
    %148 = vector.shape_cast %147 : vector<1x256xf32> to vector<1x256xf32>
    %149 = vector.broadcast %148 : vector<1x256xf32> to vector<256x256xf32>
    %150 = vector.broadcast %cst_27 : f32 to vector<256x256xf32>
    %151 = arith.select %145, %149, %150 : vector<256x256xi1>, vector<256x256xf32>
    %152 = arith.addf %141, %151 : vector<256x256xf32>
    %153 = vector.extract_strided_slice %3 {offsets = [16, 0], sizes = [8, 256], strides = [1, 1]} : vector<72x256xf32> to vector<8x256xf32>
    %154 = arith.truncf %153 : vector<8x256xf32> to vector<8x256xbf16>
    %155 = arith.truncf %152 : vector<256x256xf32> to vector<256x256xbf16>
    %cst_28 = arith.constant dense<0.000000e+00> : vector<8x256xf32>
    %156 = tpu.matmul %154, %155, %cst_28 {dimension_numbers = #tpu.dot_dimension_numbers<[1], [0], [0], [1], [0, 0, 1, 1], [], []>} : vector<8x256xbf16>, vector<256x256xbf16>, vector<8x256xf32> -> vector<8x256xf32>
    %157 = arith.addf %107, %156 : vector<8x256xf32>
    %cst_29 = arith.constant 0.000000e+00 : f32
    %158 = vector.broadcast %cst_29 : f32 to vector<256x256xf32>
    %159 = vector.extract_strided_slice %4 {offsets = [0, 3, 0], sizes = [1, 1, 256], strides = [1, 1, 1]} : vector<4x9x256xi32> to vector<1x1x256xi32>
    %160 = vector.shape_cast %159 : vector<1x1x256xi32> to vector<1x256xi32>
    %161 = vector.broadcast %160 : vector<1x256xi32> to vector<256x256xi32>
    %162 = arith.cmpi eq, %6, %161 : vector<256x256xi32>
    %163 = vector.extract_strided_slice %5 {offsets = [0, 3, 0], sizes = [1, 1, 256], strides = [1, 1, 1]} : vector<4x9x256xf32> to vector<1x1x256xf32>
    %164 = vector.shape_cast %163 : vector<1x1x256xf32> to vector<1x256xf32>
    %cst_30 = arith.constant 0.000000e+00 : f32
    %165 = vector.shape_cast %164 : vector<1x256xf32> to vector<1x256xf32>
    %166 = vector.broadcast %165 : vector<1x256xf32> to vector<256x256xf32>
    %167 = vector.broadcast %cst_30 : f32 to vector<256x256xf32>
    %168 = arith.select %162, %166, %167 : vector<256x256xi1>, vector<256x256xf32>
    %169 = arith.addf %158, %168 : vector<256x256xf32>
    %170 = vector.extract_strided_slice %4 {offsets = [1, 3, 0], sizes = [1, 1, 256], strides = [1, 1, 1]} : vector<4x9x256xi32> to vector<1x1x256xi32>
    %171 = vector.shape_cast %170 : vector<1x1x256xi32> to vector<1x256xi32>
    %172 = vector.broadcast %171 : vector<1x256xi32> to vector<256x256xi32>
    %173 = arith.cmpi eq, %6, %172 : vector<256x256xi32>
    %174 = vector.extract_strided_slice %5 {offsets = [1, 3, 0], sizes = [1, 1, 256], strides = [1, 1, 1]} : vector<4x9x256xf32> to vector<1x1x256xf32>
    %175 = vector.shape_cast %174 : vector<1x1x256xf32> to vector<1x256xf32>
    %cst_31 = arith.constant 0.000000e+00 : f32
    %176 = vector.shape_cast %175 : vector<1x256xf32> to vector<1x256xf32>
    %177 = vector.broadcast %176 : vector<1x256xf32> to vector<256x256xf32>
    %178 = vector.broadcast %cst_31 : f32 to vector<256x256xf32>
    %179 = arith.select %173, %177, %178 : vector<256x256xi1>, vector<256x256xf32>
    %180 = arith.addf %169, %179 : vector<256x256xf32>
    %181 = vector.extract_strided_slice %4 {offsets = [2, 3, 0], sizes = [1, 1, 256], strides = [1, 1, 1]} : vector<4x9x256xi32> to vector<1x1x256xi32>
    %182 = vector.shape_cast %181 : vector<1x1x256xi32> to vector<1x256xi32>
    %183 = vector.broadcast %182 : vector<1x256xi32> to vector<256x256xi32>
    %184 = arith.cmpi eq, %6, %183 : vector<256x256xi32>
    %185 = vector.extract_strided_slice %5 {offsets = [2, 3, 0], sizes = [1, 1, 256], strides = [1, 1, 1]} : vector<4x9x256xf32> to vector<1x1x256xf32>
    %186 = vector.shape_cast %185 : vector<1x1x256xf32> to vector<1x256xf32>
    %cst_32 = arith.constant 0.000000e+00 : f32
    %187 = vector.shape_cast %186 : vector<1x256xf32> to vector<1x256xf32>
    %188 = vector.broadcast %187 : vector<1x256xf32> to vector<256x256xf32>
    %189 = vector.broadcast %cst_32 : f32 to vector<256x256xf32>
    %190 = arith.select %184, %188, %189 : vector<256x256xi1>, vector<256x256xf32>
    %191 = arith.addf %180, %190 : vector<256x256xf32>
    %192 = vector.extract_strided_slice %4 {offsets = [3, 3, 0], sizes = [1, 1, 256], strides = [1, 1, 1]} : vector<4x9x256xi32> to vector<1x1x256xi32>
    %193 = vector.shape_cast %192 : vector<1x1x256xi32> to vector<1x256xi32>
    %194 = vector.broadcast %193 : vector<1x256xi32> to vector<256x256xi32>
    %195 = arith.cmpi eq, %6, %194 : vector<256x256xi32>
    %196 = vector.extract_strided_slice %5 {offsets = [3, 3, 0], sizes = [1, 1, 256], strides = [1, 1, 1]} : vector<4x9x256xf32> to vector<1x1x256xf32>
    %197 = vector.shape_cast %196 : vector<1x1x256xf32> to vector<1x256xf32>
    %cst_33 = arith.constant 0.000000e+00 : f32
    %198 = vector.shape_cast %197 : vector<1x256xf32> to vector<1x256xf32>
    %199 = vector.broadcast %198 : vector<1x256xf32> to vector<256x256xf32>
    %200 = vector.broadcast %cst_33 : f32 to vector<256x256xf32>
    %201 = arith.select %195, %199, %200 : vector<256x256xi1>, vector<256x256xf32>
    %202 = arith.addf %191, %201 : vector<256x256xf32>
    %203 = vector.extract_strided_slice %3 {offsets = [24, 0], sizes = [8, 256], strides = [1, 1]} : vector<72x256xf32> to vector<8x256xf32>
    %204 = arith.truncf %203 : vector<8x256xf32> to vector<8x256xbf16>
    %205 = arith.truncf %202 : vector<256x256xf32> to vector<256x256xbf16>
    %cst_34 = arith.constant dense<0.000000e+00> : vector<8x256xf32>
    %206 = tpu.matmul %204, %205, %cst_34 {dimension_numbers = #tpu.dot_dimension_numbers<[1], [0], [0], [1], [0, 0, 1, 1], [], []>} : vector<8x256xbf16>, vector<256x256xbf16>, vector<8x256xf32> -> vector<8x256xf32>
    %207 = arith.addf %157, %206 : vector<8x256xf32>
    %cst_35 = arith.constant 0.000000e+00 : f32
    %208 = vector.broadcast %cst_35 : f32 to vector<256x256xf32>
    %209 = vector.extract_strided_slice %4 {offsets = [0, 4, 0], sizes = [1, 1, 256], strides = [1, 1, 1]} : vector<4x9x256xi32> to vector<1x1x256xi32>
    %210 = vector.shape_cast %209 : vector<1x1x256xi32> to vector<1x256xi32>
    %211 = vector.broadcast %210 : vector<1x256xi32> to vector<256x256xi32>
    %212 = arith.cmpi eq, %6, %211 : vector<256x256xi32>
    %213 = vector.extract_strided_slice %5 {offsets = [0, 4, 0], sizes = [1, 1, 256], strides = [1, 1, 1]} : vector<4x9x256xf32> to vector<1x1x256xf32>
    %214 = vector.shape_cast %213 : vector<1x1x256xf32> to vector<1x256xf32>
    %cst_36 = arith.constant 0.000000e+00 : f32
    %215 = vector.shape_cast %214 : vector<1x256xf32> to vector<1x256xf32>
    %216 = vector.broadcast %215 : vector<1x256xf32> to vector<256x256xf32>
    %217 = vector.broadcast %cst_36 : f32 to vector<256x256xf32>
    %218 = arith.select %212, %216, %217 : vector<256x256xi1>, vector<256x256xf32>
    %219 = arith.addf %208, %218 : vector<256x256xf32>
    %220 = vector.extract_strided_slice %4 {offsets = [1, 4, 0], sizes = [1, 1, 256], strides = [1, 1, 1]} : vector<4x9x256xi32> to vector<1x1x256xi32>
    %221 = vector.shape_cast %220 : vector<1x1x256xi32> to vector<1x256xi32>
    %222 = vector.broadcast %221 : vector<1x256xi32> to vector<256x256xi32>
    %223 = arith.cmpi eq, %6, %222 : vector<256x256xi32>
    %224 = vector.extract_strided_slice %5 {offsets = [1, 4, 0], sizes = [1, 1, 256], strides = [1, 1, 1]} : vector<4x9x256xf32> to vector<1x1x256xf32>
    %225 = vector.shape_cast %224 : vector<1x1x256xf32> to vector<1x256xf32>
    %cst_37 = arith.constant 0.000000e+00 : f32
    %226 = vector.shape_cast %225 : vector<1x256xf32> to vector<1x256xf32>
    %227 = vector.broadcast %226 : vector<1x256xf32> to vector<256x256xf32>
    %228 = vector.broadcast %cst_37 : f32 to vector<256x256xf32>
    %229 = arith.select %223, %227, %228 : vector<256x256xi1>, vector<256x256xf32>
    %230 = arith.addf %219, %229 : vector<256x256xf32>
    %231 = vector.extract_strided_slice %4 {offsets = [2, 4, 0], sizes = [1, 1, 256], strides = [1, 1, 1]} : vector<4x9x256xi32> to vector<1x1x256xi32>
    %232 = vector.shape_cast %231 : vector<1x1x256xi32> to vector<1x256xi32>
    %233 = vector.broadcast %232 : vector<1x256xi32> to vector<256x256xi32>
    %234 = arith.cmpi eq, %6, %233 : vector<256x256xi32>
    %235 = vector.extract_strided_slice %5 {offsets = [2, 4, 0], sizes = [1, 1, 256], strides = [1, 1, 1]} : vector<4x9x256xf32> to vector<1x1x256xf32>
    %236 = vector.shape_cast %235 : vector<1x1x256xf32> to vector<1x256xf32>
    %cst_38 = arith.constant 0.000000e+00 : f32
    %237 = vector.shape_cast %236 : vector<1x256xf32> to vector<1x256xf32>
    %238 = vector.broadcast %237 : vector<1x256xf32> to vector<256x256xf32>
    %239 = vector.broadcast %cst_38 : f32 to vector<256x256xf32>
    %240 = arith.select %234, %238, %239 : vector<256x256xi1>, vector<256x256xf32>
    %241 = arith.addf %230, %240 : vector<256x256xf32>
    %242 = vector.extract_strided_slice %4 {offsets = [3, 4, 0], sizes = [1, 1, 256], strides = [1, 1, 1]} : vector<4x9x256xi32> to vector<1x1x256xi32>
    %243 = vector.shape_cast %242 : vector<1x1x256xi32> to vector<1x256xi32>
    %244 = vector.broadcast %243 : vector<1x256xi32> to vector<256x256xi32>
    %245 = arith.cmpi eq, %6, %244 : vector<256x256xi32>
    %246 = vector.extract_strided_slice %5 {offsets = [3, 4, 0], sizes = [1, 1, 256], strides = [1, 1, 1]} : vector<4x9x256xf32> to vector<1x1x256xf32>
    %247 = vector.shape_cast %246 : vector<1x1x256xf32> to vector<1x256xf32>
    %cst_39 = arith.constant 0.000000e+00 : f32
    %248 = vector.shape_cast %247 : vector<1x256xf32> to vector<1x256xf32>
    %249 = vector.broadcast %248 : vector<1x256xf32> to vector<256x256xf32>
    %250 = vector.broadcast %cst_39 : f32 to vector<256x256xf32>
    %251 = arith.select %245, %249, %250 : vector<256x256xi1>, vector<256x256xf32>
    %252 = arith.addf %241, %251 : vector<256x256xf32>
    %253 = vector.extract_strided_slice %3 {offsets = [32, 0], sizes = [8, 256], strides = [1, 1]} : vector<72x256xf32> to vector<8x256xf32>
    %254 = arith.truncf %253 : vector<8x256xf32> to vector<8x256xbf16>
    %255 = arith.truncf %252 : vector<256x256xf32> to vector<256x256xbf16>
    %cst_40 = arith.constant dense<0.000000e+00> : vector<8x256xf32>
    %256 = tpu.matmul %254, %255, %cst_40 {dimension_numbers = #tpu.dot_dimension_numbers<[1], [0], [0], [1], [0, 0, 1, 1], [], []>} : vector<8x256xbf16>, vector<256x256xbf16>, vector<8x256xf32> -> vector<8x256xf32>
    %257 = arith.addf %207, %256 : vector<8x256xf32>
    %cst_41 = arith.constant 0.000000e+00 : f32
    %258 = vector.broadcast %cst_41 : f32 to vector<256x256xf32>
    %259 = vector.extract_strided_slice %4 {offsets = [0, 5, 0], sizes = [1, 1, 256], strides = [1, 1, 1]} : vector<4x9x256xi32> to vector<1x1x256xi32>
    %260 = vector.shape_cast %259 : vector<1x1x256xi32> to vector<1x256xi32>
    %261 = vector.broadcast %260 : vector<1x256xi32> to vector<256x256xi32>
    %262 = arith.cmpi eq, %6, %261 : vector<256x256xi32>
    %263 = vector.extract_strided_slice %5 {offsets = [0, 5, 0], sizes = [1, 1, 256], strides = [1, 1, 1]} : vector<4x9x256xf32> to vector<1x1x256xf32>
    %264 = vector.shape_cast %263 : vector<1x1x256xf32> to vector<1x256xf32>
    %cst_42 = arith.constant 0.000000e+00 : f32
    %265 = vector.shape_cast %264 : vector<1x256xf32> to vector<1x256xf32>
    %266 = vector.broadcast %265 : vector<1x256xf32> to vector<256x256xf32>
    %267 = vector.broadcast %cst_42 : f32 to vector<256x256xf32>
    %268 = arith.select %262, %266, %267 : vector<256x256xi1>, vector<256x256xf32>
    %269 = arith.addf %258, %268 : vector<256x256xf32>
    %270 = vector.extract_strided_slice %4 {offsets = [1, 5, 0], sizes = [1, 1, 256], strides = [1, 1, 1]} : vector<4x9x256xi32> to vector<1x1x256xi32>
    %271 = vector.shape_cast %270 : vector<1x1x256xi32> to vector<1x256xi32>
    %272 = vector.broadcast %271 : vector<1x256xi32> to vector<256x256xi32>
    %273 = arith.cmpi eq, %6, %272 : vector<256x256xi32>
    %274 = vector.extract_strided_slice %5 {offsets = [1, 5, 0], sizes = [1, 1, 256], strides = [1, 1, 1]} : vector<4x9x256xf32> to vector<1x1x256xf32>
    %275 = vector.shape_cast %274 : vector<1x1x256xf32> to vector<1x256xf32>
    %cst_43 = arith.constant 0.000000e+00 : f32
    %276 = vector.shape_cast %275 : vector<1x256xf32> to vector<1x256xf32>
    %277 = vector.broadcast %276 : vector<1x256xf32> to vector<256x256xf32>
    %278 = vector.broadcast %cst_43 : f32 to vector<256x256xf32>
    %279 = arith.select %273, %277, %278 : vector<256x256xi1>, vector<256x256xf32>
    %280 = arith.addf %269, %279 : vector<256x256xf32>
    %281 = vector.extract_strided_slice %4 {offsets = [2, 5, 0], sizes = [1, 1, 256], strides = [1, 1, 1]} : vector<4x9x256xi32> to vector<1x1x256xi32>
    %282 = vector.shape_cast %281 : vector<1x1x256xi32> to vector<1x256xi32>
    %283 = vector.broadcast %282 : vector<1x256xi32> to vector<256x256xi32>
    %284 = arith.cmpi eq, %6, %283 : vector<256x256xi32>
    %285 = vector.extract_strided_slice %5 {offsets = [2, 5, 0], sizes = [1, 1, 256], strides = [1, 1, 1]} : vector<4x9x256xf32> to vector<1x1x256xf32>
    %286 = vector.shape_cast %285 : vector<1x1x256xf32> to vector<1x256xf32>
    %cst_44 = arith.constant 0.000000e+00 : f32
    %287 = vector.shape_cast %286 : vector<1x256xf32> to vector<1x256xf32>
    %288 = vector.broadcast %287 : vector<1x256xf32> to vector<256x256xf32>
    %289 = vector.broadcast %cst_44 : f32 to vector<256x256xf32>
    %290 = arith.select %284, %288, %289 : vector<256x256xi1>, vector<256x256xf32>
    %291 = arith.addf %280, %290 : vector<256x256xf32>
    %292 = vector.extract_strided_slice %4 {offsets = [3, 5, 0], sizes = [1, 1, 256], strides = [1, 1, 1]} : vector<4x9x256xi32> to vector<1x1x256xi32>
    %293 = vector.shape_cast %292 : vector<1x1x256xi32> to vector<1x256xi32>
    %294 = vector.broadcast %293 : vector<1x256xi32> to vector<256x256xi32>
    %295 = arith.cmpi eq, %6, %294 : vector<256x256xi32>
    %296 = vector.extract_strided_slice %5 {offsets = [3, 5, 0], sizes = [1, 1, 256], strides = [1, 1, 1]} : vector<4x9x256xf32> to vector<1x1x256xf32>
    %297 = vector.shape_cast %296 : vector<1x1x256xf32> to vector<1x256xf32>
    %cst_45 = arith.constant 0.000000e+00 : f32
    %298 = vector.shape_cast %297 : vector<1x256xf32> to vector<1x256xf32>
    %299 = vector.broadcast %298 : vector<1x256xf32> to vector<256x256xf32>
    %300 = vector.broadcast %cst_45 : f32 to vector<256x256xf32>
    %301 = arith.select %295, %299, %300 : vector<256x256xi1>, vector<256x256xf32>
    %302 = arith.addf %291, %301 : vector<256x256xf32>
    %303 = vector.extract_strided_slice %3 {offsets = [40, 0], sizes = [8, 256], strides = [1, 1]} : vector<72x256xf32> to vector<8x256xf32>
    %304 = arith.truncf %303 : vector<8x256xf32> to vector<8x256xbf16>
    %305 = arith.truncf %302 : vector<256x256xf32> to vector<256x256xbf16>
    %cst_46 = arith.constant dense<0.000000e+00> : vector<8x256xf32>
    %306 = tpu.matmul %304, %305, %cst_46 {dimension_numbers = #tpu.dot_dimension_numbers<[1], [0], [0], [1], [0, 0, 1, 1], [], []>} : vector<8x256xbf16>, vector<256x256xbf16>, vector<8x256xf32> -> vector<8x256xf32>
    %307 = arith.addf %257, %306 : vector<8x256xf32>
    %cst_47 = arith.constant 0.000000e+00 : f32
    %308 = vector.broadcast %cst_47 : f32 to vector<256x256xf32>
    %309 = vector.extract_strided_slice %4 {offsets = [0, 6, 0], sizes = [1, 1, 256], strides = [1, 1, 1]} : vector<4x9x256xi32> to vector<1x1x256xi32>
    %310 = vector.shape_cast %309 : vector<1x1x256xi32> to vector<1x256xi32>
    %311 = vector.broadcast %310 : vector<1x256xi32> to vector<256x256xi32>
    %312 = arith.cmpi eq, %6, %311 : vector<256x256xi32>
    %313 = vector.extract_strided_slice %5 {offsets = [0, 6, 0], sizes = [1, 1, 256], strides = [1, 1, 1]} : vector<4x9x256xf32> to vector<1x1x256xf32>
    %314 = vector.shape_cast %313 : vector<1x1x256xf32> to vector<1x256xf32>
    %cst_48 = arith.constant 0.000000e+00 : f32
    %315 = vector.shape_cast %314 : vector<1x256xf32> to vector<1x256xf32>
    %316 = vector.broadcast %315 : vector<1x256xf32> to vector<256x256xf32>
    %317 = vector.broadcast %cst_48 : f32 to vector<256x256xf32>
    %318 = arith.select %312, %316, %317 : vector<256x256xi1>, vector<256x256xf32>
    %319 = arith.addf %308, %318 : vector<256x256xf32>
    %320 = vector.extract_strided_slice %4 {offsets = [1, 6, 0], sizes = [1, 1, 256], strides = [1, 1, 1]} : vector<4x9x256xi32> to vector<1x1x256xi32>
    %321 = vector.shape_cast %320 : vector<1x1x256xi32> to vector<1x256xi32>
    %322 = vector.broadcast %321 : vector<1x256xi32> to vector<256x256xi32>
    %323 = arith.cmpi eq, %6, %322 : vector<256x256xi32>
    %324 = vector.extract_strided_slice %5 {offsets = [1, 6, 0], sizes = [1, 1, 256], strides = [1, 1, 1]} : vector<4x9x256xf32> to vector<1x1x256xf32>
    %325 = vector.shape_cast %324 : vector<1x1x256xf32> to vector<1x256xf32>
    %cst_49 = arith.constant 0.000000e+00 : f32
    %326 = vector.shape_cast %325 : vector<1x256xf32> to vector<1x256xf32>
    %327 = vector.broadcast %326 : vector<1x256xf32> to vector<256x256xf32>
    %328 = vector.broadcast %cst_49 : f32 to vector<256x256xf32>
    %329 = arith.select %323, %327, %328 : vector<256x256xi1>, vector<256x256xf32>
    %330 = arith.addf %319, %329 : vector<256x256xf32>
    %331 = vector.extract_strided_slice %4 {offsets = [2, 6, 0], sizes = [1, 1, 256], strides = [1, 1, 1]} : vector<4x9x256xi32> to vector<1x1x256xi32>
    %332 = vector.shape_cast %331 : vector<1x1x256xi32> to vector<1x256xi32>
    %333 = vector.broadcast %332 : vector<1x256xi32> to vector<256x256xi32>
    %334 = arith.cmpi eq, %6, %333 : vector<256x256xi32>
    %335 = vector.extract_strided_slice %5 {offsets = [2, 6, 0], sizes = [1, 1, 256], strides = [1, 1, 1]} : vector<4x9x256xf32> to vector<1x1x256xf32>
    %336 = vector.shape_cast %335 : vector<1x1x256xf32> to vector<1x256xf32>
    %cst_50 = arith.constant 0.000000e+00 : f32
    %337 = vector.shape_cast %336 : vector<1x256xf32> to vector<1x256xf32>
    %338 = vector.broadcast %337 : vector<1x256xf32> to vector<256x256xf32>
    %339 = vector.broadcast %cst_50 : f32 to vector<256x256xf32>
    %340 = arith.select %334, %338, %339 : vector<256x256xi1>, vector<256x256xf32>
    %341 = arith.addf %330, %340 : vector<256x256xf32>
    %342 = vector.extract_strided_slice %4 {offsets = [3, 6, 0], sizes = [1, 1, 256], strides = [1, 1, 1]} : vector<4x9x256xi32> to vector<1x1x256xi32>
    %343 = vector.shape_cast %342 : vector<1x1x256xi32> to vector<1x256xi32>
    %344 = vector.broadcast %343 : vector<1x256xi32> to vector<256x256xi32>
    %345 = arith.cmpi eq, %6, %344 : vector<256x256xi32>
    %346 = vector.extract_strided_slice %5 {offsets = [3, 6, 0], sizes = [1, 1, 256], strides = [1, 1, 1]} : vector<4x9x256xf32> to vector<1x1x256xf32>
    %347 = vector.shape_cast %346 : vector<1x1x256xf32> to vector<1x256xf32>
    %cst_51 = arith.constant 0.000000e+00 : f32
    %348 = vector.shape_cast %347 : vector<1x256xf32> to vector<1x256xf32>
    %349 = vector.broadcast %348 : vector<1x256xf32> to vector<256x256xf32>
    %350 = vector.broadcast %cst_51 : f32 to vector<256x256xf32>
    %351 = arith.select %345, %349, %350 : vector<256x256xi1>, vector<256x256xf32>
    %352 = arith.addf %341, %351 : vector<256x256xf32>
    %353 = vector.extract_strided_slice %3 {offsets = [48, 0], sizes = [8, 256], strides = [1, 1]} : vector<72x256xf32> to vector<8x256xf32>
    %354 = arith.truncf %353 : vector<8x256xf32> to vector<8x256xbf16>
    %355 = arith.truncf %352 : vector<256x256xf32> to vector<256x256xbf16>
    %cst_52 = arith.constant dense<0.000000e+00> : vector<8x256xf32>
    %356 = tpu.matmul %354, %355, %cst_52 {dimension_numbers = #tpu.dot_dimension_numbers<[1], [0], [0], [1], [0, 0, 1, 1], [], []>} : vector<8x256xbf16>, vector<256x256xbf16>, vector<8x256xf32> -> vector<8x256xf32>
    %357 = arith.addf %307, %356 : vector<8x256xf32>
    %cst_53 = arith.constant 0.000000e+00 : f32
    %358 = vector.broadcast %cst_53 : f32 to vector<256x256xf32>
    %359 = vector.extract_strided_slice %4 {offsets = [0, 7, 0], sizes = [1, 1, 256], strides = [1, 1, 1]} : vector<4x9x256xi32> to vector<1x1x256xi32>
    %360 = vector.shape_cast %359 : vector<1x1x256xi32> to vector<1x256xi32>
    %361 = vector.broadcast %360 : vector<1x256xi32> to vector<256x256xi32>
    %362 = arith.cmpi eq, %6, %361 : vector<256x256xi32>
    %363 = vector.extract_strided_slice %5 {offsets = [0, 7, 0], sizes = [1, 1, 256], strides = [1, 1, 1]} : vector<4x9x256xf32> to vector<1x1x256xf32>
    %364 = vector.shape_cast %363 : vector<1x1x256xf32> to vector<1x256xf32>
    %cst_54 = arith.constant 0.000000e+00 : f32
    %365 = vector.shape_cast %364 : vector<1x256xf32> to vector<1x256xf32>
    %366 = vector.broadcast %365 : vector<1x256xf32> to vector<256x256xf32>
    %367 = vector.broadcast %cst_54 : f32 to vector<256x256xf32>
    %368 = arith.select %362, %366, %367 : vector<256x256xi1>, vector<256x256xf32>
    %369 = arith.addf %358, %368 : vector<256x256xf32>
    %370 = vector.extract_strided_slice %4 {offsets = [1, 7, 0], sizes = [1, 1, 256], strides = [1, 1, 1]} : vector<4x9x256xi32> to vector<1x1x256xi32>
    %371 = vector.shape_cast %370 : vector<1x1x256xi32> to vector<1x256xi32>
    %372 = vector.broadcast %371 : vector<1x256xi32> to vector<256x256xi32>
    %373 = arith.cmpi eq, %6, %372 : vector<256x256xi32>
    %374 = vector.extract_strided_slice %5 {offsets = [1, 7, 0], sizes = [1, 1, 256], strides = [1, 1, 1]} : vector<4x9x256xf32> to vector<1x1x256xf32>
    %375 = vector.shape_cast %374 : vector<1x1x256xf32> to vector<1x256xf32>
    %cst_55 = arith.constant 0.000000e+00 : f32
    %376 = vector.shape_cast %375 : vector<1x256xf32> to vector<1x256xf32>
    %377 = vector.broadcast %376 : vector<1x256xf32> to vector<256x256xf32>
    %378 = vector.broadcast %cst_55 : f32 to vector<256x256xf32>
    %379 = arith.select %373, %377, %378 : vector<256x256xi1>, vector<256x256xf32>
    %380 = arith.addf %369, %379 : vector<256x256xf32>
    %381 = vector.extract_strided_slice %4 {offsets = [2, 7, 0], sizes = [1, 1, 256], strides = [1, 1, 1]} : vector<4x9x256xi32> to vector<1x1x256xi32>
    %382 = vector.shape_cast %381 : vector<1x1x256xi32> to vector<1x256xi32>
    %383 = vector.broadcast %382 : vector<1x256xi32> to vector<256x256xi32>
    %384 = arith.cmpi eq, %6, %383 : vector<256x256xi32>
    %385 = vector.extract_strided_slice %5 {offsets = [2, 7, 0], sizes = [1, 1, 256], strides = [1, 1, 1]} : vector<4x9x256xf32> to vector<1x1x256xf32>
    %386 = vector.shape_cast %385 : vector<1x1x256xf32> to vector<1x256xf32>
    %cst_56 = arith.constant 0.000000e+00 : f32
    %387 = vector.shape_cast %386 : vector<1x256xf32> to vector<1x256xf32>
    %388 = vector.broadcast %387 : vector<1x256xf32> to vector<256x256xf32>
    %389 = vector.broadcast %cst_56 : f32 to vector<256x256xf32>
    %390 = arith.select %384, %388, %389 : vector<256x256xi1>, vector<256x256xf32>
    %391 = arith.addf %380, %390 : vector<256x256xf32>
    %392 = vector.extract_strided_slice %4 {offsets = [3, 7, 0], sizes = [1, 1, 256], strides = [1, 1, 1]} : vector<4x9x256xi32> to vector<1x1x256xi32>
    %393 = vector.shape_cast %392 : vector<1x1x256xi32> to vector<1x256xi32>
    %394 = vector.broadcast %393 : vector<1x256xi32> to vector<256x256xi32>
    %395 = arith.cmpi eq, %6, %394 : vector<256x256xi32>
    %396 = vector.extract_strided_slice %5 {offsets = [3, 7, 0], sizes = [1, 1, 256], strides = [1, 1, 1]} : vector<4x9x256xf32> to vector<1x1x256xf32>
    %397 = vector.shape_cast %396 : vector<1x1x256xf32> to vector<1x256xf32>
    %cst_57 = arith.constant 0.000000e+00 : f32
    %398 = vector.shape_cast %397 : vector<1x256xf32> to vector<1x256xf32>
    %399 = vector.broadcast %398 : vector<1x256xf32> to vector<256x256xf32>
    %400 = vector.broadcast %cst_57 : f32 to vector<256x256xf32>
    %401 = arith.select %395, %399, %400 : vector<256x256xi1>, vector<256x256xf32>
    %402 = arith.addf %391, %401 : vector<256x256xf32>
    %403 = vector.extract_strided_slice %3 {offsets = [56, 0], sizes = [8, 256], strides = [1, 1]} : vector<72x256xf32> to vector<8x256xf32>
    %404 = arith.truncf %403 : vector<8x256xf32> to vector<8x256xbf16>
    %405 = arith.truncf %402 : vector<256x256xf32> to vector<256x256xbf16>
    %cst_58 = arith.constant dense<0.000000e+00> : vector<8x256xf32>
    %406 = tpu.matmul %404, %405, %cst_58 {dimension_numbers = #tpu.dot_dimension_numbers<[1], [0], [0], [1], [0, 0, 1, 1], [], []>} : vector<8x256xbf16>, vector<256x256xbf16>, vector<8x256xf32> -> vector<8x256xf32>
    %407 = arith.addf %357, %406 : vector<8x256xf32>
    %cst_59 = arith.constant 0.000000e+00 : f32
    %408 = vector.broadcast %cst_59 : f32 to vector<256x256xf32>
    %409 = vector.extract_strided_slice %4 {offsets = [0, 8, 0], sizes = [1, 1, 256], strides = [1, 1, 1]} : vector<4x9x256xi32> to vector<1x1x256xi32>
    %410 = vector.shape_cast %409 : vector<1x1x256xi32> to vector<1x256xi32>
    %411 = vector.broadcast %410 : vector<1x256xi32> to vector<256x256xi32>
    %412 = arith.cmpi eq, %6, %411 : vector<256x256xi32>
    %413 = vector.extract_strided_slice %5 {offsets = [0, 8, 0], sizes = [1, 1, 256], strides = [1, 1, 1]} : vector<4x9x256xf32> to vector<1x1x256xf32>
    %414 = vector.shape_cast %413 : vector<1x1x256xf32> to vector<1x256xf32>
    %cst_60 = arith.constant 0.000000e+00 : f32
    %415 = vector.shape_cast %414 : vector<1x256xf32> to vector<1x256xf32>
    %416 = vector.broadcast %415 : vector<1x256xf32> to vector<256x256xf32>
    %417 = vector.broadcast %cst_60 : f32 to vector<256x256xf32>
    %418 = arith.select %412, %416, %417 : vector<256x256xi1>, vector<256x256xf32>
    %419 = arith.addf %408, %418 : vector<256x256xf32>
    %420 = vector.extract_strided_slice %4 {offsets = [1, 8, 0], sizes = [1, 1, 256], strides = [1, 1, 1]} : vector<4x9x256xi32> to vector<1x1x256xi32>
    %421 = vector.shape_cast %420 : vector<1x1x256xi32> to vector<1x256xi32>
    %422 = vector.broadcast %421 : vector<1x256xi32> to vector<256x256xi32>
    %423 = arith.cmpi eq, %6, %422 : vector<256x256xi32>
    %424 = vector.extract_strided_slice %5 {offsets = [1, 8, 0], sizes = [1, 1, 256], strides = [1, 1, 1]} : vector<4x9x256xf32> to vector<1x1x256xf32>
    %425 = vector.shape_cast %424 : vector<1x1x256xf32> to vector<1x256xf32>
    %cst_61 = arith.constant 0.000000e+00 : f32
    %426 = vector.shape_cast %425 : vector<1x256xf32> to vector<1x256xf32>
    %427 = vector.broadcast %426 : vector<1x256xf32> to vector<256x256xf32>
    %428 = vector.broadcast %cst_61 : f32 to vector<256x256xf32>
    %429 = arith.select %423, %427, %428 : vector<256x256xi1>, vector<256x256xf32>
    %430 = arith.addf %419, %429 : vector<256x256xf32>
    %431 = vector.extract_strided_slice %4 {offsets = [2, 8, 0], sizes = [1, 1, 256], strides = [1, 1, 1]} : vector<4x9x256xi32> to vector<1x1x256xi32>
    %432 = vector.shape_cast %431 : vector<1x1x256xi32> to vector<1x256xi32>
    %433 = vector.broadcast %432 : vector<1x256xi32> to vector<256x256xi32>
    %434 = arith.cmpi eq, %6, %433 : vector<256x256xi32>
    %435 = vector.extract_strided_slice %5 {offsets = [2, 8, 0], sizes = [1, 1, 256], strides = [1, 1, 1]} : vector<4x9x256xf32> to vector<1x1x256xf32>
    %436 = vector.shape_cast %435 : vector<1x1x256xf32> to vector<1x256xf32>
    %cst_62 = arith.constant 0.000000e+00 : f32
    %437 = vector.shape_cast %436 : vector<1x256xf32> to vector<1x256xf32>
    %438 = vector.broadcast %437 : vector<1x256xf32> to vector<256x256xf32>
    %439 = vector.broadcast %cst_62 : f32 to vector<256x256xf32>
    %440 = arith.select %434, %438, %439 : vector<256x256xi1>, vector<256x256xf32>
    %441 = arith.addf %430, %440 : vector<256x256xf32>
    %442 = vector.extract_strided_slice %4 {offsets = [3, 8, 0], sizes = [1, 1, 256], strides = [1, 1, 1]} : vector<4x9x256xi32> to vector<1x1x256xi32>
    %443 = vector.shape_cast %442 : vector<1x1x256xi32> to vector<1x256xi32>
    %444 = vector.broadcast %443 : vector<1x256xi32> to vector<256x256xi32>
    %445 = arith.cmpi eq, %6, %444 : vector<256x256xi32>
    %446 = vector.extract_strided_slice %5 {offsets = [3, 8, 0], sizes = [1, 1, 256], strides = [1, 1, 1]} : vector<4x9x256xf32> to vector<1x1x256xf32>
    %447 = vector.shape_cast %446 : vector<1x1x256xf32> to vector<1x256xf32>
    %cst_63 = arith.constant 0.000000e+00 : f32
    %448 = vector.shape_cast %447 : vector<1x256xf32> to vector<1x256xf32>
    %449 = vector.broadcast %448 : vector<1x256xf32> to vector<256x256xf32>
    %450 = vector.broadcast %cst_63 : f32 to vector<256x256xf32>
    %451 = arith.select %445, %449, %450 : vector<256x256xi1>, vector<256x256xf32>
    %452 = arith.addf %441, %451 : vector<256x256xf32>
    %453 = vector.extract_strided_slice %3 {offsets = [64, 0], sizes = [8, 256], strides = [1, 1]} : vector<72x256xf32> to vector<8x256xf32>
    %454 = arith.truncf %453 : vector<8x256xf32> to vector<8x256xbf16>
    %455 = arith.truncf %452 : vector<256x256xf32> to vector<256x256xbf16>
    %cst_64 = arith.constant dense<0.000000e+00> : vector<8x256xf32>
    %456 = tpu.matmul %454, %455, %cst_64 {dimension_numbers = #tpu.dot_dimension_numbers<[1], [0], [0], [1], [0, 0, 1, 1], [], []>} : vector<8x256xbf16>, vector<256x256xbf16>, vector<8x256xf32> -> vector<8x256xf32>
    %457 = arith.addf %407, %456 : vector<8x256xf32>
    %c0_65 = arith.constant 0 : index
    %c0_66 = arith.constant 0 : index
    %458 = vector.load %arg6[%c0_65, %c0_66] : memref<8x1xf32, #tpu.memory_space<vmem>>, vector<8x1xf32>
    %459 = vector.broadcast %458 : vector<8x1xf32> to vector<8x256xf32>
    %460 = arith.addf %457, %459 : vector<8x256xf32>
    %c0_67 = arith.constant 0 : index
    %c0_68 = arith.constant 0 : index
    %c0_69 = arith.constant 0 : index
    %461 = vector.load %arg7[%c0_67, %c0_68, %c0_69] : memref<1x8x256xf32, #tpu.memory_space<vmem>>, vector<1x8x256xf32>
    %462 = vector.shape_cast %461 : vector<1x8x256xf32> to vector<8x256xf32>
    %463 = vector.shape_cast %460 : vector<8x256xf32> to vector<1x8x256xf32>
    tpu.vector_store %arg7[%c0_67, %c0_68, %c0_69], %463 {strides = array<i32>} : memref<1x8x256xf32, #tpu.memory_space<vmem>>, vector<1x8x256xf32>,
    return
  }
  func.func @transform_0(%arg0: i32, %arg1: i32) -> (i32, i32, i32) {
    %c0_i32 = arith.constant 0 : i32
    %c0_i32_0 = arith.constant 0 : i32
    %c0_i32_1 = arith.constant 0 : i32
    return %arg0, %c0_i32, %c0_i32_0 : i32, i32, i32
  }
  func.func @transform_1(%arg0: i32, %arg1: i32) -> (i32, i32, i32) {
    %c0_i32 = arith.constant 0 : i32
    %c0_i32_0 = arith.constant 0 : i32
    %c0_i32_1 = arith.constant 0 : i32
    return %c0_i32, %c0_i32_0, %arg1 : i32, i32, i32
  }
  func.func @transform_2(%arg0: i32, %arg1: i32) -> (i32, i32, i32) {
    %c0_i32 = arith.constant 0 : i32
    %c0_i32_0 = arith.constant 0 : i32
    %c0_i32_1 = arith.constant 0 : i32
    return %c0_i32, %c0_i32_0, %arg1 : i32, i32, i32
  }
  func.func @transform_3(%arg0: i32, %arg1: i32) -> (i32, i32) {
    %c0_i32 = arith.constant 0 : i32
    %c0_i32_0 = arith.constant 0 : i32
    %c0_i32_1 = arith.constant 0 : i32
    return %c0_i32, %c0_i32_0 : i32, i32
  }
  func.func @transform_4(%arg0: i32, %arg1: i32) -> (i32, i32) {
    %c0_i32 = arith.constant 0 : i32
    %c0_i32_0 = arith.constant 0 : i32
    %c0_i32_1 = arith.constant 0 : i32
    return %c0_i32, %c0_i32_0 : i32, i32
  }
  func.func @transform_5(%arg0: i32, %arg1: i32) -> (i32, i32, i32) {
    %c0_i32 = arith.constant 0 : i32
    %c0_i32_0 = arith.constant 0 : i32
    return %arg0, %c0_i32, %arg1 : i32, i32, i32
  }
}

</mosaic_0001>

<llo_original>
// kernel: deform_conv2d_sphe.1
$region0: #{deform_conv2d_sphe.1}
  #allocation0 [shape = 'u32[]', space=smem, size = 0x4, offset = 0x4, fixed_abs, tag = 'smem constant byte address 0x4 - core index']
  #allocation1 [shape = 'u32[144,128]{1,0:T(1,128)}', space=vmem, size = 0x12000, scoped, tag = 'internal scratch']
  %s0 = inlined_call_operand.hbm [shape: bf16[2,4,256], index: 0, kind: input, shape index: {}]
  %s1 = inlined_call_operand.hbm [shape: s32[4,9,256], index: 1, kind: input, shape index: {}]
  %s2 = inlined_call_operand.hbm [shape: f32[4,9,256], index: 2, kind: input, shape index: {}]
  %s3 = inlined_call_operand.hbm [shape: bf16[72,4], index: 3, kind: input, shape index: {}]
  %s4 = inlined_call_operand.hbm [shape: f32[8,1], index: 4, kind: input, shape index: {}]
  %s5 = inlined_call_operand.hbm [shape: f32[2,8,256], index: 5, kind: output, shape index: {}]
  %s6 = sld [smem:[#allocation0]]
  $region73: #{deform_conv2d_sphe.1} parent=0
    _
  %s8 = ssub.s32 1, %s6
  %s9 = scalar_select 0, %s8, %s6
  $region1: #{deform_conv2d_sphe.1} parent=0
    #allocation2 [shape = 'u8[4096]{0}', space=vmem, size = 0x1000, scoped, tag = 'input window, operand 0']
    #allocation3 [shape = 's32[2]{0}', space=sflag, size = 0x8, scoped, tag = 'scoped memory for deform_conv2d_sphe.1']
    #allocation4 [shape = 's32[2]{0}', space=sflag, size = 0x8, scoped, tag = 'scoped memory for deform_conv2d_sphe.1']
    #allocation5 [shape = 'u8[65536]{0}', space=vmem, size = 0x10000, scoped, tag = 'input window, operand 1, single buffered']
    #allocation6 [shape = 's32[1]{0}', space=sflag, size = 0x4, scoped, tag = 'scoped memory for deform_conv2d_sphe.1']
    #allocation7 [shape = 'u8[65536]{0}', space=vmem, size = 0x10000, scoped, tag = 'input window, operand 2, single buffered']
    #allocation8 [shape = 'u8[18432]{0}', space=vmem, size = 0x4800, scoped, tag = 'input window, operand 3, single buffered']
    #allocation9 [shape = 's32[1]{0}', space=sflag, size = 0x4, scoped, tag = 'scoped memory for deform_conv2d_sphe.1']
    #allocation10 [shape = 'u8[4096]{0}', space=vmem, size = 0x1000, scoped, tag = 'input window, operand 4, single buffered']
    #allocation11 [shape = 'u8[16384]{0}', space=vmem, size = 0x4000, scoped, tag = 'output window, operand 0']
    %10 = vsyncpa [#allocation3], 0
    %s11 = scalar_lea.sflag [#allocation3], 1
    %12 = vsyncpa %s11, 0
    %13 = vsyncpa [#allocation6], 0
    %14 = vsyncpa [#allocation9], 0
    %15 = vsyncpa [#allocation4], 0
    %s16 = scalar_lea.sflag [#allocation4], 1
    %17 = vsyncpa %s16, 0
    loop: start=0, step=1, limit=4
    $region2: #{deform_conv2d_sphe.1} parent=1 // loop_pre_header
      _
    $region3: #{deform_conv2d_sphe.1} parent=1 // loop_header
      %s19 = sphi 0, %s23
      %p20 = scmp.ge.s32.totalorder %s19, 4
      %s26 = sphi 0, %s38
      %s27 = sphi 0, %s34
      %s28 = sphi 0, %s26
      %s29 = sphi 0, %s27
      %s30 = sphi 0, %s28
      %s31 = sphi 0, %s29
      %s41 = sphi 0, %s43
      %s44 = sphi 0, %s41
      %s45 = sphi 0, %s44
      %s61 = sphi 0, %s45
      %s67 = sphi 0, %s69
      %s70 = sphi 0, %s67
      %s71 = sphi 0, %s70
      %s87 = sphi 0, %s71
      %s93 = sphi 0, %s95
      %s96 = sphi 0, %s93
      %s97 = sphi 0, %s96
      %s113 = sphi 0, %s97
      %s117 = sphi 0, %s117
      %s119 = sphi 0, %s117
      %s120 = sphi 0, %s119
      %s134 = sphi 0, %s120
      %s138 = sphi 0, %s138
      %s140 = sphi 0, %s138
      %s141 = sphi 0, %s140
      %s155 = sphi 0, %s141
      %s163 = sphi 0, %s165
      %s166 = sphi 0, %s163
      %s167 = sphi 0, %s166
      %s183 = sphi 0, %s167
    $region4: #{deform_conv2d_sphe.1} parent=1 // loop_header_branch
      %22 = sbr.rel (%p20) target = $region8
    $region5: #{deform_conv2d_sphe.1} parent=1 // loop_body
      %s24 = ssub.s32 %s19, 1
      %s25 = ssub.s32 %s19, 2
      %s32 = sadd.s32 1, %s27
      %p33 = scmp.ge.s32.totalorder %s32, 1
      %s34 = scalar_select %p33, 0, %s32
      %s35 = sadd.s32 1, %s26
      %s36 = scalar_select %p33, %s35, %s26
      %p37 = scmp.ge.s32.totalorder %s36, 2
      %s38 = scalar_select %p37, 0, %s36
      %s39 = ssub.s32 %s26, %s38
      %p40 = scmp.eq.s32.totalorder %s39, 0
      %s42 = sadd.s32 %s41, 1
      %s43 = scalar_select %p40, %s41, %s42
      %p46 = pneg %p40
      %p47 = scmp.eq.s32.totalorder %s19, 1
      %p48 = por %p46, %p47
      %p49 = scmp.ne.s32.totalorder %s41, %s44
      %p50 = scmp.eq.s32.totalorder %s19, 0
      %p51 = por %p49, %p50
      %p52 = scmp.ne.s32.totalorder %s41, %s44
      %p53 = scmp.eq.s32.totalorder %s24, 1
      %p54 = por %p52, %p53
      %p55 = scmp.ne.s32.totalorder %s44, %s45
      %p56 = scmp.eq.s32.totalorder %s24, 0
      %p57 = por %p55, %p56
      %p58 = scmp.ne.s32.totalorder %s44, %s45
      %p59 = scmp.eq.s32.totalorder %s25, 1
      %p60 = por %p58, %p59
      %p62 = scmp.ne.s32.totalorder %s45, %s61
      %p63 = scmp.eq.s32.totalorder %s25, 0
      %p64 = por %p62, %p63
      %s65 = ssub.s32 %s27, %s34
      %p66 = scmp.eq.s32.totalorder %s65, 0
      %s68 = sadd.s32 %s67, 1
      %s69 = scalar_select %p66, %s67, %s68
      %p72 = pneg %p66
      %p73 = scmp.eq.s32.totalorder %s19, 1
      %p74 = por %p72, %p73
      %p75 = scmp.ne.s32.totalorder %s67, %s70
      %p76 = scmp.eq.s32.totalorder %s19, 0
      %p77 = por %p75, %p76
      %p78 = scmp.ne.s32.totalorder %s67, %s70
      %p79 = scmp.eq.s32.totalorder %s24, 1
      %p80 = por %p78, %p79
      %p81 = scmp.ne.s32.totalorder %s70, %s71
      %p82 = scmp.eq.s32.totalorder %s24, 0
      %p83 = por %p81, %p82
      %p84 = scmp.ne.s32.totalorder %s70, %s71
      %p85 = scmp.eq.s32.totalorder %s25, 1
      %p86 = por %p84, %p85
      %p88 = scmp.ne.s32.totalorder %s71, %s87
      %p89 = scmp.eq.s32.totalorder %s25, 0
      %p90 = por %p88, %p89
      %s91 = ssub.s32 %s27, %s34
      %p92 = scmp.eq.s32.totalorder %s91, 0
      %s94 = sadd.s32 %s93, 1
      %s95 = scalar_select %p92, %s93, %s94
      %p98 = pneg %p92
      %p99 = scmp.eq.s32.totalorder %s19, 1
      %p100 = por %p98, %p99
      %p101 = scmp.ne.s32.totalorder %s93, %s96
      %p102 = scmp.eq.s32.totalorder %s19, 0
      %p103 = por %p101, %p102
      %p104 = scmp.ne.s32.totalorder %s93, %s96
      %p105 = scmp.eq.s32.totalorder %s24, 1
      %p106 = por %p104, %p105
      %p107 = scmp.ne.s32.totalorder %s96, %s97
      %p108 = scmp.eq.s32.totalorder %s24, 0
      %p109 = por %p107, %p108
      %p110 = scmp.ne.s32.totalorder %s96, %s97
      %p111 = scmp.eq.s32.totalorder %s25, 1
      %p112 = por %p110, %p111
      %p114 = scmp.ne.s32.totalorder %s97, %s113
      %p115 = scmp.eq.s32.totalorder %s25, 0
      %p116 = por %p114, %p115
      %s118 = sadd.s32 %s117, 1
      %p121 = scmp.eq.s32.totalorder %s19, 1
      %p122 = scmp.ne.s32.totalorder %s117, %s119
      %p123 = scmp.eq.s32.totalorder %s19, 0
      %p124 = por %p122, %p123
      %p125 = scmp.ne.s32.totalorder %s117, %s119
      %p126 = scmp.eq.s32.totalorder %s24, 1
      %p127 = por %p125, %p126
      %p128 = scmp.ne.s32.totalorder %s119, %s120
      %p129 = scmp.eq.s32.totalorder %s24, 0
      %p130 = por %p128, %p129
      %p131 = scmp.ne.s32.totalorder %s119, %s120
      %p132 = scmp.eq.s32.totalorder %s25, 1
      %p133 = por %p131, %p132
      %p135 = scmp.ne.s32.totalorder %s120, %s134
      %p136 = scmp.eq.s32.totalorder %s25, 0
      %p137 = por %p135, %p136
      %s139 = sadd.s32 %s138, 1
      %p142 = scmp.eq.s32.totalorder %s19, 1
      %p143 = scmp.ne.s32.totalorder %s138, %s140
      %p144 = scmp.eq.s32.totalorder %s19, 0
      %p145 = por %p143, %p144
      %p146 = scmp.ne.s32.totalorder %s138, %s140
      %p147 = scmp.eq.s32.totalorder %s24, 1
      %p148 = por %p146, %p147
      %p149 = scmp.ne.s32.totalorder %s140, %s141
      %p150 = scmp.eq.s32.totalorder %s24, 0
      %p151 = por %p149, %p150
      %p152 = scmp.ne.s32.totalorder %s140, %s141
      %p153 = scmp.eq.s32.totalorder %s25, 1
      %p154 = por %p152, %p153
      %p156 = scmp.ne.s32.totalorder %s141, %s155
      %p157 = scmp.eq.s32.totalorder %s25, 0
      %p158 = por %p156, %p157
      %s159 = ssub.s32 %s26, %s38
      %s160 = ssub.s32 %s27, %s34
      %s161 = sor.u32 %s159, %s160
      %p162 = scmp.eq.s32.totalorder %s161, 0
      %s164 = sadd.s32 %s163, 1
      %s165 = scalar_select %p162, %s163, %s164
      %p168 = pneg %p162
      %p169 = scmp.eq.s32.totalorder %s19, 1
      %p170 = por %p168, %p169
      %p171 = scmp.ne.s32.totalorder %s163, %s166
      %p172 = scmp.eq.s32.totalorder %s19, 0
      %p173 = por %p171, %p172
      %p174 = scmp.ne.s32.totalorder %s163, %s166
      %p175 = scmp.eq.s32.totalorder %s24, 1
      %p176 = por %p174, %p175
      %p177 = scmp.ne.s32.totalorder %s166, %s167
      %p178 = scmp.eq.s32.totalorder %s24, 0
      %p179 = por %p177, %p178
      %p180 = scmp.ne.s32.totalorder %s166, %s167
      %p181 = scmp.eq.s32.totalorder %s25, 1
      %p182 = por %p180, %p181
      %p184 = scmp.ne.s32.totalorder %s167, %s183
      %p185 = scmp.eq.s32.totalorder %s25, 0
      %p186 = por %p184, %p185
      %p187 = scmp.le.s32.totalorder 1, %s19
      %p188 = scmp.lt.s32.totalorder %s19, 3
      %p189 = pnand %p187, %p188
      %p190 = pneg %p189
      // Predicated region
      $region9: #{deform_conv2d_sphe.1} parent=5 // pred_check
        _
      $region10: #{deform_conv2d_sphe.1} parent=5 // pred_check_branch
        %192 = sbr.rel (%p189) target = $region12
      $region11: #{deform_conv2d_sphe.1} parent=5 // pred_region
        %s193 = ssub.s32 %s19, 1
        // Predicated region
        $region13: #{deform_conv2d_sphe.1} parent=11 // pred_check
          %p194 = pneg %p83
        $region14: #{deform_conv2d_sphe.1} parent=11 // pred_check_branch
          %196 = sbr.rel (%p194) target = $region16
        $region15: #{deform_conv2d_sphe.1} parent=11 // pred_region
          %s197 = smul.u32 2, %s29
          %s199 = ssub.s32 2048, 2048
          %200 = vsyncadd [#allocation6], %s199
          %s201 = smul.addr %s197, 128
          %s202 = scalar_lea.hbm %s1, %s201
          %s203 = sshll.u32 [#allocation5], 4
          %s204 = int_to_ptr.vmem [resolvable:$true] %s203
          %209 = dma.hbm_to_vmem [thread:$0]  %s202, 2048, %s204, [#allocation6], 256, 256, 16
        $region16: #{deform_conv2d_sphe.1} parent=11 // pred_fallthru
          _
        // Predicated region
        $region17: #{deform_conv2d_sphe.1} parent=11 // pred_check
          %p210 = pneg %p109
        $region18: #{deform_conv2d_sphe.1} parent=11 // pred_check_branch
          %212 = sbr.rel (%p210) target = $region20
        $region19: #{deform_conv2d_sphe.1} parent=11 // pred_region
          %s213 = smul.u32 2, %s29
          %s215 = ssub.s32 2048, 2048
          %216 = vsyncadd [#allocation6], %s215
          %s217 = smul.addr %s213, 128
          %s218 = scalar_lea.hbm %s2, %s217
          %s219 = sshll.u32 [#allocation7], 4
          %s220 = int_to_ptr.vmem [resolvable:$true] %s219
          %225 = dma.hbm_to_vmem [thread:$0]  %s218, 2048, %s220, [#allocation6], 256, 256, 16
        $region20: #{deform_conv2d_sphe.1} parent=11 // pred_fallthru
          _
        // Predicated region
        $region21: #{deform_conv2d_sphe.1} parent=11 // pred_check
          %p226 = pneg %p130
        $region22: #{deform_conv2d_sphe.1} parent=11 // pred_check_branch
          %228 = sbr.rel (%p226) target = $region24
        $region23: #{deform_conv2d_sphe.1} parent=11 // pred_region
          %s230 = ssub.s32 576, 576
          %231 = vsyncadd [#allocation9], %s230
          %s232 = sshll.u32 [#allocation8], 4
          %s233 = int_to_ptr.vmem [resolvable:$true] %s232
          %238 = dma.hbm_to_vmem [thread:$0]  %s3, 576, %s233, [#allocation9], 64, 64, 4
        $region24: #{deform_conv2d_sphe.1} parent=11 // pred_fallthru
          _
        // Predicated region
        $region25: #{deform_conv2d_sphe.1} parent=11 // pred_check
          %p239 = pneg %p151
        $region26: #{deform_conv2d_sphe.1} parent=11 // pred_check_branch
          %241 = sbr.rel (%p239) target = $region28
        $region27: #{deform_conv2d_sphe.1} parent=11 // pred_region
          %s243 = ssub.s32 128, 128
          %244 = vsyncadd [#allocation9], %s243
          %s246 = sshll.u32 [#allocation10], 4
          %s247 = int_to_ptr.vmem [resolvable:$true] %s246
          %249 = dma.hbm_to_vmem [thread:$0]  %s4, 128, %s247, [#allocation9]
        $region28: #{deform_conv2d_sphe.1} parent=11 // pred_fallthru
          _
      $region12: #{deform_conv2d_sphe.1} parent=5 // pred_fallthru
        _
      %p250 = scmp.lt.s32.totalorder %s19, 2
      // Predicated region
      $region29: #{deform_conv2d_sphe.1} parent=5 // pred_check
        %p251 = pneg %p250
      $region30: #{deform_conv2d_sphe.1} parent=5 // pred_check_branch
        %253 = sbr.rel (%p251) target = $region32
      $region31: #{deform_conv2d_sphe.1} parent=5 // pred_region
        // Predicated region
        $region33: #{deform_conv2d_sphe.1} parent=31 // pred_check
          %p254 = pneg %p51
        $region34: #{deform_conv2d_sphe.1} parent=31 // pred_check_branch
          %256 = sbr.rel (%p254) target = $region36
        $region35: #{deform_conv2d_sphe.1} parent=31 // pred_region
          %s257 = sand.u32 %s41, 1
          %s258 = scalar_lea.sflag [#allocation3], %s257
          %s259 = sand.u32 %s41, 1
          %s260 = smul.addr %s259, 4
          %s261 = scalar_lea.vmem [#allocation2], %s260
          %s263 = ssub.s32 64, 64
          %264 = vsyncadd %s258, %s263
          %s265 = smul.addr %s26, 2
          %s266 = smul.addr %s265, 32
          %s267 = scalar_lea.hbm %s0, %s266
          %s269 = sshll.u32 %s261, 4
          %s270 = int_to_ptr.vmem [resolvable:$true] %s269
          %272 = dma.hbm_to_vmem [thread:$0]  %s267, 64, %s270, %s258
        $region36: #{deform_conv2d_sphe.1} parent=31 // pred_fallthru
          _
      $region32: #{deform_conv2d_sphe.1} parent=5 // pred_fallthru
        _
      %p273 = scmp.le.s32.totalorder 1, %s19
      %p274 = scmp.lt.s32.totalorder %s19, 3
      %p275 = pnand %p273, %p274
      %p276 = pneg %p275
      // Predicated region
      $region37: #{deform_conv2d_sphe.1} parent=5 // pred_check
        _
      $region38: #{deform_conv2d_sphe.1} parent=5 // pred_check_branch
        %278 = sbr.rel (%p275) target = $region40
      $region39: #{deform_conv2d_sphe.1} parent=5 // pred_region
        %s279 = ssub.s32 %s19, 1
        %s280 = sand.u32 %s44, 1
        %s281 = scalar_lea.sflag [#allocation3], %s280
        %s282 = sand.u32 %s44, 1
        %s283 = smul.addr %s282, 4
        %s284 = scalar_lea.vmem [#allocation2], %s283
        // Predicated region
        $region41: #{deform_conv2d_sphe.1} parent=39 // pred_check
          %p285 = pneg %p57
        $region42: #{deform_conv2d_sphe.1} parent=39 // pred_check_branch
          %287 = sbr.rel (%p285) target = $region44
        $region43: #{deform_conv2d_sphe.1} parent=39 // pred_region
          %288 = dma.done %s281, 64
        $region44: #{deform_conv2d_sphe.1} parent=39 // pred_fallthru
          _
        // Predicated region
        $region45: #{deform_conv2d_sphe.1} parent=39 // pred_check
          %p289 = pneg %p83
        $region46: #{deform_conv2d_sphe.1} parent=39 // pred_check_branch
          %291 = sbr.rel (%p289) target = $region48
        $region47: #{deform_conv2d_sphe.1} parent=39 // pred_region
          %292 = dma.done [#allocation6], 2048
        $region48: #{deform_conv2d_sphe.1} parent=39 // pred_fallthru
          _
        // Predicated region
        $region49: #{deform_conv2d_sphe.1} parent=39 // pred_check
          %p293 = pneg %p109
        $region50: #{deform_conv2d_sphe.1} parent=39 // pred_check_branch
          %295 = sbr.rel (%p293) target = $region52
        $region51: #{deform_conv2d_sphe.1} parent=39 // pred_region
          %296 = dma.done [#allocation6], 2048
        $region52: #{deform_conv2d_sphe.1} parent=39 // pred_fallthru
          _
        // Predicated region
        $region53: #{deform_conv2d_sphe.1} parent=39 // pred_check
          %p297 = pneg %p130
        $region54: #{deform_conv2d_sphe.1} parent=39 // pred_check_branch
          %299 = sbr.rel (%p297) target = $region56
        $region55: #{deform_conv2d_sphe.1} parent=39 // pred_region
          %300 = dma.done [#allocation9], 576
        $region56: #{deform_conv2d_sphe.1} parent=39 // pred_fallthru
          _
        // Predicated region
        $region57: #{deform_conv2d_sphe.1} parent=39 // pred_check
          %p301 = pneg %p151
        $region58: #{deform_conv2d_sphe.1} parent=39 // pred_check_branch
          %303 = sbr.rel (%p301) target = $region60
        $region59: #{deform_conv2d_sphe.1} parent=39 // pred_region
          %304 = dma.done [#allocation9], 128
        $region60: #{deform_conv2d_sphe.1} parent=39 // pred_fallthru
          _
        %s305 = sand.u32 %s44, 1
        %s306 = scalar_lea.sflag [#allocation3], %s305
        %s307 = sand.u32 %s44, 1
        %s308 = smul.addr %s307, 4
        %s309 = scalar_lea.vmem [#allocation2], %s308
        %p310 = pneg %p57
        %p311 = pneg %p54
        %p312 = pneg %p83
        %p313 = pneg %p80
        %p314 = pneg %p109
        %p315 = pneg %p106
        %p316 = pneg %p130
        %p317 = pneg %p127
        %p318 = pneg %p151
        %p319 = pneg %p148
        %p320 = pneg %p179
        %p321 = pneg %p176
        %s322 = sand.u32 %s166, 1
        %s323 = scalar_lea.sflag [#allocation4], %s322
        %s324 = sand.u32 %s166, 1
        %s325 = smul.addr %s324, 16
        %s326 = scalar_lea.vmem [#allocation11], %s325
        %s327 = smul.u32 2, %s29
        %s328 = smul.u32 2, %s29
        %s329 = smul.u32 2, %s29
        %v331 = vld [vmem:[%s284] sm:$0xf]
        %v332 = vld [vmem:[#allocation8] sm:$0xf]
        %v333 = vld [vmem:[#allocation8 + $0x4] sm:$0xf]
        %v334 = vld [vmem:[#allocation8 + $0x8] sm:$0xf]
        %v335 = vld [vmem:[#allocation8 + $0xc] sm:$0xf]
        %v336 = vld [vmem:[#allocation8 + $0x10] sm:$0xf]
        %v337 = vld [vmem:[#allocation8 + $0x14] sm:$0xf]
        %v338 = vld [vmem:[#allocation8 + $0x18] sm:$0xf]
        %v339 = vld [vmem:[#allocation8 + $0x1c] sm:$0xf]
        %v340 = vld [vmem:[#allocation8 + $0x20] sm:$0xf]
        %v350 = vunpack.c.l.b16 %v332
        %v351 = vunpack.c.l.b16 %v333
        %v352 = vunpack.c.l.b16 %v334
        %v353 = vunpack.c.l.b16 %v335
        %v354 = vunpack.c.l.b16 %v336
        %v355 = vunpack.c.l.b16 %v337
        %v356 = vunpack.c.l.b16 %v338
        %v357 = vunpack.c.l.b16 %v339
        %v358 = vunpack.c.l.b16 %v340
        %v359 = vpack.c.b16 %v351, %v350
        %v360 = vpack.c.b16 %v353, %v352
        %v361 = vpack.c.b16 %v355, %v354
        %v362 = vpack.c.b16 %v357, %v356
        %v363 = vpack.c.b16 %v358, %v358
        %v366 = vunpack.c.l.s4 1983009808
        %v367 = vunpack.c.0.s8 %v366
        %v368 = vlaneseq
        %v369 = vshrl.u32 %v368, 7
        %v370 = vsub.s32 %v367, %v369
        %v371 = vrot.slane %v331, %v370
        %v372 = vcombine.high %v371, %v371
        %vm373 = vcmask 31744
        %v375 = vsel %vm373, %v359, 0
        %v378 = vsel %vm373, %v360, 0
        %v381 = vsel %vm373, %v361, 0
        %v384 = vsel %vm373, %v362, 0
        %v387 = vsel %vm373, %v363, 0
        %vm389 = vcmask 1041408
        %v391 = vsel %vm389, %v371, 0
        %v394 = vsel %vm389, %v372, 0
        %396 = vmatprep.subr.bf16.mxu0 %v394
        %397 = vmatpush1.bf16.msra.mxu0 %v391
        %398 = vmatprep.subr.bf16.mxu0 0
        %399 = vmatpush1.bf16.msra.mxu0 0
        %400 = vmatprep.subr.bf16.mxu0 0
        %401 = vmatpush1.bf16.msra.mxu0 0
        %402 = vmatprep.subr.bf16.mxu0 0
        %403 = vmatpush1.bf16.msra.mxu0 0
        %404 = vmatprep.subr.bf16.mxu0 0
        %405 = vmatpush1.bf16.msra.mxu0 0
        %406 = vmatprep.subr.bf16.mxu0 0
        %407 = vmatpush1.bf16.msra.mxu0 0
        %408 = vmatprep.subr.bf16.mxu0 0
        %409 = vmatpush1.bf16.msra.mxu0 0
        %410 = vmatprep.subr.bf16.mxu0 0
        %411 = vmatpush1.bf16.msra.mxu0 0
        %412 = vmatprep.subr.bf16.mxu0 0
        %413 = vmatpush1.bf16.msra.mxu0 0
        %414 = vmatprep.subr.bf16.mxu0 0
        %415 = vmatpush1.bf16.msra.mxu0 0
        %416 = vmatprep.subr.bf16.mxu0 0
        %417 = vmatpush1.bf16.msra.mxu0 0
        %418 = vmatprep.subr.bf16.mxu0 0
        %419 = vmatpush1.bf16.msra.mxu0 0
        %420 = vmatprep.subr.bf16.mxu0 0
        %421 = vmatpush1.bf16.msra.mxu0 0
        %422 = vmatprep.subr.bf16.mxu0 0
        %423 = vmatpush1.bf16.msra.mxu0 0
        %424 = vmatprep.subr.bf16.mxu0 0
        %425 = vmatpush1.bf16.msra.mxu0 0
        %426 = vmatprep.subr.bf16.mxu0 0
        %427 = vmatpush1.bf16.msra.mxu0 0
        %428 = vmatprep.mubr.bf16.mxu0 0
        %429 = vmatmul.mubr.bf16.gmra.mrb[0].mxu0 %v375
        %v430 = vpop.f32.mrb[0].mxu0
        %v431 = vadd.f32 0.0, %v430
        %v432 = vpop.f32.mrb[0].mxu0
        %v433 = vadd.f32 0.0, %v432
        %v434 = vpop.f32.mrb[0].mxu0
        %v435 = vadd.f32 0.0, %v434
        %v436 = vpop.f32.mrb[0].mxu0
        %v437 = vadd.f32 0.0, %v436
        %438 = vmatprep.mubr.bf16.mxu0 0
        %439 = vmatmul.mubr.bf16.gmra.mrb[0].mxu0 %v378
        %v440 = vpop.f32.mrb[0].mxu0
        %v441 = vadd.f32 0.0, %v440
        %v442 = vpop.f32.mrb[0].mxu0
        %v443 = vadd.f32 0.0, %v442
        %v444 = vpop.f32.mrb[0].mxu0
        %v445 = vadd.f32 0.0, %v444
        %v446 = vpop.f32.mrb[0].mxu0
        %v447 = vadd.f32 0.0, %v446
        %448 = vmatprep.mubr.bf16.mxu0 0
        %449 = vmatmul.mubr.bf16.gmra.mrb[0].mxu0 %v381
        %v450 = vpop.f32.mrb[0].mxu0
        %v451 = vadd.f32 0.0, %v450
        %v452 = vpop.f32.mrb[0].mxu0
        %v453 = vadd.f32 0.0, %v452
        %v454 = vpop.f32.mrb[0].mxu0
        %v455 = vadd.f32 0.0, %v454
        %v456 = vpop.f32.mrb[0].mxu0
        %v457 = vadd.f32 0.0, %v456
        %458 = vmatprep.mubr.bf16.mxu0 0
        %459 = vmatmul.mubr.bf16.gmra.mrb[0].mxu0 %v384
        %v460 = vpop.f32.mrb[0].mxu0
        %v461 = vadd.f32 0.0, %v460
        %v462 = vpop.f32.mrb[0].mxu0
        %v463 = vadd.f32 0.0, %v462
        %v464 = vpop.f32.mrb[0].mxu0
        %v465 = vadd.f32 0.0, %v464
        %v466 = vpop.f32.mrb[0].mxu0
        %v467 = vadd.f32 0.0, %v466
        %468 = vmatprep.mubr.bf16.mxu0 0
        %469 = vmatmul.mubr.bf16.gmra.mrb[0].mxu0 %v387
        %v470 = vpop.f32.mrb[0].mxu0
        %v471 = vadd.f32 0.0, %v470
        %v472 = vpop.f32.mrb[0].mxu0
        %v473 = vadd.f32 0.0, %v472
        %v474 = vpop.f32.mrb[0].mxu0
        %v475 = vpop.f32.mrb[0].mxu0
        %476 = vdwg.mxu0
        %v477 = vld [vmem:[#allocation5] sm:$0xff]
        %v478 = vld [vmem:[#allocation5 + $0x8] sm:$0xff]
        %v479 = vld [vmem:[#allocation5 + $0x10] sm:$0x1]
        %v480 = vld [vmem:[#allocation5 + $0x18] sm:$0x1]
        %v481 = vld [vmem:[#allocation5 + $0x20] sm:$0xff]
        %v482 = vld [vmem:[#allocation5 + $0x28] sm:$0xff]
        %v483 = vld [vmem:[#allocation5 + $0x30] sm:$0x1]
        %v484 = vld [vmem:[#allocation5 + $0x38] sm:$0x1]
        %v485 = vld [vmem:[#allocation5 + $0x40] sm:$0xff]
        %v486 = vld [vmem:[#allocation5 + $0x48] sm:$0xff]
        %v487 = vld [vmem:[#allocation5 + $0x50] sm:$0x1]
        %v488 = vld [vmem:[#allocation5 + $0x58] sm:$0x1]
        %v489 = vld [vmem:[#allocation5 + $0x60] sm:$0xff]
        %v490 = vld [vmem:[#allocation5 + $0x68] sm:$0xff]
        %v491 = vld [vmem:[#allocation5 + $0x70] sm:$0x1]
        %v492 = vld [vmem:[#allocation5 + $0x78] sm:$0x1]
        %v493 = vld [vmem:[#allocation7] sm:$0xff]
        %v494 = vld [vmem:[#allocation7 + $0x8] sm:$0xff]
        %v495 = vld [vmem:[#allocation7 + $0x10] sm:$0x1]
        %v496 = vld [vmem:[#allocation7 + $0x18] sm:$0x1]
        %v497 = vld [vmem:[#allocation7 + $0x20] sm:$0xff]
        %v498 = vld [vmem:[#allocation7 + $0x28] sm:$0xff]
        %v499 = vld [vmem:[#allocation7 + $0x30] sm:$0x1]
        %v500 = vld [vmem:[#allocation7 + $0x38] sm:$0x1]
        %v501 = vld [vmem:[#allocation7 + $0x40] sm:$0xff]
        %v502 = vld [vmem:[#allocation7 + $0x48] sm:$0xff]
        %v503 = vld [vmem:[#allocation7 + $0x50] sm:$0x1]
        %v504 = vld [vmem:[#allocation7 + $0x58] sm:$0x1]
        %v505 = vld [vmem:[#allocation7 + $0x60] sm:$0xff]
        %v506 = vld [vmem:[#allocation7 + $0x68] sm:$0xff]
        %v507 = vld [vmem:[#allocation7 + $0x70] sm:$0x1]
        %v508 = vld [vmem:[#allocation7 + $0x78] sm:$0x1]
        %v509 = vlaneseq
        %v510 = vshrl.u32 %v509, 7
        %v511 = vadd.s32 %v510, 8
        %v512 = vadd.s32 %v510, 16
        %v513 = vadd.s32 %v510, 24
        %v514 = vadd.s32 %v510, 32
        %v515 = vadd.s32 %v510, 40
        %v516 = vadd.s32 %v510, 48
        %v517 = vadd.s32 %v510, 56
        %v518 = vadd.s32 %v510, 64
        %v519 = vadd.s32 %v510, 72
        %v520 = vadd.s32 %v510, 80
        %v521 = vadd.s32 %v510, 88
        %v522 = vadd.s32 %v510, 96
        %v523 = vadd.s32 %v510, 104
        %v524 = vadd.s32 %v510, 112
        %v525 = vadd.s32 %v510, 120
        %v526 = vadd.s32 %v510, 128
        %v527 = vadd.s32 %v510, 136
        %v528 = vadd.s32 %v510, 144
        %v529 = vadd.s32 %v510, 152
        %v530 = vadd.s32 %v510, 160
        %v531 = vadd.s32 %v510, 168
        %v532 = vadd.s32 %v510, 176
        %v533 = vadd.s32 %v510, 184
        %v534 = vadd.s32 %v510, 192
        %v535 = vadd.s32 %v510, 200
        %v536 = vadd.s32 %v510, 208
        %v537 = vadd.s32 %v510, 216
        %v538 = vadd.s32 %v510, 224
        %v539 = vadd.s32 %v510, 232
        %v540 = vadd.s32 %v510, 240
        %v541 = vadd.s32 %v510, 248
        %v542 = vlaneseq
        %v543 = vshrl.u32 %v542, 7
        %v544 = vsub.s32 0, %v543
        %v545 = vrot.slane %v477, %v544
        %v546 = vlaneseq
        %v547 = vshrl.u32 %v546, 7
        %v548 = vsub.s32 0, %v547
        %v549 = vrot.slane %v478, %v548
        %vm550 = vcmp.eq.s32.totalorder %v510, %v545
        %vm551 = vcmp.eq.s32.totalorder %v510, %v549
        %vm552 = vcmp.eq.s32.totalorder %v511, %v545
        %vm553 = vcmp.eq.s32.totalorder %v511, %v549
        %vm554 = vcmp.eq.s32.totalorder %v512, %v545
        %vm555 = vcmp.eq.s32.totalorder %v512, %v549
        %vm556 = vcmp.eq.s32.totalorder %v513, %v545
        %vm557 = vcmp.eq.s32.totalorder %v513, %v549
        %vm558 = vcmp.eq.s32.totalorder %v514, %v545
        %vm559 = vcmp.eq.s32.totalorder %v514, %v549
        %vm560 = vcmp.eq.s32.totalorder %v515, %v545
        %vm561 = vcmp.eq.s32.totalorder %v515, %v549
        %vm562 = vcmp.eq.s32.totalorder %v516, %v545
        %vm563 = vcmp.eq.s32.totalorder %v516, %v549
        %vm564 = vcmp.eq.s32.totalorder %v517, %v545
        %vm565 = vcmp.eq.s32.totalorder %v517, %v549
        %vm566 = vcmp.eq.s32.totalorder %v518, %v545
        %vm567 = vcmp.eq.s32.totalorder %v518, %v549
        %vm568 = vcmp.eq.s32.totalorder %v519, %v545
        %vm569 = vcmp.eq.s32.totalorder %v519, %v549
        %vm570 = vcmp.eq.s32.totalorder %v520, %v545
        %vm571 = vcmp.eq.s32.totalorder %v520, %v549
        %vm572 = vcmp.eq.s32.totalorder %v521, %v545
        %vm573 = vcmp.eq.s32.totalorder %v521, %v549
        %vm574 = vcmp.eq.s32.totalorder %v522, %v545
        %vm575 = vcmp.eq.s32.totalorder %v522, %v549
        %vm576 = vcmp.eq.s32.totalorder %v523, %v545
        %vm577 = vcmp.eq.s32.totalorder %v523, %v549
        %vm578 = vcmp.eq.s32.totalorder %v524, %v545
        %vm579 = vcmp.eq.s32.totalorder %v524, %v549
        %vm580 = vcmp.eq.s32.totalorder %v525, %v545
        %vm581 = vcmp.eq.s32.totalorder %v525, %v549
        %vm582 = vcmp.eq.s32.totalorder %v526, %v545
        %vm583 = vcmp.eq.s32.totalorder %v526, %v549
        %vm584 = vcmp.eq.s32.totalorder %v527, %v545
        %vm585 = vcmp.eq.s32.totalorder %v527, %v549
        %vm586 = vcmp.eq.s32.totalorder %v528, %v545
        %vm587 = vcmp.eq.s32.totalorder %v528, %v549
        %vm588 = vcmp.eq.s32.totalorder %v529, %v545
        %vm589 = vcmp.eq.s32.totalorder %v529, %v549
        %vm590 = vcmp.eq.s32.totalorder %v530, %v545
        %vm591 = vcmp.eq.s32.totalorder %v530, %v549
        %vm592 = vcmp.eq.s32.totalorder %v531, %v545
        %vm593 = vcmp.eq.s32.totalorder %v531, %v549
        %vm594 = vcmp.eq.s32.totalorder %v532, %v545
        %vm595 = vcmp.eq.s32.totalorder %v532, %v549
        %vm596 = vcmp.eq.s32.totalorder %v533, %v545
        %vm597 = vcmp.eq.s32.totalorder %v533, %v549
        %vm598 = vcmp.eq.s32.totalorder %v534, %v545
        %vm599 = vcmp.eq.s32.totalorder %v534, %v549
        %vm600 = vcmp.eq.s32.totalorder %v535, %v545
        %vm601 = vcmp.eq.s32.totalorder %v535, %v549
        %vm602 = vcmp.eq.s32.totalorder %v536, %v545
        %vm603 = vcmp.eq.s32.totalorder %v536, %v549
        %vm604 = vcmp.eq.s32.totalorder %v537, %v545
        %vm605 = vcmp.eq.s32.totalorder %v537, %v549
        %vm606 = vcmp.eq.s32.totalorder %v538, %v545
        %vm607 = vcmp.eq.s32.totalorder %v538, %v549
        %vm608 = vcmp.eq.s32.totalorder %v539, %v545
        %vm609 = vcmp.eq.s32.totalorder %v539, %v549
        %vm610 = vcmp.eq.s32.totalorder %v540, %v545
        %vm611 = vcmp.eq.s32.totalorder %v540, %v549
        %vm612 = vcmp.eq.s32.totalorder %v541, %v545
        %vm613 = vcmp.eq.s32.totalorder %v541, %v549
        %v614 = vlaneseq
        %v615 = vshrl.u32 %v614, 7
        %v616 = vsub.s32 0, %v615
        %v617 = vrot.slane %v493, %v616
        %v618 = vlaneseq
        %v619 = vshrl.u32 %v618, 7
        %v620 = vsub.s32 0, %v619
        %v621 = vrot.slane %v494, %v620
        %v622 = vsel %vm550, %v617, 0.0
        %v623 = vsel %vm551, %v621, 0.0
        %v624 = vsel %vm552, %v617, 0.0
        %v625 = vsel %vm553, %v621, 0.0
        %v626 = vsel %vm554, %v617, 0.0
        %v627 = vsel %vm555, %v621, 0.0
        %v628 = vsel %vm556, %v617, 0.0
        %v629 = vsel %vm557, %v621, 0.0
        %v630 = vsel %vm558, %v617, 0.0
        %v631 = vsel %vm559, %v621, 0.0
        %v632 = vsel %vm560, %v617, 0.0
        %v633 = vsel %vm561, %v621, 0.0
        %v634 = vsel %vm562, %v617, 0.0
        %v635 = vsel %vm563, %v621, 0.0
        %v636 = vsel %vm564, %v617, 0.0
        %v637 = vsel %vm565, %v621, 0.0
        %v638 = vsel %vm566, %v617, 0.0
        %v639 = vsel %vm567, %v621, 0.0
        %v640 = vsel %vm568, %v617, 0.0
        %v641 = vsel %vm569, %v621, 0.0
        %v642 = vsel %vm570, %v617, 0.0
        %v643 = vsel %vm571, %v621, 0.0
        %v644 = vsel %vm572, %v617, 0.0
        %v645 = vsel %vm573, %v621, 0.0
        %v646 = vsel %vm574, %v617, 0.0
        %v647 = vsel %vm575, %v621, 0.0
        %v648 = vsel %vm576, %v617, 0.0
        %v649 = vsel %vm577, %v621, 0.0
        %v650 = vsel %vm578, %v617, 0.0
        %v651 = vsel %vm579, %v621, 0.0
        %v652 = vsel %vm580, %v617, 0.0
        %v653 = vsel %vm581, %v621, 0.0
        %v654 = vsel %vm582, %v617, 0.0
        %v655 = vsel %vm583, %v621, 0.0
        %v656 = vsel %vm584, %v617, 0.0
        %v657 = vsel %vm585, %v621, 0.0
        %v658 = vsel %vm586, %v617, 0.0
        %v659 = vsel %vm587, %v621, 0.0
        %v660 = vsel %vm588, %v617, 0.0
        %v661 = vsel %vm589, %v621, 0.0
        %v662 = vsel %vm590, %v617, 0.0
        %v663 = vsel %vm591, %v621, 0.0
        %v664 = vsel %vm592, %v617, 0.0
        %v665 = vsel %vm593, %v621, 0.0
        %v666 = vsel %vm594, %v617, 0.0
        %v667 = vsel %vm595, %v621, 0.0
        %v668 = vsel %vm596, %v617, 0.0
        %v669 = vsel %vm597, %v621, 0.0
        %v670 = vsel %vm598, %v617, 0.0
        %v671 = vsel %vm599, %v621, 0.0
        %v672 = vsel %vm600, %v617, 0.0
        %v673 = vsel %vm601, %v621, 0.0
        %v674 = vsel %vm602, %v617, 0.0
        %v675 = vsel %vm603, %v621, 0.0
        %v676 = vsel %vm604, %v617, 0.0
        %v677 = vsel %vm605, %v621, 0.0
        %v678 = vsel %vm606, %v617, 0.0
        %v679 = vsel %vm607, %v621, 0.0
        %v680 = vsel %vm608, %v617, 0.0
        %v681 = vsel %vm609, %v621, 0.0
        %v682 = vsel %vm610, %v617, 0.0
        %v683 = vsel %vm611, %v621, 0.0
        %v684 = vsel %vm612, %v617, 0.0
        %v685 = vsel %vm613, %v621, 0.0
        %v686 = vadd.f32 %v622, 0.0
        %v687 = vadd.f32 %v623, 0.0
        %v688 = vadd.f32 %v624, 0.0
        %v689 = vadd.f32 %v625, 0.0
        %v690 = vadd.f32 %v626, 0.0
        %v691 = vadd.f32 %v627, 0.0
        %v692 = vadd.f32 %v628, 0.0
        %v693 = vadd.f32 %v629, 0.0
        %v694 = vadd.f32 %v630, 0.0
        %v695 = vadd.f32 %v631, 0.0
        %v696 = vadd.f32 %v632, 0.0
        %v697 = vadd.f32 %v633, 0.0
        %v698 = vadd.f32 %v634, 0.0
        %v699 = vadd.f32 %v635, 0.0
        %v700 = vadd.f32 %v636, 0.0
        %v701 = vadd.f32 %v637, 0.0
        %v702 = vadd.f32 %v638, 0.0
        %v703 = vadd.f32 %v639, 0.0
        %v704 = vadd.f32 %v640, 0.0
        %v705 = vadd.f32 %v641, 0.0
        %v706 = vadd.f32 %v642, 0.0
        %v707 = vadd.f32 %v643, 0.0
        %v708 = vadd.f32 %v644, 0.0
        %v709 = vadd.f32 %v645, 0.0
        %v710 = vadd.f32 %v646, 0.0
        %v711 = vadd.f32 %v647, 0.0
        %v712 = vadd.f32 %v648, 0.0
        %v713 = vadd.f32 %v649, 0.0
        %v714 = vadd.f32 %v650, 0.0
        %v715 = vadd.f32 %v651, 0.0
        %v716 = vadd.f32 %v652, 0.0
        %v717 = vadd.f32 %v653, 0.0
        %v718 = vadd.f32 %v654, 0.0
        %v719 = vadd.f32 %v655, 0.0
        %v720 = vadd.f32 %v656, 0.0
        %v721 = vadd.f32 %v657, 0.0
        %v722 = vadd.f32 %v658, 0.0
        %v723 = vadd.f32 %v659, 0.0
        %v724 = vadd.f32 %v660, 0.0
        %v725 = vadd.f32 %v661, 0.0
        %v726 = vadd.f32 %v662, 0.0
        %v727 = vadd.f32 %v663, 0.0
        %v728 = vadd.f32 %v664, 0.0
        %v729 = vadd.f32 %v665, 0.0
        %v730 = vadd.f32 %v666, 0.0
        %v731 = vadd.f32 %v667, 0.0
        %v732 = vadd.f32 %v668, 0.0
        %v733 = vadd.f32 %v669, 0.0
        %v734 = vadd.f32 %v670, 0.0
        %v735 = vadd.f32 %v671, 0.0
        %v736 = vadd.f32 %v672, 0.0
        %v737 = vadd.f32 %v673, 0.0
        %v738 = vadd.f32 %v674, 0.0
        %v739 = vadd.f32 %v675, 0.0
        %v740 = vadd.f32 %v676, 0.0
        %v741 = vadd.f32 %v677, 0.0
        %v742 = vadd.f32 %v678, 0.0
        %v743 = vadd.f32 %v679, 0.0
        %v744 = vadd.f32 %v680, 0.0
        %v745 = vadd.f32 %v681, 0.0
        %v746 = vadd.f32 %v682, 0.0
        %v747 = vadd.f32 %v683, 0.0
        %v748 = vadd.f32 %v684, 0.0
        %v749 = vadd.f32 %v685, 0.0
        %v750 = vlaneseq
        %v751 = vshrl.u32 %v750, 7
        %v752 = vsub.s32 0, %v751
        %v753 = vrot.slane %v481, %v752
        %v754 = vlaneseq
        %v755 = vshrl.u32 %v754, 7
        %v756 = vsub.s32 0, %v755
        %v757 = vrot.slane %v482, %v756
        %vm758 = vcmp.eq.s32.totalorder %v510, %v753
        %vm759 = vcmp.eq.s32.totalorder %v510, %v757
        %vm760 = vcmp.eq.s32.totalorder %v511, %v753
        %vm761 = vcmp.eq.s32.totalorder %v511, %v757
        %vm762 = vcmp.eq.s32.totalorder %v512, %v753
        %vm763 = vcmp.eq.s32.totalorder %v512, %v757
        %vm764 = vcmp.eq.s32.totalorder %v513, %v753
        %vm765 = vcmp.eq.s32.totalorder %v513, %v757
        %vm766 = vcmp.eq.s32.totalorder %v514, %v753
        %vm767 = vcmp.eq.s32.totalorder %v514, %v757
        %vm768 = vcmp.eq.s32.totalorder %v515, %v753
        %vm769 = vcmp.eq.s32.totalorder %v515, %v757
        %vm770 = vcmp.eq.s32.totalorder %v516, %v753
        %vm771 = vcmp.eq.s32.totalorder %v516, %v757
        %vm772 = vcmp.eq.s32.totalorder %v517, %v753
        %vm773 = vcmp.eq.s32.totalorder %v517, %v757
        %vm774 = vcmp.eq.s32.totalorder %v518, %v753
        %vm775 = vcmp.eq.s32.totalorder %v518, %v757
        %vm776 = vcmp.eq.s32.totalorder %v519, %v753
        %vm777 = vcmp.eq.s32.totalorder %v519, %v757
        %vm778 = vcmp.eq.s32.totalorder %v520, %v753
        %vm779 = vcmp.eq.s32.totalorder %v520, %v757
        %vm780 = vcmp.eq.s32.totalorder %v521, %v753
        %vm781 = vcmp.eq.s32.totalorder %v521, %v757
        %vm782 = vcmp.eq.s32.totalorder %v522, %v753
        %vm783 = vcmp.eq.s32.totalorder %v522, %v757
        %vm784 = vcmp.eq.s32.totalorder %v523, %v753
        %vm785 = vcmp.eq.s32.totalorder %v523, %v757
        %vm786 = vcmp.eq.s32.totalorder %v524, %v753
        %vm787 = vcmp.eq.s32.totalorder %v524, %v757
        %vm788 = vcmp.eq.s32.totalorder %v525, %v753
        %vm789 = vcmp.eq.s32.totalorder %v525, %v757
        %vm790 = vcmp.eq.s32.totalorder %v526, %v753
        %vm791 = vcmp.eq.s32.totalorder %v526, %v757
        %vm792 = vcmp.eq.s32.totalorder %v527, %v753
        %vm793 = vcmp.eq.s32.totalorder %v527, %v757
        %vm794 = vcmp.eq.s32.totalorder %v528, %v753
        %vm795 = vcmp.eq.s32.totalorder %v528, %v757
        %vm796 = vcmp.eq.s32.totalorder %v529, %v753
        %vm797 = vcmp.eq.s32.totalorder %v529, %v757
        %vm798 = vcmp.eq.s32.totalorder %v530, %v753
        %vm799 = vcmp.eq.s32.totalorder %v530, %v757
        %vm800 = vcmp.eq.s32.totalorder %v531, %v753
        %vm801 = vcmp.eq.s32.totalorder %v531, %v757
        %vm802 = vcmp.eq.s32.totalorder %v532, %v753
        %vm803 = vcmp.eq.s32.totalorder %v532, %v757
        %vm804 = vcmp.eq.s32.totalorder %v533, %v753
        %vm805 = vcmp.eq.s32.totalorder %v533, %v757
        %vm806 = vcmp.eq.s32.totalorder %v534, %v753
        %vm807 = vcmp.eq.s32.totalorder %v534, %v757
        %vm808 = vcmp.eq.s32.totalorder %v535, %v753
        %vm809 = vcmp.eq.s32.totalorder %v535, %v757
        %vm810 = vcmp.eq.s32.totalorder %v536, %v753
        %vm811 = vcmp.eq.s32.totalorder %v536, %v757
        %vm812 = vcmp.eq.s32.totalorder %v537, %v753
        %vm813 = vcmp.eq.s32.totalorder %v537, %v757
        %vm814 = vcmp.eq.s32.totalorder %v538, %v753
        %vm815 = vcmp.eq.s32.totalorder %v538, %v757
        %vm816 = vcmp.eq.s32.totalorder %v539, %v753
        %vm817 = vcmp.eq.s32.totalorder %v539, %v757
        %vm818 = vcmp.eq.s32.totalorder %v540, %v753
        %vm819 = vcmp.eq.s32.totalorder %v540, %v757
        %vm820 = vcmp.eq.s32.totalorder %v541, %v753
        %vm821 = vcmp.eq.s32.totalorder %v541, %v757
        %v822 = vlaneseq
        %v823 = vshrl.u32 %v822, 7
        %v824 = vsub.s32 0, %v823
        %v825 = vrot.slane %v497, %v824
        %v826 = vlaneseq
        %v827 = vshrl.u32 %v826, 7
        %v828 = vsub.s32 0, %v827
        %v829 = vrot.slane %v498, %v828
        %v830 = vsel %vm758, %v825, 0.0
        %v831 = vsel %vm759, %v829, 0.0
        %v832 = vsel %vm760, %v825, 0.0
        %v833 = vsel %vm761, %v829, 0.0
        %v834 = vsel %vm762, %v825, 0.0
        %v835 = vsel %vm763, %v829, 0.0
        %v836 = vsel %vm764, %v825, 0.0
        %v837 = vsel %vm765, %v829, 0.0
        %v838 = vsel %vm766, %v825, 0.0
        %v839 = vsel %vm767, %v829, 0.0
        %v840 = vsel %vm768, %v825, 0.0
        %v841 = vsel %vm769, %v829, 0.0
        %v842 = vsel %vm770, %v825, 0.0
        %v843 = vsel %vm771, %v829, 0.0
        %v844 = vsel %vm772, %v825, 0.0
        %v845 = vsel %vm773, %v829, 0.0
        %v846 = vsel %vm774, %v825, 0.0
        %v847 = vsel %vm775, %v829, 0.0
        %v848 = vsel %vm776, %v825, 0.0
        %v849 = vsel %vm777, %v829, 0.0
        %v850 = vsel %vm778, %v825, 0.0
        %v851 = vsel %vm779, %v829, 0.0
        %v852 = vsel %vm780, %v825, 0.0
        %v853 = vsel %vm781, %v829, 0.0
        %v854 = vsel %vm782, %v825, 0.0
        %v855 = vsel %vm783, %v829, 0.0
        %v856 = vsel %vm784, %v825, 0.0
        %v857 = vsel %vm785, %v829, 0.0
        %v858 = vsel %vm786, %v825, 0.0
        %v859 = vsel %vm787, %v829, 0.0
        %v860 = vsel %vm788, %v825, 0.0
        %v861 = vsel %vm789, %v829, 0.0
        %v862 = vsel %vm790, %v825, 0.0
        %v863 = vsel %vm791, %v829, 0.0
        %v864 = vsel %vm792, %v825, 0.0
        %v865 = vsel %vm793, %v829, 0.0
        %v866 = vsel %vm794, %v825, 0.0
        %v867 = vsel %vm795, %v829, 0.0
        %v868 = vsel %vm796, %v825, 0.0
        %v869 = vsel %vm797, %v829, 0.0
        %v870 = vsel %vm798, %v825, 0.0
        %v871 = vsel %vm799, %v829, 0.0
        %v872 = vsel %vm800, %v825, 0.0
        %v873 = vsel %vm801, %v829, 0.0
        %v874 = vsel %vm802, %v825, 0.0
        %v875 = vsel %vm803, %v829, 0.0
        %v876 = vsel %vm804, %v825, 0.0
        %v877 = vsel %vm805, %v829, 0.0
        %v878 = vsel %vm806, %v825, 0.0
        %v879 = vsel %vm807, %v829, 0.0
        %v880 = vsel %vm808, %v825, 0.0
        %v881 = vsel %vm809, %v829, 0.0
        %v882 = vsel %vm810, %v825, 0.0
        %v883 = vsel %vm811, %v829, 0.0
        %v884 = vsel %vm812, %v825, 0.0
        %v885 = vsel %vm813, %v829, 0.0
        %v886 = vsel %vm814, %v825, 0.0
        %v887 = vsel %vm815, %v829, 0.0
        %v888 = vsel %vm816, %v825, 0.0
        %v889 = vsel %vm817, %v829, 0.0
        %v890 = vsel %vm818, %v825, 0.0
        %v891 = vsel %vm819, %v829, 0.0
        %v892 = vsel %vm820, %v825, 0.0
        %v893 = vsel %vm821, %v829, 0.0
        %v894 = vadd.f32 %v686, %v830
        %v895 = vadd.f32 %v687, %v831
        %v896 = vadd.f32 %v688, %v832
        %v897 = vadd.f32 %v689, %v833
        %v898 = vadd.f32 %v690, %v834
        %v899 = vadd.f32 %v691, %v835
        %v900 = vadd.f32 %v692, %v836
        %v901 = vadd.f32 %v693, %v837
        %v902 = vadd.f32 %v694, %v838
        %v903 = vadd.f32 %v695, %v839
        %v904 = vadd.f32 %v696, %v840
        %v905 = vadd.f32 %v697, %v841
        %v906 = vadd.f32 %v698, %v842
        %v907 = vadd.f32 %v699, %v843
        %v908 = vadd.f32 %v700, %v844
        %v909 = vadd.f32 %v701, %v845
        %v910 = vadd.f32 %v702, %v846
        %v911 = vadd.f32 %v703, %v847
        %v912 = vadd.f32 %v704, %v848
        %v913 = vadd.f32 %v705, %v849
        %v914 = vadd.f32 %v706, %v850
        %v915 = vadd.f32 %v707, %v851
        %v916 = vadd.f32 %v708, %v852
        %v917 = vadd.f32 %v709, %v853
        %v918 = vadd.f32 %v710, %v854
        %v919 = vadd.f32 %v711, %v855
        %v920 = vadd.f32 %v712, %v856
        %v921 = vadd.f32 %v713, %v857
        %v922 = vadd.f32 %v714, %v858
        %v923 = vadd.f32 %v715, %v859
        %v924 = vadd.f32 %v716, %v860
        %v925 = vadd.f32 %v717, %v861
        %v926 = vadd.f32 %v718, %v862
        %v927 = vadd.f32 %v719, %v863
        %v928 = vadd.f32 %v720, %v864
        %v929 = vadd.f32 %v721, %v865
        %v930 = vadd.f32 %v722, %v866
        %v931 = vadd.f32 %v723, %v867
        %v932 = vadd.f32 %v724, %v868
        %v933 = vadd.f32 %v725, %v869
        %v934 = vadd.f32 %v726, %v870
        %v935 = vadd.f32 %v727, %v871
        %v936 = vadd.f32 %v728, %v872
        %v937 = vadd.f32 %v729, %v873
        %v938 = vadd.f32 %v730, %v874
        %v939 = vadd.f32 %v731, %v875
        %v940 = vadd.f32 %v732, %v876
        %v941 = vadd.f32 %v733, %v877
        %v942 = vadd.f32 %v734, %v878
        %v943 = vadd.f32 %v735, %v879
        %v944 = vadd.f32 %v736, %v880
        %v945 = vadd.f32 %v737, %v881
        %v946 = vadd.f32 %v738, %v882
        %v947 = vadd.f32 %v739, %v883
        %v948 = vadd.f32 %v740, %v884
        %v949 = vadd.f32 %v741, %v885
        %v950 = vadd.f32 %v742, %v886
        %v951 = vadd.f32 %v743, %v887
        %v952 = vadd.f32 %v744, %v888
        %v953 = vadd.f32 %v745, %v889
        %v954 = vadd.f32 %v746, %v890
        %v955 = vadd.f32 %v747, %v891
        %v956 = vadd.f32 %v748, %v892
        %v957 = vadd.f32 %v749, %v893
        %v958 = vlaneseq
        %v959 = vshrl.u32 %v958, 7
        %v960 = vsub.s32 0, %v959
        %v961 = vrot.slane %v485, %v960
        %v962 = vlaneseq
        %v963 = vshrl.u32 %v962, 7
        %v964 = vsub.s32 0, %v963
        %v965 = vrot.slane %v486, %v964
        %vm966 = vcmp.eq.s32.totalorder %v510, %v961
        %vm967 = vcmp.eq.s32.totalorder %v510, %v965
        %vm968 = vcmp.eq.s32.totalorder %v511, %v961
        %vm969 = vcmp.eq.s32.totalorder %v511, %v965
        %vm970 = vcmp.eq.s32.totalorder %v512, %v961
        %vm971 = vcmp.eq.s32.totalorder %v512, %v965
        %vm972 = vcmp.eq.s32.totalorder %v513, %v961
        %vm973 = vcmp.eq.s32.totalorder %v513, %v965
        %vm974 = vcmp.eq.s32.totalorder %v514, %v961
        %vm975 = vcmp.eq.s32.totalorder %v514, %v965
        %vm976 = vcmp.eq.s32.totalorder %v515, %v961
        %vm977 = vcmp.eq.s32.totalorder %v515, %v965
        %vm978 = vcmp.eq.s32.totalorder %v516, %v961
        %vm979 = vcmp.eq.s32.totalorder %v516, %v965
        %vm980 = vcmp.eq.s32.totalorder %v517, %v961
        %vm981 = vcmp.eq.s32.totalorder %v517, %v965
        %vm982 = vcmp.eq.s32.totalorder %v518, %v961
        %vm983 = vcmp.eq.s32.totalorder %v518, %v965
        %vm984 = vcmp.eq.s32.totalorder %v519, %v961
        %vm985 = vcmp.eq.s32.totalorder %v519, %v965
        %vm986 = vcmp.eq.s32.totalorder %v520, %v961
        %vm987 = vcmp.eq.s32.totalorder %v520, %v965
        %vm988 = vcmp.eq.s32.totalorder %v521, %v961
        %vm989 = vcmp.eq.s32.totalorder %v521, %v965
        %vm990 = vcmp.eq.s32.totalorder %v522, %v961
        %vm991 = vcmp.eq.s32.totalorder %v522, %v965
        %vm992 = vcmp.eq.s32.totalorder %v523, %v961
        %vm993 = vcmp.eq.s32.totalorder %v523, %v965
        %vm994 = vcmp.eq.s32.totalorder %v524, %v961
        %vm995 = vcmp.eq.s32.totalorder %v524, %v965
        %vm996 = vcmp.eq.s32.totalorder %v525, %v961
        %vm997 = vcmp.eq.s32.totalorder %v525, %v965
        %vm998 = vcmp.eq.s32.totalorder %v526, %v961
        %vm999 = vcmp.eq.s32.totalorder %v526, %v965
        %vm1000 = vcmp.eq.s32.totalorder %v527, %v961
        %vm1001 = vcmp.eq.s32.totalorder %v527, %v965
        %vm1002 = vcmp.eq.s32.totalorder %v528, %v961
        %vm1003 = vcmp.eq.s32.totalorder %v528, %v965
        %vm1004 = vcmp.eq.s32.totalorder %v529, %v961
        %vm1005 = vcmp.eq.s32.totalorder %v529, %v965
        %vm1006 = vcmp.eq.s32.totalorder %v530, %v961
        %vm1007 = vcmp.eq.s32.totalorder %v530, %v965
        %vm1008 = vcmp.eq.s32.totalorder %v531, %v961
        %vm1009 = vcmp.eq.s32.totalorder %v531, %v965
        %vm1010 = vcmp.eq.s32.totalorder %v532, %v961
        %vm1011 = vcmp.eq.s32.totalorder %v532, %v965
        %vm1012 = vcmp.eq.s32.totalorder %v533, %v961
        %vm1013 = vcmp.eq.s32.totalorder %v533, %v965
        %vm1014 = vcmp.eq.s32.totalorder %v534, %v961
        %vm1015 = vcmp.eq.s32.totalorder %v534, %v965
        %vm1016 = vcmp.eq.s32.totalorder %v535, %v961
        %vm1017 = vcmp.eq.s32.totalorder %v535, %v965
        %vm1018 = vcmp.eq.s32.totalorder %v536, %v961
        %vm1019 = vcmp.eq.s32.totalorder %v536, %v965
        %vm1020 = vcmp.eq.s32.totalorder %v537, %v961
        %vm1021 = vcmp.eq.s32.totalorder %v537, %v965
        %vm1022 = vcmp.eq.s32.totalorder %v538, %v961
        %vm1023 = vcmp.eq.s32.totalorder %v538, %v965
        %vm1024 = vcmp.eq.s32.totalorder %v539, %v961
        %vm1025 = vcmp.eq.s32.totalorder %v539, %v965
        %vm1026 = vcmp.eq.s32.totalorder %v540, %v961
        %vm1027 = vcmp.eq.s32.totalorder %v540, %v965
        %vm1028 = vcmp.eq.s32.totalorder %v541, %v961
        %vm1029 = vcmp.eq.s32.totalorder %v541, %v965
        %v1030 = vlaneseq
        %v1031 = vshrl.u32 %v1030, 7
        %v1032 = vsub.s32 0, %v1031
        %v1033 = vrot.slane %v501, %v1032
        %v1034 = vlaneseq
        %v1035 = vshrl.u32 %v1034, 7
        %v1036 = vsub.s32 0, %v1035
        %v1037 = vrot.slane %v502, %v1036
        %v1038 = vsel %vm966, %v1033, 0.0
        %v1039 = vsel %vm967, %v1037, 0.0
        %v1040 = vsel %vm968, %v1033, 0.0
        %v1041 = vsel %vm969, %v1037, 0.0
        %v1042 = vsel %vm970, %v1033, 0.0
        %v1043 = vsel %vm971, %v1037, 0.0
        %v1044 = vsel %vm972, %v1033, 0.0
        %v1045 = vsel %vm973, %v1037, 0.0
        %v1046 = vsel %vm974, %v1033, 0.0
        %v1047 = vsel %vm975, %v1037, 0.0
        %v1048 = vsel %vm976, %v1033, 0.0
        %v1049 = vsel %vm977, %v1037, 0.0
        %v1050 = vsel %vm978, %v1033, 0.0
        %v1051 = vsel %vm979, %v1037, 0.0
        %v1052 = vsel %vm980, %v1033, 0.0
        %v1053 = vsel %vm981, %v1037, 0.0
        %v1054 = vsel %vm982, %v1033, 0.0
        %v1055 = vsel %vm983, %v1037, 0.0
        %v1056 = vsel %vm984, %v1033, 0.0
        %v1057 = vsel %vm985, %v1037, 0.0
        %v1058 = vsel %vm986, %v1033, 0.0
        %v1059 = vsel %vm987, %v1037, 0.0
        %v1060 = vsel %vm988, %v1033, 0.0
        %v1061 = vsel %vm989, %v1037, 0.0
        %v1062 = vsel %vm990, %v1033, 0.0
        %v1063 = vsel %vm991, %v1037, 0.0
        %v1064 = vsel %vm992, %v1033, 0.0
        %v1065 = vsel %vm993, %v1037, 0.0
        %v1066 = vsel %vm994, %v1033, 0.0
        %v1067 = vsel %vm995, %v1037, 0.0
        %v1068 = vsel %vm996, %v1033, 0.0
        %v1069 = vsel %vm997, %v1037, 0.0
        %v1070 = vsel %vm998, %v1033, 0.0
        %v1071 = vsel %vm999, %v1037, 0.0
        %v1072 = vsel %vm1000, %v1033, 0.0
        %v1073 = vsel %vm1001, %v1037, 0.0
        %v1074 = vsel %vm1002, %v1033, 0.0
        %v1075 = vsel %vm1003, %v1037, 0.0
        %v1076 = vsel %vm1004, %v1033, 0.0
        %v1077 = vsel %vm1005, %v1037, 0.0
        %v1078 = vsel %vm1006, %v1033, 0.0
        %v1079 = vsel %vm1007, %v1037, 0.0
        %v1080 = vsel %vm1008, %v1033, 0.0
        %v1081 = vsel %vm1009, %v1037, 0.0
        %v1082 = vsel %vm1010, %v1033, 0.0
        %v1083 = vsel %vm1011, %v1037, 0.0
        %v1084 = vsel %vm1012, %v1033, 0.0
        %v1085 = vsel %vm1013, %v1037, 0.0
        %v1086 = vsel %vm1014, %v1033, 0.0
        %v1087 = vsel %vm1015, %v1037, 0.0
        %v1088 = vsel %vm1016, %v1033, 0.0
        %v1089 = vsel %vm1017, %v1037, 0.0
        %v1090 = vsel %vm1018, %v1033, 0.0
        %v1091 = vsel %vm1019, %v1037, 0.0
        %v1092 = vsel %vm1020, %v1033, 0.0
        %v1093 = vsel %vm1021, %v1037, 0.0
        %v1094 = vsel %vm1022, %v1033, 0.0
        %v1095 = vsel %vm1023, %v1037, 0.0
        %v1096 = vsel %vm1024, %v1033, 0.0
        %v1097 = vsel %vm1025, %v1037, 0.0
        %v1098 = vsel %vm1026, %v1033, 0.0
        %v1099 = vsel %vm1027, %v1037, 0.0
        %v1100 = vsel %vm1028, %v1033, 0.0
        %v1101 = vsel %vm1029, %v1037, 0.0
        %v1102 = vadd.f32 %v894, %v1038
        %v1103 = vadd.f32 %v895, %v1039
        %v1104 = vadd.f32 %v896, %v1040
        %v1105 = vadd.f32 %v897, %v1041
        %v1106 = vadd.f32 %v898, %v1042
        %v1107 = vadd.f32 %v899, %v1043
        %v1108 = vadd.f32 %v900, %v1044
        %v1109 = vadd.f32 %v901, %v1045
        %v1110 = vadd.f32 %v902, %v1046
        %v1111 = vadd.f32 %v903, %v1047
        %v1112 = vadd.f32 %v904, %v1048
        %v1113 = vadd.f32 %v905, %v1049
        %v1114 = vadd.f32 %v906, %v1050
        %v1115 = vadd.f32 %v907, %v1051
        %v1116 = vadd.f32 %v908, %v1052
        %v1117 = vadd.f32 %v909, %v1053
        %v1118 = vadd.f32 %v910, %v1054
        %v1119 = vadd.f32 %v911, %v1055
        %v1120 = vadd.f32 %v912, %v1056
        %v1121 = vadd.f32 %v913, %v1057
        %v1122 = vadd.f32 %v914, %v1058
        %v1123 = vadd.f32 %v915, %v1059
        %v1124 = vadd.f32 %v916, %v1060
        %v1125 = vadd.f32 %v917, %v1061
        %v1126 = vadd.f32 %v918, %v1062
        %v1127 = vadd.f32 %v919, %v1063
        %v1128 = vadd.f32 %v920, %v1064
        %v1129 = vadd.f32 %v921, %v1065
        %v1130 = vadd.f32 %v922, %v1066
        %v1131 = vadd.f32 %v923, %v1067
        %v1132 = vadd.f32 %v924, %v1068
        %v1133 = vadd.f32 %v925, %v1069
        %v1134 = vadd.f32 %v926, %v1070
        %v1135 = vadd.f32 %v927, %v1071
        %v1136 = vadd.f32 %v928, %v1072
        %v1137 = vadd.f32 %v929, %v1073
        %v1138 = vadd.f32 %v930, %v1074
        %v1139 = vadd.f32 %v931, %v1075
        %v1140 = vadd.f32 %v932, %v1076
        %v1141 = vadd.f32 %v933, %v1077
        %v1142 = vadd.f32 %v934, %v1078
        %v1143 = vadd.f32 %v935, %v1079
        %v1144 = vadd.f32 %v936, %v1080
        %v1145 = vadd.f32 %v937, %v1081
        %v1146 = vadd.f32 %v938, %v1082
        %v1147 = vadd.f32 %v939, %v1083
        %v1148 = vadd.f32 %v940, %v1084
        %v1149 = vadd.f32 %v941, %v1085
        %v1150 = vadd.f32 %v942, %v1086
        %v1151 = vadd.f32 %v943, %v1087
        %v1152 = vadd.f32 %v944, %v1088
        %v1153 = vadd.f32 %v945, %v1089
        %v1154 = vadd.f32 %v946, %v1090
        %v1155 = vadd.f32 %v947, %v1091
        %v1156 = vadd.f32 %v948, %v1092
        %v1157 = vadd.f32 %v949, %v1093
        %v1158 = vadd.f32 %v950, %v1094
        %v1159 = vadd.f32 %v951, %v1095
        %v1160 = vadd.f32 %v952, %v1096
        %v1161 = vadd.f32 %v953, %v1097
        %v1162 = vadd.f32 %v954, %v1098
        %v1163 = vadd.f32 %v955, %v1099
        %v1164 = vadd.f32 %v956, %v1100
        %v1165 = vadd.f32 %v957, %v1101
        %v1166 = vlaneseq
        %v1167 = vshrl.u32 %v1166, 7
        %v1168 = vsub.s32 0, %v1167
        %v1169 = vrot.slane %v489, %v1168
        %v1170 = vlaneseq
        %v1171 = vshrl.u32 %v1170, 7
        %v1172 = vsub.s32 0, %v1171
        %v1173 = vrot.slane %v490, %v1172
        %vm1174 = vcmp.eq.s32.totalorder %v510, %v1169
        %vm1175 = vcmp.eq.s32.totalorder %v510, %v1173
        %vm1176 = vcmp.eq.s32.totalorder %v511, %v1169
        %vm1177 = vcmp.eq.s32.totalorder %v511, %v1173
        %vm1178 = vcmp.eq.s32.totalorder %v512, %v1169
        %vm1179 = vcmp.eq.s32.totalorder %v512, %v1173
        %vm1180 = vcmp.eq.s32.totalorder %v513, %v1169
        %vm1181 = vcmp.eq.s32.totalorder %v513, %v1173
        %vm1182 = vcmp.eq.s32.totalorder %v514, %v1169
        %vm1183 = vcmp.eq.s32.totalorder %v514, %v1173
        %vm1184 = vcmp.eq.s32.totalorder %v515, %v1169
        %vm1185 = vcmp.eq.s32.totalorder %v515, %v1173
        %vm1186 = vcmp.eq.s32.totalorder %v516, %v1169
        %vm1187 = vcmp.eq.s32.totalorder %v516, %v1173
        %vm1188 = vcmp.eq.s32.totalorder %v517, %v1169
        %vm1189 = vcmp.eq.s32.totalorder %v517, %v1173
        %vm1190 = vcmp.eq.s32.totalorder %v518, %v1169
        %vm1191 = vcmp.eq.s32.totalorder %v518, %v1173
        %vm1192 = vcmp.eq.s32.totalorder %v519, %v1169
        %vm1193 = vcmp.eq.s32.totalorder %v519, %v1173
        %vm1194 = vcmp.eq.s32.totalorder %v520, %v1169
        %vm1195 = vcmp.eq.s32.totalorder %v520, %v1173
        %vm1196 = vcmp.eq.s32.totalorder %v521, %v1169
        %vm1197 = vcmp.eq.s32.totalorder %v521, %v1173
        %vm1198 = vcmp.eq.s32.totalorder %v522, %v1169
        %vm1199 = vcmp.eq.s32.totalorder %v522, %v1173
        %vm1200 = vcmp.eq.s32.totalorder %v523, %v1169
        %vm1201 = vcmp.eq.s32.totalorder %v523, %v1173
        %vm1202 = vcmp.eq.s32.totalorder %v524, %v1169
        %vm1203 = vcmp.eq.s32.totalorder %v524, %v1173
        %vm1204 = vcmp.eq.s32.totalorder %v525, %v1169
        %vm1205 = vcmp.eq.s32.totalorder %v525, %v1173
        %vm1206 = vcmp.eq.s32.totalorder %v526, %v1169
        %vm1207 = vcmp.eq.s32.totalorder %v526, %v1173
        %vm1208 = vcmp.eq.s32.totalorder %v527, %v1169
        %vm1209 = vcmp.eq.s32.totalorder %v527, %v1173
        %vm1210 = vcmp.eq.s32.totalorder %v528, %v1169
        %vm1211 = vcmp.eq.s32.totalorder %v528, %v1173
        %vm1212 = vcmp.eq.s32.totalorder %v529, %v1169
        %vm1213 = vcmp.eq.s32.totalorder %v529, %v1173
        %vm1214 = vcmp.eq.s32.totalorder %v530, %v1169
        %vm1215 = vcmp.eq.s32.totalorder %v530, %v1173
        %vm1216 = vcmp.eq.s32.totalorder %v531, %v1169
        %vm1217 = vcmp.eq.s32.totalorder %v531, %v1173
        %vm1218 = vcmp.eq.s32.totalorder %v532, %v1169
        %vm1219 = vcmp.eq.s32.totalorder %v532, %v1173
        %vm1220 = vcmp.eq.s32.totalorder %v533, %v1169
        %vm1221 = vcmp.eq.s32.totalorder %v533, %v1173
        %vm1222 = vcmp.eq.s32.totalorder %v534, %v1169
        %vm1223 = vcmp.eq.s32.totalorder %v534, %v1173
        %vm1224 = vcmp.eq.s32.totalorder %v535, %v1169
        %vm1225 = vcmp.eq.s32.totalorder %v535, %v1173
        %vm1226 = vcmp.eq.s32.totalorder %v536, %v1169
        %vm1227 = vcmp.eq.s32.totalorder %v536, %v1173
        %vm1228 = vcmp.eq.s32.totalorder %v537, %v1169
        %vm1229 = vcmp.eq.s32.totalorder %v537, %v1173
        %vm1230 = vcmp.eq.s32.totalorder %v538, %v1169
        %vm1231 = vcmp.eq.s32.totalorder %v538, %v1173
        %vm1232 = vcmp.eq.s32.totalorder %v539, %v1169
        %vm1233 = vcmp.eq.s32.totalorder %v539, %v1173
        %vm1234 = vcmp.eq.s32.totalorder %v540, %v1169
        %vm1235 = vcmp.eq.s32.totalorder %v540, %v1173
        %vm1236 = vcmp.eq.s32.totalorder %v541, %v1169
        %vm1237 = vcmp.eq.s32.totalorder %v541, %v1173
        %v1238 = vlaneseq
        %v1239 = vshrl.u32 %v1238, 7
        %v1240 = vsub.s32 0, %v1239
        %v1241 = vrot.slane %v505, %v1240
        %v1242 = vlaneseq
        %v1243 = vshrl.u32 %v1242, 7
        %v1244 = vsub.s32 0, %v1243
        %v1245 = vrot.slane %v506, %v1244
        %v1246 = vsel %vm1174, %v1241, 0.0
        %v1247 = vsel %vm1175, %v1245, 0.0
        %v1248 = vsel %vm1176, %v1241, 0.0
        %v1249 = vsel %vm1177, %v1245, 0.0
        %v1250 = vsel %vm1178, %v1241, 0.0
        %v1251 = vsel %vm1179, %v1245, 0.0
        %v1252 = vsel %vm1180, %v1241, 0.0
        %v1253 = vsel %vm1181, %v1245, 0.0
        %v1254 = vsel %vm1182, %v1241, 0.0
        %v1255 = vsel %vm1183, %v1245, 0.0
        %v1256 = vsel %vm1184, %v1241, 0.0
        %v1257 = vsel %vm1185, %v1245, 0.0
        %v1258 = vsel %vm1186, %v1241, 0.0
        %v1259 = vsel %vm1187, %v1245, 0.0
        %v1260 = vsel %vm1188, %v1241, 0.0
        %v1261 = vsel %vm1189, %v1245, 0.0
        %v1262 = vsel %vm1190, %v1241, 0.0
        %v1263 = vsel %vm1191, %v1245, 0.0
        %v1264 = vsel %vm1192, %v1241, 0.0
        %v1265 = vsel %vm1193, %v1245, 0.0
        %v1266 = vsel %vm1194, %v1241, 0.0
        %v1267 = vsel %vm1195, %v1245, 0.0
        %v1268 = vsel %vm1196, %v1241, 0.0
        %v1269 = vsel %vm1197, %v1245, 0.0
        %v1270 = vsel %vm1198, %v1241, 0.0
        %v1271 = vsel %vm1199, %v1245, 0.0
        %v1272 = vsel %vm1200, %v1241, 0.0
        %v1273 = vsel %vm1201, %v1245, 0.0
        %v1274 = vsel %vm1202, %v1241, 0.0
        %v1275 = vsel %vm1203, %v1245, 0.0
        %v1276 = vsel %vm1204, %v1241, 0.0
        %v1277 = vsel %vm1205, %v1245, 0.0
        %v1278 = vsel %vm1206, %v1241, 0.0
        %v1279 = vsel %vm1207, %v1245, 0.0
        %v1280 = vsel %vm1208, %v1241, 0.0
        %v1281 = vsel %vm1209, %v1245, 0.0
        %v1282 = vsel %vm1210, %v1241, 0.0
        %v1283 = vsel %vm1211, %v1245, 0.0
        %v1284 = vsel %vm1212, %v1241, 0.0
        %v1285 = vsel %vm1213, %v1245, 0.0
        %v1286 = vsel %vm1214, %v1241, 0.0
        %v1287 = vsel %vm1215, %v1245, 0.0
        %v1288 = vsel %vm1216, %v1241, 0.0
        %v1289 = vsel %vm1217, %v1245, 0.0
        %v1290 = vsel %vm1218, %v1241, 0.0
        %v1291 = vsel %vm1219, %v1245, 0.0
        %v1292 = vsel %vm1220, %v1241, 0.0
        %v1293 = vsel %vm1221, %v1245, 0.0
        %v1294 = vsel %vm1222, %v1241, 0.0
        %v1295 = vsel %vm1223, %v1245, 0.0
        %v1296 = vsel %vm1224, %v1241, 0.0
        %v1297 = vsel %vm1225, %v1245, 0.0
        %v1298 = vsel %vm1226, %v1241, 0.0
        %v1299 = vsel %vm1227, %v1245, 0.0
        %v1300 = vsel %vm1228, %v1241, 0.0
        %v1301 = vsel %vm1229, %v1245, 0.0
        %v1302 = vsel %vm1230, %v1241, 0.0
        %v1303 = vsel %vm1231, %v1245, 0.0
        %v1304 = vsel %vm1232, %v1241, 0.0
        %v1305 = vsel %vm1233, %v1245, 0.0
        %v1306 = vsel %vm1234, %v1241, 0.0
        %v1307 = vsel %vm1235, %v1245, 0.0
        %v1308 = vsel %vm1236, %v1241, 0.0
        %v1309 = vsel %vm1237, %v1245, 0.0
        %v1310 = vadd.f32 %v1102, %v1246
        %v1311 = vadd.f32 %v1103, %v1247
        %v1312 = vadd.f32 %v1104, %v1248
        %v1313 = vadd.f32 %v1105, %v1249
        %v1314 = vadd.f32 %v1106, %v1250
        %v1315 = vadd.f32 %v1107, %v1251
        %v1316 = vadd.f32 %v1108, %v1252
        %v1317 = vadd.f32 %v1109, %v1253
        %v1318 = vadd.f32 %v1110, %v1254
        %v1319 = vadd.f32 %v1111, %v1255
        %v1320 = vadd.f32 %v1112, %v1256
        %v1321 = vadd.f32 %v1113, %v1257
        %v1322 = vadd.f32 %v1114, %v1258
        %v1323 = vadd.f32 %v1115, %v1259
        %v1324 = vadd.f32 %v1116, %v1260
        %v1325 = vadd.f32 %v1117, %v1261
        %v1326 = vadd.f32 %v1118, %v1262
        %v1327 = vadd.f32 %v1119, %v1263
        %v1328 = vadd.f32 %v1120, %v1264
        %v1329 = vadd.f32 %v1121, %v1265
        %v1330 = vadd.f32 %v1122, %v1266
        %v1331 = vadd.f32 %v1123, %v1267
        %v1332 = vadd.f32 %v1124, %v1268
        %v1333 = vadd.f32 %v1125, %v1269
        %v1334 = vadd.f32 %v1126, %v1270
        %v1335 = vadd.f32 %v1127, %v1271
        %v1336 = vadd.f32 %v1128, %v1272
        %v1337 = vadd.f32 %v1129, %v1273
        %v1338 = vadd.f32 %v1130, %v1274
        %v1339 = vadd.f32 %v1131, %v1275
        %v1340 = vadd.f32 %v1132, %v1276
        %v1341 = vadd.f32 %v1133, %v1277
        %v1342 = vadd.f32 %v1134, %v1278
        %v1343 = vadd.f32 %v1135, %v1279
        %v1344 = vadd.f32 %v1136, %v1280
        %v1345 = vadd.f32 %v1137, %v1281
        %v1346 = vadd.f32 %v1138, %v1282
        %v1347 = vadd.f32 %v1139, %v1283
        %v1348 = vadd.f32 %v1140, %v1284
        %v1349 = vadd.f32 %v1141, %v1285
        %v1350 = vadd.f32 %v1142, %v1286
        %v1351 = vadd.f32 %v1143, %v1287
        %v1352 = vadd.f32 %v1144, %v1288
        %v1353 = vadd.f32 %v1145, %v1289
        %v1354 = vadd.f32 %v1146, %v1290
        %v1355 = vadd.f32 %v1147, %v1291
        %v1356 = vadd.f32 %v1148, %v1292
        %v1357 = vadd.f32 %v1149, %v1293
        %v1358 = vadd.f32 %v1150, %v1294
        %v1359 = vadd.f32 %v1151, %v1295
        %v1360 = vadd.f32 %v1152, %v1296
        %v1361 = vadd.f32 %v1153, %v1297
        %v1362 = vadd.f32 %v1154, %v1298
        %v1363 = vadd.f32 %v1155, %v1299
        %v1364 = vadd.f32 %v1156, %v1300
        %v1365 = vadd.f32 %v1157, %v1301
        %v1366 = vadd.f32 %v1158, %v1302
        %v1367 = vadd.f32 %v1159, %v1303
        %v1368 = vadd.f32 %v1160, %v1304
        %v1369 = vadd.f32 %v1161, %v1305
        %v1370 = vadd.f32 %v1162, %v1306
        %v1371 = vadd.f32 %v1163, %v1307
        %v1372 = vadd.f32 %v1164, %v1308
        %v1373 = vadd.f32 %v1165, %v1309
        %v1374 = vpack.c.bf16 %v431, %v431
        %v1375 = vpack.c.bf16 %v433, %v433
        %v1376 = vpack.c.bf16 %v1312, %v1310
        %v1377 = vpack.c.bf16 %v1313, %v1311
        %v1378 = vpack.c.bf16 %v1316, %v1314
        %v1379 = vpack.c.bf16 %v1317, %v1315
        %v1380 = vpack.c.bf16 %v1320, %v1318
        %v1381 = vpack.c.bf16 %v1321, %v1319
        %v1382 = vpack.c.bf16 %v1324, %v1322
        %v1383 = vpack.c.bf16 %v1325, %v1323
        %v1384 = vpack.c.bf16 %v1328, %v1326
        %v1385 = vpack.c.bf16 %v1329, %v1327
        %v1386 = vpack.c.bf16 %v1332, %v1330
        %v1387 = vpack.c.bf16 %v1333, %v1331
        %v1388 = vpack.c.bf16 %v1336, %v1334
        %v1389 = vpack.c.bf16 %v1337, %v1335
        %v1390 = vpack.c.bf16 %v1340, %v1338
        %v1391 = vpack.c.bf16 %v1341, %v1339
        %v1392 = vpack.c.bf16 %v1344, %v1342
        %v1393 = vpack.c.bf16 %v1345, %v1343
        %v1394 = vpack.c.bf16 %v1348, %v1346
        %v1395 = vpack.c.bf16 %v1349, %v1347
        %v1396 = vpack.c.bf16 %v1352, %v1350
        %v1397 = vpack.c.bf16 %v1353, %v1351
        %v1398 = vpack.c.bf16 %v1356, %v1354
        %v1399 = vpack.c.bf16 %v1357, %v1355
        %v1400 = vpack.c.bf16 %v1360, %v1358
        %v1401 = vpack.c.bf16 %v1361, %v1359
        %v1402 = vpack.c.bf16 %v1364, %v1362
        %v1403 = vpack.c.bf16 %v1365, %v1363
        %v1404 = vpack.c.bf16 %v1368, %v1366
        %v1405 = vpack.c.bf16 %v1369, %v1367
        %v1406 = vpack.c.bf16 %v1372, %v1370
        %v1407 = vpack.c.bf16 %v1373, %v1371
        %v1408 = vlaneseq
        %v1409 = vshrl.u32 %v1408, 7
        %v1410 = vsub.s32 1, %v1409
        %v1411 = vrot.slane %v477, %v1410
        %v1412 = vlaneseq
        %v1413 = vshrl.u32 %v1412, 7
        %v1414 = vsub.s32 1, %v1413
        %v1415 = vrot.slane %v478, %v1414
        %vm1416 = vcmp.eq.s32.totalorder %v510, %v1411
        %vm1417 = vcmp.eq.s32.totalorder %v510, %v1415
        %vm1418 = vcmp.eq.s32.totalorder %v511, %v1411
        %vm1419 = vcmp.eq.s32.totalorder %v511, %v1415
        %vm1420 = vcmp.eq.s32.totalorder %v512, %v1411
        %vm1421 = vcmp.eq.s32.totalorder %v512, %v1415
        %vm1422 = vcmp.eq.s32.totalorder %v513, %v1411
        %vm1423 = vcmp.eq.s32.totalorder %v513, %v1415
        %vm1424 = vcmp.eq.s32.totalorder %v514, %v1411
        %vm1425 = vcmp.eq.s32.totalorder %v514, %v1415
        %vm1426 = vcmp.eq.s32.totalorder %v515, %v1411
        %vm1427 = vcmp.eq.s32.totalorder %v515, %v1415
        %vm1428 = vcmp.eq.s32.totalorder %v516, %v1411
        %vm1429 = vcmp.eq.s32.totalorder %v516, %v1415
        %vm1430 = vcmp.eq.s32.totalorder %v517, %v1411
        %vm1431 = vcmp.eq.s32.totalorder %v517, %v1415
        %vm1432 = vcmp.eq.s32.totalorder %v518, %v1411
        %vm1433 = vcmp.eq.s32.totalorder %v518, %v1415
        %vm1434 = vcmp.eq.s32.totalorder %v519, %v1411
        %vm1435 = vcmp.eq.s32.totalorder %v519, %v1415
        %vm1436 = vcmp.eq.s32.totalorder %v520, %v1411
        %vm1437 = vcmp.eq.s32.totalorder %v520, %v1415
        %vm1438 = vcmp.eq.s32.totalorder %v521, %v1411
        %vm1439 = vcmp.eq.s32.totalorder %v521, %v1415
        %vm1440 = vcmp.eq.s32.totalorder %v522, %v1411
        %vm1441 = vcmp.eq.s32.totalorder %v522, %v1415
        %vm1442 = vcmp.eq.s32.totalorder %v523, %v1411
        %vm1443 = vcmp.eq.s32.totalorder %v523, %v1415
        %vm1444 = vcmp.eq.s32.totalorder %v524, %v1411
        %vm1445 = vcmp.eq.s32.totalorder %v524, %v1415
        %vm1446 = vcmp.eq.s32.totalorder %v525, %v1411
        %vm1447 = vcmp.eq.s32.totalorder %v525, %v1415
        %vm1448 = vcmp.eq.s32.totalorder %v526, %v1411
        %vm1449 = vcmp.eq.s32.totalorder %v526, %v1415
        %vm1450 = vcmp.eq.s32.totalorder %v527, %v1411
        %vm1451 = vcmp.eq.s32.totalorder %v527, %v1415
        %vm1452 = vcmp.eq.s32.totalorder %v528, %v1411
        %vm1453 = vcmp.eq.s32.totalorder %v528, %v1415
        %vm1454 = vcmp.eq.s32.totalorder %v529, %v1411
        %vm1455 = vcmp.eq.s32.totalorder %v529, %v1415
        %vm1456 = vcmp.eq.s32.totalorder %v530, %v1411
        %vm1457 = vcmp.eq.s32.totalorder %v530, %v1415
        %vm1458 = vcmp.eq.s32.totalorder %v531, %v1411
        %vm1459 = vcmp.eq.s32.totalorder %v531, %v1415
        %vm1460 = vcmp.eq.s32.totalorder %v532, %v1411
        %vm1461 = vcmp.eq.s32.totalorder %v532, %v1415
        %vm1462 = vcmp.eq.s32.totalorder %v533, %v1411
        %vm1463 = vcmp.eq.s32.totalorder %v533, %v1415
        %vm1464 = vcmp.eq.s32.totalorder %v534, %v1411
        %vm1465 = vcmp.eq.s32.totalorder %v534, %v1415
        %vm1466 = vcmp.eq.s32.totalorder %v535, %v1411
        %vm1467 = vcmp.eq.s32.totalorder %v535, %v1415
        %vm1468 = vcmp.eq.s32.totalorder %v536, %v1411
        %vm1469 = vcmp.eq.s32.totalorder %v536, %v1415
        %vm1470 = vcmp.eq.s32.totalorder %v537, %v1411
        %vm1471 = vcmp.eq.s32.totalorder %v537, %v1415
        %vm1472 = vcmp.eq.s32.totalorder %v538, %v1411
        %vm1473 = vcmp.eq.s32.totalorder %v538, %v1415
        %vm1474 = vcmp.eq.s32.totalorder %v539, %v1411
        %vm1475 = vcmp.eq.s32.totalorder %v539, %v1415
        %vm1476 = vcmp.eq.s32.totalorder %v540, %v1411
        %vm1477 = vcmp.eq.s32.totalorder %v540, %v1415
        %vm1478 = vcmp.eq.s32.totalorder %v541, %v1411
        %vm1479 = vcmp.eq.s32.totalorder %v541, %v1415
        %v1480 = vlaneseq
        %v1481 = vshrl.u32 %v1480, 7
        %v1482 = vsub.s32 1, %v1481
        %v1483 = vrot.slane %v493, %v1482
        %v1484 = vlaneseq
        %v1485 = vshrl.u32 %v1484, 7
        %v1486 = vsub.s32 1, %v1485
        %v1487 = vrot.slane %v494, %v1486
        %v1488 = vsel %vm1416, %v1483, 0.0
        %v1489 = vsel %vm1417, %v1487, 0.0
        %v1490 = vsel %vm1418, %v1483, 0.0
        %v1491 = vsel %vm1419, %v1487, 0.0
        %v1492 = vsel %vm1420, %v1483, 0.0
        %v1493 = vsel %vm1421, %v1487, 0.0
        %v1494 = vsel %vm1422, %v1483, 0.0
        %v1495 = vsel %vm1423, %v1487, 0.0
        %v1496 = vsel %vm1424, %v1483, 0.0
        %v1497 = vsel %vm1425, %v1487, 0.0
        %v1498 = vsel %vm1426, %v1483, 0.0
        %v1499 = vsel %vm1427, %v1487, 0.0
        %v1500 = vsel %vm1428, %v1483, 0.0
        %v1501 = vsel %vm1429, %v1487, 0.0
        %v1502 = vsel %vm1430, %v1483, 0.0
        %v1503 = vsel %vm1431, %v1487, 0.0
        %v1504 = vsel %vm1432, %v1483, 0.0
        %v1505 = vsel %vm1433, %v1487, 0.0
        %v1506 = vsel %vm1434, %v1483, 0.0
        %v1507 = vsel %vm1435, %v1487, 0.0
        %v1508 = vsel %vm1436, %v1483, 0.0
        %v1509 = vsel %vm1437, %v1487, 0.0
        %v1510 = vsel %vm1438, %v1483, 0.0
        %v1511 = vsel %vm1439, %v1487, 0.0
        %v1512 = vsel %vm1440, %v1483, 0.0
        %v1513 = vsel %vm1441, %v1487, 0.0
        %v1514 = vsel %vm1442, %v1483, 0.0
        %v1515 = vsel %vm1443, %v1487, 0.0
        %v1516 = vsel %vm1444, %v1483, 0.0
        %v1517 = vsel %vm1445, %v1487, 0.0
        %v1518 = vsel %vm1446, %v1483, 0.0
        %v1519 = vsel %vm1447, %v1487, 0.0
        %v1520 = vsel %vm1448, %v1483, 0.0
        %v1521 = vsel %vm1449, %v1487, 0.0
        %v1522 = vsel %vm1450, %v1483, 0.0
        %v1523 = vsel %vm1451, %v1487, 0.0
        %v1524 = vsel %vm1452, %v1483, 0.0
        %v1525 = vsel %vm1453, %v1487, 0.0
        %v1526 = vsel %vm1454, %v1483, 0.0
        %v1527 = vsel %vm1455, %v1487, 0.0
        %v1528 = vsel %vm1456, %v1483, 0.0
        %v1529 = vsel %vm1457, %v1487, 0.0
        %v1530 = vsel %vm1458, %v1483, 0.0
        %v1531 = vsel %vm1459, %v1487, 0.0
        %v1532 = vsel %vm1460, %v1483, 0.0
        %v1533 = vsel %vm1461, %v1487, 0.0
        %v1534 = vsel %vm1462, %v1483, 0.0
        %v1535 = vsel %vm1463, %v1487, 0.0
        %v1536 = vsel %vm1464, %v1483, 0.0
        %v1537 = vsel %vm1465, %v1487, 0.0
        %v1538 = vsel %vm1466, %v1483, 0.0
        %v1539 = vsel %vm1467, %v1487, 0.0
        %v1540 = vsel %vm1468, %v1483, 0.0
        %v1541 = vsel %vm1469, %v1487, 0.0
        %v1542 = vsel %vm1470, %v1483, 0.0
        %v1543 = vsel %vm1471, %v1487, 0.0
        %v1544 = vsel %vm1472, %v1483, 0.0
        %v1545 = vsel %vm1473, %v1487, 0.0
        %v1546 = vsel %vm1474, %v1483, 0.0
        %v1547 = vsel %vm1475, %v1487, 0.0
        %v1548 = vsel %vm1476, %v1483, 0.0
        %v1549 = vsel %vm1477, %v1487, 0.0
        %v1550 = vsel %vm1478, %v1483, 0.0
        %v1551 = vsel %vm1479, %v1487, 0.0
        %v1552 = vadd.f32 %v1488, 0.0
        %v1553 = vadd.f32 %v1489, 0.0
        %v1554 = vadd.f32 %v1490, 0.0
        %v1555 = vadd.f32 %v1491, 0.0
        %v1556 = vadd.f32 %v1492, 0.0
        %v1557 = vadd.f32 %v1493, 0.0
        %v1558 = vadd.f32 %v1494, 0.0
        %v1559 = vadd.f32 %v1495, 0.0
        %v1560 = vadd.f32 %v1496, 0.0
        %v1561 = vadd.f32 %v1497, 0.0
        %v1562 = vadd.f32 %v1498, 0.0
        %v1563 = vadd.f32 %v1499, 0.0
        %v1564 = vadd.f32 %v1500, 0.0
        %v1565 = vadd.f32 %v1501, 0.0
        %v1566 = vadd.f32 %v1502, 0.0
        %v1567 = vadd.f32 %v1503, 0.0
        %v1568 = vadd.f32 %v1504, 0.0
        %v1569 = vadd.f32 %v1505, 0.0
        %v1570 = vadd.f32 %v1506, 0.0
        %v1571 = vadd.f32 %v1507, 0.0
        %v1572 = vadd.f32 %v1508, 0.0
        %v1573 = vadd.f32 %v1509, 0.0
        %v1574 = vadd.f32 %v1510, 0.0
        %v1575 = vadd.f32 %v1511, 0.0
        %v1576 = vadd.f32 %v1512, 0.0
        %v1577 = vadd.f32 %v1513, 0.0
        %v1578 = vadd.f32 %v1514, 0.0
        %v1579 = vadd.f32 %v1515, 0.0
        %v1580 = vadd.f32 %v1516, 0.0
        %v1581 = vadd.f32 %v1517, 0.0
        %v1582 = vadd.f32 %v1518, 0.0
        %v1583 = vadd.f32 %v1519, 0.0
        %v1584 = vadd.f32 %v1520, 0.0
        %v1585 = vadd.f32 %v1521, 0.0
        %v1586 = vadd.f32 %v1522, 0.0
        %v1587 = vadd.f32 %v1523, 0.0
        %v1588 = vadd.f32 %v1524, 0.0
        %v1589 = vadd.f32 %v1525, 0.0
        %v1590 = vadd.f32 %v1526, 0.0
        %v1591 = vadd.f32 %v1527, 0.0
        %v1592 = vadd.f32 %v1528, 0.0
        %v1593 = vadd.f32 %v1529, 0.0
        %v1594 = vadd.f32 %v1530, 0.0
        %v1595 = vadd.f32 %v1531, 0.0
        %v1596 = vadd.f32 %v1532, 0.0
        %v1597 = vadd.f32 %v1533, 0.0
        %v1598 = vadd.f32 %v1534, 0.0
        %v1599 = vadd.f32 %v1535, 0.0
        %v1600 = vadd.f32 %v1536, 0.0
        %v1601 = vadd.f32 %v1537, 0.0
        %v1602 = vadd.f32 %v1538, 0.0
        %v1603 = vadd.f32 %v1539, 0.0
        %v1604 = vadd.f32 %v1540, 0.0
        %v1605 = vadd.f32 %v1541, 0.0
        %v1606 = vadd.f32 %v1542, 0.0
        %v1607 = vadd.f32 %v1543, 0.0
        %v1608 = vadd.f32 %v1544, 0.0
        %v1609 = vadd.f32 %v1545, 0.0
        %v1610 = vadd.f32 %v1546, 0.0
        %v1611 = vadd.f32 %v1547, 0.0
        %v1612 = vadd.f32 %v1548, 0.0
        %v1613 = vadd.f32 %v1549, 0.0
        %v1614 = vadd.f32 %v1550, 0.0
        %v1615 = vadd.f32 %v1551, 0.0
        %v1616 = vlaneseq
        %v1617 = vshrl.u32 %v1616, 7
        %v1618 = vsub.s32 1, %v1617
        %v1619 = vrot.slane %v481, %v1618
        %v1620 = vlaneseq
        %v1621 = vshrl.u32 %v1620, 7
        %v1622 = vsub.s32 1, %v1621
        %v1623 = vrot.slane %v482, %v1622
        %vm1624 = vcmp.eq.s32.totalorder %v510, %v1619
        %vm1625 = vcmp.eq.s32.totalorder %v510, %v1623
        %vm1626 = vcmp.eq.s32.totalorder %v511, %v1619
        %vm1627 = vcmp.eq.s32.totalorder %v511, %v1623
        %vm1628 = vcmp.eq.s32.totalorder %v512, %v1619
        %vm1629 = vcmp.eq.s32.totalorder %v512, %v1623
        %vm1630 = vcmp.eq.s32.totalorder %v513, %v1619
        %vm1631 = vcmp.eq.s32.totalorder %v513, %v1623
        %vm1632 = vcmp.eq.s32.totalorder %v514, %v1619
        %vm1633 = vcmp.eq.s32.totalorder %v514, %v1623
        %vm1634 = vcmp.eq.s32.totalorder %v515, %v1619
        %vm1635 = vcmp.eq.s32.totalorder %v515, %v1623
        %vm1636 = vcmp.eq.s32.totalorder %v516, %v1619
        %vm1637 = vcmp.eq.s32.totalorder %v516, %v1623
        %vm1638 = vcmp.eq.s32.totalorder %v517, %v1619
        %vm1639 = vcmp.eq.s32.totalorder %v517, %v1623
        %vm1640 = vcmp.eq.s32.totalorder %v518, %v1619
        %vm1641 = vcmp.eq.s32.totalorder %v518, %v1623
        %vm1642 = vcmp.eq.s32.totalorder %v519, %v1619
        %vm1643 = vcmp.eq.s32.totalorder %v519, %v1623
        %vm1644 = vcmp.eq.s32.totalorder %v520, %v1619
        %vm1645 = vcmp.eq.s32.totalorder %v520, %v1623
        %vm1646 = vcmp.eq.s32.totalorder %v521, %v1619
        %vm1647 = vcmp.eq.s32.totalorder %v521, %v1623
        %vm1648 = vcmp.eq.s32.totalorder %v522, %v1619
        %vm1649 = vcmp.eq.s32.totalorder %v522, %v1623
        %vm1650 = vcmp.eq.s32.totalorder %v523, %v1619
        %vm1651 = vcmp.eq.s32.totalorder %v523, %v1623
        %vm1652 = vcmp.eq.s32.totalorder %v524, %v1619
        %vm1653 = vcmp.eq.s32.totalorder %v524, %v1623
        %vm1654 = vcmp.eq.s32.totalorder %v525, %v1619
        %vm1655 = vcmp.eq.s32.totalorder %v525, %v1623
        %vm1656 = vcmp.eq.s32.totalorder %v526, %v1619
        %vm1657 = vcmp.eq.s32.totalorder %v526, %v1623
        %vm1658 = vcmp.eq.s32.totalorder %v527, %v1619
        %vm1659 = vcmp.eq.s32.totalorder %v527, %v1623
        %vm1660 = vcmp.eq.s32.totalorder %v528, %v1619
        %vm1661 = vcmp.eq.s32.totalorder %v528, %v1623
        %vm1662 = vcmp.eq.s32.totalorder %v529, %v1619
        %vm1663 = vcmp.eq.s32.totalorder %v529, %v1623
        %vm1664 = vcmp.eq.s32.totalorder %v530, %v1619
        %vm1665 = vcmp.eq.s32.totalorder %v530, %v1623
        %vm1666 = vcmp.eq.s32.totalorder %v531, %v1619
        %vm1667 = vcmp.eq.s32.totalorder %v531, %v1623
        %vm1668 = vcmp.eq.s32.totalorder %v532, %v1619
        %vm1669 = vcmp.eq.s32.totalorder %v532, %v1623
        %vm1670 = vcmp.eq.s32.totalorder %v533, %v1619
        %vm1671 = vcmp.eq.s32.totalorder %v533, %v1623
        %vm1672 = vcmp.eq.s32.totalorder %v534, %v1619
        %vm1673 = vcmp.eq.s32.totalorder %v534, %v1623
        %vm1674 = vcmp.eq.s32.totalorder %v535, %v1619
        %vm1675 = vcmp.eq.s32.totalorder %v535, %v1623
        %vm1676 = vcmp.eq.s32.totalorder %v536, %v1619
        %vm1677 = vcmp.eq.s32.totalorder %v536, %v1623
        %vm1678 = vcmp.eq.s32.totalorder %v537, %v1619
        %vm1679 = vcmp.eq.s32.totalorder %v537, %v1623
        %vm1680 = vcmp.eq.s32.totalorder %v538, %v1619
        %vm1681 = vcmp.eq.s32.totalorder %v538, %v1623
        %vm1682 = vcmp.eq.s32.totalorder %v539, %v1619
        %vm1683 = vcmp.eq.s32.totalorder %v539, %v1623
        %vm1684 = vcmp.eq.s32.totalorder %v540, %v1619
        %vm1685 = vcmp.eq.s32.totalorder %v540, %v1623
        %vm1686 = vcmp.eq.s32.totalorder %v541, %v1619
        %vm1687 = vcmp.eq.s32.totalorder %v541, %v1623
        %v1688 = vlaneseq
        %v1689 = vshrl.u32 %v1688, 7
        %v1690 = vsub.s32 1, %v1689
        %v1691 = vrot.slane %v497, %v1690
        %v1692 = vlaneseq
        %v1693 = vshrl.u32 %v1692, 7
        %v1694 = vsub.s32 1, %v1693
        %v1695 = vrot.slane %v498, %v1694
        %v1696 = vsel %vm1624, %v1691, 0.0
        %v1697 = vsel %vm1625, %v1695, 0.0
        %v1698 = vsel %vm1626, %v1691, 0.0
        %v1699 = vsel %vm1627, %v1695, 0.0
        %v1700 = vsel %vm1628, %v1691, 0.0
        %v1701 = vsel %vm1629, %v1695, 0.0
        %v1702 = vsel %vm1630, %v1691, 0.0
        %v1703 = vsel %vm1631, %v1695, 0.0
        %v1704 = vsel %vm1632, %v1691, 0.0
        %v1705 = vsel %vm1633, %v1695, 0.0
        %v1706 = vsel %vm1634, %v1691, 0.0
        %v1707 = vsel %vm1635, %v1695, 0.0
        %v1708 = vsel %vm1636, %v1691, 0.0
        %v1709 = vsel %vm1637, %v1695, 0.0
        %v1710 = vsel %vm1638, %v1691, 0.0
        %v1711 = vsel %vm1639, %v1695, 0.0
        %v1712 = vsel %vm1640, %v1691, 0.0
        %v1713 = vsel %vm1641, %v1695, 0.0
        %v1714 = vsel %vm1642, %v1691, 0.0
        %v1715 = vsel %vm1643, %v1695, 0.0
        %v1716 = vsel %vm1644, %v1691, 0.0
        %v1717 = vsel %vm1645, %v1695, 0.0
        %v1718 = vsel %vm1646, %v1691, 0.0
        %v1719 = vsel %vm1647, %v1695, 0.0
        %v1720 = vsel %vm1648, %v1691, 0.0
        %v1721 = vsel %vm1649, %v1695, 0.0
        %v1722 = vsel %vm1650, %v1691, 0.0
        %v1723 = vsel %vm1651, %v1695, 0.0
        %v1724 = vsel %vm1652, %v1691, 0.0
        %v1725 = vsel %vm1653, %v1695, 0.0
        %v1726 = vsel %vm1654, %v1691, 0.0
        %v1727 = vsel %vm1655, %v1695, 0.0
        %v1728 = vsel %vm1656, %v1691, 0.0
        %v1729 = vsel %vm1657, %v1695, 0.0
        %v1730 = vsel %vm1658, %v1691, 0.0
        %v1731 = vsel %vm1659, %v1695, 0.0
        %v1732 = vsel %vm1660, %v1691, 0.0
        %v1733 = vsel %vm1661, %v1695, 0.0
        %v1734 = vsel %vm1662, %v1691, 0.0
        %v1735 = vsel %vm1663, %v1695, 0.0
        %v1736 = vsel %vm1664, %v1691, 0.0
        %v1737 = vsel %vm1665, %v1695, 0.0
        %v1738 = vsel %vm1666, %v1691, 0.0
        %v1739 = vsel %vm1667, %v1695, 0.0
        %v1740 = vsel %vm1668, %v1691, 0.0
        %v1741 = vsel %vm1669, %v1695, 0.0
        %v1742 = vsel %vm1670, %v1691, 0.0
        %v1743 = vsel %vm1671, %v1695, 0.0
        %v1744 = vsel %vm1672, %v1691, 0.0
        %v1745 = vsel %vm1673, %v1695, 0.0
        %v1746 = vsel %vm1674, %v1691, 0.0
        %v1747 = vsel %vm1675, %v1695, 0.0
        %v1748 = vsel %vm1676, %v1691, 0.0
        %v1749 = vsel %vm1677, %v1695, 0.0
        %v1750 = vsel %vm1678, %v1691, 0.0
        %v1751 = vsel %vm1679, %v1695, 0.0
        %v1752 = vsel %vm1680, %v1691, 0.0
        %v1753 = vsel %vm1681, %v1695, 0.0
        %v1754 = vsel %vm1682, %v1691, 0.0
        %v1755 = vsel %vm1683, %v1695, 0.0
        %v1756 = vsel %vm1684, %v1691, 0.0
        %v1757 = vsel %vm1685, %v1695, 0.0
        %v1758 = vsel %vm1686, %v1691, 0.0
        %v1759 = vsel %vm1687, %v1695, 0.0
        %v1760 = vadd.f32 %v1552, %v1696
        %v1761 = vadd.f32 %v1553, %v1697
        %v1762 = vadd.f32 %v1554, %v1698
        %v1763 = vadd.f32 %v1555, %v1699
        %v1764 = vadd.f32 %v1556, %v1700
        %v1765 = vadd.f32 %v1557, %v1701
        %v1766 = vadd.f32 %v1558, %v1702
        %v1767 = vadd.f32 %v1559, %v1703
        %v1768 = vadd.f32 %v1560, %v1704
        %v1769 = vadd.f32 %v1561, %v1705
        %v1770 = vadd.f32 %v1562, %v1706
        %v1771 = vadd.f32 %v1563, %v1707
        %v1772 = vadd.f32 %v1564, %v1708
        %v1773 = vadd.f32 %v1565, %v1709
        %v1774 = vadd.f32 %v1566, %v1710
        %v1775 = vadd.f32 %v1567, %v1711
        %v1776 = vadd.f32 %v1568, %v1712
        %v1777 = vadd.f32 %v1569, %v1713
        %v1778 = vadd.f32 %v1570, %v1714
        %v1779 = vadd.f32 %v1571, %v1715
        %v1780 = vadd.f32 %v1572, %v1716
        %v1781 = vadd.f32 %v1573, %v1717
        %v1782 = vadd.f32 %v1574, %v1718
        %v1783 = vadd.f32 %v1575, %v1719
        %v1784 = vadd.f32 %v1576, %v1720
        %v1785 = vadd.f32 %v1577, %v1721
        %v1786 = vadd.f32 %v1578, %v1722
        %v1787 = vadd.f32 %v1579, %v1723
        %v1788 = vadd.f32 %v1580, %v1724
        %v1789 = vadd.f32 %v1581, %v1725
        %v1790 = vadd.f32 %v1582, %v1726
        %v1791 = vadd.f32 %v1583, %v1727
        %v1792 = vadd.f32 %v1584, %v1728
        %v1793 = vadd.f32 %v1585, %v1729
        %v1794 = vadd.f32 %v1586, %v1730
        %v1795 = vadd.f32 %v1587, %v1731
        %v1796 = vadd.f32 %v1588, %v1732
        %v1797 = vadd.f32 %v1589, %v1733
        %v1798 = vadd.f32 %v1590, %v1734
        %v1799 = vadd.f32 %v1591, %v1735
        %v1800 = vadd.f32 %v1592, %v1736
        %v1801 = vadd.f32 %v1593, %v1737
        %v1802 = vadd.f32 %v1594, %v1738
        %v1803 = vadd.f32 %v1595, %v1739
        %v1804 = vadd.f32 %v1596, %v1740
        %v1805 = vadd.f32 %v1597, %v1741
        %v1806 = vadd.f32 %v1598, %v1742
        %v1807 = vadd.f32 %v1599, %v1743
        %v1808 = vadd.f32 %v1600, %v1744
        %v1809 = vadd.f32 %v1601, %v1745
        %v1810 = vadd.f32 %v1602, %v1746
        %v1811 = vadd.f32 %v1603, %v1747
        %v1812 = vadd.f32 %v1604, %v1748
        %v1813 = vadd.f32 %v1605, %v1749
        %v1814 = vadd.f32 %v1606, %v1750
        %v1815 = vadd.f32 %v1607, %v1751
        %v1816 = vadd.f32 %v1608, %v1752
        %v1817 = vadd.f32 %v1609, %v1753
        %v1818 = vadd.f32 %v1610, %v1754
        %v1819 = vadd.f32 %v1611, %v1755
        %v1820 = vadd.f32 %v1612, %v1756
        %v1821 = vadd.f32 %v1613, %v1757
        %v1822 = vadd.f32 %v1614, %v1758
        %v1823 = vadd.f32 %v1615, %v1759
        %v1824 = vlaneseq
        %v1825 = vshrl.u32 %v1824, 7
        %v1826 = vsub.s32 1, %v1825
        %v1827 = vrot.slane %v485, %v1826
        %v1828 = vlaneseq
        %v1829 = vshrl.u32 %v1828, 7
        %v1830 = vsub.s32 1, %v1829
        %v1831 = vrot.slane %v486, %v1830
        %vm1832 = vcmp.eq.s32.totalorder %v510, %v1827
        %vm1833 = vcmp.eq.s32.totalorder %v510, %v1831
        %vm1834 = vcmp.eq.s32.totalorder %v511, %v1827
        %vm1835 = vcmp.eq.s32.totalorder %v511, %v1831
        %vm1836 = vcmp.eq.s32.totalorder %v512, %v1827
        %vm1837 = vcmp.eq.s32.totalorder %v512, %v1831
        %vm1838 = vcmp.eq.s32.totalorder %v513, %v1827
        %vm1839 = vcmp.eq.s32.totalorder %v513, %v1831
        %vm1840 = vcmp.eq.s32.totalorder %v514, %v1827
        %vm1841 = vcmp.eq.s32.totalorder %v514, %v1831
        %vm1842 = vcmp.eq.s32.totalorder %v515, %v1827
        %vm1843 = vcmp.eq.s32.totalorder %v515, %v1831
        %vm1844 = vcmp.eq.s32.totalorder %v516, %v1827
        %vm1845 = vcmp.eq.s32.totalorder %v516, %v1831
        %vm1846 = vcmp.eq.s32.totalorder %v517, %v1827
        %vm1847 = vcmp.eq.s32.totalorder %v517, %v1831
        %vm1848 = vcmp.eq.s32.totalorder %v518, %v1827
        %vm1849 = vcmp.eq.s32.totalorder %v518, %v1831
        %vm1850 = vcmp.eq.s32.totalorder %v519, %v1827
        %vm1851 = vcmp.eq.s32.totalorder %v519, %v1831
        %vm1852 = vcmp.eq.s32.totalorder %v520, %v1827
        %vm1853 = vcmp.eq.s32.totalorder %v520, %v1831
        %vm1854 = vcmp.eq.s32.totalorder %v521, %v1827
        %vm1855 = vcmp.eq.s32.totalorder %v521, %v1831
        %vm1856 = vcmp.eq.s32.totalorder %v522, %v1827
        %vm1857 = vcmp.eq.s32.totalorder %v522, %v1831
        %vm1858 = vcmp.eq.s32.totalorder %v523, %v1827
        %vm1859 = vcmp.eq.s32.totalorder %v523, %v1831
        %vm1860 = vcmp.eq.s32.totalorder %v524, %v1827
        %vm1861 = vcmp.eq.s32.totalorder %v524, %v1831
        %vm1862 = vcmp.eq.s32.totalorder %v525, %v1827
        %vm1863 = vcmp.eq.s32.totalorder %v525, %v1831
        %vm1864 = vcmp.eq.s32.totalorder %v526, %v1827
        %vm1865 = vcmp.eq.s32.totalorder %v526, %v1831
        %vm1866 = vcmp.eq.s32.totalorder %v527, %v1827
        %vm1867 = vcmp.eq.s32.totalorder %v527, %v1831
        %vm1868 = vcmp.eq.s32.totalorder %v528, %v1827
        %vm1869 = vcmp.eq.s32.totalorder %v528, %v1831
        %vm1870 = vcmp.eq.s32.totalorder %v529, %v1827
        %vm1871 = vcmp.eq.s32.totalorder %v529, %v1831
        %vm1872 = vcmp.eq.s32.totalorder %v530, %v1827
        %vm1873 = vcmp.eq.s32.totalorder %v530, %v1831
        %vm1874 = vcmp.eq.s32.totalorder %v531, %v1827
        %vm1875 = vcmp.eq.s32.totalorder %v531, %v1831
        %vm1876 = vcmp.eq.s32.totalorder %v532, %v1827
        %vm1877 = vcmp.eq.s32.totalorder %v532, %v1831
        %vm1878 = vcmp.eq.s32.totalorder %v533, %v1827
        %vm1879 = vcmp.eq.s32.totalorder %v533, %v1831
        %vm1880 = vcmp.eq.s32.totalorder %v534, %v1827
        %vm1881 = vcmp.eq.s32.totalorder %v534, %v1831
        %vm1882 = vcmp.eq.s32.totalorder %v535, %v1827
        %vm1883 = vcmp.eq.s32.totalorder %v535, %v1831
        %vm1884 = vcmp.eq.s32.totalorder %v536, %v1827
        %vm1885 = vcmp.eq.s32.totalorder %v536, %v1831
        %vm1886 = vcmp.eq.s32.totalorder %v537, %v1827
        %vm1887 = vcmp.eq.s32.totalorder %v537, %v1831
        %vm1888 = vcmp.eq.s32.totalorder %v538, %v1827
        %vm1889 = vcmp.eq.s32.totalorder %v538, %v1831
        %vm1890 = vcmp.eq.s32.totalorder %v539, %v1827
        %vm1891 = vcmp.eq.s32.totalorder %v539, %v1831
        %vm1892 = vcmp.eq.s32.totalorder %v540, %v1827
        %vm1893 = vcmp.eq.s32.totalorder %v540, %v1831
        %vm1894 = vcmp.eq.s32.totalorder %v541, %v1827
        %vm1895 = vcmp.eq.s32.totalorder %v541, %v1831
        %v1896 = vlaneseq
        %v1897 = vshrl.u32 %v1896, 7
        %v1898 = vsub.s32 1, %v1897
        %v1899 = vrot.slane %v501, %v1898
        %v1900 = vlaneseq
        %v1901 = vshrl.u32 %v1900, 7
        %v1902 = vsub.s32 1, %v1901
        %v1903 = vrot.slane %v502, %v1902
        %v1904 = vsel %vm1832, %v1899, 0.0
        %v1905 = vsel %vm1833, %v1903, 0.0
        %v1906 = vsel %vm1834, %v1899, 0.0
        %v1907 = vsel %vm1835, %v1903, 0.0
        %v1908 = vsel %vm1836, %v1899, 0.0
        %v1909 = vsel %vm1837, %v1903, 0.0
        %v1910 = vsel %vm1838, %v1899, 0.0
        %v1911 = vsel %vm1839, %v1903, 0.0
        %v1912 = vsel %vm1840, %v1899, 0.0
        %v1913 = vsel %vm1841, %v1903, 0.0
        %v1914 = vsel %vm1842, %v1899, 0.0
        %v1915 = vsel %vm1843, %v1903, 0.0
        %v1916 = vsel %vm1844, %v1899, 0.0
        %v1917 = vsel %vm1845, %v1903, 0.0
        %v1918 = vsel %vm1846, %v1899, 0.0
        %v1919 = vsel %vm1847, %v1903, 0.0
        %v1920 = vsel %vm1848, %v1899, 0.0
        %v1921 = vsel %vm1849, %v1903, 0.0
        %v1922 = vsel %vm1850, %v1899, 0.0
        %v1923 = vsel %vm1851, %v1903, 0.0
        %v1924 = vsel %vm1852, %v1899, 0.0
        %v1925 = vsel %vm1853, %v1903, 0.0
        %v1926 = vsel %vm1854, %v1899, 0.0
        %v1927 = vsel %vm1855, %v1903, 0.0
        %v1928 = vsel %vm1856, %v1899, 0.0
        %v1929 = vsel %vm1857, %v1903, 0.0
        %v1930 = vsel %vm1858, %v1899, 0.0
        %v1931 = vsel %vm1859, %v1903, 0.0
        %v1932 = vsel %vm1860, %v1899, 0.0
        %v1933 = vsel %vm1861, %v1903, 0.0
        %v1934 = vsel %vm1862, %v1899, 0.0
        %v1935 = vsel %vm1863, %v1903, 0.0
        %v1936 = vsel %vm1864, %v1899, 0.0
        %v1937 = vsel %vm1865, %v1903, 0.0
        %v1938 = vsel %vm1866, %v1899, 0.0
        %v1939 = vsel %vm1867, %v1903, 0.0
        %v1940 = vsel %vm1868, %v1899, 0.0
        %v1941 = vsel %vm1869, %v1903, 0.0
        %v1942 = vsel %vm1870, %v1899, 0.0
        %v1943 = vsel %vm1871, %v1903, 0.0
        %v1944 = vsel %vm1872, %v1899, 0.0
        %v1945 = vsel %vm1873, %v1903, 0.0
        %v1946 = vsel %vm1874, %v1899, 0.0
        %v1947 = vsel %vm1875, %v1903, 0.0
        %v1948 = vsel %vm1876, %v1899, 0.0
        %v1949 = vsel %vm1877, %v1903, 0.0
        %v1950 = vsel %vm1878, %v1899, 0.0
        %v1951 = vsel %vm1879, %v1903, 0.0
        %v1952 = vsel %vm1880, %v1899, 0.0
        %v1953 = vsel %vm1881, %v1903, 0.0
        %v1954 = vsel %vm1882, %v1899, 0.0
        %v1955 = vsel %vm1883, %v1903, 0.0
        %v1956 = vsel %vm1884, %v1899, 0.0
        %v1957 = vsel %vm1885, %v1903, 0.0
        %v1958 = vsel %vm1886, %v1899, 0.0
        %v1959 = vsel %vm1887, %v1903, 0.0
        %v1960 = vsel %vm1888, %v1899, 0.0
        %v1961 = vsel %vm1889, %v1903, 0.0
        %v1962 = vsel %vm1890, %v1899, 0.0
        %v1963 = vsel %vm1891, %v1903, 0.0
        %v1964 = vsel %vm1892, %v1899, 0.0
        %v1965 = vsel %vm1893, %v1903, 0.0
        %v1966 = vsel %vm1894, %v1899, 0.0
        %v1967 = vsel %vm1895, %v1903, 0.0
        %v1968 = vadd.f32 %v1760, %v1904
        %v1969 = vadd.f32 %v1761, %v1905
        %v1970 = vadd.f32 %v1762, %v1906
        %v1971 = vadd.f32 %v1763, %v1907
        %v1972 = vadd.f32 %v1764, %v1908
        %v1973 = vadd.f32 %v1765, %v1909
        %v1974 = vadd.f32 %v1766, %v1910
        %v1975 = vadd.f32 %v1767, %v1911
        %v1976 = vadd.f32 %v1768, %v1912
        %v1977 = vadd.f32 %v1769, %v1913
        %v1978 = vadd.f32 %v1770, %v1914
        %v1979 = vadd.f32 %v1771, %v1915
        %v1980 = vadd.f32 %v1772, %v1916
        %v1981 = vadd.f32 %v1773, %v1917
        %v1982 = vadd.f32 %v1774, %v1918
        %v1983 = vadd.f32 %v1775, %v1919
        %v1984 = vadd.f32 %v1776, %v1920
        %v1985 = vadd.f32 %v1777, %v1921
        %v1986 = vadd.f32 %v1778, %v1922
        %v1987 = vadd.f32 %v1779, %v1923
        %v1988 = vadd.f32 %v1780, %v1924
        %v1989 = vadd.f32 %v1781, %v1925
        %v1990 = vadd.f32 %v1782, %v1926
        %v1991 = vadd.f32 %v1783, %v1927
        %v1992 = vadd.f32 %v1784, %v1928
        %v1993 = vadd.f32 %v1785, %v1929
        %v1994 = vadd.f32 %v1786, %v1930
        %v1995 = vadd.f32 %v1787, %v1931
        %v1996 = vadd.f32 %v1788, %v1932
        %v1997 = vadd.f32 %v1789, %v1933
        %v1998 = vadd.f32 %v1790, %v1934
        %v1999 = vadd.f32 %v1791, %v1935
        %v2000 = vadd.f32 %v1792, %v1936
        %v2001 = vadd.f32 %v1793, %v1937
        %v2002 = vadd.f32 %v1794, %v1938
        %v2003 = vadd.f32 %v1795, %v1939
        %v2004 = vadd.f32 %v1796, %v1940
        %v2005 = vadd.f32 %v1797, %v1941
        %v2006 = vadd.f32 %v1798, %v1942
        %v2007 = vadd.f32 %v1799, %v1943
        %v2008 = vadd.f32 %v1800, %v1944
        %v2009 = vadd.f32 %v1801, %v1945
        %v2010 = vadd.f32 %v1802, %v1946
        %v2011 = vadd.f32 %v1803, %v1947
        %v2012 = vadd.f32 %v1804, %v1948
        %v2013 = vadd.f32 %v1805, %v1949
        %v2014 = vadd.f32 %v1806, %v1950
        %v2015 = vadd.f32 %v1807, %v1951
        %v2016 = vadd.f32 %v1808, %v1952
        %v2017 = vadd.f32 %v1809, %v1953
        %v2018 = vadd.f32 %v1810, %v1954
        %v2019 = vadd.f32 %v1811, %v1955
        %v2020 = vadd.f32 %v1812, %v1956
        %v2021 = vadd.f32 %v1813, %v1957
        %v2022 = vadd.f32 %v1814, %v1958
        %v2023 = vadd.f32 %v1815, %v1959
        %v2024 = vadd.f32 %v1816, %v1960
        %v2025 = vadd.f32 %v1817, %v1961
        %v2026 = vadd.f32 %v1818, %v1962
        %v2027 = vadd.f32 %v1819, %v1963
        %v2028 = vadd.f32 %v1820, %v1964
        %v2029 = vadd.f32 %v1821, %v1965
        %v2030 = vadd.f32 %v1822, %v1966
        %v2031 = vadd.f32 %v1823, %v1967
        %v2032 = vlaneseq
        %v2033 = vshrl.u32 %v2032, 7
        %v2034 = vsub.s32 1, %v2033
        %v2035 = vrot.slane %v489, %v2034
        %v2036 = vlaneseq
        %v2037 = vshrl.u32 %v2036, 7
        %v2038 = vsub.s32 1, %v2037
        %v2039 = vrot.slane %v490, %v2038
        %vm2040 = vcmp.eq.s32.totalorder %v510, %v2035
        %vm2041 = vcmp.eq.s32.totalorder %v510, %v2039
        %vm2042 = vcmp.eq.s32.totalorder %v511, %v2035
        %vm2043 = vcmp.eq.s32.totalorder %v511, %v2039
        %vm2044 = vcmp.eq.s32.totalorder %v512, %v2035
        %vm2045 = vcmp.eq.s32.totalorder %v512, %v2039
        %vm2046 = vcmp.eq.s32.totalorder %v513, %v2035
        %vm2047 = vcmp.eq.s32.totalorder %v513, %v2039
        %vm2048 = vcmp.eq.s32.totalorder %v514, %v2035
        %vm2049 = vcmp.eq.s32.totalorder %v514, %v2039
        %vm2050 = vcmp.eq.s32.totalorder %v515, %v2035
        %vm2051 = vcmp.eq.s32.totalorder %v515, %v2039
        %vm2052 = vcmp.eq.s32.totalorder %v516, %v2035
        %vm2053 = vcmp.eq.s32.totalorder %v516, %v2039
        %vm2054 = vcmp.eq.s32.totalorder %v517, %v2035
        %vm2055 = vcmp.eq.s32.totalorder %v517, %v2039
        %vm2056 = vcmp.eq.s32.totalorder %v518, %v2035
        %vm2057 = vcmp.eq.s32.totalorder %v518, %v2039
        %vm2058 = vcmp.eq.s32.totalorder %v519, %v2035
        %vm2059 = vcmp.eq.s32.totalorder %v519, %v2039
        %vm2060 = vcmp.eq.s32.totalorder %v520, %v2035
        %vm2061 = vcmp.eq.s32.totalorder %v520, %v2039
        %vm2062 = vcmp.eq.s32.totalorder %v521, %v2035
        %vm2063 = vcmp.eq.s32.totalorder %v521, %v2039
        %vm2064 = vcmp.eq.s32.totalorder %v522, %v2035
        %vm2065 = vcmp.eq.s32.totalorder %v522, %v2039
        %vm2066 = vcmp.eq.s32.totalorder %v523, %v2035
        %vm2067 = vcmp.eq.s32.totalorder %v523, %v2039
        %vm2068 = vcmp.eq.s32.totalorder %v524, %v2035
        %vm2069 = vcmp.eq.s32.totalorder %v524, %v2039
        %vm2070 = vcmp.eq.s32.totalorder %v525, %v2035
        %vm2071 = vcmp.eq.s32.totalorder %v525, %v2039
        %vm2072 = vcmp.eq.s32.totalorder %v526, %v2035
        %vm2073 = vcmp.eq.s32.totalorder %v526, %v2039
        %vm2074 = vcmp.eq.s32.totalorder %v527, %v2035
        %vm2075 = vcmp.eq.s32.totalorder %v527, %v2039
        %vm2076 = vcmp.eq.s32.totalorder %v528, %v2035
        %vm2077 = vcmp.eq.s32.totalorder %v528, %v2039
        %vm2078 = vcmp.eq.s32.totalorder %v529, %v2035
        %vm2079 = vcmp.eq.s32.totalorder %v529, %v2039
        %vm2080 = vcmp.eq.s32.totalorder %v530, %v2035
        %vm2081 = vcmp.eq.s32.totalorder %v530, %v2039
        %vm2082 = vcmp.eq.s32.totalorder %v531, %v2035
        %vm2083 = vcmp.eq.s32.totalorder %v531, %v2039
        %vm2084 = vcmp.eq.s32.totalorder %v532, %v2035
        %vm2085 = vcmp.eq.s32.totalorder %v532, %v2039
        %vm2086 = vcmp.eq.s32.totalorder %v533, %v2035
        %vm2087 = vcmp.eq.s32.totalorder %v533, %v2039
        %vm2088 = vcmp.eq.s32.totalorder %v534, %v2035
        %vm2089 = vcmp.eq.s32.totalorder %v534, %v2039
        %vm2090 = vcmp.eq.s32.totalorder %v535, %v2035
        %vm2091 = vcmp.eq.s32.totalorder %v535, %v2039
        %vm2092 = vcmp.eq.s32.totalorder %v536, %v2035
        %vm2093 = vcmp.eq.s32.totalorder %v536, %v2039
        %vm2094 = vcmp.eq.s32.totalorder %v537, %v2035
        %vm2095 = vcmp.eq.s32.totalorder %v537, %v2039
        %vm2096 = vcmp.eq.s32.totalorder %v538, %v2035
        %vm2097 = vcmp.eq.s32.totalorder %v538, %v2039
        %vm2098 = vcmp.eq.s32.totalorder %v539, %v2035
        %vm2099 = vcmp.eq.s32.totalorder %v539, %v2039
        %vm2100 = vcmp.eq.s32.totalorder %v540, %v2035
        %vm2101 = vcmp.eq.s32.totalorder %v540, %v2039
        %vm2102 = vcmp.eq.s32.totalorder %v541, %v2035
        %vm2103 = vcmp.eq.s32.totalorder %v541, %v2039
        %v2104 = vlaneseq
        %v2105 = vshrl.u32 %v2104, 7
        %v2106 = vsub.s32 1, %v2105
        %v2107 = vrot.slane %v505, %v2106
        %v2108 = vlaneseq
        %v2109 = vshrl.u32 %v2108, 7
        %v2110 = vsub.s32 1, %v2109
        %v2111 = vrot.slane %v506, %v2110
        %v2112 = vsel %vm2040, %v2107, 0.0
        %v2113 = vsel %vm2041, %v2111, 0.0
        %v2114 = vsel %vm2042, %v2107, 0.0
        %v2115 = vsel %vm2043, %v2111, 0.0
        %v2116 = vsel %vm2044, %v2107, 0.0
        %v2117 = vsel %vm2045, %v2111, 0.0
        %v2118 = vsel %vm2046, %v2107, 0.0
        %v2119 = vsel %vm2047, %v2111, 0.0
        %v2120 = vsel %vm2048, %v2107, 0.0
        %v2121 = vsel %vm2049, %v2111, 0.0
        %v2122 = vsel %vm2050, %v2107, 0.0
        %v2123 = vsel %vm2051, %v2111, 0.0
        %v2124 = vsel %vm2052, %v2107, 0.0
        %v2125 = vsel %vm2053, %v2111, 0.0
        %v2126 = vsel %vm2054, %v2107, 0.0
        %v2127 = vsel %vm2055, %v2111, 0.0
        %v2128 = vsel %vm2056, %v2107, 0.0
        %v2129 = vsel %vm2057, %v2111, 0.0
        %v2130 = vsel %vm2058, %v2107, 0.0
        %v2131 = vsel %vm2059, %v2111, 0.0
        %v2132 = vsel %vm2060, %v2107, 0.0
        %v2133 = vsel %vm2061, %v2111, 0.0
        %v2134 = vsel %vm2062, %v2107, 0.0
        %v2135 = vsel %vm2063, %v2111, 0.0
        %v2136 = vsel %vm2064, %v2107, 0.0
        %v2137 = vsel %vm2065, %v2111, 0.0
        %v2138 = vsel %vm2066, %v2107, 0.0
        %v2139 = vsel %vm2067, %v2111, 0.0
        %v2140 = vsel %vm2068, %v2107, 0.0
        %v2141 = vsel %vm2069, %v2111, 0.0
        %v2142 = vsel %vm2070, %v2107, 0.0
        %v2143 = vsel %vm2071, %v2111, 0.0
        %v2144 = vsel %vm2072, %v2107, 0.0
        %v2145 = vsel %vm2073, %v2111, 0.0
        %v2146 = vsel %vm2074, %v2107, 0.0
        %v2147 = vsel %vm2075, %v2111, 0.0
        %v2148 = vsel %vm2076, %v2107, 0.0
        %v2149 = vsel %vm2077, %v2111, 0.0
        %v2150 = vsel %vm2078, %v2107, 0.0
        %v2151 = vsel %vm2079, %v2111, 0.0
        %v2152 = vsel %vm2080, %v2107, 0.0
        %v2153 = vsel %vm2081, %v2111, 0.0
        %v2154 = vsel %vm2082, %v2107, 0.0
        %v2155 = vsel %vm2083, %v2111, 0.0
        %v2156 = vsel %vm2084, %v2107, 0.0
        %v2157 = vsel %vm2085, %v2111, 0.0
        %v2158 = vsel %vm2086, %v2107, 0.0
        %v2159 = vsel %vm2087, %v2111, 0.0
        %v2160 = vsel %vm2088, %v2107, 0.0
        %v2161 = vsel %vm2089, %v2111, 0.0
        %v2162 = vsel %vm2090, %v2107, 0.0
        %v2163 = vsel %vm2091, %v2111, 0.0
        %v2164 = vsel %vm2092, %v2107, 0.0
        %v2165 = vsel %vm2093, %v2111, 0.0
        %v2166 = vsel %vm2094, %v2107, 0.0
        %v2167 = vsel %vm2095, %v2111, 0.0
        %v2168 = vsel %vm2096, %v2107, 0.0
        %v2169 = vsel %vm2097, %v2111, 0.0
        %v2170 = vsel %vm2098, %v2107, 0.0
        %v2171 = vsel %vm2099, %v2111, 0.0
        %v2172 = vsel %vm2100, %v2107, 0.0
        %v2173 = vsel %vm2101, %v2111, 0.0
        %v2174 = vsel %vm2102, %v2107, 0.0
        %v2175 = vsel %vm2103, %v2111, 0.0
        %v2176 = vadd.f32 %v1968, %v2112
        %v2177 = vadd.f32 %v1969, %v2113
        %v2178 = vadd.f32 %v1970, %v2114
        %v2179 = vadd.f32 %v1971, %v2115
        %v2180 = vadd.f32 %v1972, %v2116
        %v2181 = vadd.f32 %v1973, %v2117
        %v2182 = vadd.f32 %v1974, %v2118
        %v2183 = vadd.f32 %v1975, %v2119
        %v2184 = vadd.f32 %v1976, %v2120
        %v2185 = vadd.f32 %v1977, %v2121
        %v2186 = vadd.f32 %v1978, %v2122
        %v2187 = vadd.f32 %v1979, %v2123
        %v2188 = vadd.f32 %v1980, %v2124
        %v2189 = vadd.f32 %v1981, %v2125
        %v2190 = vadd.f32 %v1982, %v2126
        %v2191 = vadd.f32 %v1983, %v2127
        %v2192 = vadd.f32 %v1984, %v2128
        %v2193 = vadd.f32 %v1985, %v2129
        %v2194 = vadd.f32 %v1986, %v2130
        %v2195 = vadd.f32 %v1987, %v2131
        %v2196 = vadd.f32 %v1988, %v2132
        %v2197 = vadd.f32 %v1989, %v2133
        %v2198 = vadd.f32 %v1990, %v2134
        %v2199 = vadd.f32 %v1991, %v2135
        %v2200 = vadd.f32 %v1992, %v2136
        %v2201 = vadd.f32 %v1993, %v2137
        %v2202 = vadd.f32 %v1994, %v2138
        %v2203 = vadd.f32 %v1995, %v2139
        %v2204 = vadd.f32 %v1996, %v2140
        %v2205 = vadd.f32 %v1997, %v2141
        %v2206 = vadd.f32 %v1998, %v2142
        %v2207 = vadd.f32 %v1999, %v2143
        %v2208 = vadd.f32 %v2000, %v2144
        %v2209 = vadd.f32 %v2001, %v2145
        %v2210 = vadd.f32 %v2002, %v2146
        %v2211 = vadd.f32 %v2003, %v2147
        %v2212 = vadd.f32 %v2004, %v2148
        %v2213 = vadd.f32 %v2005, %v2149
        %v2214 = vadd.f32 %v2006, %v2150
        %v2215 = vadd.f32 %v2007, %v2151
        %v2216 = vadd.f32 %v2008, %v2152
        %v2217 = vadd.f32 %v2009, %v2153
        %v2218 = vadd.f32 %v2010, %v2154
        %v2219 = vadd.f32 %v2011, %v2155
        %v2220 = vadd.f32 %v2012, %v2156
        %v2221 = vadd.f32 %v2013, %v2157
        %v2222 = vadd.f32 %v2014, %v2158
        %v2223 = vadd.f32 %v2015, %v2159
        %v2224 = vadd.f32 %v2016, %v2160
        %v2225 = vadd.f32 %v2017, %v2161
        %v2226 = vadd.f32 %v2018, %v2162
        %v2227 = vadd.f32 %v2019, %v2163
        %v2228 = vadd.f32 %v2020, %v2164
        %v2229 = vadd.f32 %v2021, %v2165
        %v2230 = vadd.f32 %v2022, %v2166
        %v2231 = vadd.f32 %v2023, %v2167
        %v2232 = vadd.f32 %v2024, %v2168
        %v2233 = vadd.f32 %v2025, %v2169
        %v2234 = vadd.f32 %v2026, %v2170
        %v2235 = vadd.f32 %v2027, %v2171
        %v2236 = vadd.f32 %v2028, %v2172
        %v2237 = vadd.f32 %v2029, %v2173
        %v2238 = vadd.f32 %v2030, %v2174
        %v2239 = vadd.f32 %v2031, %v2175
        %v2240 = vpack.c.bf16 %v435, %v435
        %v2241 = vpack.c.bf16 %v437, %v437
        %v2242 = vpack.c.bf16 %v2178, %v2176
        %v2243 = vpack.c.bf16 %v2179, %v2177
        %v2244 = vpack.c.bf16 %v2182, %v2180
        %v2245 = vpack.c.bf16 %v2183, %v2181
        %v2246 = vpack.c.bf16 %v2186, %v2184
        %v2247 = vpack.c.bf16 %v2187, %v2185
        %v2248 = vpack.c.bf16 %v2190, %v2188
        %v2249 = vpack.c.bf16 %v2191, %v2189
        %v2250 = vpack.c.bf16 %v2194, %v2192
        %v2251 = vpack.c.bf16 %v2195, %v2193
        %v2252 = vpack.c.bf16 %v2198, %v2196
        %v2253 = vpack.c.bf16 %v2199, %v2197
        %v2254 = vpack.c.bf16 %v2202, %v2200
        %v2255 = vpack.c.bf16 %v2203, %v2201
        %v2256 = vpack.c.bf16 %v2206, %v2204
        %v2257 = vpack.c.bf16 %v2207, %v2205
        %v2258 = vpack.c.bf16 %v2210, %v2208
        %v2259 = vpack.c.bf16 %v2211, %v2209
        %v2260 = vpack.c.bf16 %v2214, %v2212
        %v2261 = vpack.c.bf16 %v2215, %v2213
        %v2262 = vpack.c.bf16 %v2218, %v2216
        %v2263 = vpack.c.bf16 %v2219, %v2217
        %v2264 = vpack.c.bf16 %v2222, %v2220
        %v2265 = vpack.c.bf16 %v2223, %v2221
        %v2266 = vpack.c.bf16 %v2226, %v2224
        %v2267 = vpack.c.bf16 %v2227, %v2225
        %v2268 = vpack.c.bf16 %v2230, %v2228
        %v2269 = vpack.c.bf16 %v2231, %v2229
        %v2270 = vpack.c.bf16 %v2234, %v2232
        %v2271 = vpack.c.bf16 %v2235, %v2233
        %v2272 = vpack.c.bf16 %v2238, %v2236
        %v2273 = vpack.c.bf16 %v2239, %v2237
        %2274 = vmatprep.subr.bf16.mxu0 %v2243
        %2275 = vmatpush1.bf16.msra.mxu0 %v2242
        %2276 = vmatprep.subr.bf16.mxu0 %v2245
        %2277 = vmatpush1.bf16.msra.mxu0 %v2244
        %2278 = vmatprep.subr.bf16.mxu0 %v2247
        %2279 = vmatpush1.bf16.msra.mxu0 %v2246
        %2280 = vmatprep.subr.bf16.mxu0 %v2249
        %2281 = vmatpush1.bf16.msra.mxu0 %v2248
        %2282 = vmatprep.subr.bf16.mxu0 %v2251
        %2283 = vmatpush1.bf16.msra.mxu0 %v2250
        %2284 = vmatprep.subr.bf16.mxu0 %v2253
        %2285 = vmatpush1.bf16.msra.mxu0 %v2252
        %2286 = vmatprep.subr.bf16.mxu0 %v2255
        %2287 = vmatpush1.bf16.msra.mxu0 %v2254
        %2288 = vmatprep.subr.bf16.mxu0 %v2257
        %2289 = vmatpush1.bf16.msra.mxu0 %v2256
        %2290 = vmatprep.subr.bf16.mxu0 %v2259
        %2291 = vmatpush1.bf16.msra.mxu0 %v2258
        %2292 = vmatprep.subr.bf16.mxu0 %v2261
        %2293 = vmatpush1.bf16.msra.mxu0 %v2260
        %2294 = vmatprep.subr.bf16.mxu0 %v2263
        %2295 = vmatpush1.bf16.msra.mxu0 %v2262
        %2296 = vmatprep.subr.bf16.mxu0 %v2265
        %2297 = vmatpush1.bf16.msra.mxu0 %v2264
        %2298 = vmatprep.subr.bf16.mxu0 %v2267
        %2299 = vmatpush1.bf16.msra.mxu0 %v2266
        %2300 = vmatprep.subr.bf16.mxu0 %v2269
        %2301 = vmatpush1.bf16.msra.mxu0 %v2268
        %2302 = vmatprep.subr.bf16.mxu0 %v2271
        %2303 = vmatpush1.bf16.msra.mxu0 %v2270
        %2304 = vmatprep.subr.bf16.mxu0 %v2273
        %2305 = vmatpush1.bf16.msra.mxu0 %v2272
        %2306 = vmatprep.mubr.bf16.mxu0 %v2241
        %2307 = vmatmul.mubr.bf16.gmra.mrb[0].mxu0 %v2240
        %v2308 = vpop.f32.mrb[0].mxu0
        %v2309 = vadd.f32 0.0, %v2308
        %v2310 = vpop.f32.mrb[0].mxu0
        %v2311 = vadd.f32 0.0, %v2310
        %v2312 = vpop.f32.mrb[0].mxu0
        %v2313 = vpop.f32.mrb[0].mxu0
        %2314 = vdwg.mxu0
        %2315 = vmatprep.subr.bf16.mxu0 %v1377
        %2316 = vmatpush1.bf16.msra.mxu0 %v1376
        %2317 = vmatprep.subr.bf16.mxu0 %v1379
        %2318 = vmatpush1.bf16.msra.mxu0 %v1378
        %2319 = vmatprep.subr.bf16.mxu0 %v1381
        %2320 = vmatpush1.bf16.msra.mxu0 %v1380
        %2321 = vmatprep.subr.bf16.mxu0 %v1383
        %2322 = vmatpush1.bf16.msra.mxu0 %v1382
        %2323 = vmatprep.subr.bf16.mxu0 %v1385
        %2324 = vmatpush1.bf16.msra.mxu0 %v1384
        %2325 = vmatprep.subr.bf16.mxu0 %v1387
        %2326 = vmatpush1.bf16.msra.mxu0 %v1386
        %2327 = vmatprep.subr.bf16.mxu0 %v1389
        %2328 = vmatpush1.bf16.msra.mxu0 %v1388
        %2329 = vmatprep.subr.bf16.mxu0 %v1391
        %2330 = vmatpush1.bf16.msra.mxu0 %v1390
        %2331 = vmatprep.subr.bf16.mxu0 %v1393
        %2332 = vmatpush1.bf16.msra.mxu0 %v1392
        %2333 = vmatprep.subr.bf16.mxu0 %v1395
        %2334 = vmatpush1.bf16.msra.mxu0 %v1394
        %2335 = vmatprep.subr.bf16.mxu0 %v1397
        %2336 = vmatpush1.bf16.msra.mxu0 %v1396
        %2337 = vmatprep.subr.bf16.mxu0 %v1399
        %2338 = vmatpush1.bf16.msra.mxu0 %v1398
        %2339 = vmatprep.subr.bf16.mxu0 %v1401
        %2340 = vmatpush1.bf16.msra.mxu0 %v1400
        %2341 = vmatprep.subr.bf16.mxu0 %v1403
        %2342 = vmatpush1.bf16.msra.mxu0 %v1402
        %2343 = vmatprep.subr.bf16.mxu0 %v1405
        %2344 = vmatpush1.bf16.msra.mxu0 %v1404
        %2345 = vmatprep.subr.bf16.mxu0 %v1407
        %2346 = vmatpush1.bf16.msra.mxu0 %v1406
        %2347 = vmatprep.mubr.bf16.mxu0 %v1375
        %2348 = vmatmul.mubr.bf16.gmra.mrb[0].mxu0 %v1374
        %v2349 = vpop.f32.mrb[0].mxu0
        %v2350 = vadd.f32 %v2309, %v2349
        %v2351 = vpop.f32.mrb[0].mxu0
        %v2352 = vadd.f32 %v2311, %v2351
        %v2353 = vpop.f32.mrb[0].mxu0
        %v2354 = vpop.f32.mrb[0].mxu0
        %2355 = vdwg.mxu0
        %v2356 = vlaneseq
        %v2357 = vshrl.u32 %v2356, 7
        %v2358 = vsub.s32 2, %v2357
        %v2359 = vrot.slane %v477, %v2358
        %v2360 = vlaneseq
        %v2361 = vshrl.u32 %v2360, 7
        %v2362 = vsub.s32 2, %v2361
        %v2363 = vrot.slane %v478, %v2362
        %vm2364 = vcmp.eq.s32.totalorder %v510, %v2359
        %vm2365 = vcmp.eq.s32.totalorder %v510, %v2363
        %vm2366 = vcmp.eq.s32.totalorder %v511, %v2359
        %vm2367 = vcmp.eq.s32.totalorder %v511, %v2363
        %vm2368 = vcmp.eq.s32.totalorder %v512, %v2359
        %vm2369 = vcmp.eq.s32.totalorder %v512, %v2363
        %vm2370 = vcmp.eq.s32.totalorder %v513, %v2359
        %vm2371 = vcmp.eq.s32.totalorder %v513, %v2363
        %vm2372 = vcmp.eq.s32.totalorder %v514, %v2359
        %vm2373 = vcmp.eq.s32.totalorder %v514, %v2363
        %vm2374 = vcmp.eq.s32.totalorder %v515, %v2359
        %vm2375 = vcmp.eq.s32.totalorder %v515, %v2363
        %vm2376 = vcmp.eq.s32.totalorder %v516, %v2359
        %vm2377 = vcmp.eq.s32.totalorder %v516, %v2363
        %vm2378 = vcmp.eq.s32.totalorder %v517, %v2359
        %vm2379 = vcmp.eq.s32.totalorder %v517, %v2363
        %vm2380 = vcmp.eq.s32.totalorder %v518, %v2359
        %vm2381 = vcmp.eq.s32.totalorder %v518, %v2363
        %vm2382 = vcmp.eq.s32.totalorder %v519, %v2359
        %vm2383 = vcmp.eq.s32.totalorder %v519, %v2363
        %vm2384 = vcmp.eq.s32.totalorder %v520, %v2359
        %vm2385 = vcmp.eq.s32.totalorder %v520, %v2363
        %vm2386 = vcmp.eq.s32.totalorder %v521, %v2359
        %vm2387 = vcmp.eq.s32.totalorder %v521, %v2363
        %vm2388 = vcmp.eq.s32.totalorder %v522, %v2359
        %vm2389 = vcmp.eq.s32.totalorder %v522, %v2363
        %vm2390 = vcmp.eq.s32.totalorder %v523, %v2359
        %vm2391 = vcmp.eq.s32.totalorder %v523, %v2363
        %vm2392 = vcmp.eq.s32.totalorder %v524, %v2359
        %vm2393 = vcmp.eq.s32.totalorder %v524, %v2363
        %vm2394 = vcmp.eq.s32.totalorder %v525, %v2359
        %vm2395 = vcmp.eq.s32.totalorder %v525, %v2363
        %vm2396 = vcmp.eq.s32.totalorder %v526, %v2359
        %vm2397 = vcmp.eq.s32.totalorder %v526, %v2363
        %vm2398 = vcmp.eq.s32.totalorder %v527, %v2359
        %vm2399 = vcmp.eq.s32.totalorder %v527, %v2363
        %vm2400 = vcmp.eq.s32.totalorder %v528, %v2359
        %vm2401 = vcmp.eq.s32.totalorder %v528, %v2363
        %vm2402 = vcmp.eq.s32.totalorder %v529, %v2359
        %vm2403 = vcmp.eq.s32.totalorder %v529, %v2363
        %vm2404 = vcmp.eq.s32.totalorder %v530, %v2359
        %vm2405 = vcmp.eq.s32.totalorder %v530, %v2363
        %vm2406 = vcmp.eq.s32.totalorder %v531, %v2359
        %vm2407 = vcmp.eq.s32.totalorder %v531, %v2363
        %vm2408 = vcmp.eq.s32.totalorder %v532, %v2359
        %vm2409 = vcmp.eq.s32.totalorder %v532, %v2363
        %vm2410 = vcmp.eq.s32.totalorder %v533, %v2359
        %vm2411 = vcmp.eq.s32.totalorder %v533, %v2363
        %vm2412 = vcmp.eq.s32.totalorder %v534, %v2359
        %vm2413 = vcmp.eq.s32.totalorder %v534, %v2363
        %vm2414 = vcmp.eq.s32.totalorder %v535, %v2359
        %vm2415 = vcmp.eq.s32.totalorder %v535, %v2363
        %vm2416 = vcmp.eq.s32.totalorder %v536, %v2359
        %vm2417 = vcmp.eq.s32.totalorder %v536, %v2363
        %vm2418 = vcmp.eq.s32.totalorder %v537, %v2359
        %vm2419 = vcmp.eq.s32.totalorder %v537, %v2363
        %vm2420 = vcmp.eq.s32.totalorder %v538, %v2359
        %vm2421 = vcmp.eq.s32.totalorder %v538, %v2363
        %vm2422 = vcmp.eq.s32.totalorder %v539, %v2359
        %vm2423 = vcmp.eq.s32.totalorder %v539, %v2363
        %vm2424 = vcmp.eq.s32.totalorder %v540, %v2359
        %vm2425 = vcmp.eq.s32.totalorder %v540, %v2363
        %vm2426 = vcmp.eq.s32.totalorder %v541, %v2359
        %vm2427 = vcmp.eq.s32.totalorder %v541, %v2363
        %v2428 = vlaneseq
        %v2429 = vshrl.u32 %v2428, 7
        %v2430 = vsub.s32 2, %v2429
        %v2431 = vrot.slane %v493, %v2430
        %v2432 = vlaneseq
        %v2433 = vshrl.u32 %v2432, 7
        %v2434 = vsub.s32 2, %v2433
        %v2435 = vrot.slane %v494, %v2434
        %v2436 = vsel %vm2364, %v2431, 0.0
        %v2437 = vsel %vm2365, %v2435, 0.0
        %v2438 = vsel %vm2366, %v2431, 0.0
        %v2439 = vsel %vm2367, %v2435, 0.0
        %v2440 = vsel %vm2368, %v2431, 0.0
        %v2441 = vsel %vm2369, %v2435, 0.0
        %v2442 = vsel %vm2370, %v2431, 0.0
        %v2443 = vsel %vm2371, %v2435, 0.0
        %v2444 = vsel %vm2372, %v2431, 0.0
        %v2445 = vsel %vm2373, %v2435, 0.0
        %v2446 = vsel %vm2374, %v2431, 0.0
        %v2447 = vsel %vm2375, %v2435, 0.0
        %v2448 = vsel %vm2376, %v2431, 0.0
        %v2449 = vsel %vm2377, %v2435, 0.0
        %v2450 = vsel %vm2378, %v2431, 0.0
        %v2451 = vsel %vm2379, %v2435, 0.0
        %v2452 = vsel %vm2380, %v2431, 0.0
        %v2453 = vsel %vm2381, %v2435, 0.0
        %v2454 = vsel %vm2382, %v2431, 0.0
        %v2455 = vsel %vm2383, %v2435, 0.0
        %v2456 = vsel %vm2384, %v2431, 0.0
        %v2457 = vsel %vm2385, %v2435, 0.0
        %v2458 = vsel %vm2386, %v2431, 0.0
        %v2459 = vsel %vm2387, %v2435, 0.0
        %v2460 = vsel %vm2388, %v2431, 0.0
        %v2461 = vsel %vm2389, %v2435, 0.0
        %v2462 = vsel %vm2390, %v2431, 0.0
        %v2463 = vsel %vm2391, %v2435, 0.0
        %v2464 = vsel %vm2392, %v2431, 0.0
        %v2465 = vsel %vm2393, %v2435, 0.0
        %v2466 = vsel %vm2394, %v2431, 0.0
        %v2467 = vsel %vm2395, %v2435, 0.0
        %v2468 = vsel %vm2396, %v2431, 0.0
        %v2469 = vsel %vm2397, %v2435, 0.0
        %v2470 = vsel %vm2398, %v2431, 0.0
        %v2471 = vsel %vm2399, %v2435, 0.0
        %v2472 = vsel %vm2400, %v2431, 0.0
        %v2473 = vsel %vm2401, %v2435, 0.0
        %v2474 = vsel %vm2402, %v2431, 0.0
        %v2475 = vsel %vm2403, %v2435, 0.0
        %v2476 = vsel %vm2404, %v2431, 0.0
        %v2477 = vsel %vm2405, %v2435, 0.0
        %v2478 = vsel %vm2406, %v2431, 0.0
        %v2479 = vsel %vm2407, %v2435, 0.0
        %v2480 = vsel %vm2408, %v2431, 0.0
        %v2481 = vsel %vm2409, %v2435, 0.0
        %v2482 = vsel %vm2410, %v2431, 0.0
        %v2483 = vsel %vm2411, %v2435, 0.0
        %v2484 = vsel %vm2412, %v2431, 0.0
        %v2485 = vsel %vm2413, %v2435, 0.0
        %v2486 = vsel %vm2414, %v2431, 0.0
        %v2487 = vsel %vm2415, %v2435, 0.0
        %v2488 = vsel %vm2416, %v2431, 0.0
        %v2489 = vsel %vm2417, %v2435, 0.0
        %v2490 = vsel %vm2418, %v2431, 0.0
        %v2491 = vsel %vm2419, %v2435, 0.0
        %v2492 = vsel %vm2420, %v2431, 0.0
        %v2493 = vsel %vm2421, %v2435, 0.0
        %v2494 = vsel %vm2422, %v2431, 0.0
        %v2495 = vsel %vm2423, %v2435, 0.0
        %v2496 = vsel %vm2424, %v2431, 0.0
        %v2497 = vsel %vm2425, %v2435, 0.0
        %v2498 = vsel %vm2426, %v2431, 0.0
        %v2499 = vsel %vm2427, %v2435, 0.0
        %v2500 = vadd.f32 %v2436, 0.0
        %v2501 = vadd.f32 %v2437, 0.0
        %v2502 = vadd.f32 %v2438, 0.0
        %v2503 = vadd.f32 %v2439, 0.0
        %v2504 = vadd.f32 %v2440, 0.0
        %v2505 = vadd.f32 %v2441, 0.0
        %v2506 = vadd.f32 %v2442, 0.0
        %v2507 = vadd.f32 %v2443, 0.0
        %v2508 = vadd.f32 %v2444, 0.0
        %v2509 = vadd.f32 %v2445, 0.0
        %v2510 = vadd.f32 %v2446, 0.0
        %v2511 = vadd.f32 %v2447, 0.0
        %v2512 = vadd.f32 %v2448, 0.0
        %v2513 = vadd.f32 %v2449, 0.0
        %v2514 = vadd.f32 %v2450, 0.0
        %v2515 = vadd.f32 %v2451, 0.0
        %v2516 = vadd.f32 %v2452, 0.0
        %v2517 = vadd.f32 %v2453, 0.0
        %v2518 = vadd.f32 %v2454, 0.0
        %v2519 = vadd.f32 %v2455, 0.0
        %v2520 = vadd.f32 %v2456, 0.0
        %v2521 = vadd.f32 %v2457, 0.0
        %v2522 = vadd.f32 %v2458, 0.0
        %v2523 = vadd.f32 %v2459, 0.0
        %v2524 = vadd.f32 %v2460, 0.0
        %v2525 = vadd.f32 %v2461, 0.0
        %v2526 = vadd.f32 %v2462, 0.0
        %v2527 = vadd.f32 %v2463, 0.0
        %v2528 = vadd.f32 %v2464, 0.0
        %v2529 = vadd.f32 %v2465, 0.0
        %v2530 = vadd.f32 %v2466, 0.0
        %v2531 = vadd.f32 %v2467, 0.0
        %v2532 = vadd.f32 %v2468, 0.0
        %v2533 = vadd.f32 %v2469, 0.0
        %v2534 = vadd.f32 %v2470, 0.0
        %v2535 = vadd.f32 %v2471, 0.0
        %v2536 = vadd.f32 %v2472, 0.0
        %v2537 = vadd.f32 %v2473, 0.0
        %v2538 = vadd.f32 %v2474, 0.0
        %v2539 = vadd.f32 %v2475, 0.0
        %v2540 = vadd.f32 %v2476, 0.0
        %v2541 = vadd.f32 %v2477, 0.0
        %v2542 = vadd.f32 %v2478, 0.0
        %v2543 = vadd.f32 %v2479, 0.0
        %v2544 = vadd.f32 %v2480, 0.0
        %v2545 = vadd.f32 %v2481, 0.0
        %v2546 = vadd.f32 %v2482, 0.0
        %v2547 = vadd.f32 %v2483, 0.0
        %v2548 = vadd.f32 %v2484, 0.0
        %v2549 = vadd.f32 %v2485, 0.0
        %v2550 = vadd.f32 %v2486, 0.0
        %v2551 = vadd.f32 %v2487, 0.0
        %v2552 = vadd.f32 %v2488, 0.0
        %v2553 = vadd.f32 %v2489, 0.0
        %v2554 = vadd.f32 %v2490, 0.0
        %v2555 = vadd.f32 %v2491, 0.0
        %v2556 = vadd.f32 %v2492, 0.0
        %v2557 = vadd.f32 %v2493, 0.0
        %v2558 = vadd.f32 %v2494, 0.0
        %v2559 = vadd.f32 %v2495, 0.0
        %v2560 = vadd.f32 %v2496, 0.0
        %v2561 = vadd.f32 %v2497, 0.0
        %v2562 = vadd.f32 %v2498, 0.0
        %v2563 = vadd.f32 %v2499, 0.0
        %v2564 = vlaneseq
        %v2565 = vshrl.u32 %v2564, 7
        %v2566 = vsub.s32 2, %v2565
        %v2567 = vrot.slane %v481, %v2566
        %v2568 = vlaneseq
        %v2569 = vshrl.u32 %v2568, 7
        %v2570 = vsub.s32 2, %v2569
        %v2571 = vrot.slane %v482, %v2570
        %vm2572 = vcmp.eq.s32.totalorder %v510, %v2567
        %vm2573 = vcmp.eq.s32.totalorder %v510, %v2571
        %vm2574 = vcmp.eq.s32.totalorder %v511, %v2567
        %vm2575 = vcmp.eq.s32.totalorder %v511, %v2571
        %vm2576 = vcmp.eq.s32.totalorder %v512, %v2567
        %vm2577 = vcmp.eq.s32.totalorder %v512, %v2571
        %vm2578 = vcmp.eq.s32.totalorder %v513, %v2567
        %vm2579 = vcmp.eq.s32.totalorder %v513, %v2571
        %vm2580 = vcmp.eq.s32.totalorder %v514, %v2567
        %vm2581 = vcmp.eq.s32.totalorder %v514, %v2571
        %vm2582 = vcmp.eq.s32.totalorder %v515, %v2567
        %vm2583 = vcmp.eq.s32.totalorder %v515, %v2571
        %vm2584 = vcmp.eq.s32.totalorder %v516, %v2567
        %vm2585 = vcmp.eq.s32.totalorder %v516, %v2571
        %vm2586 = vcmp.eq.s32.totalorder %v517, %v2567
        %vm2587 = vcmp.eq.s32.totalorder %v517, %v2571
        %vm2588 = vcmp.eq.s32.totalorder %v518, %v2567
        %vm2589 = vcmp.eq.s32.totalorder %v518, %v2571
        %vm2590 = vcmp.eq.s32.totalorder %v519, %v2567
        %vm2591 = vcmp.eq.s32.totalorder %v519, %v2571
        %vm2592 = vcmp.eq.s32.totalorder %v520, %v2567
        %vm2593 = vcmp.eq.s32.totalorder %v520, %v2571
        %vm2594 = vcmp.eq.s32.totalorder %v521, %v2567
        %vm2595 = vcmp.eq.s32.totalorder %v521, %v2571
        %vm2596 = vcmp.eq.s32.totalorder %v522, %v2567
        %vm2597 = vcmp.eq.s32.totalorder %v522, %v2571
        %vm2598 = vcmp.eq.s32.totalorder %v523, %v2567
        %vm2599 = vcmp.eq.s32.totalorder %v523, %v2571
        %vm2600 = vcmp.eq.s32.totalorder %v524, %v2567
        %vm2601 = vcmp.eq.s32.totalorder %v524, %v2571
        %vm2602 = vcmp.eq.s32.totalorder %v525, %v2567
        %vm2603 = vcmp.eq.s32.totalorder %v525, %v2571
        %vm2604 = vcmp.eq.s32.totalorder %v526, %v2567
        %vm2605 = vcmp.eq.s32.totalorder %v526, %v2571
        %vm2606 = vcmp.eq.s32.totalorder %v527, %v2567
        %vm2607 = vcmp.eq.s32.totalorder %v527, %v2571
        %vm2608 = vcmp.eq.s32.totalorder %v528, %v2567
        %vm2609 = vcmp.eq.s32.totalorder %v528, %v2571
        %vm2610 = vcmp.eq.s32.totalorder %v529, %v2567
        %vm2611 = vcmp.eq.s32.totalorder %v529, %v2571
        %vm2612 = vcmp.eq.s32.totalorder %v530, %v2567
        %vm2613 = vcmp.eq.s32.totalorder %v530, %v2571
        %vm2614 = vcmp.eq.s32.totalorder %v531, %v2567
        %vm2615 = vcmp.eq.s32.totalorder %v531, %v2571
        %vm2616 = vcmp.eq.s32.totalorder %v532, %v2567
        %vm2617 = vcmp.eq.s32.totalorder %v532, %v2571
        %vm2618 = vcmp.eq.s32.totalorder %v533, %v2567
        %vm2619 = vcmp.eq.s32.totalorder %v533, %v2571
        %vm2620 = vcmp.eq.s32.totalorder %v534, %v2567
        %vm2621 = vcmp.eq.s32.totalorder %v534, %v2571
        %vm2622 = vcmp.eq.s32.totalorder %v535, %v2567
        %vm2623 = vcmp.eq.s32.totalorder %v535, %v2571
        %vm2624 = vcmp.eq.s32.totalorder %v536, %v2567
        %vm2625 = vcmp.eq.s32.totalorder %v536, %v2571
        %vm2626 = vcmp.eq.s32.totalorder %v537, %v2567
        %vm2627 = vcmp.eq.s32.totalorder %v537, %v2571
        %vm2628 = vcmp.eq.s32.totalorder %v538, %v2567
        %vm2629 = vcmp.eq.s32.totalorder %v538, %v2571
        %vm2630 = vcmp.eq.s32.totalorder %v539, %v2567
        %vm2631 = vcmp.eq.s32.totalorder %v539, %v2571
        %vm2632 = vcmp.eq.s32.totalorder %v540, %v2567
        %vm2633 = vcmp.eq.s32.totalorder %v540, %v2571
        %vm2634 = vcmp.eq.s32.totalorder %v541, %v2567
        %vm2635 = vcmp.eq.s32.totalorder %v541, %v2571
        %v2636 = vlaneseq
        %v2637 = vshrl.u32 %v2636, 7
        %v2638 = vsub.s32 2, %v2637
        %v2639 = vrot.slane %v497, %v2638
        %v2640 = vlaneseq
        %v2641 = vshrl.u32 %v2640, 7
        %v2642 = vsub.s32 2, %v2641
        %v2643 = vrot.slane %v498, %v2642
        %v2644 = vsel %vm2572, %v2639, 0.0
        %v2645 = vsel %vm2573, %v2643, 0.0
        %v2646 = vsel %vm2574, %v2639, 0.0
        %v2647 = vsel %vm2575, %v2643, 0.0
        %v2648 = vsel %vm2576, %v2639, 0.0
        %v2649 = vsel %vm2577, %v2643, 0.0
        %v2650 = vsel %vm2578, %v2639, 0.0
        %v2651 = vsel %vm2579, %v2643, 0.0
        %v2652 = vsel %vm2580, %v2639, 0.0
        %v2653 = vsel %vm2581, %v2643, 0.0
        %v2654 = vsel %vm2582, %v2639, 0.0
        %v2655 = vsel %vm2583, %v2643, 0.0
        %v2656 = vsel %vm2584, %v2639, 0.0
        %v2657 = vsel %vm2585, %v2643, 0.0
        %v2658 = vsel %vm2586, %v2639, 0.0
        %v2659 = vsel %vm2587, %v2643, 0.0
        %v2660 = vsel %vm2588, %v2639, 0.0
        %v2661 = vsel %vm2589, %v2643, 0.0
        %v2662 = vsel %vm2590, %v2639, 0.0
        %v2663 = vsel %vm2591, %v2643, 0.0
        %v2664 = vsel %vm2592, %v2639, 0.0
        %v2665 = vsel %vm2593, %v2643, 0.0
        %v2666 = vsel %vm2594, %v2639, 0.0
        %v2667 = vsel %vm2595, %v2643, 0.0
        %v2668 = vsel %vm2596, %v2639, 0.0
        %v2669 = vsel %vm2597, %v2643, 0.0
        %v2670 = vsel %vm2598, %v2639, 0.0
        %v2671 = vsel %vm2599, %v2643, 0.0
        %v2672 = vsel %vm2600, %v2639, 0.0
        %v2673 = vsel %vm2601, %v2643, 0.0
        %v2674 = vsel %vm2602, %v2639, 0.0
        %v2675 = vsel %vm2603, %v2643, 0.0
        %v2676 = vsel %vm2604, %v2639, 0.0
        %v2677 = vsel %vm2605, %v2643, 0.0
        %v2678 = vsel %vm2606, %v2639, 0.0
        %v2679 = vsel %vm2607, %v2643, 0.0
        %v2680 = vsel %vm2608, %v2639, 0.0
        %v2681 = vsel %vm2609, %v2643, 0.0
        %v2682 = vsel %vm2610, %v2639, 0.0
        %v2683 = vsel %vm2611, %v2643, 0.0
        %v2684 = vsel %vm2612, %v2639, 0.0
        %v2685 = vsel %vm2613, %v2643, 0.0
        %v2686 = vsel %vm2614, %v2639, 0.0
        %v2687 = vsel %vm2615, %v2643, 0.0
        %v2688 = vsel %vm2616, %v2639, 0.0
        %v2689 = vsel %vm2617, %v2643, 0.0
        %v2690 = vsel %vm2618, %v2639, 0.0
        %v2691 = vsel %vm2619, %v2643, 0.0
        %v2692 = vsel %vm2620, %v2639, 0.0
        %v2693 = vsel %vm2621, %v2643, 0.0
        %v2694 = vsel %vm2622, %v2639, 0.0
        %v2695 = vsel %vm2623, %v2643, 0.0
        %v2696 = vsel %vm2624, %v2639, 0.0
        %v2697 = vsel %vm2625, %v2643, 0.0
        %v2698 = vsel %vm2626, %v2639, 0.0
        %v2699 = vsel %vm2627, %v2643, 0.0
        %v2700 = vsel %vm2628, %v2639, 0.0
        %v2701 = vsel %vm2629, %v2643, 0.0
        %v2702 = vsel %vm2630, %v2639, 0.0
        %v2703 = vsel %vm2631, %v2643, 0.0
        %v2704 = vsel %vm2632, %v2639, 0.0
        %v2705 = vsel %vm2633, %v2643, 0.0
        %v2706 = vsel %vm2634, %v2639, 0.0
        %v2707 = vsel %vm2635, %v2643, 0.0
        %v2708 = vadd.f32 %v2500, %v2644
        %v2709 = vadd.f32 %v2501, %v2645
        %v2710 = vadd.f32 %v2502, %v2646
        %v2711 = vadd.f32 %v2503, %v2647
        %v2712 = vadd.f32 %v2504, %v2648
        %v2713 = vadd.f32 %v2505, %v2649
        %v2714 = vadd.f32 %v2506, %v2650
        %v2715 = vadd.f32 %v2507, %v2651
        %v2716 = vadd.f32 %v2508, %v2652
        %v2717 = vadd.f32 %v2509, %v2653
        %v2718 = vadd.f32 %v2510, %v2654
        %v2719 = vadd.f32 %v2511, %v2655
        %v2720 = vadd.f32 %v2512, %v2656
        %v2721 = vadd.f32 %v2513, %v2657
        %v2722 = vadd.f32 %v2514, %v2658
        %v2723 = vadd.f32 %v2515, %v2659
        %v2724 = vadd.f32 %v2516, %v2660
        %v2725 = vadd.f32 %v2517, %v2661
        %v2726 = vadd.f32 %v2518, %v2662
        %v2727 = vadd.f32 %v2519, %v2663
        %v2728 = vadd.f32 %v2520, %v2664
        %v2729 = vadd.f32 %v2521, %v2665
        %v2730 = vadd.f32 %v2522, %v2666
        %v2731 = vadd.f32 %v2523, %v2667
        %v2732 = vadd.f32 %v2524, %v2668
        %v2733 = vadd.f32 %v2525, %v2669
        %v2734 = vadd.f32 %v2526, %v2670
        %v2735 = vadd.f32 %v2527, %v2671
        %v2736 = vadd.f32 %v2528, %v2672
        %v2737 = vadd.f32 %v2529, %v2673
        %v2738 = vadd.f32 %v2530, %v2674
        %v2739 = vadd.f32 %v2531, %v2675
        %v2740 = vadd.f32 %v2532, %v2676
        %v2741 = vadd.f32 %v2533, %v2677
        %v2742 = vadd.f32 %v2534, %v2678
        %v2743 = vadd.f32 %v2535, %v2679
        %v2744 = vadd.f32 %v2536, %v2680
        %v2745 = vadd.f32 %v2537, %v2681
        %v2746 = vadd.f32 %v2538, %v2682
        %v2747 = vadd.f32 %v2539, %v2683
        %v2748 = vadd.f32 %v2540, %v2684
        %v2749 = vadd.f32 %v2541, %v2685
        %v2750 = vadd.f32 %v2542, %v2686
        %v2751 = vadd.f32 %v2543, %v2687
        %v2752 = vadd.f32 %v2544, %v2688
        %v2753 = vadd.f32 %v2545, %v2689
        %v2754 = vadd.f32 %v2546, %v2690
        %v2755 = vadd.f32 %v2547, %v2691
        %v2756 = vadd.f32 %v2548, %v2692
        %v2757 = vadd.f32 %v2549, %v2693
        %v2758 = vadd.f32 %v2550, %v2694
        %v2759 = vadd.f32 %v2551, %v2695
        %v2760 = vadd.f32 %v2552, %v2696
        %v2761 = vadd.f32 %v2553, %v2697
        %v2762 = vadd.f32 %v2554, %v2698
        %v2763 = vadd.f32 %v2555, %v2699
        %v2764 = vadd.f32 %v2556, %v2700
        %v2765 = vadd.f32 %v2557, %v2701
        %v2766 = vadd.f32 %v2558, %v2702
        %v2767 = vadd.f32 %v2559, %v2703
        %v2768 = vadd.f32 %v2560, %v2704
        %v2769 = vadd.f32 %v2561, %v2705
        %v2770 = vadd.f32 %v2562, %v2706
        %v2771 = vadd.f32 %v2563, %v2707
        %v2772 = vlaneseq
        %v2773 = vshrl.u32 %v2772, 7
        %v2774 = vsub.s32 2, %v2773
        %v2775 = vrot.slane %v485, %v2774
        %v2776 = vlaneseq
        %v2777 = vshrl.u32 %v2776, 7
        %v2778 = vsub.s32 2, %v2777
        %v2779 = vrot.slane %v486, %v2778
        %vm2780 = vcmp.eq.s32.totalorder %v510, %v2775
        %vm2781 = vcmp.eq.s32.totalorder %v510, %v2779
        %vm2782 = vcmp.eq.s32.totalorder %v511, %v2775
        %vm2783 = vcmp.eq.s32.totalorder %v511, %v2779
        %vm2784 = vcmp.eq.s32.totalorder %v512, %v2775
        %vm2785 = vcmp.eq.s32.totalorder %v512, %v2779
        %vm2786 = vcmp.eq.s32.totalorder %v513, %v2775
        %vm2787 = vcmp.eq.s32.totalorder %v513, %v2779
        %vm2788 = vcmp.eq.s32.totalorder %v514, %v2775
        %vm2789 = vcmp.eq.s32.totalorder %v514, %v2779
        %vm2790 = vcmp.eq.s32.totalorder %v515, %v2775
        %vm2791 = vcmp.eq.s32.totalorder %v515, %v2779
        %vm2792 = vcmp.eq.s32.totalorder %v516, %v2775
        %vm2793 = vcmp.eq.s32.totalorder %v516, %v2779
        %vm2794 = vcmp.eq.s32.totalorder %v517, %v2775
        %vm2795 = vcmp.eq.s32.totalorder %v517, %v2779
        %vm2796 = vcmp.eq.s32.totalorder %v518, %v2775
        %vm2797 = vcmp.eq.s32.totalorder %v518, %v2779
        %vm2798 = vcmp.eq.s32.totalorder %v519, %v2775
        %vm2799 = vcmp.eq.s32.totalorder %v519, %v2779
        %vm2800 = vcmp.eq.s32.totalorder %v520, %v2775
        %vm2801 = vcmp.eq.s32.totalorder %v520, %v2779
        %vm2802 = vcmp.eq.s32.totalorder %v521, %v2775
        %vm2803 = vcmp.eq.s32.totalorder %v521, %v2779
        %vm2804 = vcmp.eq.s32.totalorder %v522, %v2775
        %vm2805 = vcmp.eq.s32.totalorder %v522, %v2779
        %vm2806 = vcmp.eq.s32.totalorder %v523, %v2775
        %vm2807 = vcmp.eq.s32.totalorder %v523, %v2779
        %vm2808 = vcmp.eq.s32.totalorder %v524, %v2775
        %vm2809 = vcmp.eq.s32.totalorder %v524, %v2779
        %vm2810 = vcmp.eq.s32.totalorder %v525, %v2775
        %vm2811 = vcmp.eq.s32.totalorder %v525, %v2779
        %vm2812 = vcmp.eq.s32.totalorder %v526, %v2775
        %vm2813 = vcmp.eq.s32.totalorder %v526, %v2779
        %vm2814 = vcmp.eq.s32.totalorder %v527, %v2775
        %vm2815 = vcmp.eq.s32.totalorder %v527, %v2779
        %vm2816 = vcmp.eq.s32.totalorder %v528, %v2775
        %vm2817 = vcmp.eq.s32.totalorder %v528, %v2779
        %vm2818 = vcmp.eq.s32.totalorder %v529, %v2775
        %vm2819 = vcmp.eq.s32.totalorder %v529, %v2779
        %vm2820 = vcmp.eq.s32.totalorder %v530, %v2775
        %vm2821 = vcmp.eq.s32.totalorder %v530, %v2779
        %vm2822 = vcmp.eq.s32.totalorder %v531, %v2775
        %vm2823 = vcmp.eq.s32.totalorder %v531, %v2779
        %vm2824 = vcmp.eq.s32.totalorder %v532, %v2775
        %vm2825 = vcmp.eq.s32.totalorder %v532, %v2779
        %vm2826 = vcmp.eq.s32.totalorder %v533, %v2775
        %vm2827 = vcmp.eq.s32.totalorder %v533, %v2779
        %vm2828 = vcmp.eq.s32.totalorder %v534, %v2775
        %vm2829 = vcmp.eq.s32.totalorder %v534, %v2779
        %vm2830 = vcmp.eq.s32.totalorder %v535, %v2775
        %vm2831 = vcmp.eq.s32.totalorder %v535, %v2779
        %vm2832 = vcmp.eq.s32.totalorder %v536, %v2775
        %vm2833 = vcmp.eq.s32.totalorder %v536, %v2779
        %vm2834 = vcmp.eq.s32.totalorder %v537, %v2775
        %vm2835 = vcmp.eq.s32.totalorder %v537, %v2779
        %vm2836 = vcmp.eq.s32.totalorder %v538, %v2775
        %vm2837 = vcmp.eq.s32.totalorder %v538, %v2779
        %vm2838 = vcmp.eq.s32.totalorder %v539, %v2775
        %vm2839 = vcmp.eq.s32.totalorder %v539, %v2779
        %vm2840 = vcmp.eq.s32.totalorder %v540, %v2775
        %vm2841 = vcmp.eq.s32.totalorder %v540, %v2779
        %vm2842 = vcmp.eq.s32.totalorder %v541, %v2775
        %vm2843 = vcmp.eq.s32.totalorder %v541, %v2779
        %v2844 = vlaneseq
        %v2845 = vshrl.u32 %v2844, 7
        %v2846 = vsub.s32 2, %v2845
        %v2847 = vrot.slane %v501, %v2846
        %v2848 = vlaneseq
        %v2849 = vshrl.u32 %v2848, 7
        %v2850 = vsub.s32 2, %v2849
        %v2851 = vrot.slane %v502, %v2850
        %v2852 = vsel %vm2780, %v2847, 0.0
        %v2853 = vsel %vm2781, %v2851, 0.0
        %v2854 = vsel %vm2782, %v2847, 0.0
        %v2855 = vsel %vm2783, %v2851, 0.0
        %v2856 = vsel %vm2784, %v2847, 0.0
        %v2857 = vsel %vm2785, %v2851, 0.0
        %v2858 = vsel %vm2786, %v2847, 0.0
        %v2859 = vsel %vm2787, %v2851, 0.0
        %v2860 = vsel %vm2788, %v2847, 0.0
        %v2861 = vsel %vm2789, %v2851, 0.0
        %v2862 = vsel %vm2790, %v2847, 0.0
        %v2863 = vsel %vm2791, %v2851, 0.0
        %v2864 = vsel %vm2792, %v2847, 0.0
        %v2865 = vsel %vm2793, %v2851, 0.0
        %v2866 = vsel %vm2794, %v2847, 0.0
        %v2867 = vsel %vm2795, %v2851, 0.0
        %v2868 = vsel %vm2796, %v2847, 0.0
        %v2869 = vsel %vm2797, %v2851, 0.0
        %v2870 = vsel %vm2798, %v2847, 0.0
        %v2871 = vsel %vm2799, %v2851, 0.0
        %v2872 = vsel %vm2800, %v2847, 0.0
        %v2873 = vsel %vm2801, %v2851, 0.0
        %v2874 = vsel %vm2802, %v2847, 0.0
        %v2875 = vsel %vm2803, %v2851, 0.0
        %v2876 = vsel %vm2804, %v2847, 0.0
        %v2877 = vsel %vm2805, %v2851, 0.0
        %v2878 = vsel %vm2806, %v2847, 0.0
        %v2879 = vsel %vm2807, %v2851, 0.0
        %v2880 = vsel %vm2808, %v2847, 0.0
        %v2881 = vsel %vm2809, %v2851, 0.0
        %v2882 = vsel %vm2810, %v2847, 0.0
        %v2883 = vsel %vm2811, %v2851, 0.0
        %v2884 = vsel %vm2812, %v2847, 0.0
        %v2885 = vsel %vm2813, %v2851, 0.0
        %v2886 = vsel %vm2814, %v2847, 0.0
        %v2887 = vsel %vm2815, %v2851, 0.0
        %v2888 = vsel %vm2816, %v2847, 0.0
        %v2889 = vsel %vm2817, %v2851, 0.0
        %v2890 = vsel %vm2818, %v2847, 0.0
        %v2891 = vsel %vm2819, %v2851, 0.0
        %v2892 = vsel %vm2820, %v2847, 0.0
        %v2893 = vsel %vm2821, %v2851, 0.0
        %v2894 = vsel %vm2822, %v2847, 0.0
        %v2895 = vsel %vm2823, %v2851, 0.0
        %v2896 = vsel %vm2824, %v2847, 0.0
        %v2897 = vsel %vm2825, %v2851, 0.0
        %v2898 = vsel %vm2826, %v2847, 0.0
        %v2899 = vsel %vm2827, %v2851, 0.0
        %v2900 = vsel %vm2828, %v2847, 0.0
        %v2901 = vsel %vm2829, %v2851, 0.0
        %v2902 = vsel %vm2830, %v2847, 0.0
        %v2903 = vsel %vm2831, %v2851, 0.0
        %v2904 = vsel %vm2832, %v2847, 0.0
        %v2905 = vsel %vm2833, %v2851, 0.0
        %v2906 = vsel %vm2834, %v2847, 0.0
        %v2907 = vsel %vm2835, %v2851, 0.0
        %v2908 = vsel %vm2836, %v2847, 0.0
        %v2909 = vsel %vm2837, %v2851, 0.0
        %v2910 = vsel %vm2838, %v2847, 0.0
        %v2911 = vsel %vm2839, %v2851, 0.0
        %v2912 = vsel %vm2840, %v2847, 0.0
        %v2913 = vsel %vm2841, %v2851, 0.0
        %v2914 = vsel %vm2842, %v2847, 0.0
        %v2915 = vsel %vm2843, %v2851, 0.0
        %v2916 = vadd.f32 %v2708, %v2852
        %v2917 = vadd.f32 %v2709, %v2853
        %v2918 = vadd.f32 %v2710, %v2854
        %v2919 = vadd.f32 %v2711, %v2855
        %v2920 = vadd.f32 %v2712, %v2856
        %v2921 = vadd.f32 %v2713, %v2857
        %v2922 = vadd.f32 %v2714, %v2858
        %v2923 = vadd.f32 %v2715, %v2859
        %v2924 = vadd.f32 %v2716, %v2860
        %v2925 = vadd.f32 %v2717, %v2861
        %v2926 = vadd.f32 %v2718, %v2862
        %v2927 = vadd.f32 %v2719, %v2863
        %v2928 = vadd.f32 %v2720, %v2864
        %v2929 = vadd.f32 %v2721, %v2865
        %v2930 = vadd.f32 %v2722, %v2866
        %v2931 = vadd.f32 %v2723, %v2867
        %v2932 = vadd.f32 %v2724, %v2868
        %v2933 = vadd.f32 %v2725, %v2869
        %v2934 = vadd.f32 %v2726, %v2870
        %v2935 = vadd.f32 %v2727, %v2871
        %v2936 = vadd.f32 %v2728, %v2872
        %v2937 = vadd.f32 %v2729, %v2873
        %v2938 = vadd.f32 %v2730, %v2874
        %v2939 = vadd.f32 %v2731, %v2875
        %v2940 = vadd.f32 %v2732, %v2876
        %v2941 = vadd.f32 %v2733, %v2877
        %v2942 = vadd.f32 %v2734, %v2878
        %v2943 = vadd.f32 %v2735, %v2879
        %v2944 = vadd.f32 %v2736, %v2880
        %v2945 = vadd.f32 %v2737, %v2881
        %v2946 = vadd.f32 %v2738, %v2882
        %v2947 = vadd.f32 %v2739, %v2883
        %v2948 = vadd.f32 %v2740, %v2884
        %v2949 = vadd.f32 %v2741, %v2885
        %v2950 = vadd.f32 %v2742, %v2886
        %v2951 = vadd.f32 %v2743, %v2887
        %v2952 = vadd.f32 %v2744, %v2888
        %v2953 = vadd.f32 %v2745, %v2889
        %v2954 = vadd.f32 %v2746, %v2890
        %v2955 = vadd.f32 %v2747, %v2891
        %v2956 = vadd.f32 %v2748, %v2892
        %v2957 = vadd.f32 %v2749, %v2893
        %v2958 = vadd.f32 %v2750, %v2894
        %v2959 = vadd.f32 %v2751, %v2895
        %v2960 = vadd.f32 %v2752, %v2896
        %v2961 = vadd.f32 %v2753, %v2897
        %v2962 = vadd.f32 %v2754, %v2898
        %v2963 = vadd.f32 %v2755, %v2899
        %v2964 = vadd.f32 %v2756, %v2900
        %v2965 = vadd.f32 %v2757, %v2901
        %v2966 = vadd.f32 %v2758, %v2902
        %v2967 = vadd.f32 %v2759, %v2903
        %v2968 = vadd.f32 %v2760, %v2904
        %v2969 = vadd.f32 %v2761, %v2905
        %v2970 = vadd.f32 %v2762, %v2906
        %v2971 = vadd.f32 %v2763, %v2907
        %v2972 = vadd.f32 %v2764, %v2908
        %v2973 = vadd.f32 %v2765, %v2909
        %v2974 = vadd.f32 %v2766, %v2910
        %v2975 = vadd.f32 %v2767, %v2911
        %v2976 = vadd.f32 %v2768, %v2912
        %v2977 = vadd.f32 %v2769, %v2913
        %v2978 = vadd.f32 %v2770, %v2914
        %v2979 = vadd.f32 %v2771, %v2915
        %v2980 = vlaneseq
        %v2981 = vshrl.u32 %v2980, 7
        %v2982 = vsub.s32 2, %v2981
        %v2983 = vrot.slane %v489, %v2982
        %v2984 = vlaneseq
        %v2985 = vshrl.u32 %v2984, 7
        %v2986 = vsub.s32 2, %v2985
        %v2987 = vrot.slane %v490, %v2986
        %vm2988 = vcmp.eq.s32.totalorder %v510, %v2983
        %vm2989 = vcmp.eq.s32.totalorder %v510, %v2987
        %vm2990 = vcmp.eq.s32.totalorder %v511, %v2983
        %vm2991 = vcmp.eq.s32.totalorder %v511, %v2987
        %vm2992 = vcmp.eq.s32.totalorder %v512, %v2983
        %vm2993 = vcmp.eq.s32.totalorder %v512, %v2987
        %vm2994 = vcmp.eq.s32.totalorder %v513, %v2983
        %vm2995 = vcmp.eq.s32.totalorder %v513, %v2987
        %vm2996 = vcmp.eq.s32.totalorder %v514, %v2983
        %vm2997 = vcmp.eq.s32.totalorder %v514, %v2987
        %vm2998 = vcmp.eq.s32.totalorder %v515, %v2983
        %vm2999 = vcmp.eq.s32.totalorder %v515, %v2987
        %vm3000 = vcmp.eq.s32.totalorder %v516, %v2983
        %vm3001 = vcmp.eq.s32.totalorder %v516, %v2987
        %vm3002 = vcmp.eq.s32.totalorder %v517, %v2983
        %vm3003 = vcmp.eq.s32.totalorder %v517, %v2987
        %vm3004 = vcmp.eq.s32.totalorder %v518, %v2983
        %vm3005 = vcmp.eq.s32.totalorder %v518, %v2987
        %vm3006 = vcmp.eq.s32.totalorder %v519, %v2983
        %vm3007 = vcmp.eq.s32.totalorder %v519, %v2987
        %vm3008 = vcmp.eq.s32.totalorder %v520, %v2983
        %vm3009 = vcmp.eq.s32.totalorder %v520, %v2987
        %vm3010 = vcmp.eq.s32.totalorder %v521, %v2983
        %vm3011 = vcmp.eq.s32.totalorder %v521, %v2987
        %vm3012 = vcmp.eq.s32.totalorder %v522, %v2983
        %vm3013 = vcmp.eq.s32.totalorder %v522, %v2987
        %vm3014 = vcmp.eq.s32.totalorder %v523, %v2983
        %vm3015 = vcmp.eq.s32.totalorder %v523, %v2987
        %vm3016 = vcmp.eq.s32.totalorder %v524, %v2983
        %vm3017 = vcmp.eq.s32.totalorder %v524, %v2987
        %vm3018 = vcmp.eq.s32.totalorder %v525, %v2983
        %vm3019 = vcmp.eq.s32.totalorder %v525, %v2987
        %vm3020 = vcmp.eq.s32.totalorder %v526, %v2983
        %vm3021 = vcmp.eq.s32.totalorder %v526, %v2987
        %vm3022 = vcmp.eq.s32.totalorder %v527, %v2983
        %vm3023 = vcmp.eq.s32.totalorder %v527, %v2987
        %vm3024 = vcmp.eq.s32.totalorder %v528, %v2983
        %vm3025 = vcmp.eq.s32.totalorder %v528, %v2987
        %vm3026 = vcmp.eq.s32.totalorder %v529, %v2983
        %vm3027 = vcmp.eq.s32.totalorder %v529, %v2987
        %vm3028 = vcmp.eq.s32.totalorder %v530, %v2983
        %vm3029 = vcmp.eq.s32.totalorder %v530, %v2987
        %vm3030 = vcmp.eq.s32.totalorder %v531, %v2983
        %vm3031 = vcmp.eq.s32.totalorder %v531, %v2987
        %vm3032 = vcmp.eq.s32.totalorder %v532, %v2983
        %vm3033 = vcmp.eq.s32.totalorder %v532, %v2987
        %vm3034 = vcmp.eq.s32.totalorder %v533, %v2983
        %vm3035 = vcmp.eq.s32.totalorder %v533, %v2987
        %vm3036 = vcmp.eq.s32.totalorder %v534, %v2983
        %vm3037 = vcmp.eq.s32.totalorder %v534, %v2987
        %vm3038 = vcmp.eq.s32.totalorder %v535, %v2983
        %vm3039 = vcmp.eq.s32.totalorder %v535, %v2987
        %vm3040 = vcmp.eq.s32.totalorder %v536, %v2983
        %vm3041 = vcmp.eq.s32.totalorder %v536, %v2987
        %vm3042 = vcmp.eq.s32.totalorder %v537, %v2983
        %vm3043 = vcmp.eq.s32.totalorder %v537, %v2987
        %vm3044 = vcmp.eq.s32.totalorder %v538, %v2983
        %vm3045 = vcmp.eq.s32.totalorder %v538, %v2987
        %vm3046 = vcmp.eq.s32.totalorder %v539, %v2983
        %vm3047 = vcmp.eq.s32.totalorder %v539, %v2987
        %vm3048 = vcmp.eq.s32.totalorder %v540, %v2983
        %vm3049 = vcmp.eq.s32.totalorder %v540, %v2987
        %vm3050 = vcmp.eq.s32.totalorder %v541, %v2983
        %vm3051 = vcmp.eq.s32.totalorder %v541, %v2987
        %v3052 = vlaneseq
        %v3053 = vshrl.u32 %v3052, 7
        %v3054 = vsub.s32 2, %v3053
        %v3055 = vrot.slane %v505, %v3054
        %v3056 = vlaneseq
        %v3057 = vshrl.u32 %v3056, 7
        %v3058 = vsub.s32 2, %v3057
        %v3059 = vrot.slane %v506, %v3058
        %v3060 = vsel %vm2988, %v3055, 0.0
        %v3061 = vsel %vm2989, %v3059, 0.0
        %v3062 = vsel %vm2990, %v3055, 0.0
        %v3063 = vsel %vm2991, %v3059, 0.0
        %v3064 = vsel %vm2992, %v3055, 0.0
        %v3065 = vsel %vm2993, %v3059, 0.0
        %v3066 = vsel %vm2994, %v3055, 0.0
        %v3067 = vsel %vm2995, %v3059, 0.0
        %v3068 = vsel %vm2996, %v3055, 0.0
        %v3069 = vsel %vm2997, %v3059, 0.0
        %v3070 = vsel %vm2998, %v3055, 0.0
        %v3071 = vsel %vm2999, %v3059, 0.0
        %v3072 = vsel %vm3000, %v3055, 0.0
        %v3073 = vsel %vm3001, %v3059, 0.0
        %v3074 = vsel %vm3002, %v3055, 0.0
        %v3075 = vsel %vm3003, %v3059, 0.0
        %v3076 = vsel %vm3004, %v3055, 0.0
        %v3077 = vsel %vm3005, %v3059, 0.0
        %v3078 = vsel %vm3006, %v3055, 0.0
        %v3079 = vsel %vm3007, %v3059, 0.0
        %v3080 = vsel %vm3008, %v3055, 0.0
        %v3081 = vsel %vm3009, %v3059, 0.0
        %v3082 = vsel %vm3010, %v3055, 0.0
        %v3083 = vsel %vm3011, %v3059, 0.0
        %v3084 = vsel %vm3012, %v3055, 0.0
        %v3085 = vsel %vm3013, %v3059, 0.0
        %v3086 = vsel %vm3014, %v3055, 0.0
        %v3087 = vsel %vm3015, %v3059, 0.0
        %v3088 = vsel %vm3016, %v3055, 0.0
        %v3089 = vsel %vm3017, %v3059, 0.0
        %v3090 = vsel %vm3018, %v3055, 0.0
        %v3091 = vsel %vm3019, %v3059, 0.0
        %v3092 = vsel %vm3020, %v3055, 0.0
        %v3093 = vsel %vm3021, %v3059, 0.0
        %v3094 = vsel %vm3022, %v3055, 0.0
        %v3095 = vsel %vm3023, %v3059, 0.0
        %v3096 = vsel %vm3024, %v3055, 0.0
        %v3097 = vsel %vm3025, %v3059, 0.0
        %v3098 = vsel %vm3026, %v3055, 0.0
        %v3099 = vsel %vm3027, %v3059, 0.0
        %v3100 = vsel %vm3028, %v3055, 0.0
        %v3101 = vsel %vm3029, %v3059, 0.0
        %v3102 = vsel %vm3030, %v3055, 0.0
        %v3103 = vsel %vm3031, %v3059, 0.0
        %v3104 = vsel %vm3032, %v3055, 0.0
        %v3105 = vsel %vm3033, %v3059, 0.0
        %v3106 = vsel %vm3034, %v3055, 0.0
        %v3107 = vsel %vm3035, %v3059, 0.0
        %v3108 = vsel %vm3036, %v3055, 0.0
        %v3109 = vsel %vm3037, %v3059, 0.0
        %v3110 = vsel %vm3038, %v3055, 0.0
        %v3111 = vsel %vm3039, %v3059, 0.0
        %v3112 = vsel %vm3040, %v3055, 0.0
        %v3113 = vsel %vm3041, %v3059, 0.0
        %v3114 = vsel %vm3042, %v3055, 0.0
        %v3115 = vsel %vm3043, %v3059, 0.0
        %v3116 = vsel %vm3044, %v3055, 0.0
        %v3117 = vsel %vm3045, %v3059, 0.0
        %v3118 = vsel %vm3046, %v3055, 0.0
        %v3119 = vsel %vm3047, %v3059, 0.0
        %v3120 = vsel %vm3048, %v3055, 0.0
        %v3121 = vsel %vm3049, %v3059, 0.0
        %v3122 = vsel %vm3050, %v3055, 0.0
        %v3123 = vsel %vm3051, %v3059, 0.0
        %v3124 = vadd.f32 %v2916, %v3060
        %v3125 = vadd.f32 %v2917, %v3061
        %v3126 = vadd.f32 %v2918, %v3062
        %v3127 = vadd.f32 %v2919, %v3063
        %v3128 = vadd.f32 %v2920, %v3064
        %v3129 = vadd.f32 %v2921, %v3065
        %v3130 = vadd.f32 %v2922, %v3066
        %v3131 = vadd.f32 %v2923, %v3067
        %v3132 = vadd.f32 %v2924, %v3068
        %v3133 = vadd.f32 %v2925, %v3069
        %v3134 = vadd.f32 %v2926, %v3070
        %v3135 = vadd.f32 %v2927, %v3071
        %v3136 = vadd.f32 %v2928, %v3072
        %v3137 = vadd.f32 %v2929, %v3073
        %v3138 = vadd.f32 %v2930, %v3074
        %v3139 = vadd.f32 %v2931, %v3075
        %v3140 = vadd.f32 %v2932, %v3076
        %v3141 = vadd.f32 %v2933, %v3077
        %v3142 = vadd.f32 %v2934, %v3078
        %v3143 = vadd.f32 %v2935, %v3079
        %v3144 = vadd.f32 %v2936, %v3080
        %v3145 = vadd.f32 %v2937, %v3081
        %v3146 = vadd.f32 %v2938, %v3082
        %v3147 = vadd.f32 %v2939, %v3083
        %v3148 = vadd.f32 %v2940, %v3084
        %v3149 = vadd.f32 %v2941, %v3085
        %v3150 = vadd.f32 %v2942, %v3086
        %v3151 = vadd.f32 %v2943, %v3087
        %v3152 = vadd.f32 %v2944, %v3088
        %v3153 = vadd.f32 %v2945, %v3089
        %v3154 = vadd.f32 %v2946, %v3090
        %v3155 = vadd.f32 %v2947, %v3091
        %v3156 = vadd.f32 %v2948, %v3092
        %v3157 = vadd.f32 %v2949, %v3093
        %v3158 = vadd.f32 %v2950, %v3094
        %v3159 = vadd.f32 %v2951, %v3095
        %v3160 = vadd.f32 %v2952, %v3096
        %v3161 = vadd.f32 %v2953, %v3097
        %v3162 = vadd.f32 %v2954, %v3098
        %v3163 = vadd.f32 %v2955, %v3099
        %v3164 = vadd.f32 %v2956, %v3100
        %v3165 = vadd.f32 %v2957, %v3101
        %v3166 = vadd.f32 %v2958, %v3102
        %v3167 = vadd.f32 %v2959, %v3103
        %v3168 = vadd.f32 %v2960, %v3104
        %v3169 = vadd.f32 %v2961, %v3105
        %v3170 = vadd.f32 %v2962, %v3106
        %v3171 = vadd.f32 %v2963, %v3107
        %v3172 = vadd.f32 %v2964, %v3108
        %v3173 = vadd.f32 %v2965, %v3109
        %v3174 = vadd.f32 %v2966, %v3110
        %v3175 = vadd.f32 %v2967, %v3111
        %v3176 = vadd.f32 %v2968, %v3112
        %v3177 = vadd.f32 %v2969, %v3113
        %v3178 = vadd.f32 %v2970, %v3114
        %v3179 = vadd.f32 %v2971, %v3115
        %v3180 = vadd.f32 %v2972, %v3116
        %v3181 = vadd.f32 %v2973, %v3117
        %v3182 = vadd.f32 %v2974, %v3118
        %v3183 = vadd.f32 %v2975, %v3119
        %v3184 = vadd.f32 %v2976, %v3120
        %v3185 = vadd.f32 %v2977, %v3121
        %v3186 = vadd.f32 %v2978, %v3122
        %v3187 = vadd.f32 %v2979, %v3123
        %v3188 = vpack.c.bf16 %v441, %v441
        %v3189 = vpack.c.bf16 %v443, %v443
        %v3190 = vpack.c.bf16 %v3126, %v3124
        %v3191 = vpack.c.bf16 %v3127, %v3125
        %v3192 = vpack.c.bf16 %v3130, %v3128
        %v3193 = vpack.c.bf16 %v3131, %v3129
        %v3194 = vpack.c.bf16 %v3134, %v3132
        %v3195 = vpack.c.bf16 %v3135, %v3133
        %v3196 = vpack.c.bf16 %v3138, %v3136
        %v3197 = vpack.c.bf16 %v3139, %v3137
        %v3198 = vpack.c.bf16 %v3142, %v3140
        %v3199 = vpack.c.bf16 %v3143, %v3141
        %v3200 = vpack.c.bf16 %v3146, %v3144
        %v3201 = vpack.c.bf16 %v3147, %v3145
        %v3202 = vpack.c.bf16 %v3150, %v3148
        %v3203 = vpack.c.bf16 %v3151, %v3149
        %v3204 = vpack.c.bf16 %v3154, %v3152
        %v3205 = vpack.c.bf16 %v3155, %v3153
        %v3206 = vpack.c.bf16 %v3158, %v3156
        %v3207 = vpack.c.bf16 %v3159, %v3157
        %v3208 = vpack.c.bf16 %v3162, %v3160
        %v3209 = vpack.c.bf16 %v3163, %v3161
        %v3210 = vpack.c.bf16 %v3166, %v3164
        %v3211 = vpack.c.bf16 %v3167, %v3165
        %v3212 = vpack.c.bf16 %v3170, %v3168
        %v3213 = vpack.c.bf16 %v3171, %v3169
        %v3214 = vpack.c.bf16 %v3174, %v3172
        %v3215 = vpack.c.bf16 %v3175, %v3173
        %v3216 = vpack.c.bf16 %v3178, %v3176
        %v3217 = vpack.c.bf16 %v3179, %v3177
        %v3218 = vpack.c.bf16 %v3182, %v3180
        %v3219 = vpack.c.bf16 %v3183, %v3181
        %v3220 = vpack.c.bf16 %v3186, %v3184
        %v3221 = vpack.c.bf16 %v3187, %v3185
        %3222 = vmatprep.subr.bf16.mxu0 %v3191
        %3223 = vmatpush1.bf16.msra.mxu0 %v3190
        %3224 = vmatprep.subr.bf16.mxu0 %v3193
        %3225 = vmatpush1.bf16.msra.mxu0 %v3192
        %3226 = vmatprep.subr.bf16.mxu0 %v3195
        %3227 = vmatpush1.bf16.msra.mxu0 %v3194
        %3228 = vmatprep.subr.bf16.mxu0 %v3197
        %3229 = vmatpush1.bf16.msra.mxu0 %v3196
        %3230 = vmatprep.subr.bf16.mxu0 %v3199
        %3231 = vmatpush1.bf16.msra.mxu0 %v3198
        %3232 = vmatprep.subr.bf16.mxu0 %v3201
        %3233 = vmatpush1.bf16.msra.mxu0 %v3200
        %3234 = vmatprep.subr.bf16.mxu0 %v3203
        %3235 = vmatpush1.bf16.msra.mxu0 %v3202
        %3236 = vmatprep.subr.bf16.mxu0 %v3205
        %3237 = vmatpush1.bf16.msra.mxu0 %v3204
        %3238 = vmatprep.subr.bf16.mxu0 %v3207
        %3239 = vmatpush1.bf16.msra.mxu0 %v3206
        %3240 = vmatprep.subr.bf16.mxu0 %v3209
        %3241 = vmatpush1.bf16.msra.mxu0 %v3208
        %3242 = vmatprep.subr.bf16.mxu0 %v3211
        %3243 = vmatpush1.bf16.msra.mxu0 %v3210
        %3244 = vmatprep.subr.bf16.mxu0 %v3213
        %3245 = vmatpush1.bf16.msra.mxu0 %v3212
        %3246 = vmatprep.subr.bf16.mxu0 %v3215
        %3247 = vmatpush1.bf16.msra.mxu0 %v3214
        %3248 = vmatprep.subr.bf16.mxu0 %v3217
        %3249 = vmatpush1.bf16.msra.mxu0 %v3216
        %3250 = vmatprep.subr.bf16.mxu0 %v3219
        %3251 = vmatpush1.bf16.msra.mxu0 %v3218
        %3252 = vmatprep.subr.bf16.mxu0 %v3221
        %3253 = vmatpush1.bf16.msra.mxu0 %v3220
        %3254 = vmatprep.mubr.bf16.mxu0 %v3189
        %3255 = vmatmul.mubr.bf16.gmra.mrb[0].mxu0 %v3188
        %v3256 = vpop.f32.mrb[0].mxu0
        %v3257 = vadd.f32 0.0, %v3256
        %v3258 = vpop.f32.mrb[0].mxu0
        %v3259 = vadd.f32 0.0, %v3258
        %v3260 = vpop.f32.mrb[0].mxu0
        %v3261 = vpop.f32.mrb[0].mxu0
        %3262 = vdwg.mxu0
        %v3263 = vadd.f32 %v2350, %v3257
        %v3264 = vadd.f32 %v2352, %v3259
        %v3265 = vlaneseq
        %v3266 = vshrl.u32 %v3265, 7
        %v3267 = vsub.s32 3, %v3266
        %v3268 = vrot.slane %v477, %v3267
        %v3269 = vlaneseq
        %v3270 = vshrl.u32 %v3269, 7
        %v3271 = vsub.s32 3, %v3270
        %v3272 = vrot.slane %v478, %v3271
        %vm3273 = vcmp.eq.s32.totalorder %v510, %v3268
        %vm3274 = vcmp.eq.s32.totalorder %v510, %v3272
        %vm3275 = vcmp.eq.s32.totalorder %v511, %v3268
        %vm3276 = vcmp.eq.s32.totalorder %v511, %v3272
        %vm3277 = vcmp.eq.s32.totalorder %v512, %v3268
        %vm3278 = vcmp.eq.s32.totalorder %v512, %v3272
        %vm3279 = vcmp.eq.s32.totalorder %v513, %v3268
        %vm3280 = vcmp.eq.s32.totalorder %v513, %v3272
        %vm3281 = vcmp.eq.s32.totalorder %v514, %v3268
        %vm3282 = vcmp.eq.s32.totalorder %v514, %v3272
        %vm3283 = vcmp.eq.s32.totalorder %v515, %v3268
        %vm3284 = vcmp.eq.s32.totalorder %v515, %v3272
        %vm3285 = vcmp.eq.s32.totalorder %v516, %v3268
        %vm3286 = vcmp.eq.s32.totalorder %v516, %v3272
        %vm3287 = vcmp.eq.s32.totalorder %v517, %v3268
        %vm3288 = vcmp.eq.s32.totalorder %v517, %v3272
        %vm3289 = vcmp.eq.s32.totalorder %v518, %v3268
        %vm3290 = vcmp.eq.s32.totalorder %v518, %v3272
        %vm3291 = vcmp.eq.s32.totalorder %v519, %v3268
        %vm3292 = vcmp.eq.s32.totalorder %v519, %v3272
        %vm3293 = vcmp.eq.s32.totalorder %v520, %v3268
        %vm3294 = vcmp.eq.s32.totalorder %v520, %v3272
        %vm3295 = vcmp.eq.s32.totalorder %v521, %v3268
        %vm3296 = vcmp.eq.s32.totalorder %v521, %v3272
        %vm3297 = vcmp.eq.s32.totalorder %v522, %v3268
        %vm3298 = vcmp.eq.s32.totalorder %v522, %v3272
        %vm3299 = vcmp.eq.s32.totalorder %v523, %v3268
        %vm3300 = vcmp.eq.s32.totalorder %v523, %v3272
        %vm3301 = vcmp.eq.s32.totalorder %v524, %v3268
        %vm3302 = vcmp.eq.s32.totalorder %v524, %v3272
        %vm3303 = vcmp.eq.s32.totalorder %v525, %v3268
        %vm3304 = vcmp.eq.s32.totalorder %v525, %v3272
        %vm3305 = vcmp.eq.s32.totalorder %v526, %v3268
        %vm3306 = vcmp.eq.s32.totalorder %v526, %v3272
        %vm3307 = vcmp.eq.s32.totalorder %v527, %v3268
        %vm3308 = vcmp.eq.s32.totalorder %v527, %v3272
        %vm3309 = vcmp.eq.s32.totalorder %v528, %v3268
        %vm3310 = vcmp.eq.s32.totalorder %v528, %v3272
        %vm3311 = vcmp.eq.s32.totalorder %v529, %v3268
        %vm3312 = vcmp.eq.s32.totalorder %v529, %v3272
        %vm3313 = vcmp.eq.s32.totalorder %v530, %v3268
        %vm3314 = vcmp.eq.s32.totalorder %v530, %v3272
        %vm3315 = vcmp.eq.s32.totalorder %v531, %v3268
        %vm3316 = vcmp.eq.s32.totalorder %v531, %v3272
        %vm3317 = vcmp.eq.s32.totalorder %v532, %v3268
        %vm3318 = vcmp.eq.s32.totalorder %v532, %v3272
        %vm3319 = vcmp.eq.s32.totalorder %v533, %v3268
        %vm3320 = vcmp.eq.s32.totalorder %v533, %v3272
        %vm3321 = vcmp.eq.s32.totalorder %v534, %v3268
        %vm3322 = vcmp.eq.s32.totalorder %v534, %v3272
        %vm3323 = vcmp.eq.s32.totalorder %v535, %v3268
        %vm3324 = vcmp.eq.s32.totalorder %v535, %v3272
        %vm3325 = vcmp.eq.s32.totalorder %v536, %v3268
        %vm3326 = vcmp.eq.s32.totalorder %v536, %v3272
        %vm3327 = vcmp.eq.s32.totalorder %v537, %v3268
        %vm3328 = vcmp.eq.s32.totalorder %v537, %v3272
        %vm3329 = vcmp.eq.s32.totalorder %v538, %v3268
        %vm3330 = vcmp.eq.s32.totalorder %v538, %v3272
        %vm3331 = vcmp.eq.s32.totalorder %v539, %v3268
        %vm3332 = vcmp.eq.s32.totalorder %v539, %v3272
        %vm3333 = vcmp.eq.s32.totalorder %v540, %v3268
        %vm3334 = vcmp.eq.s32.totalorder %v540, %v3272
        %vm3335 = vcmp.eq.s32.totalorder %v541, %v3268
        %vm3336 = vcmp.eq.s32.totalorder %v541, %v3272
        %v3337 = vlaneseq
        %v3338 = vshrl.u32 %v3337, 7
        %v3339 = vsub.s32 3, %v3338
        %v3340 = vrot.slane %v493, %v3339
        %v3341 = vlaneseq
        %v3342 = vshrl.u32 %v3341, 7
        %v3343 = vsub.s32 3, %v3342
        %v3344 = vrot.slane %v494, %v3343
        %v3345 = vsel %vm3273, %v3340, 0.0
        %v3346 = vsel %vm3274, %v3344, 0.0
        %v3347 = vsel %vm3275, %v3340, 0.0
        %v3348 = vsel %vm3276, %v3344, 0.0
        %v3349 = vsel %vm3277, %v3340, 0.0
        %v3350 = vsel %vm3278, %v3344, 0.0
        %v3351 = vsel %vm3279, %v3340, 0.0
        %v3352 = vsel %vm3280, %v3344, 0.0
        %v3353 = vsel %vm3281, %v3340, 0.0
        %v3354 = vsel %vm3282, %v3344, 0.0
        %v3355 = vsel %vm3283, %v3340, 0.0
        %v3356 = vsel %vm3284, %v3344, 0.0
        %v3357 = vsel %vm3285, %v3340, 0.0
        %v3358 = vsel %vm3286, %v3344, 0.0
        %v3359 = vsel %vm3287, %v3340, 0.0
        %v3360 = vsel %vm3288, %v3344, 0.0
        %v3361 = vsel %vm3289, %v3340, 0.0
        %v3362 = vsel %vm3290, %v3344, 0.0
        %v3363 = vsel %vm3291, %v3340, 0.0
        %v3364 = vsel %vm3292, %v3344, 0.0
        %v3365 = vsel %vm3293, %v3340, 0.0
        %v3366 = vsel %vm3294, %v3344, 0.0
        %v3367 = vsel %vm3295, %v3340, 0.0
        %v3368 = vsel %vm3296, %v3344, 0.0
        %v3369 = vsel %vm3297, %v3340, 0.0
        %v3370 = vsel %vm3298, %v3344, 0.0
        %v3371 = vsel %vm3299, %v3340, 0.0
        %v3372 = vsel %vm3300, %v3344, 0.0
        %v3373 = vsel %vm3301, %v3340, 0.0
        %v3374 = vsel %vm3302, %v3344, 0.0
        %v3375 = vsel %vm3303, %v3340, 0.0
        %v3376 = vsel %vm3304, %v3344, 0.0
        %v3377 = vsel %vm3305, %v3340, 0.0
        %v3378 = vsel %vm3306, %v3344, 0.0
        %v3379 = vsel %vm3307, %v3340, 0.0
        %v3380 = vsel %vm3308, %v3344, 0.0
        %v3381 = vsel %vm3309, %v3340, 0.0
        %v3382 = vsel %vm3310, %v3344, 0.0
        %v3383 = vsel %vm3311, %v3340, 0.0
        %v3384 = vsel %vm3312, %v3344, 0.0
        %v3385 = vsel %vm3313, %v3340, 0.0
        %v3386 = vsel %vm3314, %v3344, 0.0
        %v3387 = vsel %vm3315, %v3340, 0.0
        %v3388 = vsel %vm3316, %v3344, 0.0
        %v3389 = vsel %vm3317, %v3340, 0.0
        %v3390 = vsel %vm3318, %v3344, 0.0
        %v3391 = vsel %vm3319, %v3340, 0.0
        %v3392 = vsel %vm3320, %v3344, 0.0
        %v3393 = vsel %vm3321, %v3340, 0.0
        %v3394 = vsel %vm3322, %v3344, 0.0
        %v3395 = vsel %vm3323, %v3340, 0.0
        %v3396 = vsel %vm3324, %v3344, 0.0
        %v3397 = vsel %vm3325, %v3340, 0.0
        %v3398 = vsel %vm3326, %v3344, 0.0
        %v3399 = vsel %vm3327, %v3340, 0.0
        %v3400 = vsel %vm3328, %v3344, 0.0
        %v3401 = vsel %vm3329, %v3340, 0.0
        %v3402 = vsel %vm3330, %v3344, 0.0
        %v3403 = vsel %vm3331, %v3340, 0.0
        %v3404 = vsel %vm3332, %v3344, 0.0
        %v3405 = vsel %vm3333, %v3340, 0.0
        %v3406 = vsel %vm3334, %v3344, 0.0
        %v3407 = vsel %vm3335, %v3340, 0.0
        %v3408 = vsel %vm3336, %v3344, 0.0
        %v3409 = vadd.f32 %v3345, 0.0
        %v3410 = vadd.f32 %v3346, 0.0
        %v3411 = vadd.f32 %v3347, 0.0
        %v3412 = vadd.f32 %v3348, 0.0
        %v3413 = vadd.f32 %v3349, 0.0
        %v3414 = vadd.f32 %v3350, 0.0
        %v3415 = vadd.f32 %v3351, 0.0
        %v3416 = vadd.f32 %v3352, 0.0
        %v3417 = vadd.f32 %v3353, 0.0
        %v3418 = vadd.f32 %v3354, 0.0
        %v3419 = vadd.f32 %v3355, 0.0
        %v3420 = vadd.f32 %v3356, 0.0
        %v3421 = vadd.f32 %v3357, 0.0
        %v3422 = vadd.f32 %v3358, 0.0
        %v3423 = vadd.f32 %v3359, 0.0
        %v3424 = vadd.f32 %v3360, 0.0
        %v3425 = vadd.f32 %v3361, 0.0
        %v3426 = vadd.f32 %v3362, 0.0
        %v3427 = vadd.f32 %v3363, 0.0
        %v3428 = vadd.f32 %v3364, 0.0
        %v3429 = vadd.f32 %v3365, 0.0
        %v3430 = vadd.f32 %v3366, 0.0
        %v3431 = vadd.f32 %v3367, 0.0
        %v3432 = vadd.f32 %v3368, 0.0
        %v3433 = vadd.f32 %v3369, 0.0
        %v3434 = vadd.f32 %v3370, 0.0
        %v3435 = vadd.f32 %v3371, 0.0
        %v3436 = vadd.f32 %v3372, 0.0
        %v3437 = vadd.f32 %v3373, 0.0
        %v3438 = vadd.f32 %v3374, 0.0
        %v3439 = vadd.f32 %v3375, 0.0
        %v3440 = vadd.f32 %v3376, 0.0
        %v3441 = vadd.f32 %v3377, 0.0
        %v3442 = vadd.f32 %v3378, 0.0
        %v3443 = vadd.f32 %v3379, 0.0
        %v3444 = vadd.f32 %v3380, 0.0
        %v3445 = vadd.f32 %v3381, 0.0
        %v3446 = vadd.f32 %v3382, 0.0
        %v3447 = vadd.f32 %v3383, 0.0
        %v3448 = vadd.f32 %v3384, 0.0
        %v3449 = vadd.f32 %v3385, 0.0
        %v3450 = vadd.f32 %v3386, 0.0
        %v3451 = vadd.f32 %v3387, 0.0
        %v3452 = vadd.f32 %v3388, 0.0
        %v3453 = vadd.f32 %v3389, 0.0
        %v3454 = vadd.f32 %v3390, 0.0
        %v3455 = vadd.f32 %v3391, 0.0
        %v3456 = vadd.f32 %v3392, 0.0
        %v3457 = vadd.f32 %v3393, 0.0
        %v3458 = vadd.f32 %v3394, 0.0
        %v3459 = vadd.f32 %v3395, 0.0
        %v3460 = vadd.f32 %v3396, 0.0
        %v3461 = vadd.f32 %v3397, 0.0
        %v3462 = vadd.f32 %v3398, 0.0
        %v3463 = vadd.f32 %v3399, 0.0
        %v3464 = vadd.f32 %v3400, 0.0
        %v3465 = vadd.f32 %v3401, 0.0
        %v3466 = vadd.f32 %v3402, 0.0
        %v3467 = vadd.f32 %v3403, 0.0
        %v3468 = vadd.f32 %v3404, 0.0
        %v3469 = vadd.f32 %v3405, 0.0
        %v3470 = vadd.f32 %v3406, 0.0
        %v3471 = vadd.f32 %v3407, 0.0
        %v3472 = vadd.f32 %v3408, 0.0
        %v3473 = vlaneseq
        %v3474 = vshrl.u32 %v3473, 7
        %v3475 = vsub.s32 3, %v3474
        %v3476 = vrot.slane %v481, %v3475
        %v3477 = vlaneseq
        %v3478 = vshrl.u32 %v3477, 7
        %v3479 = vsub.s32 3, %v3478
        %v3480 = vrot.slane %v482, %v3479
        %vm3481 = vcmp.eq.s32.totalorder %v510, %v3476
        %vm3482 = vcmp.eq.s32.totalorder %v510, %v3480
        %vm3483 = vcmp.eq.s32.totalorder %v511, %v3476
        %vm3484 = vcmp.eq.s32.totalorder %v511, %v3480
        %vm3485 = vcmp.eq.s32.totalorder %v512, %v3476
        %vm3486 = vcmp.eq.s32.totalorder %v512, %v3480
        %vm3487 = vcmp.eq.s32.totalorder %v513, %v3476
        %vm3488 = vcmp.eq.s32.totalorder %v513, %v3480
        %vm3489 = vcmp.eq.s32.totalorder %v514, %v3476
        %vm3490 = vcmp.eq.s32.totalorder %v514, %v3480
        %vm3491 = vcmp.eq.s32.totalorder %v515, %v3476
        %vm3492 = vcmp.eq.s32.totalorder %v515, %v3480
        %vm3493 = vcmp.eq.s32.totalorder %v516, %v3476
        %vm3494 = vcmp.eq.s32.totalorder %v516, %v3480
        %vm3495 = vcmp.eq.s32.totalorder %v517, %v3476
        %vm3496 = vcmp.eq.s32.totalorder %v517, %v3480
        %vm3497 = vcmp.eq.s32.totalorder %v518, %v3476
        %vm3498 = vcmp.eq.s32.totalorder %v518, %v3480
        %vm3499 = vcmp.eq.s32.totalorder %v519, %v3476
        %vm3500 = vcmp.eq.s32.totalorder %v519, %v3480
        %vm3501 = vcmp.eq.s32.totalorder %v520, %v3476
        %vm3502 = vcmp.eq.s32.totalorder %v520, %v3480
        %vm3503 = vcmp.eq.s32.totalorder %v521, %v3476
        %vm3504 = vcmp.eq.s32.totalorder %v521, %v3480
        %vm3505 = vcmp.eq.s32.totalorder %v522, %v3476
        %vm3506 = vcmp.eq.s32.totalorder %v522, %v3480
        %vm3507 = vcmp.eq.s32.totalorder %v523, %v3476
        %vm3508 = vcmp.eq.s32.totalorder %v523, %v3480
        %vm3509 = vcmp.eq.s32.totalorder %v524, %v3476
        %vm3510 = vcmp.eq.s32.totalorder %v524, %v3480
        %vm3511 = vcmp.eq.s32.totalorder %v525, %v3476
        %vm3512 = vcmp.eq.s32.totalorder %v525, %v3480
        %vm3513 = vcmp.eq.s32.totalorder %v526, %v3476
        %vm3514 = vcmp.eq.s32.totalorder %v526, %v3480
        %vm3515 = vcmp.eq.s32.totalorder %v527, %v3476
        %vm3516 = vcmp.eq.s32.totalorder %v527, %v3480
        %vm3517 = vcmp.eq.s32.totalorder %v528, %v3476
        %vm3518 = vcmp.eq.s32.totalorder %v528, %v3480
        %vm3519 = vcmp.eq.s32.totalorder %v529, %v3476
        %vm3520 = vcmp.eq.s32.totalorder %v529, %v3480
        %vm3521 = vcmp.eq.s32.totalorder %v530, %v3476
        %vm3522 = vcmp.eq.s32.totalorder %v530, %v3480
        %vm3523 = vcmp.eq.s32.totalorder %v531, %v3476
        %vm3524 = vcmp.eq.s32.totalorder %v531, %v3480
        %vm3525 = vcmp.eq.s32.totalorder %v532, %v3476
        %vm3526 = vcmp.eq.s32.totalorder %v532, %v3480
        %vm3527 = vcmp.eq.s32.totalorder %v533, %v3476
        %vm3528 = vcmp.eq.s32.totalorder %v533, %v3480
        %vm3529 = vcmp.eq.s32.totalorder %v534, %v3476
        %vm3530 = vcmp.eq.s32.totalorder %v534, %v3480
        %vm3531 = vcmp.eq.s32.totalorder %v535, %v3476
        %vm3532 = vcmp.eq.s32.totalorder %v535, %v3480
        %vm3533 = vcmp.eq.s32.totalorder %v536, %v3476
        %vm3534 = vcmp.eq.s32.totalorder %v536, %v3480
        %vm3535 = vcmp.eq.s32.totalorder %v537, %v3476
        %vm3536 = vcmp.eq.s32.totalorder %v537, %v3480
        %vm3537 = vcmp.eq.s32.totalorder %v538, %v3476
        %vm3538 = vcmp.eq.s32.totalorder %v538, %v3480
        %vm3539 = vcmp.eq.s32.totalorder %v539, %v3476
        %vm3540 = vcmp.eq.s32.totalorder %v539, %v3480
        %vm3541 = vcmp.eq.s32.totalorder %v540, %v3476
        %vm3542 = vcmp.eq.s32.totalorder %v540, %v3480
        %vm3543 = vcmp.eq.s32.totalorder %v541, %v3476
        %vm3544 = vcmp.eq.s32.totalorder %v541, %v3480
        %v3545 = vlaneseq
        %v3546 = vshrl.u32 %v3545, 7
        %v3547 = vsub.s32 3, %v3546
        %v3548 = vrot.slane %v497, %v3547
        %v3549 = vlaneseq
        %v3550 = vshrl.u32 %v3549, 7
        %v3551 = vsub.s32 3, %v3550
        %v3552 = vrot.slane %v498, %v3551
        %v3553 = vsel %vm3481, %v3548, 0.0
        %v3554 = vsel %vm3482, %v3552, 0.0
        %v3555 = vsel %vm3483, %v3548, 0.0
        %v3556 = vsel %vm3484, %v3552, 0.0
        %v3557 = vsel %vm3485, %v3548, 0.0
        %v3558 = vsel %vm3486, %v3552, 0.0
        %v3559 = vsel %vm3487, %v3548, 0.0
        %v3560 = vsel %vm3488, %v3552, 0.0
        %v3561 = vsel %vm3489, %v3548, 0.0
        %v3562 = vsel %vm3490, %v3552, 0.0
        %v3563 = vsel %vm3491, %v3548, 0.0
        %v3564 = vsel %vm3492, %v3552, 0.0
        %v3565 = vsel %vm3493, %v3548, 0.0
        %v3566 = vsel %vm3494, %v3552, 0.0
        %v3567 = vsel %vm3495, %v3548, 0.0
        %v3568 = vsel %vm3496, %v3552, 0.0
        %v3569 = vsel %vm3497, %v3548, 0.0
        %v3570 = vsel %vm3498, %v3552, 0.0
        %v3571 = vsel %vm3499, %v3548, 0.0
        %v3572 = vsel %vm3500, %v3552, 0.0
        %v3573 = vsel %vm3501, %v3548, 0.0
        %v3574 = vsel %vm3502, %v3552, 0.0
        %v3575 = vsel %vm3503, %v3548, 0.0
        %v3576 = vsel %vm3504, %v3552, 0.0
        %v3577 = vsel %vm3505, %v3548, 0.0
        %v3578 = vsel %vm3506, %v3552, 0.0
        %v3579 = vsel %vm3507, %v3548, 0.0
        %v3580 = vsel %vm3508, %v3552, 0.0
        %v3581 = vsel %vm3509, %v3548, 0.0
        %v3582 = vsel %vm3510, %v3552, 0.0
        %v3583 = vsel %vm3511, %v3548, 0.0
        %v3584 = vsel %vm3512, %v3552, 0.0
        %v3585 = vsel %vm3513, %v3548, 0.0
        %v3586 = vsel %vm3514, %v3552, 0.0
        %v3587 = vsel %vm3515, %v3548, 0.0
        %v3588 = vsel %vm3516, %v3552, 0.0
        %v3589 = vsel %vm3517, %v3548, 0.0
        %v3590 = vsel %vm3518, %v3552, 0.0
        %v3591 = vsel %vm3519, %v3548, 0.0
        %v3592 = vsel %vm3520, %v3552, 0.0
        %v3593 = vsel %vm3521, %v3548, 0.0
        %v3594 = vsel %vm3522, %v3552, 0.0
        %v3595 = vsel %vm3523, %v3548, 0.0
        %v3596 = vsel %vm3524, %v3552, 0.0
        %v3597 = vsel %vm3525, %v3548, 0.0
        %v3598 = vsel %vm3526, %v3552, 0.0
        %v3599 = vsel %vm3527, %v3548, 0.0
        %v3600 = vsel %vm3528, %v3552, 0.0
        %v3601 = vsel %vm3529, %v3548, 0.0
        %v3602 = vsel %vm3530, %v3552, 0.0
        %v3603 = vsel %vm3531, %v3548, 0.0
        %v3604 = vsel %vm3532, %v3552, 0.0
        %v3605 = vsel %vm3533, %v3548, 0.0
        %v3606 = vsel %vm3534, %v3552, 0.0
        %v3607 = vsel %vm3535, %v3548, 0.0
        %v3608 = vsel %vm3536, %v3552, 0.0
        %v3609 = vsel %vm3537, %v3548, 0.0
        %v3610 = vsel %vm3538, %v3552, 0.0
        %v3611 = vsel %vm3539, %v3548, 0.0
        %v3612 = vsel %vm3540, %v3552, 0.0
        %v3613 = vsel %vm3541, %v3548, 0.0
        %v3614 = vsel %vm3542, %v3552, 0.0
        %v3615 = vsel %vm3543, %v3548, 0.0
        %v3616 = vsel %vm3544, %v3552, 0.0
        %v3617 = vadd.f32 %v3409, %v3553
        %v3618 = vadd.f32 %v3410, %v3554
        %v3619 = vadd.f32 %v3411, %v3555
        %v3620 = vadd.f32 %v3412, %v3556
        %v3621 = vadd.f32 %v3413, %v3557
        %v3622 = vadd.f32 %v3414, %v3558
        %v3623 = vadd.f32 %v3415, %v3559
        %v3624 = vadd.f32 %v3416, %v3560
        %v3625 = vadd.f32 %v3417, %v3561
        %v3626 = vadd.f32 %v3418, %v3562
        %v3627 = vadd.f32 %v3419, %v3563
        %v3628 = vadd.f32 %v3420, %v3564
        %v3629 = vadd.f32 %v3421, %v3565
        %v3630 = vadd.f32 %v3422, %v3566
        %v3631 = vadd.f32 %v3423, %v3567
        %v3632 = vadd.f32 %v3424, %v3568
        %v3633 = vadd.f32 %v3425, %v3569
        %v3634 = vadd.f32 %v3426, %v3570
        %v3635 = vadd.f32 %v3427, %v3571
        %v3636 = vadd.f32 %v3428, %v3572
        %v3637 = vadd.f32 %v3429, %v3573
        %v3638 = vadd.f32 %v3430, %v3574
        %v3639 = vadd.f32 %v3431, %v3575
        %v3640 = vadd.f32 %v3432, %v3576
        %v3641 = vadd.f32 %v3433, %v3577
        %v3642 = vadd.f32 %v3434, %v3578
        %v3643 = vadd.f32 %v3435, %v3579
        %v3644 = vadd.f32 %v3436, %v3580
        %v3645 = vadd.f32 %v3437, %v3581
        %v3646 = vadd.f32 %v3438, %v3582
        %v3647 = vadd.f32 %v3439, %v3583
        %v3648 = vadd.f32 %v3440, %v3584
        %v3649 = vadd.f32 %v3441, %v3585
        %v3650 = vadd.f32 %v3442, %v3586
        %v3651 = vadd.f32 %v3443, %v3587
        %v3652 = vadd.f32 %v3444, %v3588
        %v3653 = vadd.f32 %v3445, %v3589
        %v3654 = vadd.f32 %v3446, %v3590
        %v3655 = vadd.f32 %v3447, %v3591
        %v3656 = vadd.f32 %v3448, %v3592
        %v3657 = vadd.f32 %v3449, %v3593
        %v3658 = vadd.f32 %v3450, %v3594
        %v3659 = vadd.f32 %v3451, %v3595
        %v3660 = vadd.f32 %v3452, %v3596
        %v3661 = vadd.f32 %v3453, %v3597
        %v3662 = vadd.f32 %v3454, %v3598
        %v3663 = vadd.f32 %v3455, %v3599
        %v3664 = vadd.f32 %v3456, %v3600
        %v3665 = vadd.f32 %v3457, %v3601
        %v3666 = vadd.f32 %v3458, %v3602
        %v3667 = vadd.f32 %v3459, %v3603
        %v3668 = vadd.f32 %v3460, %v3604
        %v3669 = vadd.f32 %v3461, %v3605
        %v3670 = vadd.f32 %v3462, %v3606
        %v3671 = vadd.f32 %v3463, %v3607
        %v3672 = vadd.f32 %v3464, %v3608
        %v3673 = vadd.f32 %v3465, %v3609
        %v3674 = vadd.f32 %v3466, %v3610
        %v3675 = vadd.f32 %v3467, %v3611
        %v3676 = vadd.f32 %v3468, %v3612
        %v3677 = vadd.f32 %v3469, %v3613
        %v3678 = vadd.f32 %v3470, %v3614
        %v3679 = vadd.f32 %v3471, %v3615
        %v3680 = vadd.f32 %v3472, %v3616
        %v3681 = vlaneseq
        %v3682 = vshrl.u32 %v3681, 7
        %v3683 = vsub.s32 3, %v3682
        %v3684 = vrot.slane %v485, %v3683
        %v3685 = vlaneseq
        %v3686 = vshrl.u32 %v3685, 7
        %v3687 = vsub.s32 3, %v3686
        %v3688 = vrot.slane %v486, %v3687
        %vm3689 = vcmp.eq.s32.totalorder %v510, %v3684
        %vm3690 = vcmp.eq.s32.totalorder %v510, %v3688
        %vm3691 = vcmp.eq.s32.totalorder %v511, %v3684
        %vm3692 = vcmp.eq.s32.totalorder %v511, %v3688
        %vm3693 = vcmp.eq.s32.totalorder %v512, %v3684
        %vm3694 = vcmp.eq.s32.totalorder %v512, %v3688
        %vm3695 = vcmp.eq.s32.totalorder %v513, %v3684
        %vm3696 = vcmp.eq.s32.totalorder %v513, %v3688
        %vm3697 = vcmp.eq.s32.totalorder %v514, %v3684
        %vm3698 = vcmp.eq.s32.totalorder %v514, %v3688
        %vm3699 = vcmp.eq.s32.totalorder %v515, %v3684
        %vm3700 = vcmp.eq.s32.totalorder %v515, %v3688
        %vm3701 = vcmp.eq.s32.totalorder %v516, %v3684
        %vm3702 = vcmp.eq.s32.totalorder %v516, %v3688
        %vm3703 = vcmp.eq.s32.totalorder %v517, %v3684
        %vm3704 = vcmp.eq.s32.totalorder %v517, %v3688
        %vm3705 = vcmp.eq.s32.totalorder %v518, %v3684
        %vm3706 = vcmp.eq.s32.totalorder %v518, %v3688
        %vm3707 = vcmp.eq.s32.totalorder %v519, %v3684
        %vm3708 = vcmp.eq.s32.totalorder %v519, %v3688
        %vm3709 = vcmp.eq.s32.totalorder %v520, %v3684
        %vm3710 = vcmp.eq.s32.totalorder %v520, %v3688
        %vm3711 = vcmp.eq.s32.totalorder %v521, %v3684
        %vm3712 = vcmp.eq.s32.totalorder %v521, %v3688
        %vm3713 = vcmp.eq.s32.totalorder %v522, %v3684
        %vm3714 = vcmp.eq.s32.totalorder %v522, %v3688
        %vm3715 = vcmp.eq.s32.totalorder %v523, %v3684
        %vm3716 = vcmp.eq.s32.totalorder %v523, %v3688
        %vm3717 = vcmp.eq.s32.totalorder %v524, %v3684
        %vm3718 = vcmp.eq.s32.totalorder %v524, %v3688
        %vm3719 = vcmp.eq.s32.totalorder %v525, %v3684
        %vm3720 = vcmp.eq.s32.totalorder %v525, %v3688
        %vm3721 = vcmp.eq.s32.totalorder %v526, %v3684
        %vm3722 = vcmp.eq.s32.totalorder %v526, %v3688
        %vm3723 = vcmp.eq.s32.totalorder %v527, %v3684
        %vm3724 = vcmp.eq.s32.totalorder %v527, %v3688
        %vm3725 = vcmp.eq.s32.totalorder %v528, %v3684
        %vm3726 = vcmp.eq.s32.totalorder %v528, %v3688
        %vm3727 = vcmp.eq.s32.totalorder %v529, %v3684
        %vm3728 = vcmp.eq.s32.totalorder %v529, %v3688
        %vm3729 = vcmp.eq.s32.totalorder %v530, %v3684
        %vm3730 = vcmp.eq.s32.totalorder %v530, %v3688
        %vm3731 = vcmp.eq.s32.totalorder %v531, %v3684
        %vm3732 = vcmp.eq.s32.totalorder %v531, %v3688
        %vm3733 = vcmp.eq.s32.totalorder %v532, %v3684
        %vm3734 = vcmp.eq.s32.totalorder %v532, %v3688
        %vm3735 = vcmp.eq.s32.totalorder %v533, %v3684
        %vm3736 = vcmp.eq.s32.totalorder %v533, %v3688
        %vm3737 = vcmp.eq.s32.totalorder %v534, %v3684
        %vm3738 = vcmp.eq.s32.totalorder %v534, %v3688
        %vm3739 = vcmp.eq.s32.totalorder %v535, %v3684
        %vm3740 = vcmp.eq.s32.totalorder %v535, %v3688
        %vm3741 = vcmp.eq.s32.totalorder %v536, %v3684
        %vm3742 = vcmp.eq.s32.totalorder %v536, %v3688
        %vm3743 = vcmp.eq.s32.totalorder %v537, %v3684
        %vm3744 = vcmp.eq.s32.totalorder %v537, %v3688
        %vm3745 = vcmp.eq.s32.totalorder %v538, %v3684
        %vm3746 = vcmp.eq.s32.totalorder %v538, %v3688
        %vm3747 = vcmp.eq.s32.totalorder %v539, %v3684
        %vm3748 = vcmp.eq.s32.totalorder %v539, %v3688
        %vm3749 = vcmp.eq.s32.totalorder %v540, %v3684
        %vm3750 = vcmp.eq.s32.totalorder %v540, %v3688
        %vm3751 = vcmp.eq.s32.totalorder %v541, %v3684
        %vm3752 = vcmp.eq.s32.totalorder %v541, %v3688
        %v3753 = vlaneseq
        %v3754 = vshrl.u32 %v3753, 7
        %v3755 = vsub.s32 3, %v3754
        %v3756 = vrot.slane %v501, %v3755
        %v3757 = vlaneseq
        %v3758 = vshrl.u32 %v3757, 7
        %v3759 = vsub.s32 3, %v3758
        %v3760 = vrot.slane %v502, %v3759
        %v3761 = vsel %vm3689, %v3756, 0.0
        %v3762 = vsel %vm3690, %v3760, 0.0
        %v3763 = vsel %vm3691, %v3756, 0.0
        %v3764 = vsel %vm3692, %v3760, 0.0
        %v3765 = vsel %vm3693, %v3756, 0.0
        %v3766 = vsel %vm3694, %v3760, 0.0
        %v3767 = vsel %vm3695, %v3756, 0.0
        %v3768 = vsel %vm3696, %v3760, 0.0
        %v3769 = vsel %vm3697, %v3756, 0.0
        %v3770 = vsel %vm3698, %v3760, 0.0
        %v3771 = vsel %vm3699, %v3756, 0.0
        %v3772 = vsel %vm3700, %v3760, 0.0
        %v3773 = vsel %vm3701, %v3756, 0.0
        %v3774 = vsel %vm3702, %v3760, 0.0
        %v3775 = vsel %vm3703, %v3756, 0.0
        %v3776 = vsel %vm3704, %v3760, 0.0
        %v3777 = vsel %vm3705, %v3756, 0.0
        %v3778 = vsel %vm3706, %v3760, 0.0
        %v3779 = vsel %vm3707, %v3756, 0.0
        %v3780 = vsel %vm3708, %v3760, 0.0
        %v3781 = vsel %vm3709, %v3756, 0.0
        %v3782 = vsel %vm3710, %v3760, 0.0
        %v3783 = vsel %vm3711, %v3756, 0.0
        %v3784 = vsel %vm3712, %v3760, 0.0
        %v3785 = vsel %vm3713, %v3756, 0.0
        %v3786 = vsel %vm3714, %v3760, 0.0
        %v3787 = vsel %vm3715, %v3756, 0.0
        %v3788 = vsel %vm3716, %v3760, 0.0
        %v3789 = vsel %vm3717, %v3756, 0.0
        %v3790 = vsel %vm3718, %v3760, 0.0
        %v3791 = vsel %vm3719, %v3756, 0.0
        %v3792 = vsel %vm3720, %v3760, 0.0
        %v3793 = vsel %vm3721, %v3756, 0.0
        %v3794 = vsel %vm3722, %v3760, 0.0
        %v3795 = vsel %vm3723, %v3756, 0.0
        %v3796 = vsel %vm3724, %v3760, 0.0
        %v3797 = vsel %vm3725, %v3756, 0.0
        %v3798 = vsel %vm3726, %v3760, 0.0
        %v3799 = vsel %vm3727, %v3756, 0.0
        %v3800 = vsel %vm3728, %v3760, 0.0
        %v3801 = vsel %vm3729, %v3756, 0.0
        %v3802 = vsel %vm3730, %v3760, 0.0
        %v3803 = vsel %vm3731, %v3756, 0.0
        %v3804 = vsel %vm3732, %v3760, 0.0
        %v3805 = vsel %vm3733, %v3756, 0.0
        %v3806 = vsel %vm3734, %v3760, 0.0
        %v3807 = vsel %vm3735, %v3756, 0.0
        %v3808 = vsel %vm3736, %v3760, 0.0
        %v3809 = vsel %vm3737, %v3756, 0.0
        %v3810 = vsel %vm3738, %v3760, 0.0
        %v3811 = vsel %vm3739, %v3756, 0.0
        %v3812 = vsel %vm3740, %v3760, 0.0
        %v3813 = vsel %vm3741, %v3756, 0.0
        %v3814 = vsel %vm3742, %v3760, 0.0
        %v3815 = vsel %vm3743, %v3756, 0.0
        %v3816 = vsel %vm3744, %v3760, 0.0
        %v3817 = vsel %vm3745, %v3756, 0.0
        %v3818 = vsel %vm3746, %v3760, 0.0
        %v3819 = vsel %vm3747, %v3756, 0.0
        %v3820 = vsel %vm3748, %v3760, 0.0
        %v3821 = vsel %vm3749, %v3756, 0.0
        %v3822 = vsel %vm3750, %v3760, 0.0
        %v3823 = vsel %vm3751, %v3756, 0.0
        %v3824 = vsel %vm3752, %v3760, 0.0
        %v3825 = vadd.f32 %v3617, %v3761
        %v3826 = vadd.f32 %v3618, %v3762
        %v3827 = vadd.f32 %v3619, %v3763
        %v3828 = vadd.f32 %v3620, %v3764
        %v3829 = vadd.f32 %v3621, %v3765
        %v3830 = vadd.f32 %v3622, %v3766
        %v3831 = vadd.f32 %v3623, %v3767
        %v3832 = vadd.f32 %v3624, %v3768
        %v3833 = vadd.f32 %v3625, %v3769
        %v3834 = vadd.f32 %v3626, %v3770
        %v3835 = vadd.f32 %v3627, %v3771
        %v3836 = vadd.f32 %v3628, %v3772
        %v3837 = vadd.f32 %v3629, %v3773
        %v3838 = vadd.f32 %v3630, %v3774
        %v3839 = vadd.f32 %v3631, %v3775
        %v3840 = vadd.f32 %v3632, %v3776
        %v3841 = vadd.f32 %v3633, %v3777
        %v3842 = vadd.f32 %v3634, %v3778
        %v3843 = vadd.f32 %v3635, %v3779
        %v3844 = vadd.f32 %v3636, %v3780
        %v3845 = vadd.f32 %v3637, %v3781
        %v3846 = vadd.f32 %v3638, %v3782
        %v3847 = vadd.f32 %v3639, %v3783
        %v3848 = vadd.f32 %v3640, %v3784
        %v3849 = vadd.f32 %v3641, %v3785
        %v3850 = vadd.f32 %v3642, %v3786
        %v3851 = vadd.f32 %v3643, %v3787
        %v3852 = vadd.f32 %v3644, %v3788
        %v3853 = vadd.f32 %v3645, %v3789
        %v3854 = vadd.f32 %v3646, %v3790
        %v3855 = vadd.f32 %v3647, %v3791
        %v3856 = vadd.f32 %v3648, %v3792
        %v3857 = vadd.f32 %v3649, %v3793
        %v3858 = vadd.f32 %v3650, %v3794
        %v3859 = vadd.f32 %v3651, %v3795
        %v3860 = vadd.f32 %v3652, %v3796
        %v3861 = vadd.f32 %v3653, %v3797
        %v3862 = vadd.f32 %v3654, %v3798
        %v3863 = vadd.f32 %v3655, %v3799
        %v3864 = vadd.f32 %v3656, %v3800
        %v3865 = vadd.f32 %v3657, %v3801
        %v3866 = vadd.f32 %v3658, %v3802
        %v3867 = vadd.f32 %v3659, %v3803
        %v3868 = vadd.f32 %v3660, %v3804
        %v3869 = vadd.f32 %v3661, %v3805
        %v3870 = vadd.f32 %v3662, %v3806
        %v3871 = vadd.f32 %v3663, %v3807
        %v3872 = vadd.f32 %v3664, %v3808
        %v3873 = vadd.f32 %v3665, %v3809
        %v3874 = vadd.f32 %v3666, %v3810
        %v3875 = vadd.f32 %v3667, %v3811
        %v3876 = vadd.f32 %v3668, %v3812
        %v3877 = vadd.f32 %v3669, %v3813
        %v3878 = vadd.f32 %v3670, %v3814
        %v3879 = vadd.f32 %v3671, %v3815
        %v3880 = vadd.f32 %v3672, %v3816
        %v3881 = vadd.f32 %v3673, %v3817
        %v3882 = vadd.f32 %v3674, %v3818
        %v3883 = vadd.f32 %v3675, %v3819
        %v3884 = vadd.f32 %v3676, %v3820
        %v3885 = vadd.f32 %v3677, %v3821
        %v3886 = vadd.f32 %v3678, %v3822
        %v3887 = vadd.f32 %v3679, %v3823
        %v3888 = vadd.f32 %v3680, %v3824
        %v3889 = vlaneseq
        %v3890 = vshrl.u32 %v3889, 7
        %v3891 = vsub.s32 3, %v3890
        %v3892 = vrot.slane %v489, %v3891
        %v3893 = vlaneseq
        %v3894 = vshrl.u32 %v3893, 7
        %v3895 = vsub.s32 3, %v3894
        %v3896 = vrot.slane %v490, %v3895
        %vm3897 = vcmp.eq.s32.totalorder %v510, %v3892
        %vm3898 = vcmp.eq.s32.totalorder %v510, %v3896
        %vm3899 = vcmp.eq.s32.totalorder %v511, %v3892
        %vm3900 = vcmp.eq.s32.totalorder %v511, %v3896
        %vm3901 = vcmp.eq.s32.totalorder %v512, %v3892
        %vm3902 = vcmp.eq.s32.totalorder %v512, %v3896
        %vm3903 = vcmp.eq.s32.totalorder %v513, %v3892
        %vm3904 = vcmp.eq.s32.totalorder %v513, %v3896
        %vm3905 = vcmp.eq.s32.totalorder %v514, %v3892
        %vm3906 = vcmp.eq.s32.totalorder %v514, %v3896
        %vm3907 = vcmp.eq.s32.totalorder %v515, %v3892
        %vm3908 = vcmp.eq.s32.totalorder %v515, %v3896
        %vm3909 = vcmp.eq.s32.totalorder %v516, %v3892
        %vm3910 = vcmp.eq.s32.totalorder %v516, %v3896
        %vm3911 = vcmp.eq.s32.totalorder %v517, %v3892
        %vm3912 = vcmp.eq.s32.totalorder %v517, %v3896
        %vm3913 = vcmp.eq.s32.totalorder %v518, %v3892
        %vm3914 = vcmp.eq.s32.totalorder %v518, %v3896
        %vm3915 = vcmp.eq.s32.totalorder %v519, %v3892
        %vm3916 = vcmp.eq.s32.totalorder %v519, %v3896
        %vm3917 = vcmp.eq.s32.totalorder %v520, %v3892
        %vm3918 = vcmp.eq.s32.totalorder %v520, %v3896
        %vm3919 = vcmp.eq.s32.totalorder %v521, %v3892
        %vm3920 = vcmp.eq.s32.totalorder %v521, %v3896
        %vm3921 = vcmp.eq.s32.totalorder %v522, %v3892
        %vm3922 = vcmp.eq.s32.totalorder %v522, %v3896
        %vm3923 = vcmp.eq.s32.totalorder %v523, %v3892
        %vm3924 = vcmp.eq.s32.totalorder %v523, %v3896
        %vm3925 = vcmp.eq.s32.totalorder %v524, %v3892
        %vm3926 = vcmp.eq.s32.totalorder %v524, %v3896
        %vm3927 = vcmp.eq.s32.totalorder %v525, %v3892
        %vm3928 = vcmp.eq.s32.totalorder %v525, %v3896
        %vm3929 = vcmp.eq.s32.totalorder %v526, %v3892
        %vm3930 = vcmp.eq.s32.totalorder %v526, %v3896
        %vm3931 = vcmp.eq.s32.totalorder %v527, %v3892
        %vm3932 = vcmp.eq.s32.totalorder %v527, %v3896
        %vm3933 = vcmp.eq.s32.totalorder %v528, %v3892
        %vm3934 = vcmp.eq.s32.totalorder %v528, %v3896
        %vm3935 = vcmp.eq.s32.totalorder %v529, %v3892
        %vm3936 = vcmp.eq.s32.totalorder %v529, %v3896
        %vm3937 = vcmp.eq.s32.totalorder %v530, %v3892
        %vm3938 = vcmp.eq.s32.totalorder %v530, %v3896
        %vm3939 = vcmp.eq.s32.totalorder %v531, %v3892
        %vm3940 = vcmp.eq.s32.totalorder %v531, %v3896
        %vm3941 = vcmp.eq.s32.totalorder %v532, %v3892
        %vm3942 = vcmp.eq.s32.totalorder %v532, %v3896
        %vm3943 = vcmp.eq.s32.totalorder %v533, %v3892
        %vm3944 = vcmp.eq.s32.totalorder %v533, %v3896
        %vm3945 = vcmp.eq.s32.totalorder %v534, %v3892
        %vm3946 = vcmp.eq.s32.totalorder %v534, %v3896
        %vm3947 = vcmp.eq.s32.totalorder %v535, %v3892
        %vm3948 = vcmp.eq.s32.totalorder %v535, %v3896
        %vm3949 = vcmp.eq.s32.totalorder %v536, %v3892
        %vm3950 = vcmp.eq.s32.totalorder %v536, %v3896
        %vm3951 = vcmp.eq.s32.totalorder %v537, %v3892
        %vm3952 = vcmp.eq.s32.totalorder %v537, %v3896
        %vm3953 = vcmp.eq.s32.totalorder %v538, %v3892
        %vm3954 = vcmp.eq.s32.totalorder %v538, %v3896
        %vm3955 = vcmp.eq.s32.totalorder %v539, %v3892
        %vm3956 = vcmp.eq.s32.totalorder %v539, %v3896
        %vm3957 = vcmp.eq.s32.totalorder %v540, %v3892
        %vm3958 = vcmp.eq.s32.totalorder %v540, %v3896
        %vm3959 = vcmp.eq.s32.totalorder %v541, %v3892
        %vm3960 = vcmp.eq.s32.totalorder %v541, %v3896
        %v3961 = vlaneseq
        %v3962 = vshrl.u32 %v3961, 7
        %v3963 = vsub.s32 3, %v3962
        %v3964 = vrot.slane %v505, %v3963
        %v3965 = vlaneseq
        %v3966 = vshrl.u32 %v3965, 7
        %v3967 = vsub.s32 3, %v3966
        %v3968 = vrot.slane %v506, %v3967
        %v3969 = vsel %vm3897, %v3964, 0.0
        %v3970 = vsel %vm3898, %v3968, 0.0
        %v3971 = vsel %vm3899, %v3964, 0.0
        %v3972 = vsel %vm3900, %v3968, 0.0
        %v3973 = vsel %vm3901, %v3964, 0.0
        %v3974 = vsel %vm3902, %v3968, 0.0
        %v3975 = vsel %vm3903, %v3964, 0.0
        %v3976 = vsel %vm3904, %v3968, 0.0
        %v3977 = vsel %vm3905, %v3964, 0.0
        %v3978 = vsel %vm3906, %v3968, 0.0
        %v3979 = vsel %vm3907, %v3964, 0.0
        %v3980 = vsel %vm3908, %v3968, 0.0
        %v3981 = vsel %vm3909, %v3964, 0.0
        %v3982 = vsel %vm3910, %v3968, 0.0
        %v3983 = vsel %vm3911, %v3964, 0.0
        %v3984 = vsel %vm3912, %v3968, 0.0
        %v3985 = vsel %vm3913, %v3964, 0.0
        %v3986 = vsel %vm3914, %v3968, 0.0
        %v3987 = vsel %vm3915, %v3964, 0.0
        %v3988 = vsel %vm3916, %v3968, 0.0
        %v3989 = vsel %vm3917, %v3964, 0.0
        %v3990 = vsel %vm3918, %v3968, 0.0
        %v3991 = vsel %vm3919, %v3964, 0.0
        %v3992 = vsel %vm3920, %v3968, 0.0
        %v3993 = vsel %vm3921, %v3964, 0.0
        %v3994 = vsel %vm3922, %v3968, 0.0
        %v3995 = vsel %vm3923, %v3964, 0.0
        %v3996 = vsel %vm3924, %v3968, 0.0
        %v3997 = vsel %vm3925, %v3964, 0.0
        %v3998 = vsel %vm3926, %v3968, 0.0
        %v3999 = vsel %vm3927, %v3964, 0.0
        %v4000 = vsel %vm3928, %v3968, 0.0
        %v4001 = vsel %vm3929, %v3964, 0.0
        %v4002 = vsel %vm3930, %v3968, 0.0
        %v4003 = vsel %vm3931, %v3964, 0.0
        %v4004 = vsel %vm3932, %v3968, 0.0
        %v4005 = vsel %vm3933, %v3964, 0.0
        %v4006 = vsel %vm3934, %v3968, 0.0
        %v4007 = vsel %vm3935, %v3964, 0.0
        %v4008 = vsel %vm3936, %v3968, 0.0
        %v4009 = vsel %vm3937, %v3964, 0.0
        %v4010 = vsel %vm3938, %v3968, 0.0
        %v4011 = vsel %vm3939, %v3964, 0.0
        %v4012 = vsel %vm3940, %v3968, 0.0
        %v4013 = vsel %vm3941, %v3964, 0.0
        %v4014 = vsel %vm3942, %v3968, 0.0
        %v4015 = vsel %vm3943, %v3964, 0.0
        %v4016 = vsel %vm3944, %v3968, 0.0
        %v4017 = vsel %vm3945, %v3964, 0.0
        %v4018 = vsel %vm3946, %v3968, 0.0
        %v4019 = vsel %vm3947, %v3964, 0.0
        %v4020 = vsel %vm3948, %v3968, 0.0
        %v4021 = vsel %vm3949, %v3964, 0.0
        %v4022 = vsel %vm3950, %v3968, 0.0
        %v4023 = vsel %vm3951, %v3964, 0.0
        %v4024 = vsel %vm3952, %v3968, 0.0
        %v4025 = vsel %vm3953, %v3964, 0.0
        %v4026 = vsel %vm3954, %v3968, 0.0
        %v4027 = vsel %vm3955, %v3964, 0.0
        %v4028 = vsel %vm3956, %v3968, 0.0
        %v4029 = vsel %vm3957, %v3964, 0.0
        %v4030 = vsel %vm3958, %v3968, 0.0
        %v4031 = vsel %vm3959, %v3964, 0.0
        %v4032 = vsel %vm3960, %v3968, 0.0
        %v4033 = vadd.f32 %v3825, %v3969
        %v4034 = vadd.f32 %v3826, %v3970
        %v4035 = vadd.f32 %v3827, %v3971
        %v4036 = vadd.f32 %v3828, %v3972
        %v4037 = vadd.f32 %v3829, %v3973
        %v4038 = vadd.f32 %v3830, %v3974
        %v4039 = vadd.f32 %v3831, %v3975
        %v4040 = vadd.f32 %v3832, %v3976
        %v4041 = vadd.f32 %v3833, %v3977
        %v4042 = vadd.f32 %v3834, %v3978
        %v4043 = vadd.f32 %v3835, %v3979
        %v4044 = vadd.f32 %v3836, %v3980
        %v4045 = vadd.f32 %v3837, %v3981
        %v4046 = vadd.f32 %v3838, %v3982
        %v4047 = vadd.f32 %v3839, %v3983
        %v4048 = vadd.f32 %v3840, %v3984
        %v4049 = vadd.f32 %v3841, %v3985
        %v4050 = vadd.f32 %v3842, %v3986
        %v4051 = vadd.f32 %v3843, %v3987
        %v4052 = vadd.f32 %v3844, %v3988
        %v4053 = vadd.f32 %v3845, %v3989
        %v4054 = vadd.f32 %v3846, %v3990
        %v4055 = vadd.f32 %v3847, %v3991
        %v4056 = vadd.f32 %v3848, %v3992
        %v4057 = vadd.f32 %v3849, %v3993
        %v4058 = vadd.f32 %v3850, %v3994
        %v4059 = vadd.f32 %v3851, %v3995
        %v4060 = vadd.f32 %v3852, %v3996
        %v4061 = vadd.f32 %v3853, %v3997
        %v4062 = vadd.f32 %v3854, %v3998
        %v4063 = vadd.f32 %v3855, %v3999
        %v4064 = vadd.f32 %v3856, %v4000
        %v4065 = vadd.f32 %v3857, %v4001
        %v4066 = vadd.f32 %v3858, %v4002
        %v4067 = vadd.f32 %v3859, %v4003
        %v4068 = vadd.f32 %v3860, %v4004
        %v4069 = vadd.f32 %v3861, %v4005
        %v4070 = vadd.f32 %v3862, %v4006
        %v4071 = vadd.f32 %v3863, %v4007
        %v4072 = vadd.f32 %v3864, %v4008
        %v4073 = vadd.f32 %v3865, %v4009
        %v4074 = vadd.f32 %v3866, %v4010
        %v4075 = vadd.f32 %v3867, %v4011
        %v4076 = vadd.f32 %v3868, %v4012
        %v4077 = vadd.f32 %v3869, %v4013
        %v4078 = vadd.f32 %v3870, %v4014
        %v4079 = vadd.f32 %v3871, %v4015
        %v4080 = vadd.f32 %v3872, %v4016
        %v4081 = vadd.f32 %v3873, %v4017
        %v4082 = vadd.f32 %v3874, %v4018
        %v4083 = vadd.f32 %v3875, %v4019
        %v4084 = vadd.f32 %v3876, %v4020
        %v4085 = vadd.f32 %v3877, %v4021
        %v4086 = vadd.f32 %v3878, %v4022
        %v4087 = vadd.f32 %v3879, %v4023
        %v4088 = vadd.f32 %v3880, %v4024
        %v4089 = vadd.f32 %v3881, %v4025
        %v4090 = vadd.f32 %v3882, %v4026
        %v4091 = vadd.f32 %v3883, %v4027
        %v4092 = vadd.f32 %v3884, %v4028
        %v4093 = vadd.f32 %v3885, %v4029
        %v4094 = vadd.f32 %v3886, %v4030
        %v4095 = vadd.f32 %v3887, %v4031
        %v4096 = vadd.f32 %v3888, %v4032
        %v4097 = vpack.c.bf16 %v445, %v445
        %v4098 = vpack.c.bf16 %v447, %v447
        %v4099 = vpack.c.bf16 %v4035, %v4033
        %v4100 = vpack.c.bf16 %v4036, %v4034
        %v4101 = vpack.c.bf16 %v4039, %v4037
        %v4102 = vpack.c.bf16 %v4040, %v4038
        %v4103 = vpack.c.bf16 %v4043, %v4041
        %v4104 = vpack.c.bf16 %v4044, %v4042
        %v4105 = vpack.c.bf16 %v4047, %v4045
        %v4106 = vpack.c.bf16 %v4048, %v4046
        %v4107 = vpack.c.bf16 %v4051, %v4049
        %v4108 = vpack.c.bf16 %v4052, %v4050
        %v4109 = vpack.c.bf16 %v4055, %v4053
        %v4110 = vpack.c.bf16 %v4056, %v4054
        %v4111 = vpack.c.bf16 %v4059, %v4057
        %v4112 = vpack.c.bf16 %v4060, %v4058
        %v4113 = vpack.c.bf16 %v4063, %v4061
        %v4114 = vpack.c.bf16 %v4064, %v4062
        %v4115 = vpack.c.bf16 %v4067, %v4065
        %v4116 = vpack.c.bf16 %v4068, %v4066
        %v4117 = vpack.c.bf16 %v4071, %v4069
        %v4118 = vpack.c.bf16 %v4072, %v4070
        %v4119 = vpack.c.bf16 %v4075, %v4073
        %v4120 = vpack.c.bf16 %v4076, %v4074
        %v4121 = vpack.c.bf16 %v4079, %v4077
        %v4122 = vpack.c.bf16 %v4080, %v4078
        %v4123 = vpack.c.bf16 %v4083, %v4081
        %v4124 = vpack.c.bf16 %v4084, %v4082
        %v4125 = vpack.c.bf16 %v4087, %v4085
        %v4126 = vpack.c.bf16 %v4088, %v4086
        %v4127 = vpack.c.bf16 %v4091, %v4089
        %v4128 = vpack.c.bf16 %v4092, %v4090
        %v4129 = vpack.c.bf16 %v4095, %v4093
        %v4130 = vpack.c.bf16 %v4096, %v4094
        %4131 = vmatprep.subr.bf16.mxu0 %v4100
        %4132 = vmatpush1.bf16.msra.mxu0 %v4099
        %4133 = vmatprep.subr.bf16.mxu0 %v4102
        %4134 = vmatpush1.bf16.msra.mxu0 %v4101
        %4135 = vmatprep.subr.bf16.mxu0 %v4104
        %4136 = vmatpush1.bf16.msra.mxu0 %v4103
        %4137 = vmatprep.subr.bf16.mxu0 %v4106
        %4138 = vmatpush1.bf16.msra.mxu0 %v4105
        %4139 = vmatprep.subr.bf16.mxu0 %v4108
        %4140 = vmatpush1.bf16.msra.mxu0 %v4107
        %4141 = vmatprep.subr.bf16.mxu0 %v4110
        %4142 = vmatpush1.bf16.msra.mxu0 %v4109
        %4143 = vmatprep.subr.bf16.mxu0 %v4112
        %4144 = vmatpush1.bf16.msra.mxu0 %v4111
        %4145 = vmatprep.subr.bf16.mxu0 %v4114
        %4146 = vmatpush1.bf16.msra.mxu0 %v4113
        %4147 = vmatprep.subr.bf16.mxu0 %v4116
        %4148 = vmatpush1.bf16.msra.mxu0 %v4115
        %4149 = vmatprep.subr.bf16.mxu0 %v4118
        %4150 = vmatpush1.bf16.msra.mxu0 %v4117
        %4151 = vmatprep.subr.bf16.mxu0 %v4120
        %4152 = vmatpush1.bf16.msra.mxu0 %v4119
        %4153 = vmatprep.subr.bf16.mxu0 %v4122
        %4154 = vmatpush1.bf16.msra.mxu0 %v4121
        %4155 = vmatprep.subr.bf16.mxu0 %v4124
        %4156 = vmatpush1.bf16.msra.mxu0 %v4123
        %4157 = vmatprep.subr.bf16.mxu0 %v4126
        %4158 = vmatpush1.bf16.msra.mxu0 %v4125
        %4159 = vmatprep.subr.bf16.mxu0 %v4128
        %4160 = vmatpush1.bf16.msra.mxu0 %v4127
        %4161 = vmatprep.subr.bf16.mxu0 %v4130
        %4162 = vmatpush1.bf16.msra.mxu0 %v4129
        %4163 = vmatprep.mubr.bf16.mxu0 %v4098
        %4164 = vmatmul.mubr.bf16.gmra.mrb[0].mxu0 %v4097
        %v4165 = vpop.f32.mrb[0].mxu0
        %v4166 = vadd.f32 0.0, %v4165
        %v4167 = vpop.f32.mrb[0].mxu0
        %v4168 = vadd.f32 0.0, %v4167
        %v4169 = vpop.f32.mrb[0].mxu0
        %v4170 = vpop.f32.mrb[0].mxu0
        %4171 = vdwg.mxu0
        %v4172 = vadd.f32 %v3263, %v4166
        %v4173 = vadd.f32 %v3264, %v4168
        %v4174 = vlaneseq
        %v4175 = vshrl.u32 %v4174, 7
        %v4176 = vsub.s32 4, %v4175
        %v4177 = vrot.slane %v477, %v4176
        %v4178 = vlaneseq
        %v4179 = vshrl.u32 %v4178, 7
        %v4180 = vsub.s32 4, %v4179
        %v4181 = vrot.slane %v478, %v4180
        %vm4182 = vcmp.eq.s32.totalorder %v510, %v4177
        %vm4183 = vcmp.eq.s32.totalorder %v510, %v4181
        %vm4184 = vcmp.eq.s32.totalorder %v511, %v4177
        %vm4185 = vcmp.eq.s32.totalorder %v511, %v4181
        %vm4186 = vcmp.eq.s32.totalorder %v512, %v4177
        %vm4187 = vcmp.eq.s32.totalorder %v512, %v4181
        %vm4188 = vcmp.eq.s32.totalorder %v513, %v4177
        %vm4189 = vcmp.eq.s32.totalorder %v513, %v4181
        %vm4190 = vcmp.eq.s32.totalorder %v514, %v4177
        %vm4191 = vcmp.eq.s32.totalorder %v514, %v4181
        %vm4192 = vcmp.eq.s32.totalorder %v515, %v4177
        %vm4193 = vcmp.eq.s32.totalorder %v515, %v4181
        %vm4194 = vcmp.eq.s32.totalorder %v516, %v4177
        %vm4195 = vcmp.eq.s32.totalorder %v516, %v4181
        %vm4196 = vcmp.eq.s32.totalorder %v517, %v4177
        %vm4197 = vcmp.eq.s32.totalorder %v517, %v4181
        %vm4198 = vcmp.eq.s32.totalorder %v518, %v4177
        %vm4199 = vcmp.eq.s32.totalorder %v518, %v4181
        %vm4200 = vcmp.eq.s32.totalorder %v519, %v4177
        %vm4201 = vcmp.eq.s32.totalorder %v519, %v4181
        %vm4202 = vcmp.eq.s32.totalorder %v520, %v4177
        %vm4203 = vcmp.eq.s32.totalorder %v520, %v4181
        %vm4204 = vcmp.eq.s32.totalorder %v521, %v4177
        %vm4205 = vcmp.eq.s32.totalorder %v521, %v4181
        %vm4206 = vcmp.eq.s32.totalorder %v522, %v4177
        %vm4207 = vcmp.eq.s32.totalorder %v522, %v4181
        %vm4208 = vcmp.eq.s32.totalorder %v523, %v4177
        %vm4209 = vcmp.eq.s32.totalorder %v523, %v4181
        %vm4210 = vcmp.eq.s32.totalorder %v524, %v4177
        %vm4211 = vcmp.eq.s32.totalorder %v524, %v4181
        %vm4212 = vcmp.eq.s32.totalorder %v525, %v4177
        %vm4213 = vcmp.eq.s32.totalorder %v525, %v4181
        %vm4214 = vcmp.eq.s32.totalorder %v526, %v4177
        %vm4215 = vcmp.eq.s32.totalorder %v526, %v4181
        %vm4216 = vcmp.eq.s32.totalorder %v527, %v4177
        %vm4217 = vcmp.eq.s32.totalorder %v527, %v4181
        %vm4218 = vcmp.eq.s32.totalorder %v528, %v4177
        %vm4219 = vcmp.eq.s32.totalorder %v528, %v4181
        %vm4220 = vcmp.eq.s32.totalorder %v529, %v4177
        %vm4221 = vcmp.eq.s32.totalorder %v529, %v4181
        %vm4222 = vcmp.eq.s32.totalorder %v530, %v4177
        %vm4223 = vcmp.eq.s32.totalorder %v530, %v4181
        %vm4224 = vcmp.eq.s32.totalorder %v531, %v4177
        %vm4225 = vcmp.eq.s32.totalorder %v531, %v4181
        %vm4226 = vcmp.eq.s32.totalorder %v532, %v4177
        %vm4227 = vcmp.eq.s32.totalorder %v532, %v4181
        %vm4228 = vcmp.eq.s32.totalorder %v533, %v4177
        %vm4229 = vcmp.eq.s32.totalorder %v533, %v4181
        %vm4230 = vcmp.eq.s32.totalorder %v534, %v4177
        %vm4231 = vcmp.eq.s32.totalorder %v534, %v4181
        %vm4232 = vcmp.eq.s32.totalorder %v535, %v4177
        %vm4233 = vcmp.eq.s32.totalorder %v535, %v4181
        %vm4234 = vcmp.eq.s32.totalorder %v536, %v4177
        %vm4235 = vcmp.eq.s32.totalorder %v536, %v4181
        %vm4236 = vcmp.eq.s32.totalorder %v537, %v4177
        %vm4237 = vcmp.eq.s32.totalorder %v537, %v4181
        %vm4238 = vcmp.eq.s32.totalorder %v538, %v4177
        %vm4239 = vcmp.eq.s32.totalorder %v538, %v4181
        %vm4240 = vcmp.eq.s32.totalorder %v539, %v4177
        %vm4241 = vcmp.eq.s32.totalorder %v539, %v4181
        %vm4242 = vcmp.eq.s32.totalorder %v540, %v4177
        %vm4243 = vcmp.eq.s32.totalorder %v540, %v4181
        %vm4244 = vcmp.eq.s32.totalorder %v541, %v4177
        %vm4245 = vcmp.eq.s32.totalorder %v541, %v4181
        %v4246 = vlaneseq
        %v4247 = vshrl.u32 %v4246, 7
        %v4248 = vsub.s32 4, %v4247
        %v4249 = vrot.slane %v493, %v4248
        %v4250 = vlaneseq
        %v4251 = vshrl.u32 %v4250, 7
        %v4252 = vsub.s32 4, %v4251
        %v4253 = vrot.slane %v494, %v4252
        %v4254 = vsel %vm4182, %v4249, 0.0
        %v4255 = vsel %vm4183, %v4253, 0.0
        %v4256 = vsel %vm4184, %v4249, 0.0
        %v4257 = vsel %vm4185, %v4253, 0.0
        %v4258 = vsel %vm4186, %v4249, 0.0
        %v4259 = vsel %vm4187, %v4253, 0.0
        %v4260 = vsel %vm4188, %v4249, 0.0
        %v4261 = vsel %vm4189, %v4253, 0.0
        %v4262 = vsel %vm4190, %v4249, 0.0
        %v4263 = vsel %vm4191, %v4253, 0.0
        %v4264 = vsel %vm4192, %v4249, 0.0
        %v4265 = vsel %vm4193, %v4253, 0.0
        %v4266 = vsel %vm4194, %v4249, 0.0
        %v4267 = vsel %vm4195, %v4253, 0.0
        %v4268 = vsel %vm4196, %v4249, 0.0
        %v4269 = vsel %vm4197, %v4253, 0.0
        %v4270 = vsel %vm4198, %v4249, 0.0
        %v4271 = vsel %vm4199, %v4253, 0.0
        %v4272 = vsel %vm4200, %v4249, 0.0
        %v4273 = vsel %vm4201, %v4253, 0.0
        %v4274 = vsel %vm4202, %v4249, 0.0
        %v4275 = vsel %vm4203, %v4253, 0.0
        %v4276 = vsel %vm4204, %v4249, 0.0
        %v4277 = vsel %vm4205, %v4253, 0.0
        %v4278 = vsel %vm4206, %v4249, 0.0
        %v4279 = vsel %vm4207, %v4253, 0.0
        %v4280 = vsel %vm4208, %v4249, 0.0
        %v4281 = vsel %vm4209, %v4253, 0.0
        %v4282 = vsel %vm4210, %v4249, 0.0
        %v4283 = vsel %vm4211, %v4253, 0.0
        %v4284 = vsel %vm4212, %v4249, 0.0
        %v4285 = vsel %vm4213, %v4253, 0.0
        %v4286 = vsel %vm4214, %v4249, 0.0
        %v4287 = vsel %vm4215, %v4253, 0.0
        %v4288 = vsel %vm4216, %v4249, 0.0
        %v4289 = vsel %vm4217, %v4253, 0.0
        %v4290 = vsel %vm4218, %v4249, 0.0
        %v4291 = vsel %vm4219, %v4253, 0.0
        %v4292 = vsel %vm4220, %v4249, 0.0
        %v4293 = vsel %vm4221, %v4253, 0.0
        %v4294 = vsel %vm4222, %v4249, 0.0
        %v4295 = vsel %vm4223, %v4253, 0.0
        %v4296 = vsel %vm4224, %v4249, 0.0
        %v4297 = vsel %vm4225, %v4253, 0.0
        %v4298 = vsel %vm4226, %v4249, 0.0
        %v4299 = vsel %vm4227, %v4253, 0.0
        %v4300 = vsel %vm4228, %v4249, 0.0
        %v4301 = vsel %vm4229, %v4253, 0.0
        %v4302 = vsel %vm4230, %v4249, 0.0
        %v4303 = vsel %vm4231, %v4253, 0.0
        %v4304 = vsel %vm4232, %v4249, 0.0
        %v4305 = vsel %vm4233, %v4253, 0.0
        %v4306 = vsel %vm4234, %v4249, 0.0
        %v4307 = vsel %vm4235, %v4253, 0.0
        %v4308 = vsel %vm4236, %v4249, 0.0
        %v4309 = vsel %vm4237, %v4253, 0.0
        %v4310 = vsel %vm4238, %v4249, 0.0
        %v4311 = vsel %vm4239, %v4253, 0.0
        %v4312 = vsel %vm4240, %v4249, 0.0
        %v4313 = vsel %vm4241, %v4253, 0.0
        %v4314 = vsel %vm4242, %v4249, 0.0
        %v4315 = vsel %vm4243, %v4253, 0.0
        %v4316 = vsel %vm4244, %v4249, 0.0
        %v4317 = vsel %vm4245, %v4253, 0.0
        %v4318 = vadd.f32 %v4254, 0.0
        %v4319 = vadd.f32 %v4255, 0.0
        %v4320 = vadd.f32 %v4256, 0.0
        %v4321 = vadd.f32 %v4257, 0.0
        %v4322 = vadd.f32 %v4258, 0.0
        %v4323 = vadd.f32 %v4259, 0.0
        %v4324 = vadd.f32 %v4260, 0.0
        %v4325 = vadd.f32 %v4261, 0.0
        %v4326 = vadd.f32 %v4262, 0.0
        %v4327 = vadd.f32 %v4263, 0.0
        %v4328 = vadd.f32 %v4264, 0.0
        %v4329 = vadd.f32 %v4265, 0.0
        %v4330 = vadd.f32 %v4266, 0.0
        %v4331 = vadd.f32 %v4267, 0.0
        %v4332 = vadd.f32 %v4268, 0.0
        %v4333 = vadd.f32 %v4269, 0.0
        %v4334 = vadd.f32 %v4270, 0.0
        %v4335 = vadd.f32 %v4271, 0.0
        %v4336 = vadd.f32 %v4272, 0.0
        %v4337 = vadd.f32 %v4273, 0.0
        %v4338 = vadd.f32 %v4274, 0.0
        %v4339 = vadd.f32 %v4275, 0.0
        %v4340 = vadd.f32 %v4276, 0.0
        %v4341 = vadd.f32 %v4277, 0.0
        %v4342 = vadd.f32 %v4278, 0.0
        %v4343 = vadd.f32 %v4279, 0.0
        %v4344 = vadd.f32 %v4280, 0.0
        %v4345 = vadd.f32 %v4281, 0.0
        %v4346 = vadd.f32 %v4282, 0.0
        %v4347 = vadd.f32 %v4283, 0.0
        %v4348 = vadd.f32 %v4284, 0.0
        %v4349 = vadd.f32 %v4285, 0.0
        %v4350 = vadd.f32 %v4286, 0.0
        %v4351 = vadd.f32 %v4287, 0.0
        %v4352 = vadd.f32 %v4288, 0.0
        %v4353 = vadd.f32 %v4289, 0.0
        %v4354 = vadd.f32 %v4290, 0.0
        %v4355 = vadd.f32 %v4291, 0.0
        %v4356 = vadd.f32 %v4292, 0.0
        %v4357 = vadd.f32 %v4293, 0.0
        %v4358 = vadd.f32 %v4294, 0.0
        %v4359 = vadd.f32 %v4295, 0.0
        %v4360 = vadd.f32 %v4296, 0.0
        %v4361 = vadd.f32 %v4297, 0.0
        %v4362 = vadd.f32 %v4298, 0.0
        %v4363 = vadd.f32 %v4299, 0.0
        %v4364 = vadd.f32 %v4300, 0.0
        %v4365 = vadd.f32 %v4301, 0.0
        %v4366 = vadd.f32 %v4302, 0.0
        %v4367 = vadd.f32 %v4303, 0.0
        %v4368 = vadd.f32 %v4304, 0.0
        %v4369 = vadd.f32 %v4305, 0.0
        %v4370 = vadd.f32 %v4306, 0.0
        %v4371 = vadd.f32 %v4307, 0.0
        %v4372 = vadd.f32 %v4308, 0.0
        %v4373 = vadd.f32 %v4309, 0.0
        %v4374 = vadd.f32 %v4310, 0.0
        %v4375 = vadd.f32 %v4311, 0.0
        %v4376 = vadd.f32 %v4312, 0.0
        %v4377 = vadd.f32 %v4313, 0.0
        %v4378 = vadd.f32 %v4314, 0.0
        %v4379 = vadd.f32 %v4315, 0.0
        %v4380 = vadd.f32 %v4316, 0.0
        %v4381 = vadd.f32 %v4317, 0.0
        %v4382 = vlaneseq
        %v4383 = vshrl.u32 %v4382, 7
        %v4384 = vsub.s32 4, %v4383
        %v4385 = vrot.slane %v481, %v4384
        %v4386 = vlaneseq
        %v4387 = vshrl.u32 %v4386, 7
        %v4388 = vsub.s32 4, %v4387
        %v4389 = vrot.slane %v482, %v4388
        %vm4390 = vcmp.eq.s32.totalorder %v510, %v4385
        %vm4391 = vcmp.eq.s32.totalorder %v510, %v4389
        %vm4392 = vcmp.eq.s32.totalorder %v511, %v4385
        %vm4393 = vcmp.eq.s32.totalorder %v511, %v4389
        %vm4394 = vcmp.eq.s32.totalorder %v512, %v4385
        %vm4395 = vcmp.eq.s32.totalorder %v512, %v4389
        %vm4396 = vcmp.eq.s32.totalorder %v513, %v4385
        %vm4397 = vcmp.eq.s32.totalorder %v513, %v4389
        %vm4398 = vcmp.eq.s32.totalorder %v514, %v4385
        %vm4399 = vcmp.eq.s32.totalorder %v514, %v4389
        %vm4400 = vcmp.eq.s32.totalorder %v515, %v4385
        %vm4401 = vcmp.eq.s32.totalorder %v515, %v4389
        %vm4402 = vcmp.eq.s32.totalorder %v516, %v4385
        %vm4403 = vcmp.eq.s32.totalorder %v516, %v4389
        %vm4404 = vcmp.eq.s32.totalorder %v517, %v4385
        %vm4405 = vcmp.eq.s32.totalorder %v517, %v4389
        %vm4406 = vcmp.eq.s32.totalorder %v518, %v4385
        %vm4407 = vcmp.eq.s32.totalorder %v518, %v4389
        %vm4408 = vcmp.eq.s32.totalorder %v519, %v4385
        %vm4409 = vcmp.eq.s32.totalorder %v519, %v4389
        %vm4410 = vcmp.eq.s32.totalorder %v520, %v4385
        %vm4411 = vcmp.eq.s32.totalorder %v520, %v4389
        %vm4412 = vcmp.eq.s32.totalorder %v521, %v4385
        %vm4413 = vcmp.eq.s32.totalorder %v521, %v4389
        %vm4414 = vcmp.eq.s32.totalorder %v522, %v4385
        %vm4415 = vcmp.eq.s32.totalorder %v522, %v4389
        %vm4416 = vcmp.eq.s32.totalorder %v523, %v4385
        %vm4417 = vcmp.eq.s32.totalorder %v523, %v4389
        %vm4418 = vcmp.eq.s32.totalorder %v524, %v4385
        %vm4419 = vcmp.eq.s32.totalorder %v524, %v4389
        %vm4420 = vcmp.eq.s32.totalorder %v525, %v4385
        %vm4421 = vcmp.eq.s32.totalorder %v525, %v4389
        %vm4422 = vcmp.eq.s32.totalorder %v526, %v4385
        %vm4423 = vcmp.eq.s32.totalorder %v526, %v4389
        %vm4424 = vcmp.eq.s32.totalorder %v527, %v4385
        %vm4425 = vcmp.eq.s32.totalorder %v527, %v4389
        %vm4426 = vcmp.eq.s32.totalorder %v528, %v4385
        %vm4427 = vcmp.eq.s32.totalorder %v528, %v4389
        %vm4428 = vcmp.eq.s32.totalorder %v529, %v4385
        %vm4429 = vcmp.eq.s32.totalorder %v529, %v4389
        %vm4430 = vcmp.eq.s32.totalorder %v530, %v4385
        %vm4431 = vcmp.eq.s32.totalorder %v530, %v4389
        %vm4432 = vcmp.eq.s32.totalorder %v531, %v4385
        %vm4433 = vcmp.eq.s32.totalorder %v531, %v4389
        %vm4434 = vcmp.eq.s32.totalorder %v532, %v4385
        %vm4435 = vcmp.eq.s32.totalorder %v532, %v4389
        %vm4436 = vcmp.eq.s32.totalorder %v533, %v4385
        %vm4437 = vcmp.eq.s32.totalorder %v533, %v4389
        %vm4438 = vcmp.eq.s32.totalorder %v534, %v4385
        %vm4439 = vcmp.eq.s32.totalorder %v534, %v4389
        %vm4440 = vcmp.eq.s32.totalorder %v535, %v4385
        %vm4441 = vcmp.eq.s32.totalorder %v535, %v4389
        %vm4442 = vcmp.eq.s32.totalorder %v536, %v4385
        %vm4443 = vcmp.eq.s32.totalorder %v536, %v4389
        %vm4444 = vcmp.eq.s32.totalorder %v537, %v4385
        %vm4445 = vcmp.eq.s32.totalorder %v537, %v4389
        %vm4446 = vcmp.eq.s32.totalorder %v538, %v4385
        %vm4447 = vcmp.eq.s32.totalorder %v538, %v4389
        %vm4448 = vcmp.eq.s32.totalorder %v539, %v4385
        %vm4449 = vcmp.eq.s32.totalorder %v539, %v4389
        %vm4450 = vcmp.eq.s32.totalorder %v540, %v4385
        %vm4451 = vcmp.eq.s32.totalorder %v540, %v4389
        %vm4452 = vcmp.eq.s32.totalorder %v541, %v4385
        %vm4453 = vcmp.eq.s32.totalorder %v541, %v4389
        %v4454 = vlaneseq
        %v4455 = vshrl.u32 %v4454, 7
        %v4456 = vsub.s32 4, %v4455
        %v4457 = vrot.slane %v497, %v4456
        %v4458 = vlaneseq
        %v4459 = vshrl.u32 %v4458, 7
        %v4460 = vsub.s32 4, %v4459
        %v4461 = vrot.slane %v498, %v4460
        %v4462 = vsel %vm4390, %v4457, 0.0
        %v4463 = vsel %vm4391, %v4461, 0.0
        %v4464 = vsel %vm4392, %v4457, 0.0
        %v4465 = vsel %vm4393, %v4461, 0.0
        %v4466 = vsel %vm4394, %v4457, 0.0
        %v4467 = vsel %vm4395, %v4461, 0.0
        %v4468 = vsel %vm4396, %v4457, 0.0
        %v4469 = vsel %vm4397, %v4461, 0.0
        %v4470 = vsel %vm4398, %v4457, 0.0
        %v4471 = vsel %vm4399, %v4461, 0.0
        %v4472 = vsel %vm4400, %v4457, 0.0
        %v4473 = vsel %vm4401, %v4461, 0.0
        %v4474 = vsel %vm4402, %v4457, 0.0
        %v4475 = vsel %vm4403, %v4461, 0.0
        %v4476 = vsel %vm4404, %v4457, 0.0
        %v4477 = vsel %vm4405, %v4461, 0.0
        %v4478 = vsel %vm4406, %v4457, 0.0
        %v4479 = vsel %vm4407, %v4461, 0.0
        %v4480 = vsel %vm4408, %v4457, 0.0
        %v4481 = vsel %vm4409, %v4461, 0.0
        %v4482 = vsel %vm4410, %v4457, 0.0
        %v4483 = vsel %vm4411, %v4461, 0.0
        %v4484 = vsel %vm4412, %v4457, 0.0
        %v4485 = vsel %vm4413, %v4461, 0.0
        %v4486 = vsel %vm4414, %v4457, 0.0
        %v4487 = vsel %vm4415, %v4461, 0.0
        %v4488 = vsel %vm4416, %v4457, 0.0
        %v4489 = vsel %vm4417, %v4461, 0.0
        %v4490 = vsel %vm4418, %v4457, 0.0
        %v4491 = vsel %vm4419, %v4461, 0.0
        %v4492 = vsel %vm4420, %v4457, 0.0
        %v4493 = vsel %vm4421, %v4461, 0.0
        %v4494 = vsel %vm4422, %v4457, 0.0
        %v4495 = vsel %vm4423, %v4461, 0.0
        %v4496 = vsel %vm4424, %v4457, 0.0
        %v4497 = vsel %vm4425, %v4461, 0.0
        %v4498 = vsel %vm4426, %v4457, 0.0
        %v4499 = vsel %vm4427, %v4461, 0.0
        %v4500 = vsel %vm4428, %v4457, 0.0
        %v4501 = vsel %vm4429, %v4461, 0.0
        %v4502 = vsel %vm4430, %v4457, 0.0
        %v4503 = vsel %vm4431, %v4461, 0.0
        %v4504 = vsel %vm4432, %v4457, 0.0
        %v4505 = vsel %vm4433, %v4461, 0.0
        %v4506 = vsel %vm4434, %v4457, 0.0
        %v4507 = vsel %vm4435, %v4461, 0.0
        %v4508 = vsel %vm4436, %v4457, 0.0
        %v4509 = vsel %vm4437, %v4461, 0.0
        %v4510 = vsel %vm4438, %v4457, 0.0
        %v4511 = vsel %vm4439, %v4461, 0.0
        %v4512 = vsel %vm4440, %v4457, 0.0
        %v4513 = vsel %vm4441, %v4461, 0.0
        %v4514 = vsel %vm4442, %v4457, 0.0
        %v4515 = vsel %vm4443, %v4461, 0.0
        %v4516 = vsel %vm4444, %v4457, 0.0
        %v4517 = vsel %vm4445, %v4461, 0.0
        %v4518 = vsel %vm4446, %v4457, 0.0
        %v4519 = vsel %vm4447, %v4461, 0.0
        %v4520 = vsel %vm4448, %v4457, 0.0
        %v4521 = vsel %vm4449, %v4461, 0.0
        %v4522 = vsel %vm4450, %v4457, 0.0
        %v4523 = vsel %vm4451, %v4461, 0.0
        %v4524 = vsel %vm4452, %v4457, 0.0
        %v4525 = vsel %vm4453, %v4461, 0.0
        %v4526 = vadd.f32 %v4318, %v4462
        %v4527 = vadd.f32 %v4319, %v4463
        %v4528 = vadd.f32 %v4320, %v4464
        %v4529 = vadd.f32 %v4321, %v4465
        %v4530 = vadd.f32 %v4322, %v4466
        %v4531 = vadd.f32 %v4323, %v4467
        %v4532 = vadd.f32 %v4324, %v4468
        %v4533 = vadd.f32 %v4325, %v4469
        %v4534 = vadd.f32 %v4326, %v4470
        %v4535 = vadd.f32 %v4327, %v4471
        %v4536 = vadd.f32 %v4328, %v4472
        %v4537 = vadd.f32 %v4329, %v4473
        %v4538 = vadd.f32 %v4330, %v4474
        %v4539 = vadd.f32 %v4331, %v4475
        %v4540 = vadd.f32 %v4332, %v4476
        %v4541 = vadd.f32 %v4333, %v4477
        %v4542 = vadd.f32 %v4334, %v4478
        %v4543 = vadd.f32 %v4335, %v4479
        %v4544 = vadd.f32 %v4336, %v4480
        %v4545 = vadd.f32 %v4337, %v4481
        %v4546 = vadd.f32 %v4338, %v4482
        %v4547 = vadd.f32 %v4339, %v4483
        %v4548 = vadd.f32 %v4340, %v4484
        %v4549 = vadd.f32 %v4341, %v4485
        %v4550 = vadd.f32 %v4342, %v4486
        %v4551 = vadd.f32 %v4343, %v4487
        %v4552 = vadd.f32 %v4344, %v4488
        %v4553 = vadd.f32 %v4345, %v4489
        %v4554 = vadd.f32 %v4346, %v4490
        %v4555 = vadd.f32 %v4347, %v4491
        %v4556 = vadd.f32 %v4348, %v4492
        %v4557 = vadd.f32 %v4349, %v4493
        %v4558 = vadd.f32 %v4350, %v4494
        %v4559 = vadd.f32 %v4351, %v4495
        %v4560 = vadd.f32 %v4352, %v4496
        %v4561 = vadd.f32 %v4353, %v4497
        %v4562 = vadd.f32 %v4354, %v4498
        %v4563 = vadd.f32 %v4355, %v4499
        %v4564 = vadd.f32 %v4356, %v4500
        %v4565 = vadd.f32 %v4357, %v4501
        %v4566 = vadd.f32 %v4358, %v4502
        %v4567 = vadd.f32 %v4359, %v4503
        %v4568 = vadd.f32 %v4360, %v4504
        %v4569 = vadd.f32 %v4361, %v4505
        %v4570 = vadd.f32 %v4362, %v4506
        %v4571 = vadd.f32 %v4363, %v4507
        %v4572 = vadd.f32 %v4364, %v4508
        %v4573 = vadd.f32 %v4365, %v4509
        %v4574 = vadd.f32 %v4366, %v4510
        %v4575 = vadd.f32 %v4367, %v4511
        %v4576 = vadd.f32 %v4368, %v4512
        %v4577 = vadd.f32 %v4369, %v4513
        %v4578 = vadd.f32 %v4370, %v4514
        %v4579 = vadd.f32 %v4371, %v4515
        %v4580 = vadd.f32 %v4372, %v4516
        %v4581 = vadd.f32 %v4373, %v4517
        %v4582 = vadd.f32 %v4374, %v4518
        %v4583 = vadd.f32 %v4375, %v4519
        %v4584 = vadd.f32 %v4376, %v4520
        %v4585 = vadd.f32 %v4377, %v4521
        %v4586 = vadd.f32 %v4378, %v4522
        %v4587 = vadd.f32 %v4379, %v4523
        %v4588 = vadd.f32 %v4380, %v4524
        %v4589 = vadd.f32 %v4381, %v4525
        %v4590 = vlaneseq
        %v4591 = vshrl.u32 %v4590, 7
        %v4592 = vsub.s32 4, %v4591
        %v4593 = vrot.slane %v485, %v4592
        %v4594 = vlaneseq
        %v4595 = vshrl.u32 %v4594, 7
        %v4596 = vsub.s32 4, %v4595
        %v4597 = vrot.slane %v486, %v4596
        %vm4598 = vcmp.eq.s32.totalorder %v510, %v4593
        %vm4599 = vcmp.eq.s32.totalorder %v510, %v4597
        %vm4600 = vcmp.eq.s32.totalorder %v511, %v4593
        %vm4601 = vcmp.eq.s32.totalorder %v511, %v4597
        %vm4602 = vcmp.eq.s32.totalorder %v512, %v4593
        %vm4603 = vcmp.eq.s32.totalorder %v512, %v4597
        %vm4604 = vcmp.eq.s32.totalorder %v513, %v4593
        %vm4605 = vcmp.eq.s32.totalorder %v513, %v4597
        %vm4606 = vcmp.eq.s32.totalorder %v514, %v4593
        %vm4607 = vcmp.eq.s32.totalorder %v514, %v4597
        %vm4608 = vcmp.eq.s32.totalorder %v515, %v4593
        %vm4609 = vcmp.eq.s32.totalorder %v515, %v4597
        %vm4610 = vcmp.eq.s32.totalorder %v516, %v4593
        %vm4611 = vcmp.eq.s32.totalorder %v516, %v4597
        %vm4612 = vcmp.eq.s32.totalorder %v517, %v4593
        %vm4613 = vcmp.eq.s32.totalorder %v517, %v4597
        %vm4614 = vcmp.eq.s32.totalorder %v518, %v4593
        %vm4615 = vcmp.eq.s32.totalorder %v518, %v4597
        %vm4616 = vcmp.eq.s32.totalorder %v519, %v4593
        %vm4617 = vcmp.eq.s32.totalorder %v519, %v4597
        %vm4618 = vcmp.eq.s32.totalorder %v520, %v4593
        %vm4619 = vcmp.eq.s32.totalorder %v520, %v4597
        %vm4620 = vcmp.eq.s32.totalorder %v521, %v4593
        %vm4621 = vcmp.eq.s32.totalorder %v521, %v4597
        %vm4622 = vcmp.eq.s32.totalorder %v522, %v4593
        %vm4623 = vcmp.eq.s32.totalorder %v522, %v4597
        %vm4624 = vcmp.eq.s32.totalorder %v523, %v4593
        %vm4625 = vcmp.eq.s32.totalorder %v523, %v4597
        %vm4626 = vcmp.eq.s32.totalorder %v524, %v4593
        %vm4627 = vcmp.eq.s32.totalorder %v524, %v4597
        %vm4628 = vcmp.eq.s32.totalorder %v525, %v4593
        %vm4629 = vcmp.eq.s32.totalorder %v525, %v4597
        %vm4630 = vcmp.eq.s32.totalorder %v526, %v4593
        %vm4631 = vcmp.eq.s32.totalorder %v526, %v4597
        %vm4632 = vcmp.eq.s32.totalorder %v527, %v4593
        %vm4633 = vcmp.eq.s32.totalorder %v527, %v4597
        %vm4634 = vcmp.eq.s32.totalorder %v528, %v4593
        %vm4635 = vcmp.eq.s32.totalorder %v528, %v4597
        %vm4636 = vcmp.eq.s32.totalorder %v529, %v4593
        %vm4637 = vcmp.eq.s32.totalorder %v529, %v4597
        %vm4638 = vcmp.eq.s32.totalorder %v530, %v4593
        %vm4639 = vcmp.eq.s32.totalorder %v530, %v4597
        %vm4640 = vcmp.eq.s32.totalorder %v531, %v4593
        %vm4641 = vcmp.eq.s32.totalorder %v531, %v4597
        %vm4642 = vcmp.eq.s32.totalorder %v532, %v4593
        %vm4643 = vcmp.eq.s32.totalorder %v532, %v4597
        %vm4644 = vcmp.eq.s32.totalorder %v533, %v4593
        %vm4645 = vcmp.eq.s32.totalorder %v533, %v4597
        %vm4646 = vcmp.eq.s32.totalorder %v534, %v4593
        %vm4647 = vcmp.eq.s32.totalorder %v534, %v4597
        %vm4648 = vcmp.eq.s32.totalorder %v535, %v4593
        %vm4649 = vcmp.eq.s32.totalorder %v535, %v4597
        %vm4650 = vcmp.eq.s32.totalorder %v536, %v4593
        %vm4651 = vcmp.eq.s32.totalorder %v536, %v4597
        %vm4652 = vcmp.eq.s32.totalorder %v537, %v4593
        %vm4653 = vcmp.eq.s32.totalorder %v537, %v4597
        %vm4654 = vcmp.eq.s32.totalorder %v538, %v4593
        %vm4655 = vcmp.eq.s32.totalorder %v538, %v4597
        %vm4656 = vcmp.eq.s32.totalorder %v539, %v4593
        %vm4657 = vcmp.eq.s32.totalorder %v539, %v4597
        %vm4658 = vcmp.eq.s32.totalorder %v540, %v4593
        %vm4659 = vcmp.eq.s32.totalorder %v540, %v4597
        %vm4660 = vcmp.eq.s32.totalorder %v541, %v4593
        %vm4661 = vcmp.eq.s32.totalorder %v541, %v4597
        %v4662 = vlaneseq
        %v4663 = vshrl.u32 %v4662, 7
        %v4664 = vsub.s32 4, %v4663
        %v4665 = vrot.slane %v501, %v4664
        %v4666 = vlaneseq
        %v4667 = vshrl.u32 %v4666, 7
        %v4668 = vsub.s32 4, %v4667
        %v4669 = vrot.slane %v502, %v4668
        %v4670 = vsel %vm4598, %v4665, 0.0
        %v4671 = vsel %vm4599, %v4669, 0.0
        %v4672 = vsel %vm4600, %v4665, 0.0
        %v4673 = vsel %vm4601, %v4669, 0.0
        %v4674 = vsel %vm4602, %v4665, 0.0
        %v4675 = vsel %vm4603, %v4669, 0.0
        %v4676 = vsel %vm4604, %v4665, 0.0
        %v4677 = vsel %vm4605, %v4669, 0.0
        %v4678 = vsel %vm4606, %v4665, 0.0
        %v4679 = vsel %vm4607, %v4669, 0.0
        %v4680 = vsel %vm4608, %v4665, 0.0
        %v4681 = vsel %vm4609, %v4669, 0.0
        %v4682 = vsel %vm4610, %v4665, 0.0
        %v4683 = vsel %vm4611, %v4669, 0.0
        %v4684 = vsel %vm4612, %v4665, 0.0
        %v4685 = vsel %vm4613, %v4669, 0.0
        %v4686 = vsel %vm4614, %v4665, 0.0
        %v4687 = vsel %vm4615, %v4669, 0.0
        %v4688 = vsel %vm4616, %v4665, 0.0
        %v4689 = vsel %vm4617, %v4669, 0.0
        %v4690 = vsel %vm4618, %v4665, 0.0
        %v4691 = vsel %vm4619, %v4669, 0.0
        %v4692 = vsel %vm4620, %v4665, 0.0
        %v4693 = vsel %vm4621, %v4669, 0.0
        %v4694 = vsel %vm4622, %v4665, 0.0
        %v4695 = vsel %vm4623, %v4669, 0.0
        %v4696 = vsel %vm4624, %v4665, 0.0
        %v4697 = vsel %vm4625, %v4669, 0.0
        %v4698 = vsel %vm4626, %v4665, 0.0
        %v4699 = vsel %vm4627, %v4669, 0.0
        %v4700 = vsel %vm4628, %v4665, 0.0
        %v4701 = vsel %vm4629, %v4669, 0.0
        %v4702 = vsel %vm4630, %v4665, 0.0
        %v4703 = vsel %vm4631, %v4669, 0.0
        %v4704 = vsel %vm4632, %v4665, 0.0
        %v4705 = vsel %vm4633, %v4669, 0.0
        %v4706 = vsel %vm4634, %v4665, 0.0
        %v4707 = vsel %vm4635, %v4669, 0.0
        %v4708 = vsel %vm4636, %v4665, 0.0
        %v4709 = vsel %vm4637, %v4669, 0.0
        %v4710 = vsel %vm4638, %v4665, 0.0
        %v4711 = vsel %vm4639, %v4669, 0.0
        %v4712 = vsel %vm4640, %v4665, 0.0
        %v4713 = vsel %vm4641, %v4669, 0.0
        %v4714 = vsel %vm4642, %v4665, 0.0
        %v4715 = vsel %vm4643, %v4669, 0.0
        %v4716 = vsel %vm4644, %v4665, 0.0
        %v4717 = vsel %vm4645, %v4669, 0.0
        %v4718 = vsel %vm4646, %v4665, 0.0
        %v4719 = vsel %vm4647, %v4669, 0.0
        %v4720 = vsel %vm4648, %v4665, 0.0
        %v4721 = vsel %vm4649, %v4669, 0.0
        %v4722 = vsel %vm4650, %v4665, 0.0
        %v4723 = vsel %vm4651, %v4669, 0.0
        %v4724 = vsel %vm4652, %v4665, 0.0
        %v4725 = vsel %vm4653, %v4669, 0.0
        %v4726 = vsel %vm4654, %v4665, 0.0
        %v4727 = vsel %vm4655, %v4669, 0.0
        %v4728 = vsel %vm4656, %v4665, 0.0
        %v4729 = vsel %vm4657, %v4669, 0.0
        %v4730 = vsel %vm4658, %v4665, 0.0
        %v4731 = vsel %vm4659, %v4669, 0.0
        %v4732 = vsel %vm4660, %v4665, 0.0
        %v4733 = vsel %vm4661, %v4669, 0.0
        %v4734 = vadd.f32 %v4526, %v4670
        %v4735 = vadd.f32 %v4527, %v4671
        %v4736 = vadd.f32 %v4528, %v4672
        %v4737 = vadd.f32 %v4529, %v4673
        %v4738 = vadd.f32 %v4530, %v4674
        %v4739 = vadd.f32 %v4531, %v4675
        %v4740 = vadd.f32 %v4532, %v4676
        %v4741 = vadd.f32 %v4533, %v4677
        %v4742 = vadd.f32 %v4534, %v4678
        %v4743 = vadd.f32 %v4535, %v4679
        %v4744 = vadd.f32 %v4536, %v4680
        %v4745 = vadd.f32 %v4537, %v4681
        %v4746 = vadd.f32 %v4538, %v4682
        %v4747 = vadd.f32 %v4539, %v4683
        %v4748 = vadd.f32 %v4540, %v4684
        %v4749 = vadd.f32 %v4541, %v4685
        %v4750 = vadd.f32 %v4542, %v4686
        %v4751 = vadd.f32 %v4543, %v4687
        %v4752 = vadd.f32 %v4544, %v4688
        %v4753 = vadd.f32 %v4545, %v4689
        %v4754 = vadd.f32 %v4546, %v4690
        %v4755 = vadd.f32 %v4547, %v4691
        %v4756 = vadd.f32 %v4548, %v4692
        %v4757 = vadd.f32 %v4549, %v4693
        %v4758 = vadd.f32 %v4550, %v4694
        %v4759 = vadd.f32 %v4551, %v4695
        %v4760 = vadd.f32 %v4552, %v4696
        %v4761 = vadd.f32 %v4553, %v4697
        %v4762 = vadd.f32 %v4554, %v4698
        %v4763 = vadd.f32 %v4555, %v4699
        %v4764 = vadd.f32 %v4556, %v4700
        %v4765 = vadd.f32 %v4557, %v4701
        %v4766 = vadd.f32 %v4558, %v4702
        %v4767 = vadd.f32 %v4559, %v4703
        %v4768 = vadd.f32 %v4560, %v4704
        %v4769 = vadd.f32 %v4561, %v4705
        %v4770 = vadd.f32 %v4562, %v4706
        %v4771 = vadd.f32 %v4563, %v4707
        %v4772 = vadd.f32 %v4564, %v4708
        %v4773 = vadd.f32 %v4565, %v4709
        %v4774 = vadd.f32 %v4566, %v4710
        %v4775 = vadd.f32 %v4567, %v4711
        %v4776 = vadd.f32 %v4568, %v4712
        %v4777 = vadd.f32 %v4569, %v4713
        %v4778 = vadd.f32 %v4570, %v4714
        %v4779 = vadd.f32 %v4571, %v4715
        %v4780 = vadd.f32 %v4572, %v4716
        %v4781 = vadd.f32 %v4573, %v4717
        %v4782 = vadd.f32 %v4574, %v4718
        %v4783 = vadd.f32 %v4575, %v4719
        %v4784 = vadd.f32 %v4576, %v4720
        %v4785 = vadd.f32 %v4577, %v4721
        %v4786 = vadd.f32 %v4578, %v4722
        %v4787 = vadd.f32 %v4579, %v4723
        %v4788 = vadd.f32 %v4580, %v4724
        %v4789 = vadd.f32 %v4581, %v4725
        %v4790 = vadd.f32 %v4582, %v4726
        %v4791 = vadd.f32 %v4583, %v4727
        %v4792 = vadd.f32 %v4584, %v4728
        %v4793 = vadd.f32 %v4585, %v4729
        %v4794 = vadd.f32 %v4586, %v4730
        %v4795 = vadd.f32 %v4587, %v4731
        %v4796 = vadd.f32 %v4588, %v4732
        %v4797 = vadd.f32 %v4589, %v4733
        %v4798 = vlaneseq
        %v4799 = vshrl.u32 %v4798, 7
        %v4800 = vsub.s32 4, %v4799
        %v4801 = vrot.slane %v489, %v4800
        %v4802 = vlaneseq
        %v4803 = vshrl.u32 %v4802, 7
        %v4804 = vsub.s32 4, %v4803
        %v4805 = vrot.slane %v490, %v4804
        %vm4806 = vcmp.eq.s32.totalorder %v510, %v4801
        %vm4807 = vcmp.eq.s32.totalorder %v510, %v4805
        %vm4808 = vcmp.eq.s32.totalorder %v511, %v4801
        %vm4809 = vcmp.eq.s32.totalorder %v511, %v4805
        %vm4810 = vcmp.eq.s32.totalorder %v512, %v4801
        %vm4811 = vcmp.eq.s32.totalorder %v512, %v4805
        %vm4812 = vcmp.eq.s32.totalorder %v513, %v4801
        %vm4813 = vcmp.eq.s32.totalorder %v513, %v4805
        %vm4814 = vcmp.eq.s32.totalorder %v514, %v4801
        %vm4815 = vcmp.eq.s32.totalorder %v514, %v4805
        %vm4816 = vcmp.eq.s32.totalorder %v515, %v4801
        %vm4817 = vcmp.eq.s32.totalorder %v515, %v4805
        %vm4818 = vcmp.eq.s32.totalorder %v516, %v4801
        %vm4819 = vcmp.eq.s32.totalorder %v516, %v4805
        %vm4820 = vcmp.eq.s32.totalorder %v517, %v4801
        %vm4821 = vcmp.eq.s32.totalorder %v517, %v4805
        %vm4822 = vcmp.eq.s32.totalorder %v518, %v4801
        %vm4823 = vcmp.eq.s32.totalorder %v518, %v4805
        %vm4824 = vcmp.eq.s32.totalorder %v519, %v4801
        %vm4825 = vcmp.eq.s32.totalorder %v519, %v4805
        %vm4826 = vcmp.eq.s32.totalorder %v520, %v4801
        %vm4827 = vcmp.eq.s32.totalorder %v520, %v4805
        %vm4828 = vcmp.eq.s32.totalorder %v521, %v4801
        %vm4829 = vcmp.eq.s32.totalorder %v521, %v4805
        %vm4830 = vcmp.eq.s32.totalorder %v522, %v4801
        %vm4831 = vcmp.eq.s32.totalorder %v522, %v4805
        %vm4832 = vcmp.eq.s32.totalorder %v523, %v4801
        %vm4833 = vcmp.eq.s32.totalorder %v523, %v4805
        %vm4834 = vcmp.eq.s32.totalorder %v524, %v4801
        %vm4835 = vcmp.eq.s32.totalorder %v524, %v4805
        %vm4836 = vcmp.eq.s32.totalorder %v525, %v4801
        %vm4837 = vcmp.eq.s32.totalorder %v525, %v4805
        %vm4838 = vcmp.eq.s32.totalorder %v526, %v4801
        %vm4839 = vcmp.eq.s32.totalorder %v526, %v4805
        %vm4840 = vcmp.eq.s32.totalorder %v527, %v4801
        %vm4841 = vcmp.eq.s32.totalorder %v527, %v4805
        %vm4842 = vcmp.eq.s32.totalorder %v528, %v4801
        %vm4843 = vcmp.eq.s32.totalorder %v528, %v4805
        %vm4844 = vcmp.eq.s32.totalorder %v529, %v4801
        %vm4845 = vcmp.eq.s32.totalorder %v529, %v4805
        %vm4846 = vcmp.eq.s32.totalorder %v530, %v4801
        %vm4847 = vcmp.eq.s32.totalorder %v530, %v4805
        %vm4848 = vcmp.eq.s32.totalorder %v531, %v4801
        %vm4849 = vcmp.eq.s32.totalorder %v531, %v4805
        %vm4850 = vcmp.eq.s32.totalorder %v532, %v4801
        %vm4851 = vcmp.eq.s32.totalorder %v532, %v4805
        %vm4852 = vcmp.eq.s32.totalorder %v533, %v4801
        %vm4853 = vcmp.eq.s32.totalorder %v533, %v4805
        %vm4854 = vcmp.eq.s32.totalorder %v534, %v4801
        %vm4855 = vcmp.eq.s32.totalorder %v534, %v4805
        %vm4856 = vcmp.eq.s32.totalorder %v535, %v4801
        %vm4857 = vcmp.eq.s32.totalorder %v535, %v4805
        %vm4858 = vcmp.eq.s32.totalorder %v536, %v4801
        %vm4859 = vcmp.eq.s32.totalorder %v536, %v4805
        %vm4860 = vcmp.eq.s32.totalorder %v537, %v4801
        %vm4861 = vcmp.eq.s32.totalorder %v537, %v4805
        %vm4862 = vcmp.eq.s32.totalorder %v538, %v4801
        %vm4863 = vcmp.eq.s32.totalorder %v538, %v4805
        %vm4864 = vcmp.eq.s32.totalorder %v539, %v4801
        %vm4865 = vcmp.eq.s32.totalorder %v539, %v4805
        %vm4866 = vcmp.eq.s32.totalorder %v540, %v4801
        %vm4867 = vcmp.eq.s32.totalorder %v540, %v4805
        %vm4868 = vcmp.eq.s32.totalorder %v541, %v4801
        %vm4869 = vcmp.eq.s32.totalorder %v541, %v4805
        %v4870 = vlaneseq
        %v4871 = vshrl.u32 %v4870, 7
        %v4872 = vsub.s32 4, %v4871
        %v4873 = vrot.slane %v505, %v4872
        %v4874 = vlaneseq
        %v4875 = vshrl.u32 %v4874, 7
        %v4876 = vsub.s32 4, %v4875
        %v4877 = vrot.slane %v506, %v4876
        %v4878 = vsel %vm4806, %v4873, 0.0
        %v4879 = vsel %vm4807, %v4877, 0.0
        %v4880 = vsel %vm4808, %v4873, 0.0
        %v4881 = vsel %vm4809, %v4877, 0.0
        %v4882 = vsel %vm4810, %v4873, 0.0
        %v4883 = vsel %vm4811, %v4877, 0.0
        %v4884 = vsel %vm4812, %v4873, 0.0
        %v4885 = vsel %vm4813, %v4877, 0.0
        %v4886 = vsel %vm4814, %v4873, 0.0
        %v4887 = vsel %vm4815, %v4877, 0.0
        %v4888 = vsel %vm4816, %v4873, 0.0
        %v4889 = vsel %vm4817, %v4877, 0.0
        %v4890 = vsel %vm4818, %v4873, 0.0
        %v4891 = vsel %vm4819, %v4877, 0.0
        %v4892 = vsel %vm4820, %v4873, 0.0
        %v4893 = vsel %vm4821, %v4877, 0.0
        %v4894 = vsel %vm4822, %v4873, 0.0
        %v4895 = vsel %vm4823, %v4877, 0.0
        %v4896 = vsel %vm4824, %v4873, 0.0
        %v4897 = vsel %vm4825, %v4877, 0.0
        %v4898 = vsel %vm4826, %v4873, 0.0
        %v4899 = vsel %vm4827, %v4877, 0.0
        %v4900 = vsel %vm4828, %v4873, 0.0
        %v4901 = vsel %vm4829, %v4877, 0.0
        %v4902 = vsel %vm4830, %v4873, 0.0
        %v4903 = vsel %vm4831, %v4877, 0.0
        %v4904 = vsel %vm4832, %v4873, 0.0
        %v4905 = vsel %vm4833, %v4877, 0.0
        %v4906 = vsel %vm4834, %v4873, 0.0
        %v4907 = vsel %vm4835, %v4877, 0.0
        %v4908 = vsel %vm4836, %v4873, 0.0
        %v4909 = vsel %vm4837, %v4877, 0.0
        %v4910 = vsel %vm4838, %v4873, 0.0
        %v4911 = vsel %vm4839, %v4877, 0.0
        %v4912 = vsel %vm4840, %v4873, 0.0
        %v4913 = vsel %vm4841, %v4877, 0.0
        %v4914 = vsel %vm4842, %v4873, 0.0
        %v4915 = vsel %vm4843, %v4877, 0.0
        %v4916 = vsel %vm4844, %v4873, 0.0
        %v4917 = vsel %vm4845, %v4877, 0.0
        %v4918 = vsel %vm4846, %v4873, 0.0
        %v4919 = vsel %vm4847, %v4877, 0.0
        %v4920 = vsel %vm4848, %v4873, 0.0
        %v4921 = vsel %vm4849, %v4877, 0.0
        %v4922 = vsel %vm4850, %v4873, 0.0
        %v4923 = vsel %vm4851, %v4877, 0.0
        %v4924 = vsel %vm4852, %v4873, 0.0
        %v4925 = vsel %vm4853, %v4877, 0.0
        %v4926 = vsel %vm4854, %v4873, 0.0
        %v4927 = vsel %vm4855, %v4877, 0.0
        %v4928 = vsel %vm4856, %v4873, 0.0
        %v4929 = vsel %vm4857, %v4877, 0.0
        %v4930 = vsel %vm4858, %v4873, 0.0
        %v4931 = vsel %vm4859, %v4877, 0.0
        %v4932 = vsel %vm4860, %v4873, 0.0
        %v4933 = vsel %vm4861, %v4877, 0.0
        %v4934 = vsel %vm4862, %v4873, 0.0
        %v4935 = vsel %vm4863, %v4877, 0.0
        %v4936 = vsel %vm4864, %v4873, 0.0
        %v4937 = vsel %vm4865, %v4877, 0.0
        %v4938 = vsel %vm4866, %v4873, 0.0
        %v4939 = vsel %vm4867, %v4877, 0.0
        %v4940 = vsel %vm4868, %v4873, 0.0
        %v4941 = vsel %vm4869, %v4877, 0.0
        %v4942 = vadd.f32 %v4734, %v4878
        %v4943 = vadd.f32 %v4735, %v4879
        %v4944 = vadd.f32 %v4736, %v4880
        %v4945 = vadd.f32 %v4737, %v4881
        %v4946 = vadd.f32 %v4738, %v4882
        %v4947 = vadd.f32 %v4739, %v4883
        %v4948 = vadd.f32 %v4740, %v4884
        %v4949 = vadd.f32 %v4741, %v4885
        %v4950 = vadd.f32 %v4742, %v4886
        %v4951 = vadd.f32 %v4743, %v4887
        %v4952 = vadd.f32 %v4744, %v4888
        %v4953 = vadd.f32 %v4745, %v4889
        %v4954 = vadd.f32 %v4746, %v4890
        %v4955 = vadd.f32 %v4747, %v4891
        %v4956 = vadd.f32 %v4748, %v4892
        %v4957 = vadd.f32 %v4749, %v4893
        %v4958 = vadd.f32 %v4750, %v4894
        %v4959 = vadd.f32 %v4751, %v4895
        %v4960 = vadd.f32 %v4752, %v4896
        %v4961 = vadd.f32 %v4753, %v4897
        %v4962 = vadd.f32 %v4754, %v4898
        %v4963 = vadd.f32 %v4755, %v4899
        %v4964 = vadd.f32 %v4756, %v4900
        %v4965 = vadd.f32 %v4757, %v4901
        %v4966 = vadd.f32 %v4758, %v4902
        %v4967 = vadd.f32 %v4759, %v4903
        %v4968 = vadd.f32 %v4760, %v4904
        %v4969 = vadd.f32 %v4761, %v4905
        %v4970 = vadd.f32 %v4762, %v4906
        %v4971 = vadd.f32 %v4763, %v4907
        %v4972 = vadd.f32 %v4764, %v4908
        %v4973 = vadd.f32 %v4765, %v4909
        %v4974 = vadd.f32 %v4766, %v4910
        %v4975 = vadd.f32 %v4767, %v4911
        %v4976 = vadd.f32 %v4768, %v4912
        %v4977 = vadd.f32 %v4769, %v4913
        %v4978 = vadd.f32 %v4770, %v4914
        %v4979 = vadd.f32 %v4771, %v4915
        %v4980 = vadd.f32 %v4772, %v4916
        %v4981 = vadd.f32 %v4773, %v4917
        %v4982 = vadd.f32 %v4774, %v4918
        %v4983 = vadd.f32 %v4775, %v4919
        %v4984 = vadd.f32 %v4776, %v4920
        %v4985 = vadd.f32 %v4777, %v4921
        %v4986 = vadd.f32 %v4778, %v4922
        %v4987 = vadd.f32 %v4779, %v4923
        %v4988 = vadd.f32 %v4780, %v4924
        %v4989 = vadd.f32 %v4781, %v4925
        %v4990 = vadd.f32 %v4782, %v4926
        %v4991 = vadd.f32 %v4783, %v4927
        %v4992 = vadd.f32 %v4784, %v4928
        %v4993 = vadd.f32 %v4785, %v4929
        %v4994 = vadd.f32 %v4786, %v4930
        %v4995 = vadd.f32 %v4787, %v4931
        %v4996 = vadd.f32 %v4788, %v4932
        %v4997 = vadd.f32 %v4789, %v4933
        %v4998 = vadd.f32 %v4790, %v4934
        %v4999 = vadd.f32 %v4791, %v4935
        %v5000 = vadd.f32 %v4792, %v4936
        %v5001 = vadd.f32 %v4793, %v4937
        %v5002 = vadd.f32 %v4794, %v4938
        %v5003 = vadd.f32 %v4795, %v4939
        %v5004 = vadd.f32 %v4796, %v4940
        %v5005 = vadd.f32 %v4797, %v4941
        %v5006 = vpack.c.bf16 %v451, %v451
        %v5007 = vpack.c.bf16 %v453, %v453
        %v5008 = vpack.c.bf16 %v4944, %v4942
        %v5009 = vpack.c.bf16 %v4945, %v4943
        %v5010 = vpack.c.bf16 %v4948, %v4946
        %v5011 = vpack.c.bf16 %v4949, %v4947
        %v5012 = vpack.c.bf16 %v4952, %v4950
        %v5013 = vpack.c.bf16 %v4953, %v4951
        %v5014 = vpack.c.bf16 %v4956, %v4954
        %v5015 = vpack.c.bf16 %v4957, %v4955
        %v5016 = vpack.c.bf16 %v4960, %v4958
        %v5017 = vpack.c.bf16 %v4961, %v4959
        %v5018 = vpack.c.bf16 %v4964, %v4962
        %v5019 = vpack.c.bf16 %v4965, %v4963
        %v5020 = vpack.c.bf16 %v4968, %v4966
        %v5021 = vpack.c.bf16 %v4969, %v4967
        %v5022 = vpack.c.bf16 %v4972, %v4970
        %v5023 = vpack.c.bf16 %v4973, %v4971
        %v5024 = vpack.c.bf16 %v4976, %v4974
        %v5025 = vpack.c.bf16 %v4977, %v4975
        %v5026 = vpack.c.bf16 %v4980, %v4978
        %v5027 = vpack.c.bf16 %v4981, %v4979
        %v5028 = vpack.c.bf16 %v4984, %v4982
        %v5029 = vpack.c.bf16 %v4985, %v4983
        %v5030 = vpack.c.bf16 %v4988, %v4986
        %v5031 = vpack.c.bf16 %v4989, %v4987
        %v5032 = vpack.c.bf16 %v4992, %v4990
        %v5033 = vpack.c.bf16 %v4993, %v4991
        %v5034 = vpack.c.bf16 %v4996, %v4994
        %v5035 = vpack.c.bf16 %v4997, %v4995
        %v5036 = vpack.c.bf16 %v5000, %v4998
        %v5037 = vpack.c.bf16 %v5001, %v4999
        %v5038 = vpack.c.bf16 %v5004, %v5002
        %v5039 = vpack.c.bf16 %v5005, %v5003
        %5040 = vmatprep.subr.bf16.mxu0 %v5009
        %5041 = vmatpush1.bf16.msra.mxu0 %v5008
        %5042 = vmatprep.subr.bf16.mxu0 %v5011
        %5043 = vmatpush1.bf16.msra.mxu0 %v5010
        %5044 = vmatprep.subr.bf16.mxu0 %v5013
        %5045 = vmatpush1.bf16.msra.mxu0 %v5012
        %5046 = vmatprep.subr.bf16.mxu0 %v5015
        %5047 = vmatpush1.bf16.msra.mxu0 %v5014
        %5048 = vmatprep.subr.bf16.mxu0 %v5017
        %5049 = vmatpush1.bf16.msra.mxu0 %v5016
        %5050 = vmatprep.subr.bf16.mxu0 %v5019
        %5051 = vmatpush1.bf16.msra.mxu0 %v5018
        %5052 = vmatprep.subr.bf16.mxu0 %v5021
        %5053 = vmatpush1.bf16.msra.mxu0 %v5020
        %5054 = vmatprep.subr.bf16.mxu0 %v5023
        %5055 = vmatpush1.bf16.msra.mxu0 %v5022
        %5056 = vmatprep.subr.bf16.mxu0 %v5025
        %5057 = vmatpush1.bf16.msra.mxu0 %v5024
        %5058 = vmatprep.subr.bf16.mxu0 %v5027
        %5059 = vmatpush1.bf16.msra.mxu0 %v5026
        %5060 = vmatprep.subr.bf16.mxu0 %v5029
        %5061 = vmatpush1.bf16.msra.mxu0 %v5028
        %5062 = vmatprep.subr.bf16.mxu0 %v5031
        %5063 = vmatpush1.bf16.msra.mxu0 %v5030
        %5064 = vmatprep.subr.bf16.mxu0 %v5033
        %5065 = vmatpush1.bf16.msra.mxu0 %v5032
        %5066 = vmatprep.subr.bf16.mxu0 %v5035
        %5067 = vmatpush1.bf16.msra.mxu0 %v5034
        %5068 = vmatprep.subr.bf16.mxu0 %v5037
        %5069 = vmatpush1.bf16.msra.mxu0 %v5036
        %5070 = vmatprep.subr.bf16.mxu0 %v5039
        %5071 = vmatpush1.bf16.msra.mxu0 %v5038
        %5072 = vmatprep.mubr.bf16.mxu0 %v5007
        %5073 = vmatmul.mubr.bf16.gmra.mrb[0].mxu0 %v5006
        %v5074 = vpop.f32.mrb[0].mxu0
        %v5075 = vadd.f32 0.0, %v5074
        %v5076 = vpop.f32.mrb[0].mxu0
        %v5077 = vadd.f32 0.0, %v5076
        %v5078 = vpop.f32.mrb[0].mxu0
        %v5079 = vpop.f32.mrb[0].mxu0
        %5080 = vdwg.mxu0
        %v5081 = vadd.f32 %v4172, %v5075
        %v5082 = vadd.f32 %v4173, %v5077
        %v5083 = vlaneseq
        %v5084 = vshrl.u32 %v5083, 7
        %v5085 = vsub.s32 5, %v5084
        %v5086 = vrot.slane %v477, %v5085
        %v5087 = vlaneseq
        %v5088 = vshrl.u32 %v5087, 7
        %v5089 = vsub.s32 5, %v5088
        %v5090 = vrot.slane %v478, %v5089
        %vm5091 = vcmp.eq.s32.totalorder %v510, %v5086
        %vm5092 = vcmp.eq.s32.totalorder %v510, %v5090
        %vm5093 = vcmp.eq.s32.totalorder %v511, %v5086
        %vm5094 = vcmp.eq.s32.totalorder %v511, %v5090
        %vm5095 = vcmp.eq.s32.totalorder %v512, %v5086
        %vm5096 = vcmp.eq.s32.totalorder %v512, %v5090
        %vm5097 = vcmp.eq.s32.totalorder %v513, %v5086
        %vm5098 = vcmp.eq.s32.totalorder %v513, %v5090
        %vm5099 = vcmp.eq.s32.totalorder %v514, %v5086
        %vm5100 = vcmp.eq.s32.totalorder %v514, %v5090
        %vm5101 = vcmp.eq.s32.totalorder %v515, %v5086
        %vm5102 = vcmp.eq.s32.totalorder %v515, %v5090
        %vm5103 = vcmp.eq.s32.totalorder %v516, %v5086
        %vm5104 = vcmp.eq.s32.totalorder %v516, %v5090
        %vm5105 = vcmp.eq.s32.totalorder %v517, %v5086
        %vm5106 = vcmp.eq.s32.totalorder %v517, %v5090
        %vm5107 = vcmp.eq.s32.totalorder %v518, %v5086
        %vm5108 = vcmp.eq.s32.totalorder %v518, %v5090
        %vm5109 = vcmp.eq.s32.totalorder %v519, %v5086
        %vm5110 = vcmp.eq.s32.totalorder %v519, %v5090
        %vm5111 = vcmp.eq.s32.totalorder %v520, %v5086
        %vm5112 = vcmp.eq.s32.totalorder %v520, %v5090
        %vm5113 = vcmp.eq.s32.totalorder %v521, %v5086
        %vm5114 = vcmp.eq.s32.totalorder %v521, %v5090
        %vm5115 = vcmp.eq.s32.totalorder %v522, %v5086
        %vm5116 = vcmp.eq.s32.totalorder %v522, %v5090
        %vm5117 = vcmp.eq.s32.totalorder %v523, %v5086
        %vm5118 = vcmp.eq.s32.totalorder %v523, %v5090
        %vm5119 = vcmp.eq.s32.totalorder %v524, %v5086
        %vm5120 = vcmp.eq.s32.totalorder %v524, %v5090
        %vm5121 = vcmp.eq.s32.totalorder %v525, %v5086
        %vm5122 = vcmp.eq.s32.totalorder %v525, %v5090
        %vm5123 = vcmp.eq.s32.totalorder %v526, %v5086
        %vm5124 = vcmp.eq.s32.totalorder %v526, %v5090
        %vm5125 = vcmp.eq.s32.totalorder %v527, %v5086
        %vm5126 = vcmp.eq.s32.totalorder %v527, %v5090
        %vm5127 = vcmp.eq.s32.totalorder %v528, %v5086
        %vm5128 = vcmp.eq.s32.totalorder %v528, %v5090
        %vm5129 = vcmp.eq.s32.totalorder %v529, %v5086
        %vm5130 = vcmp.eq.s32.totalorder %v529, %v5090
        %vm5131 = vcmp.eq.s32.totalorder %v530, %v5086
        %vm5132 = vcmp.eq.s32.totalorder %v530, %v5090
        %vm5133 = vcmp.eq.s32.totalorder %v531, %v5086
        %vm5134 = vcmp.eq.s32.totalorder %v531, %v5090
        %vm5135 = vcmp.eq.s32.totalorder %v532, %v5086
        %vm5136 = vcmp.eq.s32.totalorder %v532, %v5090
        %vm5137 = vcmp.eq.s32.totalorder %v533, %v5086
        %vm5138 = vcmp.eq.s32.totalorder %v533, %v5090
        %vm5139 = vcmp.eq.s32.totalorder %v534, %v5086
        %vm5140 = vcmp.eq.s32.totalorder %v534, %v5090
        %vm5141 = vcmp.eq.s32.totalorder %v535, %v5086
        %vm5142 = vcmp.eq.s32.totalorder %v535, %v5090
        %vm5143 = vcmp.eq.s32.totalorder %v536, %v5086
        %vm5144 = vcmp.eq.s32.totalorder %v536, %v5090
        %vm5145 = vcmp.eq.s32.totalorder %v537, %v5086
        %vm5146 = vcmp.eq.s32.totalorder %v537, %v5090
        %vm5147 = vcmp.eq.s32.totalorder %v538, %v5086
        %vm5148 = vcmp.eq.s32.totalorder %v538, %v5090
        %vm5149 = vcmp.eq.s32.totalorder %v539, %v5086
        %vm5150 = vcmp.eq.s32.totalorder %v539, %v5090
        %vm5151 = vcmp.eq.s32.totalorder %v540, %v5086
        %vm5152 = vcmp.eq.s32.totalorder %v540, %v5090
        %vm5153 = vcmp.eq.s32.totalorder %v541, %v5086
        %vm5154 = vcmp.eq.s32.totalorder %v541, %v5090
        %v5155 = vlaneseq
        %v5156 = vshrl.u32 %v5155, 7
        %v5157 = vsub.s32 5, %v5156
        %v5158 = vrot.slane %v493, %v5157
        %v5159 = vlaneseq
        %v5160 = vshrl.u32 %v5159, 7
        %v5161 = vsub.s32 5, %v5160
        %v5162 = vrot.slane %v494, %v5161
        %v5163 = vsel %vm5091, %v5158, 0.0
        %v5164 = vsel %vm5092, %v5162, 0.0
        %v5165 = vsel %vm5093, %v5158, 0.0
        %v5166 = vsel %vm5094, %v5162, 0.0
        %v5167 = vsel %vm5095, %v5158, 0.0
        %v5168 = vsel %vm5096, %v5162, 0.0
        %v5169 = vsel %vm5097, %v5158, 0.0
        %v5170 = vsel %vm5098, %v5162, 0.0
        %v5171 = vsel %vm5099, %v5158, 0.0
        %v5172 = vsel %vm5100, %v5162, 0.0
        %v5173 = vsel %vm5101, %v5158, 0.0
        %v5174 = vsel %vm5102, %v5162, 0.0
        %v5175 = vsel %vm5103, %v5158, 0.0
        %v5176 = vsel %vm5104, %v5162, 0.0
        %v5177 = vsel %vm5105, %v5158, 0.0
        %v5178 = vsel %vm5106, %v5162, 0.0
        %v5179 = vsel %vm5107, %v5158, 0.0
        %v5180 = vsel %vm5108, %v5162, 0.0
        %v5181 = vsel %vm5109, %v5158, 0.0
        %v5182 = vsel %vm5110, %v5162, 0.0
        %v5183 = vsel %vm5111, %v5158, 0.0
        %v5184 = vsel %vm5112, %v5162, 0.0
        %v5185 = vsel %vm5113, %v5158, 0.0
        %v5186 = vsel %vm5114, %v5162, 0.0
        %v5187 = vsel %vm5115, %v5158, 0.0
        %v5188 = vsel %vm5116, %v5162, 0.0
        %v5189 = vsel %vm5117, %v5158, 0.0
        %v5190 = vsel %vm5118, %v5162, 0.0
        %v5191 = vsel %vm5119, %v5158, 0.0
        %v5192 = vsel %vm5120, %v5162, 0.0
        %v5193 = vsel %vm5121, %v5158, 0.0
        %v5194 = vsel %vm5122, %v5162, 0.0
        %v5195 = vsel %vm5123, %v5158, 0.0
        %v5196 = vsel %vm5124, %v5162, 0.0
        %v5197 = vsel %vm5125, %v5158, 0.0
        %v5198 = vsel %vm5126, %v5162, 0.0
        %v5199 = vsel %vm5127, %v5158, 0.0
        %v5200 = vsel %vm5128, %v5162, 0.0
        %v5201 = vsel %vm5129, %v5158, 0.0
        %v5202 = vsel %vm5130, %v5162, 0.0
        %v5203 = vsel %vm5131, %v5158, 0.0
        %v5204 = vsel %vm5132, %v5162, 0.0
        %v5205 = vsel %vm5133, %v5158, 0.0
        %v5206 = vsel %vm5134, %v5162, 0.0
        %v5207 = vsel %vm5135, %v5158, 0.0
        %v5208 = vsel %vm5136, %v5162, 0.0
        %v5209 = vsel %vm5137, %v5158, 0.0
        %v5210 = vsel %vm5138, %v5162, 0.0
        %v5211 = vsel %vm5139, %v5158, 0.0
        %v5212 = vsel %vm5140, %v5162, 0.0
        %v5213 = vsel %vm5141, %v5158, 0.0
        %v5214 = vsel %vm5142, %v5162, 0.0
        %v5215 = vsel %vm5143, %v5158, 0.0
        %v5216 = vsel %vm5144, %v5162, 0.0
        %v5217 = vsel %vm5145, %v5158, 0.0
        %v5218 = vsel %vm5146, %v5162, 0.0
        %v5219 = vsel %vm5147, %v5158, 0.0
        %v5220 = vsel %vm5148, %v5162, 0.0
        %v5221 = vsel %vm5149, %v5158, 0.0
        %v5222 = vsel %vm5150, %v5162, 0.0
        %v5223 = vsel %vm5151, %v5158, 0.0
        %v5224 = vsel %vm5152, %v5162, 0.0
        %v5225 = vsel %vm5153, %v5158, 0.0
        %v5226 = vsel %vm5154, %v5162, 0.0
        %v5227 = vadd.f32 %v5163, 0.0
        %v5228 = vadd.f32 %v5164, 0.0
        %v5229 = vadd.f32 %v5165, 0.0
        %v5230 = vadd.f32 %v5166, 0.0
        %v5231 = vadd.f32 %v5167, 0.0
        %v5232 = vadd.f32 %v5168, 0.0
        %v5233 = vadd.f32 %v5169, 0.0
        %v5234 = vadd.f32 %v5170, 0.0
        %v5235 = vadd.f32 %v5171, 0.0
        %v5236 = vadd.f32 %v5172, 0.0
        %v5237 = vadd.f32 %v5173, 0.0
        %v5238 = vadd.f32 %v5174, 0.0
        %v5239 = vadd.f32 %v5175, 0.0
        %v5240 = vadd.f32 %v5176, 0.0
        %v5241 = vadd.f32 %v5177, 0.0
        %v5242 = vadd.f32 %v5178, 0.0
        %v5243 = vadd.f32 %v5179, 0.0
        %v5244 = vadd.f32 %v5180, 0.0
        %v5245 = vadd.f32 %v5181, 0.0
        %v5246 = vadd.f32 %v5182, 0.0
        %v5247 = vadd.f32 %v5183, 0.0
        %v5248 = vadd.f32 %v5184, 0.0
        %v5249 = vadd.f32 %v5185, 0.0
        %v5250 = vadd.f32 %v5186, 0.0
        %v5251 = vadd.f32 %v5187, 0.0
        %v5252 = vadd.f32 %v5188, 0.0
        %v5253 = vadd.f32 %v5189, 0.0
        %v5254 = vadd.f32 %v5190, 0.0
        %v5255 = vadd.f32 %v5191, 0.0
        %v5256 = vadd.f32 %v5192, 0.0
        %v5257 = vadd.f32 %v5193, 0.0
        %v5258 = vadd.f32 %v5194, 0.0
        %v5259 = vadd.f32 %v5195, 0.0
        %v5260 = vadd.f32 %v5196, 0.0
        %v5261 = vadd.f32 %v5197, 0.0
        %v5262 = vadd.f32 %v5198, 0.0
        %v5263 = vadd.f32 %v5199, 0.0
        %v5264 = vadd.f32 %v5200, 0.0
        %v5265 = vadd.f32 %v5201, 0.0
        %v5266 = vadd.f32 %v5202, 0.0
        %v5267 = vadd.f32 %v5203, 0.0
        %v5268 = vadd.f32 %v5204, 0.0
        %v5269 = vadd.f32 %v5205, 0.0
        %v5270 = vadd.f32 %v5206, 0.0
        %v5271 = vadd.f32 %v5207, 0.0
        %v5272 = vadd.f32 %v5208, 0.0
        %v5273 = vadd.f32 %v5209, 0.0
        %v5274 = vadd.f32 %v5210, 0.0
        %v5275 = vadd.f32 %v5211, 0.0
        %v5276 = vadd.f32 %v5212, 0.0
        %v5277 = vadd.f32 %v5213, 0.0
        %v5278 = vadd.f32 %v5214, 0.0
        %v5279 = vadd.f32 %v5215, 0.0
        %v5280 = vadd.f32 %v5216, 0.0
        %v5281 = vadd.f32 %v5217, 0.0
        %v5282 = vadd.f32 %v5218, 0.0
        %v5283 = vadd.f32 %v5219, 0.0
        %v5284 = vadd.f32 %v5220, 0.0
        %v5285 = vadd.f32 %v5221, 0.0
        %v5286 = vadd.f32 %v5222, 0.0
        %v5287 = vadd.f32 %v5223, 0.0
        %v5288 = vadd.f32 %v5224, 0.0
        %v5289 = vadd.f32 %v5225, 0.0
        %v5290 = vadd.f32 %v5226, 0.0
        %v5291 = vlaneseq
        %v5292 = vshrl.u32 %v5291, 7
        %v5293 = vsub.s32 5, %v5292
        %v5294 = vrot.slane %v481, %v5293
        %v5295 = vlaneseq
        %v5296 = vshrl.u32 %v5295, 7
        %v5297 = vsub.s32 5, %v5296
        %v5298 = vrot.slane %v482, %v5297
        %vm5299 = vcmp.eq.s32.totalorder %v510, %v5294
        %vm5300 = vcmp.eq.s32.totalorder %v510, %v5298
        %vm5301 = vcmp.eq.s32.totalorder %v511, %v5294
        %vm5302 = vcmp.eq.s32.totalorder %v511, %v5298
        %vm5303 = vcmp.eq.s32.totalorder %v512, %v5294
        %vm5304 = vcmp.eq.s32.totalorder %v512, %v5298
        %vm5305 = vcmp.eq.s32.totalorder %v513, %v5294
        %vm5306 = vcmp.eq.s32.totalorder %v513, %v5298
        %vm5307 = vcmp.eq.s32.totalorder %v514, %v5294
        %vm5308 = vcmp.eq.s32.totalorder %v514, %v5298
        %vm5309 = vcmp.eq.s32.totalorder %v515, %v5294
        %vm5310 = vcmp.eq.s32.totalorder %v515, %v5298
        %vm5311 = vcmp.eq.s32.totalorder %v516, %v5294
        %vm5312 = vcmp.eq.s32.totalorder %v516, %v5298
        %vm5313 = vcmp.eq.s32.totalorder %v517, %v5294
        %vm5314 = vcmp.eq.s32.totalorder %v517, %v5298
        %vm5315 = vcmp.eq.s32.totalorder %v518, %v5294
        %vm5316 = vcmp.eq.s32.totalorder %v518, %v5298
        %vm5317 = vcmp.eq.s32.totalorder %v519, %v5294
        %vm5318 = vcmp.eq.s32.totalorder %v519, %v5298
        %vm5319 = vcmp.eq.s32.totalorder %v520, %v5294
        %vm5320 = vcmp.eq.s32.totalorder %v520, %v5298
        %vm5321 = vcmp.eq.s32.totalorder %v521, %v5294
        %vm5322 = vcmp.eq.s32.totalorder %v521, %v5298
        %vm5323 = vcmp.eq.s32.totalorder %v522, %v5294
        %vm5324 = vcmp.eq.s32.totalorder %v522, %v5298
        %vm5325 = vcmp.eq.s32.totalorder %v523, %v5294
        %vm5326 = vcmp.eq.s32.totalorder %v523, %v5298
        %vm5327 = vcmp.eq.s32.totalorder %v524, %v5294
        %vm5328 = vcmp.eq.s32.totalorder %v524, %v5298
        %vm5329 = vcmp.eq.s32.totalorder %v525, %v5294
        %vm5330 = vcmp.eq.s32.totalorder %v525, %v5298
        %vm5331 = vcmp.eq.s32.totalorder %v526, %v5294
        %vm5332 = vcmp.eq.s32.totalorder %v526, %v5298
        %vm5333 = vcmp.eq.s32.totalorder %v527, %v5294
        %vm5334 = vcmp.eq.s32.totalorder %v527, %v5298
        %vm5335 = vcmp.eq.s32.totalorder %v528, %v5294
        %vm5336 = vcmp.eq.s32.totalorder %v528, %v5298
        %vm5337 = vcmp.eq.s32.totalorder %v529, %v5294
        %vm5338 = vcmp.eq.s32.totalorder %v529, %v5298
        %vm5339 = vcmp.eq.s32.totalorder %v530, %v5294
        %vm5340 = vcmp.eq.s32.totalorder %v530, %v5298
        %vm5341 = vcmp.eq.s32.totalorder %v531, %v5294
        %vm5342 = vcmp.eq.s32.totalorder %v531, %v5298
        %vm5343 = vcmp.eq.s32.totalorder %v532, %v5294
        %vm5344 = vcmp.eq.s32.totalorder %v532, %v5298
        %vm5345 = vcmp.eq.s32.totalorder %v533, %v5294
        %vm5346 = vcmp.eq.s32.totalorder %v533, %v5298
        %vm5347 = vcmp.eq.s32.totalorder %v534, %v5294
        %vm5348 = vcmp.eq.s32.totalorder %v534, %v5298
        %vm5349 = vcmp.eq.s32.totalorder %v535, %v5294
        %vm5350 = vcmp.eq.s32.totalorder %v535, %v5298
        %vm5351 = vcmp.eq.s32.totalorder %v536, %v5294
        %vm5352 = vcmp.eq.s32.totalorder %v536, %v5298
        %vm5353 = vcmp.eq.s32.totalorder %v537, %v5294
        %vm5354 = vcmp.eq.s32.totalorder %v537, %v5298
        %vm5355 = vcmp.eq.s32.totalorder %v538, %v5294
        %vm5356 = vcmp.eq.s32.totalorder %v538, %v5298
        %vm5357 = vcmp.eq.s32.totalorder %v539, %v5294
        %vm5358 = vcmp.eq.s32.totalorder %v539, %v5298
        %vm5359 = vcmp.eq.s32.totalorder %v540, %v5294
        %vm5360 = vcmp.eq.s32.totalorder %v540, %v5298
        %vm5361 = vcmp.eq.s32.totalorder %v541, %v5294
        %vm5362 = vcmp.eq.s32.totalorder %v541, %v5298
        %v5363 = vlaneseq
        %v5364 = vshrl.u32 %v5363, 7
        %v5365 = vsub.s32 5, %v5364
        %v5366 = vrot.slane %v497, %v5365
        %v5367 = vlaneseq
        %v5368 = vshrl.u32 %v5367, 7
        %v5369 = vsub.s32 5, %v5368
        %v5370 = vrot.slane %v498, %v5369
        %v5371 = vsel %vm5299, %v5366, 0.0
        %v5372 = vsel %vm5300, %v5370, 0.0
        %v5373 = vsel %vm5301, %v5366, 0.0
        %v5374 = vsel %vm5302, %v5370, 0.0
        %v5375 = vsel %vm5303, %v5366, 0.0
        %v5376 = vsel %vm5304, %v5370, 0.0
        %v5377 = vsel %vm5305, %v5366, 0.0
        %v5378 = vsel %vm5306, %v5370, 0.0
        %v5379 = vsel %vm5307, %v5366, 0.0
        %v5380 = vsel %vm5308, %v5370, 0.0
        %v5381 = vsel %vm5309, %v5366, 0.0
        %v5382 = vsel %vm5310, %v5370, 0.0
        %v5383 = vsel %vm5311, %v5366, 0.0
        %v5384 = vsel %vm5312, %v5370, 0.0
        %v5385 = vsel %vm5313, %v5366, 0.0
        %v5386 = vsel %vm5314, %v5370, 0.0
        %v5387 = vsel %vm5315, %v5366, 0.0
        %v5388 = vsel %vm5316, %v5370, 0.0
        %v5389 = vsel %vm5317, %v5366, 0.0
        %v5390 = vsel %vm5318, %v5370, 0.0
        %v5391 = vsel %vm5319, %v5366, 0.0
        %v5392 = vsel %vm5320, %v5370, 0.0
        %v5393 = vsel %vm5321, %v5366, 0.0
        %v5394 = vsel %vm5322, %v5370, 0.0
        %v5395 = vsel %vm5323, %v5366, 0.0
        %v5396 = vsel %vm5324, %v5370, 0.0
        %v5397 = vsel %vm5325, %v5366, 0.0
        %v5398 = vsel %vm5326, %v5370, 0.0
        %v5399 = vsel %vm5327, %v5366, 0.0
        %v5400 = vsel %vm5328, %v5370, 0.0
        %v5401 = vsel %vm5329, %v5366, 0.0
        %v5402 = vsel %vm5330, %v5370, 0.0
        %v5403 = vsel %vm5331, %v5366, 0.0
        %v5404 = vsel %vm5332, %v5370, 0.0
        %v5405 = vsel %vm5333, %v5366, 0.0
        %v5406 = vsel %vm5334, %v5370, 0.0
        %v5407 = vsel %vm5335, %v5366, 0.0
        %v5408 = vsel %vm5336, %v5370, 0.0
        %v5409 = vsel %vm5337, %v5366, 0.0
        %v5410 = vsel %vm5338, %v5370, 0.0
        %v5411 = vsel %vm5339, %v5366, 0.0
        %v5412 = vsel %vm5340, %v5370, 0.0
        %v5413 = vsel %vm5341, %v5366, 0.0
        %v5414 = vsel %vm5342, %v5370, 0.0
        %v5415 = vsel %vm5343, %v5366, 0.0
        %v5416 = vsel %vm5344, %v5370, 0.0
        %v5417 = vsel %vm5345, %v5366, 0.0
        %v5418 = vsel %vm5346, %v5370, 0.0
        %v5419 = vsel %vm5347, %v5366, 0.0
        %v5420 = vsel %vm5348, %v5370, 0.0
        %v5421 = vsel %vm5349, %v5366, 0.0
        %v5422 = vsel %vm5350, %v5370, 0.0
        %v5423 = vsel %vm5351, %v5366, 0.0
        %v5424 = vsel %vm5352, %v5370, 0.0
        %v5425 = vsel %vm5353, %v5366, 0.0
        %v5426 = vsel %vm5354, %v5370, 0.0
        %v5427 = vsel %vm5355, %v5366, 0.0
        %v5428 = vsel %vm5356, %v5370, 0.0
        %v5429 = vsel %vm5357, %v5366, 0.0
        %v5430 = vsel %vm5358, %v5370, 0.0
        %v5431 = vsel %vm5359, %v5366, 0.0
        %v5432 = vsel %vm5360, %v5370, 0.0
        %v5433 = vsel %vm5361, %v5366, 0.0
        %v5434 = vsel %vm5362, %v5370, 0.0
        %v5435 = vadd.f32 %v5227, %v5371
        %v5436 = vadd.f32 %v5228, %v5372
        %v5437 = vadd.f32 %v5229, %v5373
        %v5438 = vadd.f32 %v5230, %v5374
        %v5439 = vadd.f32 %v5231, %v5375
        %v5440 = vadd.f32 %v5232, %v5376
        %v5441 = vadd.f32 %v5233, %v5377
        %v5442 = vadd.f32 %v5234, %v5378
        %v5443 = vadd.f32 %v5235, %v5379
        %v5444 = vadd.f32 %v5236, %v5380
        %v5445 = vadd.f32 %v5237, %v5381
        %v5446 = vadd.f32 %v5238, %v5382
        %v5447 = vadd.f32 %v5239, %v5383
        %v5448 = vadd.f32 %v5240, %v5384
        %v5449 = vadd.f32 %v5241, %v5385
        %v5450 = vadd.f32 %v5242, %v5386
        %v5451 = vadd.f32 %v5243, %v5387
        %v5452 = vadd.f32 %v5244, %v5388
        %v5453 = vadd.f32 %v5245, %v5389
        %v5454 = vadd.f32 %v5246, %v5390
        %v5455 = vadd.f32 %v5247, %v5391
        %v5456 = vadd.f32 %v5248, %v5392
        %v5457 = vadd.f32 %v5249, %v5393
        %v5458 = vadd.f32 %v5250, %v5394
        %v5459 = vadd.f32 %v5251, %v5395
        %v5460 = vadd.f32 %v5252, %v5396
        %v5461 = vadd.f32 %v5253, %v5397
        %v5462 = vadd.f32 %v5254, %v5398
        %v5463 = vadd.f32 %v5255, %v5399
        %v5464 = vadd.f32 %v5256, %v5400
        %v5465 = vadd.f32 %v5257, %v5401
        %v5466 = vadd.f32 %v5258, %v5402
        %v5467 = vadd.f32 %v5259, %v5403
        %v5468 = vadd.f32 %v5260, %v5404
        %v5469 = vadd.f32 %v5261, %v5405
        %v5470 = vadd.f32 %v5262, %v5406
        %v5471 = vadd.f32 %v5263, %v5407
        %v5472 = vadd.f32 %v5264, %v5408
        %v5473 = vadd.f32 %v5265, %v5409
        %v5474 = vadd.f32 %v5266, %v5410
        %v5475 = vadd.f32 %v5267, %v5411
        %v5476 = vadd.f32 %v5268, %v5412
        %v5477 = vadd.f32 %v5269, %v5413
        %v5478 = vadd.f32 %v5270, %v5414
        %v5479 = vadd.f32 %v5271, %v5415
        %v5480 = vadd.f32 %v5272, %v5416
        %v5481 = vadd.f32 %v5273, %v5417
        %v5482 = vadd.f32 %v5274, %v5418
        %v5483 = vadd.f32 %v5275, %v5419
        %v5484 = vadd.f32 %v5276, %v5420
        %v5485 = vadd.f32 %v5277, %v5421
        %v5486 = vadd.f32 %v5278, %v5422
        %v5487 = vadd.f32 %v5279, %v5423
        %v5488 = vadd.f32 %v5280, %v5424
        %v5489 = vadd.f32 %v5281, %v5425
        %v5490 = vadd.f32 %v5282, %v5426
        %v5491 = vadd.f32 %v5283, %v5427
        %v5492 = vadd.f32 %v5284, %v5428
        %v5493 = vadd.f32 %v5285, %v5429
        %v5494 = vadd.f32 %v5286, %v5430
        %v5495 = vadd.f32 %v5287, %v5431
        %v5496 = vadd.f32 %v5288, %v5432
        %v5497 = vadd.f32 %v5289, %v5433
        %v5498 = vadd.f32 %v5290, %v5434
        %v5499 = vlaneseq
        %v5500 = vshrl.u32 %v5499, 7
        %v5501 = vsub.s32 5, %v5500
        %v5502 = vrot.slane %v485, %v5501
        %v5503 = vlaneseq
        %v5504 = vshrl.u32 %v5503, 7
        %v5505 = vsub.s32 5, %v5504
        %v5506 = vrot.slane %v486, %v5505
        %vm5507 = vcmp.eq.s32.totalorder %v510, %v5502
        %vm5508 = vcmp.eq.s32.totalorder %v510, %v5506
        %vm5509 = vcmp.eq.s32.totalorder %v511, %v5502
        %vm5510 = vcmp.eq.s32.totalorder %v511, %v5506
        %vm5511 = vcmp.eq.s32.totalorder %v512, %v5502
        %vm5512 = vcmp.eq.s32.totalorder %v512, %v5506
        %vm5513 = vcmp.eq.s32.totalorder %v513, %v5502
        %vm5514 = vcmp.eq.s32.totalorder %v513, %v5506
        %vm5515 = vcmp.eq.s32.totalorder %v514, %v5502
        %vm5516 = vcmp.eq.s32.totalorder %v514, %v5506
        %vm5517 = vcmp.eq.s32.totalorder %v515, %v5502
        %vm5518 = vcmp.eq.s32.totalorder %v515, %v5506
        %vm5519 = vcmp.eq.s32.totalorder %v516, %v5502
        %vm5520 = vcmp.eq.s32.totalorder %v516, %v5506
        %vm5521 = vcmp.eq.s32.totalorder %v517, %v5502
        %vm5522 = vcmp.eq.s32.totalorder %v517, %v5506
        %vm5523 = vcmp.eq.s32.totalorder %v518, %v5502
        %vm5524 = vcmp.eq.s32.totalorder %v518, %v5506
        %vm5525 = vcmp.eq.s32.totalorder %v519, %v5502
        %vm5526 = vcmp.eq.s32.totalorder %v519, %v5506
        %vm5527 = vcmp.eq.s32.totalorder %v520, %v5502
        %vm5528 = vcmp.eq.s32.totalorder %v520, %v5506
        %vm5529 = vcmp.eq.s32.totalorder %v521, %v5502
        %vm5530 = vcmp.eq.s32.totalorder %v521, %v5506
        %vm5531 = vcmp.eq.s32.totalorder %v522, %v5502
        %vm5532 = vcmp.eq.s32.totalorder %v522, %v5506
        %vm5533 = vcmp.eq.s32.totalorder %v523, %v5502
        %vm5534 = vcmp.eq.s32.totalorder %v523, %v5506
        %vm5535 = vcmp.eq.s32.totalorder %v524, %v5502
        %vm5536 = vcmp.eq.s32.totalorder %v524, %v5506
        %vm5537 = vcmp.eq.s32.totalorder %v525, %v5502
        %vm5538 = vcmp.eq.s32.totalorder %v525, %v5506
        %vm5539 = vcmp.eq.s32.totalorder %v526, %v5502
        %vm5540 = vcmp.eq.s32.totalorder %v526, %v5506
        %vm5541 = vcmp.eq.s32.totalorder %v527, %v5502
        %vm5542 = vcmp.eq.s32.totalorder %v527, %v5506
        %vm5543 = vcmp.eq.s32.totalorder %v528, %v5502
        %vm5544 = vcmp.eq.s32.totalorder %v528, %v5506
        %vm5545 = vcmp.eq.s32.totalorder %v529, %v5502
        %vm5546 = vcmp.eq.s32.totalorder %v529, %v5506
        %vm5547 = vcmp.eq.s32.totalorder %v530, %v5502
        %vm5548 = vcmp.eq.s32.totalorder %v530, %v5506
        %vm5549 = vcmp.eq.s32.totalorder %v531, %v5502
        %vm5550 = vcmp.eq.s32.totalorder %v531, %v5506
        %vm5551 = vcmp.eq.s32.totalorder %v532, %v5502
        %vm5552 = vcmp.eq.s32.totalorder %v532, %v5506
        %vm5553 = vcmp.eq.s32.totalorder %v533, %v5502
        %vm5554 = vcmp.eq.s32.totalorder %v533, %v5506
        %vm5555 = vcmp.eq.s32.totalorder %v534, %v5502
        %vm5556 = vcmp.eq.s32.totalorder %v534, %v5506
        %vm5557 = vcmp.eq.s32.totalorder %v535, %v5502
        %vm5558 = vcmp.eq.s32.totalorder %v535, %v5506
        %vm5559 = vcmp.eq.s32.totalorder %v536, %v5502
        %vm5560 = vcmp.eq.s32.totalorder %v536, %v5506
        %vm5561 = vcmp.eq.s32.totalorder %v537, %v5502
        %vm5562 = vcmp.eq.s32.totalorder %v537, %v5506
        %vm5563 = vcmp.eq.s32.totalorder %v538, %v5502
        %vm5564 = vcmp.eq.s32.totalorder %v538, %v5506
        %vm5565 = vcmp.eq.s32.totalorder %v539, %v5502
        %vm5566 = vcmp.eq.s32.totalorder %v539, %v5506
        %vm5567 = vcmp.eq.s32.totalorder %v540, %v5502
        %vm5568 = vcmp.eq.s32.totalorder %v540, %v5506
        %vm5569 = vcmp.eq.s32.totalorder %v541, %v5502
        %vm5570 = vcmp.eq.s32.totalorder %v541, %v5506
        %v5571 = vlaneseq
        %v5572 = vshrl.u32 %v5571, 7
        %v5573 = vsub.s32 5, %v5572
        %v5574 = vrot.slane %v501, %v5573
        %v5575 = vlaneseq
        %v5576 = vshrl.u32 %v5575, 7
        %v5577 = vsub.s32 5, %v5576
        %v5578 = vrot.slane %v502, %v5577
        %v5579 = vsel %vm5507, %v5574, 0.0
        %v5580 = vsel %vm5508, %v5578, 0.0
        %v5581 = vsel %vm5509, %v5574, 0.0
        %v5582 = vsel %vm5510, %v5578, 0.0
        %v5583 = vsel %vm5511, %v5574, 0.0
        %v5584 = vsel %vm5512, %v5578, 0.0
        %v5585 = vsel %vm5513, %v5574, 0.0
        %v5586 = vsel %vm5514, %v5578, 0.0
        %v5587 = vsel %vm5515, %v5574, 0.0
        %v5588 = vsel %vm5516, %v5578, 0.0
        %v5589 = vsel %vm5517, %v5574, 0.0
        %v5590 = vsel %vm5518, %v5578, 0.0
        %v5591 = vsel %vm5519, %v5574, 0.0
        %v5592 = vsel %vm5520, %v5578, 0.0
        %v5593 = vsel %vm5521, %v5574, 0.0
        %v5594 = vsel %vm5522, %v5578, 0.0
        %v5595 = vsel %vm5523, %v5574, 0.0
        %v5596 = vsel %vm5524, %v5578, 0.0
        %v5597 = vsel %vm5525, %v5574, 0.0
        %v5598 = vsel %vm5526, %v5578, 0.0
        %v5599 = vsel %vm5527, %v5574, 0.0
        %v5600 = vsel %vm5528, %v5578, 0.0
        %v5601 = vsel %vm5529, %v5574, 0.0
        %v5602 = vsel %vm5530, %v5578, 0.0
        %v5603 = vsel %vm5531, %v5574, 0.0
        %v5604 = vsel %vm5532, %v5578, 0.0
        %v5605 = vsel %vm5533, %v5574, 0.0
        %v5606 = vsel %vm5534, %v5578, 0.0
        %v5607 = vsel %vm5535, %v5574, 0.0
        %v5608 = vsel %vm5536, %v5578, 0.0
        %v5609 = vsel %vm5537, %v5574, 0.0
        %v5610 = vsel %vm5538, %v5578, 0.0
        %v5611 = vsel %vm5539, %v5574, 0.0
        %v5612 = vsel %vm5540, %v5578, 0.0
        %v5613 = vsel %vm5541, %v5574, 0.0
        %v5614 = vsel %vm5542, %v5578, 0.0
        %v5615 = vsel %vm5543, %v5574, 0.0
        %v5616 = vsel %vm5544, %v5578, 0.0
        %v5617 = vsel %vm5545, %v5574, 0.0
        %v5618 = vsel %vm5546, %v5578, 0.0
        %v5619 = vsel %vm5547, %v5574, 0.0
        %v5620 = vsel %vm5548, %v5578, 0.0
        %v5621 = vsel %vm5549, %v5574, 0.0
        %v5622 = vsel %vm5550, %v5578, 0.0
        %v5623 = vsel %vm5551, %v5574, 0.0
        %v5624 = vsel %vm5552, %v5578, 0.0
        %v5625 = vsel %vm5553, %v5574, 0.0
        %v5626 = vsel %vm5554, %v5578, 0.0
        %v5627 = vsel %vm5555, %v5574, 0.0
        %v5628 = vsel %vm5556, %v5578, 0.0
        %v5629 = vsel %vm5557, %v5574, 0.0
        %v5630 = vsel %vm5558, %v5578, 0.0
        %v5631 = vsel %vm5559, %v5574, 0.0
        %v5632 = vsel %vm5560, %v5578, 0.0
        %v5633 = vsel %vm5561, %v5574, 0.0
        %v5634 = vsel %vm5562, %v5578, 0.0
        %v5635 = vsel %vm5563, %v5574, 0.0
        %v5636 = vsel %vm5564, %v5578, 0.0
        %v5637 = vsel %vm5565, %v5574, 0.0
        %v5638 = vsel %vm5566, %v5578, 0.0
        %v5639 = vsel %vm5567, %v5574, 0.0
        %v5640 = vsel %vm5568, %v5578, 0.0
        %v5641 = vsel %vm5569, %v5574, 0.0
        %v5642 = vsel %vm5570, %v5578, 0.0
        %v5643 = vadd.f32 %v5435, %v5579
        %v5644 = vadd.f32 %v5436, %v5580
        %v5645 = vadd.f32 %v5437, %v5581
        %v5646 = vadd.f32 %v5438, %v5582
        %v5647 = vadd.f32 %v5439, %v5583
        %v5648 = vadd.f32 %v5440, %v5584
        %v5649 = vadd.f32 %v5441, %v5585
        %v5650 = vadd.f32 %v5442, %v5586
        %v5651 = vadd.f32 %v5443, %v5587
        %v5652 = vadd.f32 %v5444, %v5588
        %v5653 = vadd.f32 %v5445, %v5589
        %v5654 = vadd.f32 %v5446, %v5590
        %v5655 = vadd.f32 %v5447, %v5591
        %v5656 = vadd.f32 %v5448, %v5592
        %v5657 = vadd.f32 %v5449, %v5593
        %v5658 = vadd.f32 %v5450, %v5594
        %v5659 = vadd.f32 %v5451, %v5595
        %v5660 = vadd.f32 %v5452, %v5596
        %v5661 = vadd.f32 %v5453, %v5597
        %v5662 = vadd.f32 %v5454, %v5598
        %v5663 = vadd.f32 %v5455, %v5599
        %v5664 = vadd.f32 %v5456, %v5600
        %v5665 = vadd.f32 %v5457, %v5601
        %v5666 = vadd.f32 %v5458, %v5602
        %v5667 = vadd.f32 %v5459, %v5603
        %v5668 = vadd.f32 %v5460, %v5604
        %v5669 = vadd.f32 %v5461, %v5605
        %v5670 = vadd.f32 %v5462, %v5606
        %v5671 = vadd.f32 %v5463, %v5607
        %v5672 = vadd.f32 %v5464, %v5608
        %v5673 = vadd.f32 %v5465, %v5609
        %v5674 = vadd.f32 %v5466, %v5610
        %v5675 = vadd.f32 %v5467, %v5611
        %v5676 = vadd.f32 %v5468, %v5612
        %v5677 = vadd.f32 %v5469, %v5613
        %v5678 = vadd.f32 %v5470, %v5614
        %v5679 = vadd.f32 %v5471, %v5615
        %v5680 = vadd.f32 %v5472, %v5616
        %v5681 = vadd.f32 %v5473, %v5617
        %v5682 = vadd.f32 %v5474, %v5618
        %v5683 = vadd.f32 %v5475, %v5619
        %v5684 = vadd.f32 %v5476, %v5620
        %v5685 = vadd.f32 %v5477, %v5621
        %v5686 = vadd.f32 %v5478, %v5622
        %v5687 = vadd.f32 %v5479, %v5623
        %v5688 = vadd.f32 %v5480, %v5624
        %v5689 = vadd.f32 %v5481, %v5625
        %v5690 = vadd.f32 %v5482, %v5626
        %v5691 = vadd.f32 %v5483, %v5627
        %v5692 = vadd.f32 %v5484, %v5628
        %v5693 = vadd.f32 %v5485, %v5629
        %v5694 = vadd.f32 %v5486, %v5630
        %v5695 = vadd.f32 %v5487, %v5631
        %v5696 = vadd.f32 %v5488, %v5632
        %v5697 = vadd.f32 %v5489, %v5633
        %v5698 = vadd.f32 %v5490, %v5634
        %v5699 = vadd.f32 %v5491, %v5635
        %v5700 = vadd.f32 %v5492, %v5636
        %v5701 = vadd.f32 %v5493, %v5637
        %v5702 = vadd.f32 %v5494, %v5638
        %v5703 = vadd.f32 %v5495, %v5639
        %v5704 = vadd.f32 %v5496, %v5640
        %v5705 = vadd.f32 %v5497, %v5641
        %v5706 = vadd.f32 %v5498, %v5642
        %v5707 = vlaneseq
        %v5708 = vshrl.u32 %v5707, 7
        %v5709 = vsub.s32 5, %v5708
        %v5710 = vrot.slane %v489, %v5709
        %v5711 = vlaneseq
        %v5712 = vshrl.u32 %v5711, 7
        %v5713 = vsub.s32 5, %v5712
        %v5714 = vrot.slane %v490, %v5713
        %vm5715 = vcmp.eq.s32.totalorder %v510, %v5710
        %vm5716 = vcmp.eq.s32.totalorder %v510, %v5714
        %vm5717 = vcmp.eq.s32.totalorder %v511, %v5710
        %vm5718 = vcmp.eq.s32.totalorder %v511, %v5714
        %vm5719 = vcmp.eq.s32.totalorder %v512, %v5710
        %vm5720 = vcmp.eq.s32.totalorder %v512, %v5714
        %vm5721 = vcmp.eq.s32.totalorder %v513, %v5710
        %vm5722 = vcmp.eq.s32.totalorder %v513, %v5714
        %vm5723 = vcmp.eq.s32.totalorder %v514, %v5710
        %vm5724 = vcmp.eq.s32.totalorder %v514, %v5714
        %vm5725 = vcmp.eq.s32.totalorder %v515, %v5710
        %vm5726 = vcmp.eq.s32.totalorder %v515, %v5714
        %vm5727 = vcmp.eq.s32.totalorder %v516, %v5710
        %vm5728 = vcmp.eq.s32.totalorder %v516, %v5714
        %vm5729 = vcmp.eq.s32.totalorder %v517, %v5710
        %vm5730 = vcmp.eq.s32.totalorder %v517, %v5714
        %vm5731 = vcmp.eq.s32.totalorder %v518, %v5710
        %vm5732 = vcmp.eq.s32.totalorder %v518, %v5714
        %vm5733 = vcmp.eq.s32.totalorder %v519, %v5710
        %vm5734 = vcmp.eq.s32.totalorder %v519, %v5714
        %vm5735 = vcmp.eq.s32.totalorder %v520, %v5710
        %vm5736 = vcmp.eq.s32.totalorder %v520, %v5714
        %vm5737 = vcmp.eq.s32.totalorder %v521, %v5710
        %vm5738 = vcmp.eq.s32.totalorder %v521, %v5714
        %vm5739 = vcmp.eq.s32.totalorder %v522, %v5710
        %vm5740 = vcmp.eq.s32.totalorder %v522, %v5714
        %vm5741 = vcmp.eq.s32.totalorder %v523, %v5710
        %vm5742 = vcmp.eq.s32.totalorder %v523, %v5714
        %vm5743 = vcmp.eq.s32.totalorder %v524, %v5710
        %vm5744 = vcmp.eq.s32.totalorder %v524, %v5714
        %vm5745 = vcmp.eq.s32.totalorder %v525, %v5710
        %vm5746 = vcmp.eq.s32.totalorder %v525, %v5714
        %vm5747 = vcmp.eq.s32.totalorder %v526, %v5710
        %vm5748 = vcmp.eq.s32.totalorder %v526, %v5714
        %vm5749 = vcmp.eq.s32.totalorder %v527, %v5710
        %vm5750 = vcmp.eq.s32.totalorder %v527, %v5714
        %vm5751 = vcmp.eq.s32.totalorder %v528, %v5710
        %vm5752 = vcmp.eq.s32.totalorder %v528, %v5714
        %vm5753 = vcmp.eq.s32.totalorder %v529, %v5710
        %vm5754 = vcmp.eq.s32.totalorder %v529, %v5714
        %vm5755 = vcmp.eq.s32.totalorder %v530, %v5710
        %vm5756 = vcmp.eq.s32.totalorder %v530, %v5714
        %vm5757 = vcmp.eq.s32.totalorder %v531, %v5710
        %vm5758 = vcmp.eq.s32.totalorder %v531, %v5714
        %vm5759 = vcmp.eq.s32.totalorder %v532, %v5710
        %vm5760 = vcmp.eq.s32.totalorder %v532, %v5714
        %vm5761 = vcmp.eq.s32.totalorder %v533, %v5710
        %vm5762 = vcmp.eq.s32.totalorder %v533, %v5714
        %vm5763 = vcmp.eq.s32.totalorder %v534, %v5710
        %vm5764 = vcmp.eq.s32.totalorder %v534, %v5714
        %vm5765 = vcmp.eq.s32.totalorder %v535, %v5710
        %vm5766 = vcmp.eq.s32.totalorder %v535, %v5714
        %vm5767 = vcmp.eq.s32.totalorder %v536, %v5710
        %vm5768 = vcmp.eq.s32.totalorder %v536, %v5714
        %vm5769 = vcmp.eq.s32.totalorder %v537, %v5710
        %vm5770 = vcmp.eq.s32.totalorder %v537, %v5714
        %vm5771 = vcmp.eq.s32.totalorder %v538, %v5710
        %vm5772 = vcmp.eq.s32.totalorder %v538, %v5714
        %vm5773 = vcmp.eq.s32.totalorder %v539, %v5710
        %vm5774 = vcmp.eq.s32.totalorder %v539, %v5714
        %vm5775 = vcmp.eq.s32.totalorder %v540, %v5710
        %vm5776 = vcmp.eq.s32.totalorder %v540, %v5714
        %vm5777 = vcmp.eq.s32.totalorder %v541, %v5710
        %vm5778 = vcmp.eq.s32.totalorder %v541, %v5714
        %v5779 = vlaneseq
        %v5780 = vshrl.u32 %v5779, 7
        %v5781 = vsub.s32 5, %v5780
        %v5782 = vrot.slane %v505, %v5781
        %v5783 = vlaneseq
        %v5784 = vshrl.u32 %v5783, 7
        %v5785 = vsub.s32 5, %v5784
        %v5786 = vrot.slane %v506, %v5785
        %v5787 = vsel %vm5715, %v5782, 0.0
        %v5788 = vsel %vm5716, %v5786, 0.0
        %v5789 = vsel %vm5717, %v5782, 0.0
        %v5790 = vsel %vm5718, %v5786, 0.0
        %v5791 = vsel %vm5719, %v5782, 0.0
        %v5792 = vsel %vm5720, %v5786, 0.0
        %v5793 = vsel %vm5721, %v5782, 0.0
        %v5794 = vsel %vm5722, %v5786, 0.0
        %v5795 = vsel %vm5723, %v5782, 0.0
        %v5796 = vsel %vm5724, %v5786, 0.0
        %v5797 = vsel %vm5725, %v5782, 0.0
        %v5798 = vsel %vm5726, %v5786, 0.0
        %v5799 = vsel %vm5727, %v5782, 0.0
        %v5800 = vsel %vm5728, %v5786, 0.0
        %v5801 = vsel %vm5729, %v5782, 0.0
        %v5802 = vsel %vm5730, %v5786, 0.0
        %v5803 = vsel %vm5731, %v5782, 0.0
        %v5804 = vsel %vm5732, %v5786, 0.0
        %v5805 = vsel %vm5733, %v5782, 0.0
        %v5806 = vsel %vm5734, %v5786, 0.0
        %v5807 = vsel %vm5735, %v5782, 0.0
        %v5808 = vsel %vm5736, %v5786, 0.0
        %v5809 = vsel %vm5737, %v5782, 0.0
        %v5810 = vsel %vm5738, %v5786, 0.0
        %v5811 = vsel %vm5739, %v5782, 0.0
        %v5812 = vsel %vm5740, %v5786, 0.0
        %v5813 = vsel %vm5741, %v5782, 0.0
        %v5814 = vsel %vm5742, %v5786, 0.0
        %v5815 = vsel %vm5743, %v5782, 0.0
        %v5816 = vsel %vm5744, %v5786, 0.0
        %v5817 = vsel %vm5745, %v5782, 0.0
        %v5818 = vsel %vm5746, %v5786, 0.0
        %v5819 = vsel %vm5747, %v5782, 0.0
        %v5820 = vsel %vm5748, %v5786, 0.0
        %v5821 = vsel %vm5749, %v5782, 0.0
        %v5822 = vsel %vm5750, %v5786, 0.0
        %v5823 = vsel %vm5751, %v5782, 0.0
        %v5824 = vsel %vm5752, %v5786, 0.0
        %v5825 = vsel %vm5753, %v5782, 0.0
        %v5826 = vsel %vm5754, %v5786, 0.0
        %v5827 = vsel %vm5755, %v5782, 0.0
        %v5828 = vsel %vm5756, %v5786, 0.0
        %v5829 = vsel %vm5757, %v5782, 0.0
        %v5830 = vsel %vm5758, %v5786, 0.0
        %v5831 = vsel %vm5759, %v5782, 0.0
        %v5832 = vsel %vm5760, %v5786, 0.0
        %v5833 = vsel %vm5761, %v5782, 0.0
        %v5834 = vsel %vm5762, %v5786, 0.0
        %v5835 = vsel %vm5763, %v5782, 0.0
        %v5836 = vsel %vm5764, %v5786, 0.0
        %v5837 = vsel %vm5765, %v5782, 0.0
        %v5838 = vsel %vm5766, %v5786, 0.0
        %v5839 = vsel %vm5767, %v5782, 0.0
        %v5840 = vsel %vm5768, %v5786, 0.0
        %v5841 = vsel %vm5769, %v5782, 0.0
        %v5842 = vsel %vm5770, %v5786, 0.0
        %v5843 = vsel %vm5771, %v5782, 0.0
        %v5844 = vsel %vm5772, %v5786, 0.0
        %v5845 = vsel %vm5773, %v5782, 0.0
        %v5846 = vsel %vm5774, %v5786, 0.0
        %v5847 = vsel %vm5775, %v5782, 0.0
        %v5848 = vsel %vm5776, %v5786, 0.0
        %v5849 = vsel %vm5777, %v5782, 0.0
        %v5850 = vsel %vm5778, %v5786, 0.0
        %v5851 = vadd.f32 %v5643, %v5787
        %v5852 = vadd.f32 %v5644, %v5788
        %v5853 = vadd.f32 %v5645, %v5789
        %v5854 = vadd.f32 %v5646, %v5790
        %v5855 = vadd.f32 %v5647, %v5791
        %v5856 = vadd.f32 %v5648, %v5792
        %v5857 = vadd.f32 %v5649, %v5793
        %v5858 = vadd.f32 %v5650, %v5794
        %v5859 = vadd.f32 %v5651, %v5795
        %v5860 = vadd.f32 %v5652, %v5796
        %v5861 = vadd.f32 %v5653, %v5797
        %v5862 = vadd.f32 %v5654, %v5798
        %v5863 = vadd.f32 %v5655, %v5799
        %v5864 = vadd.f32 %v5656, %v5800
        %v5865 = vadd.f32 %v5657, %v5801
        %v5866 = vadd.f32 %v5658, %v5802
        %v5867 = vadd.f32 %v5659, %v5803
        %v5868 = vadd.f32 %v5660, %v5804
        %v5869 = vadd.f32 %v5661, %v5805
        %v5870 = vadd.f32 %v5662, %v5806
        %v5871 = vadd.f32 %v5663, %v5807
        %v5872 = vadd.f32 %v5664, %v5808
        %v5873 = vadd.f32 %v5665, %v5809
        %v5874 = vadd.f32 %v5666, %v5810
        %v5875 = vadd.f32 %v5667, %v5811
        %v5876 = vadd.f32 %v5668, %v5812
        %v5877 = vadd.f32 %v5669, %v5813
        %v5878 = vadd.f32 %v5670, %v5814
        %v5879 = vadd.f32 %v5671, %v5815
        %v5880 = vadd.f32 %v5672, %v5816
        %v5881 = vadd.f32 %v5673, %v5817
        %v5882 = vadd.f32 %v5674, %v5818
        %v5883 = vadd.f32 %v5675, %v5819
        %v5884 = vadd.f32 %v5676, %v5820
        %v5885 = vadd.f32 %v5677, %v5821
        %v5886 = vadd.f32 %v5678, %v5822
        %v5887 = vadd.f32 %v5679, %v5823
        %v5888 = vadd.f32 %v5680, %v5824
        %v5889 = vadd.f32 %v5681, %v5825
        %v5890 = vadd.f32 %v5682, %v5826
        %v5891 = vadd.f32 %v5683, %v5827
        %v5892 = vadd.f32 %v5684, %v5828
        %v5893 = vadd.f32 %v5685, %v5829
        %v5894 = vadd.f32 %v5686, %v5830
        %v5895 = vadd.f32 %v5687, %v5831
        %v5896 = vadd.f32 %v5688, %v5832
        %v5897 = vadd.f32 %v5689, %v5833
        %v5898 = vadd.f32 %v5690, %v5834
        %v5899 = vadd.f32 %v5691, %v5835
        %v5900 = vadd.f32 %v5692, %v5836
        %v5901 = vadd.f32 %v5693, %v5837
        %v5902 = vadd.f32 %v5694, %v5838
        %v5903 = vadd.f32 %v5695, %v5839
        %v5904 = vadd.f32 %v5696, %v5840
        %v5905 = vadd.f32 %v5697, %v5841
        %v5906 = vadd.f32 %v5698, %v5842
        %v5907 = vadd.f32 %v5699, %v5843
        %v5908 = vadd.f32 %v5700, %v5844
        %v5909 = vadd.f32 %v5701, %v5845
        %v5910 = vadd.f32 %v5702, %v5846
        %v5911 = vadd.f32 %v5703, %v5847
        %v5912 = vadd.f32 %v5704, %v5848
        %v5913 = vadd.f32 %v5705, %v5849
        %v5914 = vadd.f32 %v5706, %v5850
        %v5915 = vpack.c.bf16 %v455, %v455
        %v5916 = vpack.c.bf16 %v457, %v457
        %v5917 = vpack.c.bf16 %v5853, %v5851
        %v5918 = vpack.c.bf16 %v5854, %v5852
        %v5919 = vpack.c.bf16 %v5857, %v5855
        %v5920 = vpack.c.bf16 %v5858, %v5856
        %v5921 = vpack.c.bf16 %v5861, %v5859
        %v5922 = vpack.c.bf16 %v5862, %v5860
        %v5923 = vpack.c.bf16 %v5865, %v5863
        %v5924 = vpack.c.bf16 %v5866, %v5864
        %v5925 = vpack.c.bf16 %v5869, %v5867
        %v5926 = vpack.c.bf16 %v5870, %v5868
        %v5927 = vpack.c.bf16 %v5873, %v5871
        %v5928 = vpack.c.bf16 %v5874, %v5872
        %v5929 = vpack.c.bf16 %v5877, %v5875
        %v5930 = vpack.c.bf16 %v5878, %v5876
        %v5931 = vpack.c.bf16 %v5881, %v5879
        %v5932 = vpack.c.bf16 %v5882, %v5880
        %v5933 = vpack.c.bf16 %v5885, %v5883
        %v5934 = vpack.c.bf16 %v5886, %v5884
        %v5935 = vpack.c.bf16 %v5889, %v5887
        %v5936 = vpack.c.bf16 %v5890, %v5888
        %v5937 = vpack.c.bf16 %v5893, %v5891
        %v5938 = vpack.c.bf16 %v5894, %v5892
        %v5939 = vpack.c.bf16 %v5897, %v5895
        %v5940 = vpack.c.bf16 %v5898, %v5896
        %v5941 = vpack.c.bf16 %v5901, %v5899
        %v5942 = vpack.c.bf16 %v5902, %v5900
        %v5943 = vpack.c.bf16 %v5905, %v5903
        %v5944 = vpack.c.bf16 %v5906, %v5904
        %v5945 = vpack.c.bf16 %v5909, %v5907
        %v5946 = vpack.c.bf16 %v5910, %v5908
        %v5947 = vpack.c.bf16 %v5913, %v5911
        %v5948 = vpack.c.bf16 %v5914, %v5912
        %5949 = vmatprep.subr.bf16.mxu0 %v5918
        %5950 = vmatpush1.bf16.msra.mxu0 %v5917
        %5951 = vmatprep.subr.bf16.mxu0 %v5920
        %5952 = vmatpush1.bf16.msra.mxu0 %v5919
        %5953 = vmatprep.subr.bf16.mxu0 %v5922
        %5954 = vmatpush1.bf16.msra.mxu0 %v5921
        %5955 = vmatprep.subr.bf16.mxu0 %v5924
        %5956 = vmatpush1.bf16.msra.mxu0 %v5923
        %5957 = vmatprep.subr.bf16.mxu0 %v5926
        %5958 = vmatpush1.bf16.msra.mxu0 %v5925
        %5959 = vmatprep.subr.bf16.mxu0 %v5928
        %5960 = vmatpush1.bf16.msra.mxu0 %v5927
        %5961 = vmatprep.subr.bf16.mxu0 %v5930
        %5962 = vmatpush1.bf16.msra.mxu0 %v5929
        %5963 = vmatprep.subr.bf16.mxu0 %v5932
        %5964 = vmatpush1.bf16.msra.mxu0 %v5931
        %5965 = vmatprep.subr.bf16.mxu0 %v5934
        %5966 = vmatpush1.bf16.msra.mxu0 %v5933
        %5967 = vmatprep.subr.bf16.mxu0 %v5936
        %5968 = vmatpush1.bf16.msra.mxu0 %v5935
        %5969 = vmatprep.subr.bf16.mxu0 %v5938
        %5970 = vmatpush1.bf16.msra.mxu0 %v5937
        %5971 = vmatprep.subr.bf16.mxu0 %v5940
        %5972 = vmatpush1.bf16.msra.mxu0 %v5939
        %5973 = vmatprep.subr.bf16.mxu0 %v5942
        %5974 = vmatpush1.bf16.msra.mxu0 %v5941
        %5975 = vmatprep.subr.bf16.mxu0 %v5944
        %5976 = vmatpush1.bf16.msra.mxu0 %v5943
        %5977 = vmatprep.subr.bf16.mxu0 %v5946
        %5978 = vmatpush1.bf16.msra.mxu0 %v5945
        %5979 = vmatprep.subr.bf16.mxu0 %v5948
        %5980 = vmatpush1.bf16.msra.mxu0 %v5947
        %5981 = vmatprep.mubr.bf16.mxu0 %v5916
        %5982 = vmatmul.mubr.bf16.gmra.mrb[0].mxu0 %v5915
        %v5983 = vpop.f32.mrb[0].mxu0
        %v5984 = vadd.f32 0.0, %v5983
        %v5985 = vpop.f32.mrb[0].mxu0
        %v5986 = vadd.f32 0.0, %v5985
        %v5987 = vpop.f32.mrb[0].mxu0
        %v5988 = vpop.f32.mrb[0].mxu0
        %5989 = vdwg.mxu0
        %v5990 = vadd.f32 %v5081, %v5984
        %v5991 = vadd.f32 %v5082, %v5986
        %v5992 = vlaneseq
        %v5993 = vshrl.u32 %v5992, 7
        %v5994 = vsub.s32 6, %v5993
        %v5995 = vrot.slane %v477, %v5994
        %v5996 = vlaneseq
        %v5997 = vshrl.u32 %v5996, 7
        %v5998 = vsub.s32 6, %v5997
        %v5999 = vrot.slane %v478, %v5998
        %vm6000 = vcmp.eq.s32.totalorder %v510, %v5995
        %vm6001 = vcmp.eq.s32.totalorder %v510, %v5999
        %vm6002 = vcmp.eq.s32.totalorder %v511, %v5995
        %vm6003 = vcmp.eq.s32.totalorder %v511, %v5999
        %vm6004 = vcmp.eq.s32.totalorder %v512, %v5995
        %vm6005 = vcmp.eq.s32.totalorder %v512, %v5999
        %vm6006 = vcmp.eq.s32.totalorder %v513, %v5995
        %vm6007 = vcmp.eq.s32.totalorder %v513, %v5999
        %vm6008 = vcmp.eq.s32.totalorder %v514, %v5995
        %vm6009 = vcmp.eq.s32.totalorder %v514, %v5999
        %vm6010 = vcmp.eq.s32.totalorder %v515, %v5995
        %vm6011 = vcmp.eq.s32.totalorder %v515, %v5999
        %vm6012 = vcmp.eq.s32.totalorder %v516, %v5995
        %vm6013 = vcmp.eq.s32.totalorder %v516, %v5999
        %vm6014 = vcmp.eq.s32.totalorder %v517, %v5995
        %vm6015 = vcmp.eq.s32.totalorder %v517, %v5999
        %vm6016 = vcmp.eq.s32.totalorder %v518, %v5995
        %vm6017 = vcmp.eq.s32.totalorder %v518, %v5999
        %vm6018 = vcmp.eq.s32.totalorder %v519, %v5995
        %vm6019 = vcmp.eq.s32.totalorder %v519, %v5999
        %vm6020 = vcmp.eq.s32.totalorder %v520, %v5995
        %vm6021 = vcmp.eq.s32.totalorder %v520, %v5999
        %vm6022 = vcmp.eq.s32.totalorder %v521, %v5995
        %vm6023 = vcmp.eq.s32.totalorder %v521, %v5999
        %vm6024 = vcmp.eq.s32.totalorder %v522, %v5995
        %vm6025 = vcmp.eq.s32.totalorder %v522, %v5999
        %vm6026 = vcmp.eq.s32.totalorder %v523, %v5995
        %vm6027 = vcmp.eq.s32.totalorder %v523, %v5999
        %vm6028 = vcmp.eq.s32.totalorder %v524, %v5995
        %vm6029 = vcmp.eq.s32.totalorder %v524, %v5999
        %vm6030 = vcmp.eq.s32.totalorder %v525, %v5995
        %vm6031 = vcmp.eq.s32.totalorder %v525, %v5999
        %vm6032 = vcmp.eq.s32.totalorder %v526, %v5995
        %vm6033 = vcmp.eq.s32.totalorder %v526, %v5999
        %vm6034 = vcmp.eq.s32.totalorder %v527, %v5995
        %vm6035 = vcmp.eq.s32.totalorder %v527, %v5999
        %vm6036 = vcmp.eq.s32.totalorder %v528, %v5995
        %vm6037 = vcmp.eq.s32.totalorder %v528, %v5999
        %vm6038 = vcmp.eq.s32.totalorder %v529, %v5995
        %vm6039 = vcmp.eq.s32.totalorder %v529, %v5999
        %vm6040 = vcmp.eq.s32.totalorder %v530, %v5995
        %vm6041 = vcmp.eq.s32.totalorder %v530, %v5999
        %vm6042 = vcmp.eq.s32.totalorder %v531, %v5995
        %vm6043 = vcmp.eq.s32.totalorder %v531, %v5999
        %vm6044 = vcmp.eq.s32.totalorder %v532, %v5995
        %vm6045 = vcmp.eq.s32.totalorder %v532, %v5999
        %vm6046 = vcmp.eq.s32.totalorder %v533, %v5995
        %vm6047 = vcmp.eq.s32.totalorder %v533, %v5999
        %vm6048 = vcmp.eq.s32.totalorder %v534, %v5995
        %vm6049 = vcmp.eq.s32.totalorder %v534, %v5999
        %vm6050 = vcmp.eq.s32.totalorder %v535, %v5995
        %vm6051 = vcmp.eq.s32.totalorder %v535, %v5999
        %vm6052 = vcmp.eq.s32.totalorder %v536, %v5995
        %vm6053 = vcmp.eq.s32.totalorder %v536, %v5999
        %vm6054 = vcmp.eq.s32.totalorder %v537, %v5995
        %vm6055 = vcmp.eq.s32.totalorder %v537, %v5999
        %vm6056 = vcmp.eq.s32.totalorder %v538, %v5995
        %vm6057 = vcmp.eq.s32.totalorder %v538, %v5999
        %vm6058 = vcmp.eq.s32.totalorder %v539, %v5995
        %vm6059 = vcmp.eq.s32.totalorder %v539, %v5999
        %vm6060 = vcmp.eq.s32.totalorder %v540, %v5995
        %vm6061 = vcmp.eq.s32.totalorder %v540, %v5999
        %vm6062 = vcmp.eq.s32.totalorder %v541, %v5995
        %vm6063 = vcmp.eq.s32.totalorder %v541, %v5999
        %v6064 = vlaneseq
        %v6065 = vshrl.u32 %v6064, 7
        %v6066 = vsub.s32 6, %v6065
        %v6067 = vrot.slane %v493, %v6066
        %v6068 = vlaneseq
        %v6069 = vshrl.u32 %v6068, 7
        %v6070 = vsub.s32 6, %v6069
        %v6071 = vrot.slane %v494, %v6070
        %v6072 = vsel %vm6000, %v6067, 0.0
        %v6073 = vsel %vm6001, %v6071, 0.0
        %v6074 = vsel %vm6002, %v6067, 0.0
        %v6075 = vsel %vm6003, %v6071, 0.0
        %v6076 = vsel %vm6004, %v6067, 0.0
        %v6077 = vsel %vm6005, %v6071, 0.0
        %v6078 = vsel %vm6006, %v6067, 0.0
        %v6079 = vsel %vm6007, %v6071, 0.0
        %v6080 = vsel %vm6008, %v6067, 0.0
        %v6081 = vsel %vm6009, %v6071, 0.0
        %v6082 = vsel %vm6010, %v6067, 0.0
        %v6083 = vsel %vm6011, %v6071, 0.0
        %v6084 = vsel %vm6012, %v6067, 0.0
        %v6085 = vsel %vm6013, %v6071, 0.0
        %v6086 = vsel %vm6014, %v6067, 0.0
        %v6087 = vsel %vm6015, %v6071, 0.0
        %v6088 = vsel %vm6016, %v6067, 0.0
        %v6089 = vsel %vm6017, %v6071, 0.0
        %v6090 = vsel %vm6018, %v6067, 0.0
        %v6091 = vsel %vm6019, %v6071, 0.0
        %v6092 = vsel %vm6020, %v6067, 0.0
        %v6093 = vsel %vm6021, %v6071, 0.0
        %v6094 = vsel %vm6022, %v6067, 0.0
        %v6095 = vsel %vm6023, %v6071, 0.0
        %v6096 = vsel %vm6024, %v6067, 0.0
        %v6097 = vsel %vm6025, %v6071, 0.0
        %v6098 = vsel %vm6026, %v6067, 0.0
        %v6099 = vsel %vm6027, %v6071, 0.0
        %v6100 = vsel %vm6028, %v6067, 0.0
        %v6101 = vsel %vm6029, %v6071, 0.0
        %v6102 = vsel %vm6030, %v6067, 0.0
        %v6103 = vsel %vm6031, %v6071, 0.0
        %v6104 = vsel %vm6032, %v6067, 0.0
        %v6105 = vsel %vm6033, %v6071, 0.0
        %v6106 = vsel %vm6034, %v6067, 0.0
        %v6107 = vsel %vm6035, %v6071, 0.0
        %v6108 = vsel %vm6036, %v6067, 0.0
        %v6109 = vsel %vm6037, %v6071, 0.0
        %v6110 = vsel %vm6038, %v6067, 0.0
        %v6111 = vsel %vm6039, %v6071, 0.0
        %v6112 = vsel %vm6040, %v6067, 0.0
        %v6113 = vsel %vm6041, %v6071, 0.0
        %v6114 = vsel %vm6042, %v6067, 0.0
        %v6115 = vsel %vm6043, %v6071, 0.0
        %v6116 = vsel %vm6044, %v6067, 0.0
        %v6117 = vsel %vm6045, %v6071, 0.0
        %v6118 = vsel %vm6046, %v6067, 0.0
        %v6119 = vsel %vm6047, %v6071, 0.0
        %v6120 = vsel %vm6048, %v6067, 0.0
        %v6121 = vsel %vm6049, %v6071, 0.0
        %v6122 = vsel %vm6050, %v6067, 0.0
        %v6123 = vsel %vm6051, %v6071, 0.0
        %v6124 = vsel %vm6052, %v6067, 0.0
        %v6125 = vsel %vm6053, %v6071, 0.0
        %v6126 = vsel %vm6054, %v6067, 0.0
        %v6127 = vsel %vm6055, %v6071, 0.0
        %v6128 = vsel %vm6056, %v6067, 0.0
        %v6129 = vsel %vm6057, %v6071, 0.0
        %v6130 = vsel %vm6058, %v6067, 0.0
        %v6131 = vsel %vm6059, %v6071, 0.0
        %v6132 = vsel %vm6060, %v6067, 0.0
        %v6133 = vsel %vm6061, %v6071, 0.0
        %v6134 = vsel %vm6062, %v6067, 0.0
        %v6135 = vsel %vm6063, %v6071, 0.0
        %v6136 = vadd.f32 %v6072, 0.0
        %v6137 = vadd.f32 %v6073, 0.0
        %v6138 = vadd.f32 %v6074, 0.0
        %v6139 = vadd.f32 %v6075, 0.0
        %v6140 = vadd.f32 %v6076, 0.0
        %v6141 = vadd.f32 %v6077, 0.0
        %v6142 = vadd.f32 %v6078, 0.0
        %v6143 = vadd.f32 %v6079, 0.0
        %v6144 = vadd.f32 %v6080, 0.0
        %v6145 = vadd.f32 %v6081, 0.0
        %v6146 = vadd.f32 %v6082, 0.0
        %v6147 = vadd.f32 %v6083, 0.0
        %v6148 = vadd.f32 %v6084, 0.0
        %v6149 = vadd.f32 %v6085, 0.0
        %v6150 = vadd.f32 %v6086, 0.0
        %v6151 = vadd.f32 %v6087, 0.0
        %v6152 = vadd.f32 %v6088, 0.0
        %v6153 = vadd.f32 %v6089, 0.0
        %v6154 = vadd.f32 %v6090, 0.0
        %v6155 = vadd.f32 %v6091, 0.0
        %v6156 = vadd.f32 %v6092, 0.0
        %v6157 = vadd.f32 %v6093, 0.0
        %v6158 = vadd.f32 %v6094, 0.0
        %v6159 = vadd.f32 %v6095, 0.0
        %v6160 = vadd.f32 %v6096, 0.0
        %v6161 = vadd.f32 %v6097, 0.0
        %v6162 = vadd.f32 %v6098, 0.0
        %v6163 = vadd.f32 %v6099, 0.0
        %v6164 = vadd.f32 %v6100, 0.0
        %v6165 = vadd.f32 %v6101, 0.0
        %v6166 = vadd.f32 %v6102, 0.0
        %v6167 = vadd.f32 %v6103, 0.0
        %v6168 = vadd.f32 %v6104, 0.0
        %v6169 = vadd.f32 %v6105, 0.0
        %v6170 = vadd.f32 %v6106, 0.0
        %v6171 = vadd.f32 %v6107, 0.0
        %v6172 = vadd.f32 %v6108, 0.0
        %v6173 = vadd.f32 %v6109, 0.0
        %v6174 = vadd.f32 %v6110, 0.0
        %v6175 = vadd.f32 %v6111, 0.0
        %v6176 = vadd.f32 %v6112, 0.0
        %v6177 = vadd.f32 %v6113, 0.0
        %v6178 = vadd.f32 %v6114, 0.0
        %v6179 = vadd.f32 %v6115, 0.0
        %v6180 = vadd.f32 %v6116, 0.0
        %v6181 = vadd.f32 %v6117, 0.0
        %v6182 = vadd.f32 %v6118, 0.0
        %v6183 = vadd.f32 %v6119, 0.0
        %v6184 = vadd.f32 %v6120, 0.0
        %v6185 = vadd.f32 %v6121, 0.0
        %v6186 = vadd.f32 %v6122, 0.0
        %v6187 = vadd.f32 %v6123, 0.0
        %v6188 = vadd.f32 %v6124, 0.0
        %v6189 = vadd.f32 %v6125, 0.0
        %v6190 = vadd.f32 %v6126, 0.0
        %v6191 = vadd.f32 %v6127, 0.0
        %v6192 = vadd.f32 %v6128, 0.0
        %v6193 = vadd.f32 %v6129, 0.0
        %v6194 = vadd.f32 %v6130, 0.0
        %v6195 = vadd.f32 %v6131, 0.0
        %v6196 = vadd.f32 %v6132, 0.0
        %v6197 = vadd.f32 %v6133, 0.0
        %v6198 = vadd.f32 %v6134, 0.0
        %v6199 = vadd.f32 %v6135, 0.0
        %v6200 = vlaneseq
        %v6201 = vshrl.u32 %v6200, 7
        %v6202 = vsub.s32 6, %v6201
        %v6203 = vrot.slane %v481, %v6202
        %v6204 = vlaneseq
        %v6205 = vshrl.u32 %v6204, 7
        %v6206 = vsub.s32 6, %v6205
        %v6207 = vrot.slane %v482, %v6206
        %vm6208 = vcmp.eq.s32.totalorder %v510, %v6203
        %vm6209 = vcmp.eq.s32.totalorder %v510, %v6207
        %vm6210 = vcmp.eq.s32.totalorder %v511, %v6203
        %vm6211 = vcmp.eq.s32.totalorder %v511, %v6207
        %vm6212 = vcmp.eq.s32.totalorder %v512, %v6203
        %vm6213 = vcmp.eq.s32.totalorder %v512, %v6207
        %vm6214 = vcmp.eq.s32.totalorder %v513, %v6203
        %vm6215 = vcmp.eq.s32.totalorder %v513, %v6207
        %vm6216 = vcmp.eq.s32.totalorder %v514, %v6203
        %vm6217 = vcmp.eq.s32.totalorder %v514, %v6207
        %vm6218 = vcmp.eq.s32.totalorder %v515, %v6203
        %vm6219 = vcmp.eq.s32.totalorder %v515, %v6207
        %vm6220 = vcmp.eq.s32.totalorder %v516, %v6203
        %vm6221 = vcmp.eq.s32.totalorder %v516, %v6207
        %vm6222 = vcmp.eq.s32.totalorder %v517, %v6203
        %vm6223 = vcmp.eq.s32.totalorder %v517, %v6207
        %vm6224 = vcmp.eq.s32.totalorder %v518, %v6203
        %vm6225 = vcmp.eq.s32.totalorder %v518, %v6207
        %vm6226 = vcmp.eq.s32.totalorder %v519, %v6203
        %vm6227 = vcmp.eq.s32.totalorder %v519, %v6207
        %vm6228 = vcmp.eq.s32.totalorder %v520, %v6203
        %vm6229 = vcmp.eq.s32.totalorder %v520, %v6207
        %vm6230 = vcmp.eq.s32.totalorder %v521, %v6203
        %vm6231 = vcmp.eq.s32.totalorder %v521, %v6207
        %vm6232 = vcmp.eq.s32.totalorder %v522, %v6203
        %vm6233 = vcmp.eq.s32.totalorder %v522, %v6207
        %vm6234 = vcmp.eq.s32.totalorder %v523, %v6203
        %vm6235 = vcmp.eq.s32.totalorder %v523, %v6207
        %vm6236 = vcmp.eq.s32.totalorder %v524, %v6203
        %vm6237 = vcmp.eq.s32.totalorder %v524, %v6207
        %vm6238 = vcmp.eq.s32.totalorder %v525, %v6203
        %vm6239 = vcmp.eq.s32.totalorder %v525, %v6207
        %vm6240 = vcmp.eq.s32.totalorder %v526, %v6203
        %vm6241 = vcmp.eq.s32.totalorder %v526, %v6207
        %vm6242 = vcmp.eq.s32.totalorder %v527, %v6203
        %vm6243 = vcmp.eq.s32.totalorder %v527, %v6207
        %vm6244 = vcmp.eq.s32.totalorder %v528, %v6203
        %vm6245 = vcmp.eq.s32.totalorder %v528, %v6207
        %vm6246 = vcmp.eq.s32.totalorder %v529, %v6203
        %vm6247 = vcmp.eq.s32.totalorder %v529, %v6207
        %vm6248 = vcmp.eq.s32.totalorder %v530, %v6203
        %vm6249 = vcmp.eq.s32.totalorder %v530, %v6207
        %vm6250 = vcmp.eq.s32.totalorder %v531, %v6203
        %vm6251 = vcmp.eq.s32.totalorder %v531, %v6207
        %vm6252 = vcmp.eq.s32.totalorder %v532, %v6203
        %vm6253 = vcmp.eq.s32.totalorder %v532, %v6207
        %vm6254 = vcmp.eq.s32.totalorder %v533, %v6203
        %vm6255 = vcmp.eq.s32.totalorder %v533, %v6207
        %vm6256 = vcmp.eq.s32.totalorder %v534, %v6203
        %vm6257 = vcmp.eq.s32.totalorder %v534, %v6207
        %vm6258 = vcmp.eq.s32.totalorder %v535, %v6203
        %vm6259 = vcmp.eq.s32.totalorder %v535, %v6207
        %vm6260 = vcmp.eq.s32.totalorder %v536, %v6203
        %vm6261 = vcmp.eq.s32.totalorder %v536, %v6207
        %vm6262 = vcmp.eq.s32.totalorder %v537, %v6203
        %vm6263 = vcmp.eq.s32.totalorder %v537, %v6207
        %vm6264 = vcmp.eq.s32.totalorder %v538, %v6203
        %vm6265 = vcmp.eq.s32.totalorder %v538, %v6207
        %vm6266 = vcmp.eq.s32.totalorder %v539, %v6203
        %vm6267 = vcmp.eq.s32.totalorder %v539, %v6207
        %vm6268 = vcmp.eq.s32.totalorder %v540, %v6203
        %vm6269 = vcmp.eq.s32.totalorder %v540, %v6207
        %vm6270 = vcmp.eq.s32.totalorder %v541, %v6203
        %vm6271 = vcmp.eq.s32.totalorder %v541, %v6207
        %v6272 = vlaneseq
        %v6273 = vshrl.u32 %v6272, 7
        %v6274 = vsub.s32 6, %v6273
        %v6275 = vrot.slane %v497, %v6274
        %v6276 = vlaneseq
        %v6277 = vshrl.u32 %v6276, 7
        %v6278 = vsub.s32 6, %v6277
        %v6279 = vrot.slane %v498, %v6278
        %v6280 = vsel %vm6208, %v6275, 0.0
        %v6281 = vsel %vm6209, %v6279, 0.0
        %v6282 = vsel %vm6210, %v6275, 0.0
        %v6283 = vsel %vm6211, %v6279, 0.0
        %v6284 = vsel %vm6212, %v6275, 0.0
        %v6285 = vsel %vm6213, %v6279, 0.0
        %v6286 = vsel %vm6214, %v6275, 0.0
        %v6287 = vsel %vm6215, %v6279, 0.0
        %v6288 = vsel %vm6216, %v6275, 0.0
        %v6289 = vsel %vm6217, %v6279, 0.0
        %v6290 = vsel %vm6218, %v6275, 0.0
        %v6291 = vsel %vm6219, %v6279, 0.0
        %v6292 = vsel %vm6220, %v6275, 0.0
        %v6293 = vsel %vm6221, %v6279, 0.0
        %v6294 = vsel %vm6222, %v6275, 0.0
        %v6295 = vsel %vm6223, %v6279, 0.0
        %v6296 = vsel %vm6224, %v6275, 0.0
        %v6297 = vsel %vm6225, %v6279, 0.0
        %v6298 = vsel %vm6226, %v6275, 0.0
        %v6299 = vsel %vm6227, %v6279, 0.0
        %v6300 = vsel %vm6228, %v6275, 0.0
        %v6301 = vsel %vm6229, %v6279, 0.0
        %v6302 = vsel %vm6230, %v6275, 0.0
        %v6303 = vsel %vm6231, %v6279, 0.0
        %v6304 = vsel %vm6232, %v6275, 0.0
        %v6305 = vsel %vm6233, %v6279, 0.0
        %v6306 = vsel %vm6234, %v6275, 0.0
        %v6307 = vsel %vm6235, %v6279, 0.0
        %v6308 = vsel %vm6236, %v6275, 0.0
        %v6309 = vsel %vm6237, %v6279, 0.0
        %v6310 = vsel %vm6238, %v6275, 0.0
        %v6311 = vsel %vm6239, %v6279, 0.0
        %v6312 = vsel %vm6240, %v6275, 0.0
        %v6313 = vsel %vm6241, %v6279, 0.0
        %v6314 = vsel %vm6242, %v6275, 0.0
        %v6315 = vsel %vm6243, %v6279, 0.0
        %v6316 = vsel %vm6244, %v6275, 0.0
        %v6317 = vsel %vm6245, %v6279, 0.0
        %v6318 = vsel %vm6246, %v6275, 0.0
        %v6319 = vsel %vm6247, %v6279, 0.0
        %v6320 = vsel %vm6248, %v6275, 0.0
        %v6321 = vsel %vm6249, %v6279, 0.0
        %v6322 = vsel %vm6250, %v6275, 0.0
        %v6323 = vsel %vm6251, %v6279, 0.0
        %v6324 = vsel %vm6252, %v6275, 0.0
        %v6325 = vsel %vm6253, %v6279, 0.0
        %v6326 = vsel %vm6254, %v6275, 0.0
        %v6327 = vsel %vm6255, %v6279, 0.0
        %v6328 = vsel %vm6256, %v6275, 0.0
        %v6329 = vsel %vm6257, %v6279, 0.0
        %v6330 = vsel %vm6258, %v6275, 0.0
        %v6331 = vsel %vm6259, %v6279, 0.0
        %v6332 = vsel %vm6260, %v6275, 0.0
        %v6333 = vsel %vm6261, %v6279, 0.0
        %v6334 = vsel %vm6262, %v6275, 0.0
        %v6335 = vsel %vm6263, %v6279, 0.0
        %v6336 = vsel %vm6264, %v6275, 0.0
        %v6337 = vsel %vm6265, %v6279, 0.0
        %v6338 = vsel %vm6266, %v6275, 0.0
        %v6339 = vsel %vm6267, %v6279, 0.0
        %v6340 = vsel %vm6268, %v6275, 0.0
        %v6341 = vsel %vm6269, %v6279, 0.0
        %v6342 = vsel %vm6270, %v6275, 0.0
        %v6343 = vsel %vm6271, %v6279, 0.0
        %v6344 = vadd.f32 %v6136, %v6280
        %v6345 = vadd.f32 %v6137, %v6281
        %v6346 = vadd.f32 %v6138, %v6282
        %v6347 = vadd.f32 %v6139, %v6283
        %v6348 = vadd.f32 %v6140, %v6284
        %v6349 = vadd.f32 %v6141, %v6285
        %v6350 = vadd.f32 %v6142, %v6286
        %v6351 = vadd.f32 %v6143, %v6287
        %v6352 = vadd.f32 %v6144, %v6288
        %v6353 = vadd.f32 %v6145, %v6289
        %v6354 = vadd.f32 %v6146, %v6290
        %v6355 = vadd.f32 %v6147, %v6291
        %v6356 = vadd.f32 %v6148, %v6292
        %v6357 = vadd.f32 %v6149, %v6293
        %v6358 = vadd.f32 %v6150, %v6294
        %v6359 = vadd.f32 %v6151, %v6295
        %v6360 = vadd.f32 %v6152, %v6296
        %v6361 = vadd.f32 %v6153, %v6297
        %v6362 = vadd.f32 %v6154, %v6298
        %v6363 = vadd.f32 %v6155, %v6299
        %v6364 = vadd.f32 %v6156, %v6300
        %v6365 = vadd.f32 %v6157, %v6301
        %v6366 = vadd.f32 %v6158, %v6302
        %v6367 = vadd.f32 %v6159, %v6303
        %v6368 = vadd.f32 %v6160, %v6304
        %v6369 = vadd.f32 %v6161, %v6305
        %v6370 = vadd.f32 %v6162, %v6306
        %v6371 = vadd.f32 %v6163, %v6307
        %v6372 = vadd.f32 %v6164, %v6308
        %v6373 = vadd.f32 %v6165, %v6309
        %v6374 = vadd.f32 %v6166, %v6310
        %v6375 = vadd.f32 %v6167, %v6311
        %v6376 = vadd.f32 %v6168, %v6312
        %v6377 = vadd.f32 %v6169, %v6313
        %v6378 = vadd.f32 %v6170, %v6314
        %v6379 = vadd.f32 %v6171, %v6315
        %v6380 = vadd.f32 %v6172, %v6316
        %v6381 = vadd.f32 %v6173, %v6317
        %v6382 = vadd.f32 %v6174, %v6318
        %v6383 = vadd.f32 %v6175, %v6319
        %v6384 = vadd.f32 %v6176, %v6320
        %v6385 = vadd.f32 %v6177, %v6321
        %v6386 = vadd.f32 %v6178, %v6322
        %v6387 = vadd.f32 %v6179, %v6323
        %v6388 = vadd.f32 %v6180, %v6324
        %v6389 = vadd.f32 %v6181, %v6325
        %v6390 = vadd.f32 %v6182, %v6326
        %v6391 = vadd.f32 %v6183, %v6327
        %v6392 = vadd.f32 %v6184, %v6328
        %v6393 = vadd.f32 %v6185, %v6329
        %v6394 = vadd.f32 %v6186, %v6330
        %v6395 = vadd.f32 %v6187, %v6331
        %v6396 = vadd.f32 %v6188, %v6332
        %v6397 = vadd.f32 %v6189, %v6333
        %v6398 = vadd.f32 %v6190, %v6334
        %v6399 = vadd.f32 %v6191, %v6335
        %v6400 = vadd.f32 %v6192, %v6336
        %v6401 = vadd.f32 %v6193, %v6337
        %v6402 = vadd.f32 %v6194, %v6338
        %v6403 = vadd.f32 %v6195, %v6339
        %v6404 = vadd.f32 %v6196, %v6340
        %v6405 = vadd.f32 %v6197, %v6341
        %v6406 = vadd.f32 %v6198, %v6342
        %v6407 = vadd.f32 %v6199, %v6343
        %v6408 = vlaneseq
        %v6409 = vshrl.u32 %v6408, 7
        %v6410 = vsub.s32 6, %v6409
        %v6411 = vrot.slane %v485, %v6410
        %v6412 = vlaneseq
        %v6413 = vshrl.u32 %v6412, 7
        %v6414 = vsub.s32 6, %v6413
        %v6415 = vrot.slane %v486, %v6414
        %vm6416 = vcmp.eq.s32.totalorder %v510, %v6411
        %vm6417 = vcmp.eq.s32.totalorder %v510, %v6415
        %vm6418 = vcmp.eq.s32.totalorder %v511, %v6411
        %vm6419 = vcmp.eq.s32.totalorder %v511, %v6415
        %vm6420 = vcmp.eq.s32.totalorder %v512, %v6411
        %vm6421 = vcmp.eq.s32.totalorder %v512, %v6415
        %vm6422 = vcmp.eq.s32.totalorder %v513, %v6411
        %vm6423 = vcmp.eq.s32.totalorder %v513, %v6415
        %vm6424 = vcmp.eq.s32.totalorder %v514, %v6411
        %vm6425 = vcmp.eq.s32.totalorder %v514, %v6415
        %vm6426 = vcmp.eq.s32.totalorder %v515, %v6411
        %vm6427 = vcmp.eq.s32.totalorder %v515, %v6415
        %vm6428 = vcmp.eq.s32.totalorder %v516, %v6411
        %vm6429 = vcmp.eq.s32.totalorder %v516, %v6415
        %vm6430 = vcmp.eq.s32.totalorder %v517, %v6411
        %vm6431 = vcmp.eq.s32.totalorder %v517, %v6415
        %vm6432 = vcmp.eq.s32.totalorder %v518, %v6411
        %vm6433 = vcmp.eq.s32.totalorder %v518, %v6415
        %vm6434 = vcmp.eq.s32.totalorder %v519, %v6411
        %vm6435 = vcmp.eq.s32.totalorder %v519, %v6415
        %vm6436 = vcmp.eq.s32.totalorder %v520, %v6411
        %vm6437 = vcmp.eq.s32.totalorder %v520, %v6415
        %vm6438 = vcmp.eq.s32.totalorder %v521, %v6411
        %vm6439 = vcmp.eq.s32.totalorder %v521, %v6415
        %vm6440 = vcmp.eq.s32.totalorder %v522, %v6411
        %vm6441 = vcmp.eq.s32.totalorder %v522, %v6415
        %vm6442 = vcmp.eq.s32.totalorder %v523, %v6411
        %vm6443 = vcmp.eq.s32.totalorder %v523, %v6415
        %vm6444 = vcmp.eq.s32.totalorder %v524, %v6411
        %vm6445 = vcmp.eq.s32.totalorder %v524, %v6415
        %vm6446 = vcmp.eq.s32.totalorder %v525, %v6411
        %vm6447 = vcmp.eq.s32.totalorder %v525, %v6415
        %vm6448 = vcmp.eq.s32.totalorder %v526, %v6411
        %vm6449 = vcmp.eq.s32.totalorder %v526, %v6415
        %vm6450 = vcmp.eq.s32.totalorder %v527, %v6411
        %vm6451 = vcmp.eq.s32.totalorder %v527, %v6415
        %vm6452 = vcmp.eq.s32.totalorder %v528, %v6411
        %vm6453 = vcmp.eq.s32.totalorder %v528, %v6415
        %vm6454 = vcmp.eq.s32.totalorder %v529, %v6411
        %vm6455 = vcmp.eq.s32.totalorder %v529, %v6415
        %vm6456 = vcmp.eq.s32.totalorder %v530, %v6411
        %vm6457 = vcmp.eq.s32.totalorder %v530, %v6415
        %vm6458 = vcmp.eq.s32.totalorder %v531, %v6411
        %vm6459 = vcmp.eq.s32.totalorder %v531, %v6415
        %vm6460 = vcmp.eq.s32.totalorder %v532, %v6411
        %vm6461 = vcmp.eq.s32.totalorder %v532, %v6415
        %vm6462 = vcmp.eq.s32.totalorder %v533, %v6411
        %vm6463 = vcmp.eq.s32.totalorder %v533, %v6415
        %vm6464 = vcmp.eq.s32.totalorder %v534, %v6411
        %vm6465 = vcmp.eq.s32.totalorder %v534, %v6415
        %vm6466 = vcmp.eq.s32.totalorder %v535, %v6411
        %vm6467 = vcmp.eq.s32.totalorder %v535, %v6415
        %vm6468 = vcmp.eq.s32.totalorder %v536, %v6411
        %vm6469 = vcmp.eq.s32.totalorder %v536, %v6415
        %vm6470 = vcmp.eq.s32.totalorder %v537, %v6411
        %vm6471 = vcmp.eq.s32.totalorder %v537, %v6415
        %vm6472 = vcmp.eq.s32.totalorder %v538, %v6411
        %vm6473 = vcmp.eq.s32.totalorder %v538, %v6415
        %vm6474 = vcmp.eq.s32.totalorder %v539, %v6411
        %vm6475 = vcmp.eq.s32.totalorder %v539, %v6415
        %vm6476 = vcmp.eq.s32.totalorder %v540, %v6411
        %vm6477 = vcmp.eq.s32.totalorder %v540, %v6415
        %vm6478 = vcmp.eq.s32.totalorder %v541, %v6411
        %vm6479 = vcmp.eq.s32.totalorder %v541, %v6415
        %v6480 = vlaneseq
        %v6481 = vshrl.u32 %v6480, 7
        %v6482 = vsub.s32 6, %v6481
        %v6483 = vrot.slane %v501, %v6482
        %v6484 = vlaneseq
        %v6485 = vshrl.u32 %v6484, 7
        %v6486 = vsub.s32 6, %v6485
        %v6487 = vrot.slane %v502, %v6486
        %v6488 = vsel %vm6416, %v6483, 0.0
        %v6489 = vsel %vm6417, %v6487, 0.0
        %v6490 = vsel %vm6418, %v6483, 0.0
        %v6491 = vsel %vm6419, %v6487, 0.0
        %v6492 = vsel %vm6420, %v6483, 0.0
        %v6493 = vsel %vm6421, %v6487, 0.0
        %v6494 = vsel %vm6422, %v6483, 0.0
        %v6495 = vsel %vm6423, %v6487, 0.0
        %v6496 = vsel %vm6424, %v6483, 0.0
        %v6497 = vsel %vm6425, %v6487, 0.0
        %v6498 = vsel %vm6426, %v6483, 0.0
        %v6499 = vsel %vm6427, %v6487, 0.0
        %v6500 = vsel %vm6428, %v6483, 0.0
        %v6501 = vsel %vm6429, %v6487, 0.0
        %v6502 = vsel %vm6430, %v6483, 0.0
        %v6503 = vsel %vm6431, %v6487, 0.0
        %v6504 = vsel %vm6432, %v6483, 0.0
        %v6505 = vsel %vm6433, %v6487, 0.0
        %v6506 = vsel %vm6434, %v6483, 0.0
        %v6507 = vsel %vm6435, %v6487, 0.0
        %v6508 = vsel %vm6436, %v6483, 0.0
        %v6509 = vsel %vm6437, %v6487, 0.0
        %v6510 = vsel %vm6438, %v6483, 0.0
        %v6511 = vsel %vm6439, %v6487, 0.0
        %v6512 = vsel %vm6440, %v6483, 0.0
        %v6513 = vsel %vm6441, %v6487, 0.0
        %v6514 = vsel %vm6442, %v6483, 0.0
        %v6515 = vsel %vm6443, %v6487, 0.0
        %v6516 = vsel %vm6444, %v6483, 0.0
        %v6517 = vsel %vm6445, %v6487, 0.0
        %v6518 = vsel %vm6446, %v6483, 0.0
        %v6519 = vsel %vm6447, %v6487, 0.0
        %v6520 = vsel %vm6448, %v6483, 0.0
        %v6521 = vsel %vm6449, %v6487, 0.0
        %v6522 = vsel %vm6450, %v6483, 0.0
        %v6523 = vsel %vm6451, %v6487, 0.0
        %v6524 = vsel %vm6452, %v6483, 0.0
        %v6525 = vsel %vm6453, %v6487, 0.0
        %v6526 = vsel %vm6454, %v6483, 0.0
        %v6527 = vsel %vm6455, %v6487, 0.0
        %v6528 = vsel %vm6456, %v6483, 0.0
        %v6529 = vsel %vm6457, %v6487, 0.0
        %v6530 = vsel %vm6458, %v6483, 0.0
        %v6531 = vsel %vm6459, %v6487, 0.0
        %v6532 = vsel %vm6460, %v6483, 0.0
        %v6533 = vsel %vm6461, %v6487, 0.0
        %v6534 = vsel %vm6462, %v6483, 0.0
        %v6535 = vsel %vm6463, %v6487, 0.0
        %v6536 = vsel %vm6464, %v6483, 0.0
        %v6537 = vsel %vm6465, %v6487, 0.0
        %v6538 = vsel %vm6466, %v6483, 0.0
        %v6539 = vsel %vm6467, %v6487, 0.0
        %v6540 = vsel %vm6468, %v6483, 0.0
        %v6541 = vsel %vm6469, %v6487, 0.0
        %v6542 = vsel %vm6470, %v6483, 0.0
        %v6543 = vsel %vm6471, %v6487, 0.0
        %v6544 = vsel %vm6472, %v6483, 0.0
        %v6545 = vsel %vm6473, %v6487, 0.0
        %v6546 = vsel %vm6474, %v6483, 0.0
        %v6547 = vsel %vm6475, %v6487, 0.0
        %v6548 = vsel %vm6476, %v6483, 0.0
        %v6549 = vsel %vm6477, %v6487, 0.0
        %v6550 = vsel %vm6478, %v6483, 0.0
        %v6551 = vsel %vm6479, %v6487, 0.0
        %v6552 = vadd.f32 %v6344, %v6488
        %v6553 = vadd.f32 %v6345, %v6489
        %v6554 = vadd.f32 %v6346, %v6490
        %v6555 = vadd.f32 %v6347, %v6491
        %v6556 = vadd.f32 %v6348, %v6492
        %v6557 = vadd.f32 %v6349, %v6493
        %v6558 = vadd.f32 %v6350, %v6494
        %v6559 = vadd.f32 %v6351, %v6495
        %v6560 = vadd.f32 %v6352, %v6496
        %v6561 = vadd.f32 %v6353, %v6497
        %v6562 = vadd.f32 %v6354, %v6498
        %v6563 = vadd.f32 %v6355, %v6499
        %v6564 = vadd.f32 %v6356, %v6500
        %v6565 = vadd.f32 %v6357, %v6501
        %v6566 = vadd.f32 %v6358, %v6502
        %v6567 = vadd.f32 %v6359, %v6503
        %v6568 = vadd.f32 %v6360, %v6504
        %v6569 = vadd.f32 %v6361, %v6505
        %v6570 = vadd.f32 %v6362, %v6506
        %v6571 = vadd.f32 %v6363, %v6507
        %v6572 = vadd.f32 %v6364, %v6508
        %v6573 = vadd.f32 %v6365, %v6509
        %v6574 = vadd.f32 %v6366, %v6510
        %v6575 = vadd.f32 %v6367, %v6511
        %v6576 = vadd.f32 %v6368, %v6512
        %v6577 = vadd.f32 %v6369, %v6513
        %v6578 = vadd.f32 %v6370, %v6514
        %v6579 = vadd.f32 %v6371, %v6515
        %v6580 = vadd.f32 %v6372, %v6516
        %v6581 = vadd.f32 %v6373, %v6517
        %v6582 = vadd.f32 %v6374, %v6518
        %v6583 = vadd.f32 %v6375, %v6519
        %v6584 = vadd.f32 %v6376, %v6520
        %v6585 = vadd.f32 %v6377, %v6521
        %v6586 = vadd.f32 %v6378, %v6522
        %v6587 = vadd.f32 %v6379, %v6523
        %v6588 = vadd.f32 %v6380, %v6524
        %v6589 = vadd.f32 %v6381, %v6525
        %v6590 = vadd.f32 %v6382, %v6526
        %v6591 = vadd.f32 %v6383, %v6527
        %v6592 = vadd.f32 %v6384, %v6528
        %v6593 = vadd.f32 %v6385, %v6529
        %v6594 = vadd.f32 %v6386, %v6530
        %v6595 = vadd.f32 %v6387, %v6531
        %v6596 = vadd.f32 %v6388, %v6532
        %v6597 = vadd.f32 %v6389, %v6533
        %v6598 = vadd.f32 %v6390, %v6534
        %v6599 = vadd.f32 %v6391, %v6535
        %v6600 = vadd.f32 %v6392, %v6536
        %v6601 = vadd.f32 %v6393, %v6537
        %v6602 = vadd.f32 %v6394, %v6538
        %v6603 = vadd.f32 %v6395, %v6539
        %v6604 = vadd.f32 %v6396, %v6540
        %v6605 = vadd.f32 %v6397, %v6541
        %v6606 = vadd.f32 %v6398, %v6542
        %v6607 = vadd.f32 %v6399, %v6543
        %v6608 = vadd.f32 %v6400, %v6544
        %v6609 = vadd.f32 %v6401, %v6545
        %v6610 = vadd.f32 %v6402, %v6546
        %v6611 = vadd.f32 %v6403, %v6547
        %v6612 = vadd.f32 %v6404, %v6548
        %v6613 = vadd.f32 %v6405, %v6549
        %v6614 = vadd.f32 %v6406, %v6550
        %v6615 = vadd.f32 %v6407, %v6551
        %v6616 = vlaneseq
        %v6617 = vshrl.u32 %v6616, 7
        %v6618 = vsub.s32 6, %v6617
        %v6619 = vrot.slane %v489, %v6618
        %v6620 = vlaneseq
        %v6621 = vshrl.u32 %v6620, 7
        %v6622 = vsub.s32 6, %v6621
        %v6623 = vrot.slane %v490, %v6622
        %vm6624 = vcmp.eq.s32.totalorder %v510, %v6619
        %vm6625 = vcmp.eq.s32.totalorder %v510, %v6623
        %vm6626 = vcmp.eq.s32.totalorder %v511, %v6619
        %vm6627 = vcmp.eq.s32.totalorder %v511, %v6623
        %vm6628 = vcmp.eq.s32.totalorder %v512, %v6619
        %vm6629 = vcmp.eq.s32.totalorder %v512, %v6623
        %vm6630 = vcmp.eq.s32.totalorder %v513, %v6619
        %vm6631 = vcmp.eq.s32.totalorder %v513, %v6623
        %vm6632 = vcmp.eq.s32.totalorder %v514, %v6619
        %vm6633 = vcmp.eq.s32.totalorder %v514, %v6623
        %vm6634 = vcmp.eq.s32.totalorder %v515, %v6619
        %vm6635 = vcmp.eq.s32.totalorder %v515, %v6623
        %vm6636 = vcmp.eq.s32.totalorder %v516, %v6619
        %vm6637 = vcmp.eq.s32.totalorder %v516, %v6623
        %vm6638 = vcmp.eq.s32.totalorder %v517, %v6619
        %vm6639 = vcmp.eq.s32.totalorder %v517, %v6623
        %vm6640 = vcmp.eq.s32.totalorder %v518, %v6619
        %vm6641 = vcmp.eq.s32.totalorder %v518, %v6623
        %vm6642 = vcmp.eq.s32.totalorder %v519, %v6619
        %vm6643 = vcmp.eq.s32.totalorder %v519, %v6623
        %vm6644 = vcmp.eq.s32.totalorder %v520, %v6619
        %vm6645 = vcmp.eq.s32.totalorder %v520, %v6623
        %vm6646 = vcmp.eq.s32.totalorder %v521, %v6619
        %vm6647 = vcmp.eq.s32.totalorder %v521, %v6623
        %vm6648 = vcmp.eq.s32.totalorder %v522, %v6619
        %vm6649 = vcmp.eq.s32.totalorder %v522, %v6623
        %vm6650 = vcmp.eq.s32.totalorder %v523, %v6619
        %vm6651 = vcmp.eq.s32.totalorder %v523, %v6623
        %vm6652 = vcmp.eq.s32.totalorder %v524, %v6619
        %vm6653 = vcmp.eq.s32.totalorder %v524, %v6623
        %vm6654 = vcmp.eq.s32.totalorder %v525, %v6619
        %vm6655 = vcmp.eq.s32.totalorder %v525, %v6623
        %vm6656 = vcmp.eq.s32.totalorder %v526, %v6619
        %vm6657 = vcmp.eq.s32.totalorder %v526, %v6623
        %vm6658 = vcmp.eq.s32.totalorder %v527, %v6619
        %vm6659 = vcmp.eq.s32.totalorder %v527, %v6623
        %vm6660 = vcmp.eq.s32.totalorder %v528, %v6619
        %vm6661 = vcmp.eq.s32.totalorder %v528, %v6623
        %vm6662 = vcmp.eq.s32.totalorder %v529, %v6619
        %vm6663 = vcmp.eq.s32.totalorder %v529, %v6623
        %vm6664 = vcmp.eq.s32.totalorder %v530, %v6619
        %vm6665 = vcmp.eq.s32.totalorder %v530, %v6623
        %vm6666 = vcmp.eq.s32.totalorder %v531, %v6619
        %vm6667 = vcmp.eq.s32.totalorder %v531, %v6623
        %vm6668 = vcmp.eq.s32.totalorder %v532, %v6619
        %vm6669 = vcmp.eq.s32.totalorder %v532, %v6623
        %vm6670 = vcmp.eq.s32.totalorder %v533, %v6619
        %vm6671 = vcmp.eq.s32.totalorder %v533, %v6623
        %vm6672 = vcmp.eq.s32.totalorder %v534, %v6619
        %vm6673 = vcmp.eq.s32.totalorder %v534, %v6623
        %vm6674 = vcmp.eq.s32.totalorder %v535, %v6619
        %vm6675 = vcmp.eq.s32.totalorder %v535, %v6623
        %vm6676 = vcmp.eq.s32.totalorder %v536, %v6619
        %vm6677 = vcmp.eq.s32.totalorder %v536, %v6623
        %vm6678 = vcmp.eq.s32.totalorder %v537, %v6619
        %vm6679 = vcmp.eq.s32.totalorder %v537, %v6623
        %vm6680 = vcmp.eq.s32.totalorder %v538, %v6619
        %vm6681 = vcmp.eq.s32.totalorder %v538, %v6623
        %vm6682 = vcmp.eq.s32.totalorder %v539, %v6619
        %vm6683 = vcmp.eq.s32.totalorder %v539, %v6623
        %vm6684 = vcmp.eq.s32.totalorder %v540, %v6619
        %vm6685 = vcmp.eq.s32.totalorder %v540, %v6623
        %vm6686 = vcmp.eq.s32.totalorder %v541, %v6619
        %vm6687 = vcmp.eq.s32.totalorder %v541, %v6623
        %v6688 = vlaneseq
        %v6689 = vshrl.u32 %v6688, 7
        %v6690 = vsub.s32 6, %v6689
        %v6691 = vrot.slane %v505, %v6690
        %v6692 = vlaneseq
        %v6693 = vshrl.u32 %v6692, 7
        %v6694 = vsub.s32 6, %v6693
        %v6695 = vrot.slane %v506, %v6694
        %v6696 = vsel %vm6624, %v6691, 0.0
        %v6697 = vsel %vm6625, %v6695, 0.0
        %v6698 = vsel %vm6626, %v6691, 0.0
        %v6699 = vsel %vm6627, %v6695, 0.0
        %v6700 = vsel %vm6628, %v6691, 0.0
        %v6701 = vsel %vm6629, %v6695, 0.0
        %v6702 = vsel %vm6630, %v6691, 0.0
        %v6703 = vsel %vm6631, %v6695, 0.0
        %v6704 = vsel %vm6632, %v6691, 0.0
        %v6705 = vsel %vm6633, %v6695, 0.0
        %v6706 = vsel %vm6634, %v6691, 0.0
        %v6707 = vsel %vm6635, %v6695, 0.0
        %v6708 = vsel %vm6636, %v6691, 0.0
        %v6709 = vsel %vm6637, %v6695, 0.0
        %v6710 = vsel %vm6638, %v6691, 0.0
        %v6711 = vsel %vm6639, %v6695, 0.0
        %v6712 = vsel %vm6640, %v6691, 0.0
        %v6713 = vsel %vm6641, %v6695, 0.0
        %v6714 = vsel %vm6642, %v6691, 0.0
        %v6715 = vsel %vm6643, %v6695, 0.0
        %v6716 = vsel %vm6644, %v6691, 0.0
        %v6717 = vsel %vm6645, %v6695, 0.0
        %v6718 = vsel %vm6646, %v6691, 0.0
        %v6719 = vsel %vm6647, %v6695, 0.0
        %v6720 = vsel %vm6648, %v6691, 0.0
        %v6721 = vsel %vm6649, %v6695, 0.0
        %v6722 = vsel %vm6650, %v6691, 0.0
        %v6723 = vsel %vm6651, %v6695, 0.0
        %v6724 = vsel %vm6652, %v6691, 0.0
        %v6725 = vsel %vm6653, %v6695, 0.0
        %v6726 = vsel %vm6654, %v6691, 0.0
        %v6727 = vsel %vm6655, %v6695, 0.0
        %v6728 = vsel %vm6656, %v6691, 0.0
        %v6729 = vsel %vm6657, %v6695, 0.0
        %v6730 = vsel %vm6658, %v6691, 0.0
        %v6731 = vsel %vm6659, %v6695, 0.0
        %v6732 = vsel %vm6660, %v6691, 0.0
        %v6733 = vsel %vm6661, %v6695, 0.0
        %v6734 = vsel %vm6662, %v6691, 0.0
        %v6735 = vsel %vm6663, %v6695, 0.0
        %v6736 = vsel %vm6664, %v6691, 0.0
        %v6737 = vsel %vm6665, %v6695, 0.0
        %v6738 = vsel %vm6666, %v6691, 0.0
        %v6739 = vsel %vm6667, %v6695, 0.0
        %v6740 = vsel %vm6668, %v6691, 0.0
        %v6741 = vsel %vm6669, %v6695, 0.0
        %v6742 = vsel %vm6670, %v6691, 0.0
        %v6743 = vsel %vm6671, %v6695, 0.0
        %v6744 = vsel %vm6672, %v6691, 0.0
        %v6745 = vsel %vm6673, %v6695, 0.0
        %v6746 = vsel %vm6674, %v6691, 0.0
        %v6747 = vsel %vm6675, %v6695, 0.0
        %v6748 = vsel %vm6676, %v6691, 0.0
        %v6749 = vsel %vm6677, %v6695, 0.0
        %v6750 = vsel %vm6678, %v6691, 0.0
        %v6751 = vsel %vm6679, %v6695, 0.0
        %v6752 = vsel %vm6680, %v6691, 0.0
        %v6753 = vsel %vm6681, %v6695, 0.0
        %v6754 = vsel %vm6682, %v6691, 0.0
        %v6755 = vsel %vm6683, %v6695, 0.0
        %v6756 = vsel %vm6684, %v6691, 0.0
        %v6757 = vsel %vm6685, %v6695, 0.0
        %v6758 = vsel %vm6686, %v6691, 0.0
        %v6759 = vsel %vm6687, %v6695, 0.0
        %v6760 = vadd.f32 %v6552, %v6696
        %v6761 = vadd.f32 %v6553, %v6697
        %v6762 = vadd.f32 %v6554, %v6698
        %v6763 = vadd.f32 %v6555, %v6699
        %v6764 = vadd.f32 %v6556, %v6700
        %v6765 = vadd.f32 %v6557, %v6701
        %v6766 = vadd.f32 %v6558, %v6702
        %v6767 = vadd.f32 %v6559, %v6703
        %v6768 = vadd.f32 %v6560, %v6704
        %v6769 = vadd.f32 %v6561, %v6705
        %v6770 = vadd.f32 %v6562, %v6706
        %v6771 = vadd.f32 %v6563, %v6707
        %v6772 = vadd.f32 %v6564, %v6708
        %v6773 = vadd.f32 %v6565, %v6709
        %v6774 = vadd.f32 %v6566, %v6710
        %v6775 = vadd.f32 %v6567, %v6711
        %v6776 = vadd.f32 %v6568, %v6712
        %v6777 = vadd.f32 %v6569, %v6713
        %v6778 = vadd.f32 %v6570, %v6714
        %v6779 = vadd.f32 %v6571, %v6715
        %v6780 = vadd.f32 %v6572, %v6716
        %v6781 = vadd.f32 %v6573, %v6717
        %v6782 = vadd.f32 %v6574, %v6718
        %v6783 = vadd.f32 %v6575, %v6719
        %v6784 = vadd.f32 %v6576, %v6720
        %v6785 = vadd.f32 %v6577, %v6721
        %v6786 = vadd.f32 %v6578, %v6722
        %v6787 = vadd.f32 %v6579, %v6723
        %v6788 = vadd.f32 %v6580, %v6724
        %v6789 = vadd.f32 %v6581, %v6725
        %v6790 = vadd.f32 %v6582, %v6726
        %v6791 = vadd.f32 %v6583, %v6727
        %v6792 = vadd.f32 %v6584, %v6728
        %v6793 = vadd.f32 %v6585, %v6729
        %v6794 = vadd.f32 %v6586, %v6730
        %v6795 = vadd.f32 %v6587, %v6731
        %v6796 = vadd.f32 %v6588, %v6732
        %v6797 = vadd.f32 %v6589, %v6733
        %v6798 = vadd.f32 %v6590, %v6734
        %v6799 = vadd.f32 %v6591, %v6735
        %v6800 = vadd.f32 %v6592, %v6736
        %v6801 = vadd.f32 %v6593, %v6737
        %v6802 = vadd.f32 %v6594, %v6738
        %v6803 = vadd.f32 %v6595, %v6739
        %v6804 = vadd.f32 %v6596, %v6740
        %v6805 = vadd.f32 %v6597, %v6741
        %v6806 = vadd.f32 %v6598, %v6742
        %v6807 = vadd.f32 %v6599, %v6743
        %v6808 = vadd.f32 %v6600, %v6744
        %v6809 = vadd.f32 %v6601, %v6745
        %v6810 = vadd.f32 %v6602, %v6746
        %v6811 = vadd.f32 %v6603, %v6747
        %v6812 = vadd.f32 %v6604, %v6748
        %v6813 = vadd.f32 %v6605, %v6749
        %v6814 = vadd.f32 %v6606, %v6750
        %v6815 = vadd.f32 %v6607, %v6751
        %v6816 = vadd.f32 %v6608, %v6752
        %v6817 = vadd.f32 %v6609, %v6753
        %v6818 = vadd.f32 %v6610, %v6754
        %v6819 = vadd.f32 %v6611, %v6755
        %v6820 = vadd.f32 %v6612, %v6756
        %v6821 = vadd.f32 %v6613, %v6757
        %v6822 = vadd.f32 %v6614, %v6758
        %v6823 = vadd.f32 %v6615, %v6759
        %v6824 = vpack.c.bf16 %v461, %v461
        %v6825 = vpack.c.bf16 %v463, %v463
        %v6826 = vpack.c.bf16 %v6762, %v6760
        %v6827 = vpack.c.bf16 %v6763, %v6761
        %v6828 = vpack.c.bf16 %v6766, %v6764
        %v6829 = vpack.c.bf16 %v6767, %v6765
        %v6830 = vpack.c.bf16 %v6770, %v6768
        %v6831 = vpack.c.bf16 %v6771, %v6769
        %v6832 = vpack.c.bf16 %v6774, %v6772
        %v6833 = vpack.c.bf16 %v6775, %v6773
        %v6834 = vpack.c.bf16 %v6778, %v6776
        %v6835 = vpack.c.bf16 %v6779, %v6777
        %v6836 = vpack.c.bf16 %v6782, %v6780
        %v6837 = vpack.c.bf16 %v6783, %v6781
        %v6838 = vpack.c.bf16 %v6786, %v6784
        %v6839 = vpack.c.bf16 %v6787, %v6785
        %v6840 = vpack.c.bf16 %v6790, %v6788
        %v6841 = vpack.c.bf16 %v6791, %v6789
        %v6842 = vpack.c.bf16 %v6794, %v6792
        %v6843 = vpack.c.bf16 %v6795, %v6793
        %v6844 = vpack.c.bf16 %v6798, %v6796
        %v6845 = vpack.c.bf16 %v6799, %v6797
        %v6846 = vpack.c.bf16 %v6802, %v6800
        %v6847 = vpack.c.bf16 %v6803, %v6801
        %v6848 = vpack.c.bf16 %v6806, %v6804
        %v6849 = vpack.c.bf16 %v6807, %v6805
        %v6850 = vpack.c.bf16 %v6810, %v6808
        %v6851 = vpack.c.bf16 %v6811, %v6809
        %v6852 = vpack.c.bf16 %v6814, %v6812
        %v6853 = vpack.c.bf16 %v6815, %v6813
        %v6854 = vpack.c.bf16 %v6818, %v6816
        %v6855 = vpack.c.bf16 %v6819, %v6817
        %v6856 = vpack.c.bf16 %v6822, %v6820
        %v6857 = vpack.c.bf16 %v6823, %v6821
        %6858 = vmatprep.subr.bf16.mxu0 %v6827
        %6859 = vmatpush1.bf16.msra.mxu0 %v6826
        %6860 = vmatprep.subr.bf16.mxu0 %v6829
        %6861 = vmatpush1.bf16.msra.mxu0 %v6828
        %6862 = vmatprep.subr.bf16.mxu0 %v6831
        %6863 = vmatpush1.bf16.msra.mxu0 %v6830
        %6864 = vmatprep.subr.bf16.mxu0 %v6833
        %6865 = vmatpush1.bf16.msra.mxu0 %v6832
        %6866 = vmatprep.subr.bf16.mxu0 %v6835
        %6867 = vmatpush1.bf16.msra.mxu0 %v6834
        %6868 = vmatprep.subr.bf16.mxu0 %v6837
        %6869 = vmatpush1.bf16.msra.mxu0 %v6836
        %6870 = vmatprep.subr.bf16.mxu0 %v6839
        %6871 = vmatpush1.bf16.msra.mxu0 %v6838
        %6872 = vmatprep.subr.bf16.mxu0 %v6841
        %6873 = vmatpush1.bf16.msra.mxu0 %v6840
        %6874 = vmatprep.subr.bf16.mxu0 %v6843
        %6875 = vmatpush1.bf16.msra.mxu0 %v6842
        %6876 = vmatprep.subr.bf16.mxu0 %v6845
        %6877 = vmatpush1.bf16.msra.mxu0 %v6844
        %6878 = vmatprep.subr.bf16.mxu0 %v6847
        %6879 = vmatpush1.bf16.msra.mxu0 %v6846
        %6880 = vmatprep.subr.bf16.mxu0 %v6849
        %6881 = vmatpush1.bf16.msra.mxu0 %v6848
        %6882 = vmatprep.subr.bf16.mxu0 %v6851
        %6883 = vmatpush1.bf16.msra.mxu0 %v6850
        %6884 = vmatprep.subr.bf16.mxu0 %v6853
        %6885 = vmatpush1.bf16.msra.mxu0 %v6852
        %6886 = vmatprep.subr.bf16.mxu0 %v6855
        %6887 = vmatpush1.bf16.msra.mxu0 %v6854
        %6888 = vmatprep.subr.bf16.mxu0 %v6857
        %6889 = vmatpush1.bf16.msra.mxu0 %v6856
        %6890 = vmatprep.mubr.bf16.mxu0 %v6825
        %6891 = vmatmul.mubr.bf16.gmra.mrb[0].mxu0 %v6824
        %v6892 = vpop.f32.mrb[0].mxu0
        %v6893 = vadd.f32 0.0, %v6892
        %v6894 = vpop.f32.mrb[0].mxu0
        %v6895 = vadd.f32 0.0, %v6894
        %v6896 = vpop.f32.mrb[0].mxu0
        %v6897 = vpop.f32.mrb[0].mxu0
        %6898 = vdwg.mxu0
        %v6899 = vadd.f32 %v5990, %v6893
        %v6900 = vadd.f32 %v5991, %v6895
        %v6901 = vlaneseq
        %v6902 = vshrl.u32 %v6901, 7
        %v6903 = vsub.s32 7, %v6902
        %v6904 = vrot.slane %v477, %v6903
        %v6905 = vlaneseq
        %v6906 = vshrl.u32 %v6905, 7
        %v6907 = vsub.s32 7, %v6906
        %v6908 = vrot.slane %v478, %v6907
        %vm6909 = vcmp.eq.s32.totalorder %v510, %v6904
        %vm6910 = vcmp.eq.s32.totalorder %v510, %v6908
        %vm6911 = vcmp.eq.s32.totalorder %v511, %v6904
        %vm6912 = vcmp.eq.s32.totalorder %v511, %v6908
        %vm6913 = vcmp.eq.s32.totalorder %v512, %v6904
        %vm6914 = vcmp.eq.s32.totalorder %v512, %v6908
        %vm6915 = vcmp.eq.s32.totalorder %v513, %v6904
        %vm6916 = vcmp.eq.s32.totalorder %v513, %v6908
        %vm6917 = vcmp.eq.s32.totalorder %v514, %v6904
        %vm6918 = vcmp.eq.s32.totalorder %v514, %v6908
        %vm6919 = vcmp.eq.s32.totalorder %v515, %v6904
        %vm6920 = vcmp.eq.s32.totalorder %v515, %v6908
        %vm6921 = vcmp.eq.s32.totalorder %v516, %v6904
        %vm6922 = vcmp.eq.s32.totalorder %v516, %v6908
        %vm6923 = vcmp.eq.s32.totalorder %v517, %v6904
        %vm6924 = vcmp.eq.s32.totalorder %v517, %v6908
        %vm6925 = vcmp.eq.s32.totalorder %v518, %v6904
        %vm6926 = vcmp.eq.s32.totalorder %v518, %v6908
        %vm6927 = vcmp.eq.s32.totalorder %v519, %v6904
        %vm6928 = vcmp.eq.s32.totalorder %v519, %v6908
        %vm6929 = vcmp.eq.s32.totalorder %v520, %v6904
        %vm6930 = vcmp.eq.s32.totalorder %v520, %v6908
        %vm6931 = vcmp.eq.s32.totalorder %v521, %v6904
        %vm6932 = vcmp.eq.s32.totalorder %v521, %v6908
        %vm6933 = vcmp.eq.s32.totalorder %v522, %v6904
        %vm6934 = vcmp.eq.s32.totalorder %v522, %v6908
        %vm6935 = vcmp.eq.s32.totalorder %v523, %v6904
        %vm6936 = vcmp.eq.s32.totalorder %v523, %v6908
        %vm6937 = vcmp.eq.s32.totalorder %v524, %v6904
        %vm6938 = vcmp.eq.s32.totalorder %v524, %v6908
        %vm6939 = vcmp.eq.s32.totalorder %v525, %v6904
        %vm6940 = vcmp.eq.s32.totalorder %v525, %v6908
        %vm6941 = vcmp.eq.s32.totalorder %v526, %v6904
        %vm6942 = vcmp.eq.s32.totalorder %v526, %v6908
        %vm6943 = vcmp.eq.s32.totalorder %v527, %v6904
        %vm6944 = vcmp.eq.s32.totalorder %v527, %v6908
        %vm6945 = vcmp.eq.s32.totalorder %v528, %v6904
        %vm6946 = vcmp.eq.s32.totalorder %v528, %v6908
        %vm6947 = vcmp.eq.s32.totalorder %v529, %v6904
        %vm6948 = vcmp.eq.s32.totalorder %v529, %v6908
        %vm6949 = vcmp.eq.s32.totalorder %v530, %v6904
        %vm6950 = vcmp.eq.s32.totalorder %v530, %v6908
        %vm6951 = vcmp.eq.s32.totalorder %v531, %v6904
        %vm6952 = vcmp.eq.s32.totalorder %v531, %v6908
        %vm6953 = vcmp.eq.s32.totalorder %v532, %v6904
        %vm6954 = vcmp.eq.s32.totalorder %v532, %v6908
        %vm6955 = vcmp.eq.s32.totalorder %v533, %v6904
        %vm6956 = vcmp.eq.s32.totalorder %v533, %v6908
        %vm6957 = vcmp.eq.s32.totalorder %v534, %v6904
        %vm6958 = vcmp.eq.s32.totalorder %v534, %v6908
        %vm6959 = vcmp.eq.s32.totalorder %v535, %v6904
        %vm6960 = vcmp.eq.s32.totalorder %v535, %v6908
        %vm6961 = vcmp.eq.s32.totalorder %v536, %v6904
        %vm6962 = vcmp.eq.s32.totalorder %v536, %v6908
        %vm6963 = vcmp.eq.s32.totalorder %v537, %v6904
        %vm6964 = vcmp.eq.s32.totalorder %v537, %v6908
        %vm6965 = vcmp.eq.s32.totalorder %v538, %v6904
        %vm6966 = vcmp.eq.s32.totalorder %v538, %v6908
        %vm6967 = vcmp.eq.s32.totalorder %v539, %v6904
        %vm6968 = vcmp.eq.s32.totalorder %v539, %v6908
        %vm6969 = vcmp.eq.s32.totalorder %v540, %v6904
        %vm6970 = vcmp.eq.s32.totalorder %v540, %v6908
        %vm6971 = vcmp.eq.s32.totalorder %v541, %v6904
        %vm6972 = vcmp.eq.s32.totalorder %v541, %v6908
        %v6973 = vlaneseq
        %v6974 = vshrl.u32 %v6973, 7
        %v6975 = vsub.s32 7, %v6974
        %v6976 = vrot.slane %v493, %v6975
        %v6977 = vlaneseq
        %v6978 = vshrl.u32 %v6977, 7
        %v6979 = vsub.s32 7, %v6978
        %v6980 = vrot.slane %v494, %v6979
        %v6981 = vsel %vm6909, %v6976, 0.0
        %v6982 = vsel %vm6910, %v6980, 0.0
        %v6983 = vsel %vm6911, %v6976, 0.0
        %v6984 = vsel %vm6912, %v6980, 0.0
        %v6985 = vsel %vm6913, %v6976, 0.0
        %v6986 = vsel %vm6914, %v6980, 0.0
        %v6987 = vsel %vm6915, %v6976, 0.0
        %v6988 = vsel %vm6916, %v6980, 0.0
        %v6989 = vsel %vm6917, %v6976, 0.0
        %v6990 = vsel %vm6918, %v6980, 0.0
        %v6991 = vsel %vm6919, %v6976, 0.0
        %v6992 = vsel %vm6920, %v6980, 0.0
        %v6993 = vsel %vm6921, %v6976, 0.0
        %v6994 = vsel %vm6922, %v6980, 0.0
        %v6995 = vsel %vm6923, %v6976, 0.0
        %v6996 = vsel %vm6924, %v6980, 0.0
        %v6997 = vsel %vm6925, %v6976, 0.0
        %v6998 = vsel %vm6926, %v6980, 0.0
        %v6999 = vsel %vm6927, %v6976, 0.0
        %v7000 = vsel %vm6928, %v6980, 0.0
        %v7001 = vsel %vm6929, %v6976, 0.0
        %v7002 = vsel %vm6930, %v6980, 0.0
        %v7003 = vsel %vm6931, %v6976, 0.0
        %v7004 = vsel %vm6932, %v6980, 0.0
        %v7005 = vsel %vm6933, %v6976, 0.0
        %v7006 = vsel %vm6934, %v6980, 0.0
        %v7007 = vsel %vm6935, %v6976, 0.0
        %v7008 = vsel %vm6936, %v6980, 0.0
        %v7009 = vsel %vm6937, %v6976, 0.0
        %v7010 = vsel %vm6938, %v6980, 0.0
        %v7011 = vsel %vm6939, %v6976, 0.0
        %v7012 = vsel %vm6940, %v6980, 0.0
        %v7013 = vsel %vm6941, %v6976, 0.0
        %v7014 = vsel %vm6942, %v6980, 0.0
        %v7015 = vsel %vm6943, %v6976, 0.0
        %v7016 = vsel %vm6944, %v6980, 0.0
        %v7017 = vsel %vm6945, %v6976, 0.0
        %v7018 = vsel %vm6946, %v6980, 0.0
        %v7019 = vsel %vm6947, %v6976, 0.0
        %v7020 = vsel %vm6948, %v6980, 0.0
        %v7021 = vsel %vm6949, %v6976, 0.0
        %v7022 = vsel %vm6950, %v6980, 0.0
        %v7023 = vsel %vm6951, %v6976, 0.0
        %v7024 = vsel %vm6952, %v6980, 0.0
        %v7025 = vsel %vm6953, %v6976, 0.0
        %v7026 = vsel %vm6954, %v6980, 0.0
        %v7027 = vsel %vm6955, %v6976, 0.0
        %v7028 = vsel %vm6956, %v6980, 0.0
        %v7029 = vsel %vm6957, %v6976, 0.0
        %v7030 = vsel %vm6958, %v6980, 0.0
        %v7031 = vsel %vm6959, %v6976, 0.0
        %v7032 = vsel %vm6960, %v6980, 0.0
        %v7033 = vsel %vm6961, %v6976, 0.0
        %v7034 = vsel %vm6962, %v6980, 0.0
        %v7035 = vsel %vm6963, %v6976, 0.0
        %v7036 = vsel %vm6964, %v6980, 0.0
        %v7037 = vsel %vm6965, %v6976, 0.0
        %v7038 = vsel %vm6966, %v6980, 0.0
        %v7039 = vsel %vm6967, %v6976, 0.0
        %v7040 = vsel %vm6968, %v6980, 0.0
        %v7041 = vsel %vm6969, %v6976, 0.0
        %v7042 = vsel %vm6970, %v6980, 0.0
        %v7043 = vsel %vm6971, %v6976, 0.0
        %v7044 = vsel %vm6972, %v6980, 0.0
        %v7045 = vadd.f32 %v6981, 0.0
        %v7046 = vadd.f32 %v6982, 0.0
        %v7047 = vadd.f32 %v6983, 0.0
        %v7048 = vadd.f32 %v6984, 0.0
        %v7049 = vadd.f32 %v6985, 0.0
        %v7050 = vadd.f32 %v6986, 0.0
        %v7051 = vadd.f32 %v6987, 0.0
        %v7052 = vadd.f32 %v6988, 0.0
        %v7053 = vadd.f32 %v6989, 0.0
        %v7054 = vadd.f32 %v6990, 0.0
        %v7055 = vadd.f32 %v6991, 0.0
        %v7056 = vadd.f32 %v6992, 0.0
        %v7057 = vadd.f32 %v6993, 0.0
        %v7058 = vadd.f32 %v6994, 0.0
        %v7059 = vadd.f32 %v6995, 0.0
        %v7060 = vadd.f32 %v6996, 0.0
        %v7061 = vadd.f32 %v6997, 0.0
        %v7062 = vadd.f32 %v6998, 0.0
        %v7063 = vadd.f32 %v6999, 0.0
        %v7064 = vadd.f32 %v7000, 0.0
        %v7065 = vadd.f32 %v7001, 0.0
        %v7066 = vadd.f32 %v7002, 0.0
        %v7067 = vadd.f32 %v7003, 0.0
        %v7068 = vadd.f32 %v7004, 0.0
        %v7069 = vadd.f32 %v7005, 0.0
        %v7070 = vadd.f32 %v7006, 0.0
        %v7071 = vadd.f32 %v7007, 0.0
        %v7072 = vadd.f32 %v7008, 0.0
        %v7073 = vadd.f32 %v7009, 0.0
        %v7074 = vadd.f32 %v7010, 0.0
        %v7075 = vadd.f32 %v7011, 0.0
        %v7076 = vadd.f32 %v7012, 0.0
        %v7077 = vadd.f32 %v7013, 0.0
        %v7078 = vadd.f32 %v7014, 0.0
        %v7079 = vadd.f32 %v7015, 0.0
        %v7080 = vadd.f32 %v7016, 0.0
        %v7081 = vadd.f32 %v7017, 0.0
        %v7082 = vadd.f32 %v7018, 0.0
        %v7083 = vadd.f32 %v7019, 0.0
        %v7084 = vadd.f32 %v7020, 0.0
        %v7085 = vadd.f32 %v7021, 0.0
        %v7086 = vadd.f32 %v7022, 0.0
        %v7087 = vadd.f32 %v7023, 0.0
        %v7088 = vadd.f32 %v7024, 0.0
        %v7089 = vadd.f32 %v7025, 0.0
        %v7090 = vadd.f32 %v7026, 0.0
        %v7091 = vadd.f32 %v7027, 0.0
        %v7092 = vadd.f32 %v7028, 0.0
        %v7093 = vadd.f32 %v7029, 0.0
        %v7094 = vadd.f32 %v7030, 0.0
        %v7095 = vadd.f32 %v7031, 0.0
        %v7096 = vadd.f32 %v7032, 0.0
        %v7097 = vadd.f32 %v7033, 0.0
        %v7098 = vadd.f32 %v7034, 0.0
        %v7099 = vadd.f32 %v7035, 0.0
        %v7100 = vadd.f32 %v7036, 0.0
        %v7101 = vadd.f32 %v7037, 0.0
        %v7102 = vadd.f32 %v7038, 0.0
        %v7103 = vadd.f32 %v7039, 0.0
        %v7104 = vadd.f32 %v7040, 0.0
        %v7105 = vadd.f32 %v7041, 0.0
        %v7106 = vadd.f32 %v7042, 0.0
        %v7107 = vadd.f32 %v7043, 0.0
        %v7108 = vadd.f32 %v7044, 0.0
        %v7109 = vlaneseq
        %v7110 = vshrl.u32 %v7109, 7
        %v7111 = vsub.s32 7, %v7110
        %v7112 = vrot.slane %v481, %v7111
        %v7113 = vlaneseq
        %v7114 = vshrl.u32 %v7113, 7
        %v7115 = vsub.s32 7, %v7114
        %v7116 = vrot.slane %v482, %v7115
        %vm7117 = vcmp.eq.s32.totalorder %v510, %v7112
        %vm7118 = vcmp.eq.s32.totalorder %v510, %v7116
        %vm7119 = vcmp.eq.s32.totalorder %v511, %v7112
        %vm7120 = vcmp.eq.s32.totalorder %v511, %v7116
        %vm7121 = vcmp.eq.s32.totalorder %v512, %v7112
        %vm7122 = vcmp.eq.s32.totalorder %v512, %v7116
        %vm7123 = vcmp.eq.s32.totalorder %v513, %v7112
        %vm7124 = vcmp.eq.s32.totalorder %v513, %v7116
        %vm7125 = vcmp.eq.s32.totalorder %v514, %v7112
        %vm7126 = vcmp.eq.s32.totalorder %v514, %v7116
        %vm7127 = vcmp.eq.s32.totalorder %v515, %v7112
        %vm7128 = vcmp.eq.s32.totalorder %v515, %v7116
        %vm7129 = vcmp.eq.s32.totalorder %v516, %v7112
        %vm7130 = vcmp.eq.s32.totalorder %v516, %v7116
        %vm7131 = vcmp.eq.s32.totalorder %v517, %v7112
        %vm7132 = vcmp.eq.s32.totalorder %v517, %v7116
        %vm7133 = vcmp.eq.s32.totalorder %v518, %v7112
        %vm7134 = vcmp.eq.s32.totalorder %v518, %v7116
        %vm7135 = vcmp.eq.s32.totalorder %v519, %v7112
        %vm7136 = vcmp.eq.s32.totalorder %v519, %v7116
        %vm7137 = vcmp.eq.s32.totalorder %v520, %v7112
        %vm7138 = vcmp.eq.s32.totalorder %v520, %v7116
        %vm7139 = vcmp.eq.s32.totalorder %v521, %v7112
        %vm7140 = vcmp.eq.s32.totalorder %v521, %v7116
        %vm7141 = vcmp.eq.s32.totalorder %v522, %v7112
        %vm7142 = vcmp.eq.s32.totalorder %v522, %v7116
        %vm7143 = vcmp.eq.s32.totalorder %v523, %v7112
        %vm7144 = vcmp.eq.s32.totalorder %v523, %v7116
        %vm7145 = vcmp.eq.s32.totalorder %v524, %v7112
        %vm7146 = vcmp.eq.s32.totalorder %v524, %v7116
        %vm7147 = vcmp.eq.s32.totalorder %v525, %v7112
        %vm7148 = vcmp.eq.s32.totalorder %v525, %v7116
        %vm7149 = vcmp.eq.s32.totalorder %v526, %v7112
        %vm7150 = vcmp.eq.s32.totalorder %v526, %v7116
        %vm7151 = vcmp.eq.s32.totalorder %v527, %v7112
        %vm7152 = vcmp.eq.s32.totalorder %v527, %v7116
        %vm7153 = vcmp.eq.s32.totalorder %v528, %v7112
        %vm7154 = vcmp.eq.s32.totalorder %v528, %v7116
        %vm7155 = vcmp.eq.s32.totalorder %v529, %v7112
        %vm7156 = vcmp.eq.s32.totalorder %v529, %v7116
        %vm7157 = vcmp.eq.s32.totalorder %v530, %v7112
        %vm7158 = vcmp.eq.s32.totalorder %v530, %v7116
        %vm7159 = vcmp.eq.s32.totalorder %v531, %v7112
        %vm7160 = vcmp.eq.s32.totalorder %v531, %v7116
        %vm7161 = vcmp.eq.s32.totalorder %v532, %v7112
        %vm7162 = vcmp.eq.s32.totalorder %v532, %v7116
        %vm7163 = vcmp.eq.s32.totalorder %v533, %v7112
        %vm7164 = vcmp.eq.s32.totalorder %v533, %v7116
        %vm7165 = vcmp.eq.s32.totalorder %v534, %v7112
        %vm7166 = vcmp.eq.s32.totalorder %v534, %v7116
        %vm7167 = vcmp.eq.s32.totalorder %v535, %v7112
        %vm7168 = vcmp.eq.s32.totalorder %v535, %v7116
        %vm7169 = vcmp.eq.s32.totalorder %v536, %v7112
        %vm7170 = vcmp.eq.s32.totalorder %v536, %v7116
        %vm7171 = vcmp.eq.s32.totalorder %v537, %v7112
        %vm7172 = vcmp.eq.s32.totalorder %v537, %v7116
        %vm7173 = vcmp.eq.s32.totalorder %v538, %v7112
        %vm7174 = vcmp.eq.s32.totalorder %v538, %v7116
        %vm7175 = vcmp.eq.s32.totalorder %v539, %v7112
        %vm7176 = vcmp.eq.s32.totalorder %v539, %v7116
        %vm7177 = vcmp.eq.s32.totalorder %v540, %v7112
        %vm7178 = vcmp.eq.s32.totalorder %v540, %v7116
        %vm7179 = vcmp.eq.s32.totalorder %v541, %v7112
        %vm7180 = vcmp.eq.s32.totalorder %v541, %v7116
        %v7181 = vlaneseq
        %v7182 = vshrl.u32 %v7181, 7
        %v7183 = vsub.s32 7, %v7182
        %v7184 = vrot.slane %v497, %v7183
        %v7185 = vlaneseq
        %v7186 = vshrl.u32 %v7185, 7
        %v7187 = vsub.s32 7, %v7186
        %v7188 = vrot.slane %v498, %v7187
        %v7189 = vsel %vm7117, %v7184, 0.0
        %v7190 = vsel %vm7118, %v7188, 0.0
        %v7191 = vsel %vm7119, %v7184, 0.0
        %v7192 = vsel %vm7120, %v7188, 0.0
        %v7193 = vsel %vm7121, %v7184, 0.0
        %v7194 = vsel %vm7122, %v7188, 0.0
        %v7195 = vsel %vm7123, %v7184, 0.0
        %v7196 = vsel %vm7124, %v7188, 0.0
        %v7197 = vsel %vm7125, %v7184, 0.0
        %v7198 = vsel %vm7126, %v7188, 0.0
        %v7199 = vsel %vm7127, %v7184, 0.0
        %v7200 = vsel %vm7128, %v7188, 0.0
        %v7201 = vsel %vm7129, %v7184, 0.0
        %v7202 = vsel %vm7130, %v7188, 0.0
        %v7203 = vsel %vm7131, %v7184, 0.0
        %v7204 = vsel %vm7132, %v7188, 0.0
        %v7205 = vsel %vm7133, %v7184, 0.0
        %v7206 = vsel %vm7134, %v7188, 0.0
        %v7207 = vsel %vm7135, %v7184, 0.0
        %v7208 = vsel %vm7136, %v7188, 0.0
        %v7209 = vsel %vm7137, %v7184, 0.0
        %v7210 = vsel %vm7138, %v7188, 0.0
        %v7211 = vsel %vm7139, %v7184, 0.0
        %v7212 = vsel %vm7140, %v7188, 0.0
        %v7213 = vsel %vm7141, %v7184, 0.0
        %v7214 = vsel %vm7142, %v7188, 0.0
        %v7215 = vsel %vm7143, %v7184, 0.0
        %v7216 = vsel %vm7144, %v7188, 0.0
        %v7217 = vsel %vm7145, %v7184, 0.0
        %v7218 = vsel %vm7146, %v7188, 0.0
        %v7219 = vsel %vm7147, %v7184, 0.0
        %v7220 = vsel %vm7148, %v7188, 0.0
        %v7221 = vsel %vm7149, %v7184, 0.0
        %v7222 = vsel %vm7150, %v7188, 0.0
        %v7223 = vsel %vm7151, %v7184, 0.0
        %v7224 = vsel %vm7152, %v7188, 0.0
        %v7225 = vsel %vm7153, %v7184, 0.0
        %v7226 = vsel %vm7154, %v7188, 0.0
        %v7227 = vsel %vm7155, %v7184, 0.0
        %v7228 = vsel %vm7156, %v7188, 0.0
        %v7229 = vsel %vm7157, %v7184, 0.0
        %v7230 = vsel %vm7158, %v7188, 0.0
        %v7231 = vsel %vm7159, %v7184, 0.0
        %v7232 = vsel %vm7160, %v7188, 0.0
        %v7233 = vsel %vm7161, %v7184, 0.0
        %v7234 = vsel %vm7162, %v7188, 0.0
        %v7235 = vsel %vm7163, %v7184, 0.0
        %v7236 = vsel %vm7164, %v7188, 0.0
        %v7237 = vsel %vm7165, %v7184, 0.0
        %v7238 = vsel %vm7166, %v7188, 0.0
        %v7239 = vsel %vm7167, %v7184, 0.0
        %v7240 = vsel %vm7168, %v7188, 0.0
        %v7241 = vsel %vm7169, %v7184, 0.0
        %v7242 = vsel %vm7170, %v7188, 0.0
        %v7243 = vsel %vm7171, %v7184, 0.0
        %v7244 = vsel %vm7172, %v7188, 0.0
        %v7245 = vsel %vm7173, %v7184, 0.0
        %v7246 = vsel %vm7174, %v7188, 0.0
        %v7247 = vsel %vm7175, %v7184, 0.0
        %v7248 = vsel %vm7176, %v7188, 0.0
        %v7249 = vsel %vm7177, %v7184, 0.0
        %v7250 = vsel %vm7178, %v7188, 0.0
        %v7251 = vsel %vm7179, %v7184, 0.0
        %v7252 = vsel %vm7180, %v7188, 0.0
        %v7253 = vadd.f32 %v7045, %v7189
        %v7254 = vadd.f32 %v7046, %v7190
        %v7255 = vadd.f32 %v7047, %v7191
        %v7256 = vadd.f32 %v7048, %v7192
        %v7257 = vadd.f32 %v7049, %v7193
        %v7258 = vadd.f32 %v7050, %v7194
        %v7259 = vadd.f32 %v7051, %v7195
        %v7260 = vadd.f32 %v7052, %v7196
        %v7261 = vadd.f32 %v7053, %v7197
        %v7262 = vadd.f32 %v7054, %v7198
        %v7263 = vadd.f32 %v7055, %v7199
        %v7264 = vadd.f32 %v7056, %v7200
        %v7265 = vadd.f32 %v7057, %v7201
        %v7266 = vadd.f32 %v7058, %v7202
        %v7267 = vadd.f32 %v7059, %v7203
        %v7268 = vadd.f32 %v7060, %v7204
        %v7269 = vadd.f32 %v7061, %v7205
        %v7270 = vadd.f32 %v7062, %v7206
        %v7271 = vadd.f32 %v7063, %v7207
        %v7272 = vadd.f32 %v7064, %v7208
        %v7273 = vadd.f32 %v7065, %v7209
        %v7274 = vadd.f32 %v7066, %v7210
        %v7275 = vadd.f32 %v7067, %v7211
        %v7276 = vadd.f32 %v7068, %v7212
        %v7277 = vadd.f32 %v7069, %v7213
        %v7278 = vadd.f32 %v7070, %v7214
        %v7279 = vadd.f32 %v7071, %v7215
        %v7280 = vadd.f32 %v7072, %v7216
        %v7281 = vadd.f32 %v7073, %v7217
        %v7282 = vadd.f32 %v7074, %v7218
        %v7283 = vadd.f32 %v7075, %v7219
        %v7284 = vadd.f32 %v7076, %v7220
        %v7285 = vadd.f32 %v7077, %v7221
        %v7286 = vadd.f32 %v7078, %v7222
        %v7287 = vadd.f32 %v7079, %v7223
        %v7288 = vadd.f32 %v7080, %v7224
        %v7289 = vadd.f32 %v7081, %v7225
        %v7290 = vadd.f32 %v7082, %v7226
        %v7291 = vadd.f32 %v7083, %v7227
        %v7292 = vadd.f32 %v7084, %v7228
        %v7293 = vadd.f32 %v7085, %v7229
        %v7294 = vadd.f32 %v7086, %v7230
        %v7295 = vadd.f32 %v7087, %v7231
        %v7296 = vadd.f32 %v7088, %v7232
        %v7297 = vadd.f32 %v7089, %v7233
        %v7298 = vadd.f32 %v7090, %v7234
        %v7299 = vadd.f32 %v7091, %v7235
        %v7300 = vadd.f32 %v7092, %v7236
        %v7301 = vadd.f32 %v7093, %v7237
        %v7302 = vadd.f32 %v7094, %v7238
        %v7303 = vadd.f32 %v7095, %v7239
        %v7304 = vadd.f32 %v7096, %v7240
        %v7305 = vadd.f32 %v7097, %v7241
        %v7306 = vadd.f32 %v7098, %v7242
        %v7307 = vadd.f32 %v7099, %v7243
        %v7308 = vadd.f32 %v7100, %v7244
        %v7309 = vadd.f32 %v7101, %v7245
        %v7310 = vadd.f32 %v7102, %v7246
        %v7311 = vadd.f32 %v7103, %v7247
        %v7312 = vadd.f32 %v7104, %v7248
        %v7313 = vadd.f32 %v7105, %v7249
        %v7314 = vadd.f32 %v7106, %v7250
        %v7315 = vadd.f32 %v7107, %v7251
        %v7316 = vadd.f32 %v7108, %v7252
        %v7317 = vlaneseq
        %v7318 = vshrl.u32 %v7317, 7
        %v7319 = vsub.s32 7, %v7318
        %v7320 = vrot.slane %v485, %v7319
        %v7321 = vlaneseq
        %v7322 = vshrl.u32 %v7321, 7
        %v7323 = vsub.s32 7, %v7322
        %v7324 = vrot.slane %v486, %v7323
        %vm7325 = vcmp.eq.s32.totalorder %v510, %v7320
        %vm7326 = vcmp.eq.s32.totalorder %v510, %v7324
        %vm7327 = vcmp.eq.s32.totalorder %v511, %v7320
        %vm7328 = vcmp.eq.s32.totalorder %v511, %v7324
        %vm7329 = vcmp.eq.s32.totalorder %v512, %v7320
        %vm7330 = vcmp.eq.s32.totalorder %v512, %v7324
        %vm7331 = vcmp.eq.s32.totalorder %v513, %v7320
        %vm7332 = vcmp.eq.s32.totalorder %v513, %v7324
        %vm7333 = vcmp.eq.s32.totalorder %v514, %v7320
        %vm7334 = vcmp.eq.s32.totalorder %v514, %v7324
        %vm7335 = vcmp.eq.s32.totalorder %v515, %v7320
        %vm7336 = vcmp.eq.s32.totalorder %v515, %v7324
        %vm7337 = vcmp.eq.s32.totalorder %v516, %v7320
        %vm7338 = vcmp.eq.s32.totalorder %v516, %v7324
        %vm7339 = vcmp.eq.s32.totalorder %v517, %v7320
        %vm7340 = vcmp.eq.s32.totalorder %v517, %v7324
        %vm7341 = vcmp.eq.s32.totalorder %v518, %v7320
        %vm7342 = vcmp.eq.s32.totalorder %v518, %v7324
        %vm7343 = vcmp.eq.s32.totalorder %v519, %v7320
        %vm7344 = vcmp.eq.s32.totalorder %v519, %v7324
        %vm7345 = vcmp.eq.s32.totalorder %v520, %v7320
        %vm7346 = vcmp.eq.s32.totalorder %v520, %v7324
        %vm7347 = vcmp.eq.s32.totalorder %v521, %v7320
        %vm7348 = vcmp.eq.s32.totalorder %v521, %v7324
        %vm7349 = vcmp.eq.s32.totalorder %v522, %v7320
        %vm7350 = vcmp.eq.s32.totalorder %v522, %v7324
        %vm7351 = vcmp.eq.s32.totalorder %v523, %v7320
        %vm7352 = vcmp.eq.s32.totalorder %v523, %v7324
        %vm7353 = vcmp.eq.s32.totalorder %v524, %v7320
        %vm7354 = vcmp.eq.s32.totalorder %v524, %v7324
        %vm7355 = vcmp.eq.s32.totalorder %v525, %v7320
        %vm7356 = vcmp.eq.s32.totalorder %v525, %v7324
        %vm7357 = vcmp.eq.s32.totalorder %v526, %v7320
        %vm7358 = vcmp.eq.s32.totalorder %v526, %v7324
        %vm7359 = vcmp.eq.s32.totalorder %v527, %v7320
        %vm7360 = vcmp.eq.s32.totalorder %v527, %v7324
        %vm7361 = vcmp.eq.s32.totalorder %v528, %v7320
        %vm7362 = vcmp.eq.s32.totalorder %v528, %v7324
        %vm7363 = vcmp.eq.s32.totalorder %v529, %v7320
        %vm7364 = vcmp.eq.s32.totalorder %v529, %v7324
        %vm7365 = vcmp.eq.s32.totalorder %v530, %v7320
        %vm7366 = vcmp.eq.s32.totalorder %v530, %v7324
        %vm7367 = vcmp.eq.s32.totalorder %v531, %v7320
        %vm7368 = vcmp.eq.s32.totalorder %v531, %v7324
        %vm7369 = vcmp.eq.s32.totalorder %v532, %v7320
        %vm7370 = vcmp.eq.s32.totalorder %v532, %v7324
        %vm7371 = vcmp.eq.s32.totalorder %v533, %v7320
        %vm7372 = vcmp.eq.s32.totalorder %v533, %v7324
        %vm7373 = vcmp.eq.s32.totalorder %v534, %v7320
        %vm7374 = vcmp.eq.s32.totalorder %v534, %v7324
        %vm7375 = vcmp.eq.s32.totalorder %v535, %v7320
        %vm7376 = vcmp.eq.s32.totalorder %v535, %v7324
        %vm7377 = vcmp.eq.s32.totalorder %v536, %v7320
        %vm7378 = vcmp.eq.s32.totalorder %v536, %v7324
        %vm7379 = vcmp.eq.s32.totalorder %v537, %v7320
        %vm7380 = vcmp.eq.s32.totalorder %v537, %v7324
        %vm7381 = vcmp.eq.s32.totalorder %v538, %v7320
        %vm7382 = vcmp.eq.s32.totalorder %v538, %v7324
        %vm7383 = vcmp.eq.s32.totalorder %v539, %v7320
        %vm7384 = vcmp.eq.s32.totalorder %v539, %v7324
        %vm7385 = vcmp.eq.s32.totalorder %v540, %v7320
        %vm7386 = vcmp.eq.s32.totalorder %v540, %v7324
        %vm7387 = vcmp.eq.s32.totalorder %v541, %v7320
        %vm7388 = vcmp.eq.s32.totalorder %v541, %v7324
        %v7389 = vlaneseq
        %v7390 = vshrl.u32 %v7389, 7
        %v7391 = vsub.s32 7, %v7390
        %v7392 = vrot.slane %v501, %v7391
        %v7393 = vlaneseq
        %v7394 = vshrl.u32 %v7393, 7
        %v7395 = vsub.s32 7, %v7394
        %v7396 = vrot.slane %v502, %v7395
        %v7397 = vsel %vm7325, %v7392, 0.0
        %v7398 = vsel %vm7326, %v7396, 0.0
        %v7399 = vsel %vm7327, %v7392, 0.0
        %v7400 = vsel %vm7328, %v7396, 0.0
        %v7401 = vsel %vm7329, %v7392, 0.0
        %v7402 = vsel %vm7330, %v7396, 0.0
        %v7403 = vsel %vm7331, %v7392, 0.0
        %v7404 = vsel %vm7332, %v7396, 0.0
        %v7405 = vsel %vm7333, %v7392, 0.0
        %v7406 = vsel %vm7334, %v7396, 0.0
        %v7407 = vsel %vm7335, %v7392, 0.0
        %v7408 = vsel %vm7336, %v7396, 0.0
        %v7409 = vsel %vm7337, %v7392, 0.0
        %v7410 = vsel %vm7338, %v7396, 0.0
        %v7411 = vsel %vm7339, %v7392, 0.0
        %v7412 = vsel %vm7340, %v7396, 0.0
        %v7413 = vsel %vm7341, %v7392, 0.0
        %v7414 = vsel %vm7342, %v7396, 0.0
        %v7415 = vsel %vm7343, %v7392, 0.0
        %v7416 = vsel %vm7344, %v7396, 0.0
        %v7417 = vsel %vm7345, %v7392, 0.0
        %v7418 = vsel %vm7346, %v7396, 0.0
        %v7419 = vsel %vm7347, %v7392, 0.0
        %v7420 = vsel %vm7348, %v7396, 0.0
        %v7421 = vsel %vm7349, %v7392, 0.0
        %v7422 = vsel %vm7350, %v7396, 0.0
        %v7423 = vsel %vm7351, %v7392, 0.0
        %v7424 = vsel %vm7352, %v7396, 0.0
        %v7425 = vsel %vm7353, %v7392, 0.0
        %v7426 = vsel %vm7354, %v7396, 0.0
        %v7427 = vsel %vm7355, %v7392, 0.0
        %v7428 = vsel %vm7356, %v7396, 0.0
        %v7429 = vsel %vm7357, %v7392, 0.0
        %v7430 = vsel %vm7358, %v7396, 0.0
        %v7431 = vsel %vm7359, %v7392, 0.0
        %v7432 = vsel %vm7360, %v7396, 0.0
        %v7433 = vsel %vm7361, %v7392, 0.0
        %v7434 = vsel %vm7362, %v7396, 0.0
        %v7435 = vsel %vm7363, %v7392, 0.0
        %v7436 = vsel %vm7364, %v7396, 0.0
        %v7437 = vsel %vm7365, %v7392, 0.0
        %v7438 = vsel %vm7366, %v7396, 0.0
        %v7439 = vsel %vm7367, %v7392, 0.0
        %v7440 = vsel %vm7368, %v7396, 0.0
        %v7441 = vsel %vm7369, %v7392, 0.0
        %v7442 = vsel %vm7370, %v7396, 0.0
        %v7443 = vsel %vm7371, %v7392, 0.0
        %v7444 = vsel %vm7372, %v7396, 0.0
        %v7445 = vsel %vm7373, %v7392, 0.0
        %v7446 = vsel %vm7374, %v7396, 0.0
        %v7447 = vsel %vm7375, %v7392, 0.0
        %v7448 = vsel %vm7376, %v7396, 0.0
        %v7449 = vsel %vm7377, %v7392, 0.0
        %v7450 = vsel %vm7378, %v7396, 0.0
        %v7451 = vsel %vm7379, %v7392, 0.0
        %v7452 = vsel %vm7380, %v7396, 0.0
        %v7453 = vsel %vm7381, %v7392, 0.0
        %v7454 = vsel %vm7382, %v7396, 0.0
        %v7455 = vsel %vm7383, %v7392, 0.0
        %v7456 = vsel %vm7384, %v7396, 0.0
        %v7457 = vsel %vm7385, %v7392, 0.0
        %v7458 = vsel %vm7386, %v7396, 0.0
        %v7459 = vsel %vm7387, %v7392, 0.0
        %v7460 = vsel %vm7388, %v7396, 0.0
        %v7461 = vadd.f32 %v7253, %v7397
        %v7462 = vadd.f32 %v7254, %v7398
        %v7463 = vadd.f32 %v7255, %v7399
        %v7464 = vadd.f32 %v7256, %v7400
        %v7465 = vadd.f32 %v7257, %v7401
        %v7466 = vadd.f32 %v7258, %v7402
        %v7467 = vadd.f32 %v7259, %v7403
        %v7468 = vadd.f32 %v7260, %v7404
        %v7469 = vadd.f32 %v7261, %v7405
        %v7470 = vadd.f32 %v7262, %v7406
        %v7471 = vadd.f32 %v7263, %v7407
        %v7472 = vadd.f32 %v7264, %v7408
        %v7473 = vadd.f32 %v7265, %v7409
        %v7474 = vadd.f32 %v7266, %v7410
        %v7475 = vadd.f32 %v7267, %v7411
        %v7476 = vadd.f32 %v7268, %v7412
        %v7477 = vadd.f32 %v7269, %v7413
        %v7478 = vadd.f32 %v7270, %v7414
        %v7479 = vadd.f32 %v7271, %v7415
        %v7480 = vadd.f32 %v7272, %v7416
        %v7481 = vadd.f32 %v7273, %v7417
        %v7482 = vadd.f32 %v7274, %v7418
        %v7483 = vadd.f32 %v7275, %v7419
        %v7484 = vadd.f32 %v7276, %v7420
        %v7485 = vadd.f32 %v7277, %v7421
        %v7486 = vadd.f32 %v7278, %v7422
        %v7487 = vadd.f32 %v7279, %v7423
        %v7488 = vadd.f32 %v7280, %v7424
        %v7489 = vadd.f32 %v7281, %v7425
        %v7490 = vadd.f32 %v7282, %v7426
        %v7491 = vadd.f32 %v7283, %v7427
        %v7492 = vadd.f32 %v7284, %v7428
        %v7493 = vadd.f32 %v7285, %v7429
        %v7494 = vadd.f32 %v7286, %v7430
        %v7495 = vadd.f32 %v7287, %v7431
        %v7496 = vadd.f32 %v7288, %v7432
        %v7497 = vadd.f32 %v7289, %v7433
        %v7498 = vadd.f32 %v7290, %v7434
        %v7499 = vadd.f32 %v7291, %v7435
        %v7500 = vadd.f32 %v7292, %v7436
        %v7501 = vadd.f32 %v7293, %v7437
        %v7502 = vadd.f32 %v7294, %v7438
        %v7503 = vadd.f32 %v7295, %v7439
        %v7504 = vadd.f32 %v7296, %v7440
        %v7505 = vadd.f32 %v7297, %v7441
        %v7506 = vadd.f32 %v7298, %v7442
        %v7507 = vadd.f32 %v7299, %v7443
        %v7508 = vadd.f32 %v7300, %v7444
        %v7509 = vadd.f32 %v7301, %v7445
        %v7510 = vadd.f32 %v7302, %v7446
        %v7511 = vadd.f32 %v7303, %v7447
        %v7512 = vadd.f32 %v7304, %v7448
        %v7513 = vadd.f32 %v7305, %v7449
        %v7514 = vadd.f32 %v7306, %v7450
        %v7515 = vadd.f32 %v7307, %v7451
        %v7516 = vadd.f32 %v7308, %v7452
        %v7517 = vadd.f32 %v7309, %v7453
        %v7518 = vadd.f32 %v7310, %v7454
        %v7519 = vadd.f32 %v7311, %v7455
        %v7520 = vadd.f32 %v7312, %v7456
        %v7521 = vadd.f32 %v7313, %v7457
        %v7522 = vadd.f32 %v7314, %v7458
        %v7523 = vadd.f32 %v7315, %v7459
        %v7524 = vadd.f32 %v7316, %v7460
        %v7525 = vlaneseq
        %v7526 = vshrl.u32 %v7525, 7
        %v7527 = vsub.s32 7, %v7526
        %v7528 = vrot.slane %v489, %v7527
        %v7529 = vlaneseq
        %v7530 = vshrl.u32 %v7529, 7
        %v7531 = vsub.s32 7, %v7530
        %v7532 = vrot.slane %v490, %v7531
        %vm7533 = vcmp.eq.s32.totalorder %v510, %v7528
        %vm7534 = vcmp.eq.s32.totalorder %v510, %v7532
        %vm7535 = vcmp.eq.s32.totalorder %v511, %v7528
        %vm7536 = vcmp.eq.s32.totalorder %v511, %v7532
        %vm7537 = vcmp.eq.s32.totalorder %v512, %v7528
        %vm7538 = vcmp.eq.s32.totalorder %v512, %v7532
        %vm7539 = vcmp.eq.s32.totalorder %v513, %v7528
        %vm7540 = vcmp.eq.s32.totalorder %v513, %v7532
        %vm7541 = vcmp.eq.s32.totalorder %v514, %v7528
        %vm7542 = vcmp.eq.s32.totalorder %v514, %v7532
        %vm7543 = vcmp.eq.s32.totalorder %v515, %v7528
        %vm7544 = vcmp.eq.s32.totalorder %v515, %v7532
        %vm7545 = vcmp.eq.s32.totalorder %v516, %v7528
        %vm7546 = vcmp.eq.s32.totalorder %v516, %v7532
        %vm7547 = vcmp.eq.s32.totalorder %v517, %v7528
        %vm7548 = vcmp.eq.s32.totalorder %v517, %v7532
        %vm7549 = vcmp.eq.s32.totalorder %v518, %v7528
        %vm7550 = vcmp.eq.s32.totalorder %v518, %v7532
        %vm7551 = vcmp.eq.s32.totalorder %v519, %v7528
        %vm7552 = vcmp.eq.s32.totalorder %v519, %v7532
        %vm7553 = vcmp.eq.s32.totalorder %v520, %v7528
        %vm7554 = vcmp.eq.s32.totalorder %v520, %v7532
        %vm7555 = vcmp.eq.s32.totalorder %v521, %v7528
        %vm7556 = vcmp.eq.s32.totalorder %v521, %v7532
        %vm7557 = vcmp.eq.s32.totalorder %v522, %v7528
        %vm7558 = vcmp.eq.s32.totalorder %v522, %v7532
        %vm7559 = vcmp.eq.s32.totalorder %v523, %v7528
        %vm7560 = vcmp.eq.s32.totalorder %v523, %v7532
        %vm7561 = vcmp.eq.s32.totalorder %v524, %v7528
        %vm7562 = vcmp.eq.s32.totalorder %v524, %v7532
        %vm7563 = vcmp.eq.s32.totalorder %v525, %v7528
        %vm7564 = vcmp.eq.s32.totalorder %v525, %v7532
        %vm7565 = vcmp.eq.s32.totalorder %v526, %v7528
        %vm7566 = vcmp.eq.s32.totalorder %v526, %v7532
        %vm7567 = vcmp.eq.s32.totalorder %v527, %v7528
        %vm7568 = vcmp.eq.s32.totalorder %v527, %v7532
        %vm7569 = vcmp.eq.s32.totalorder %v528, %v7528
        %vm7570 = vcmp.eq.s32.totalorder %v528, %v7532
        %vm7571 = vcmp.eq.s32.totalorder %v529, %v7528
        %vm7572 = vcmp.eq.s32.totalorder %v529, %v7532
        %vm7573 = vcmp.eq.s32.totalorder %v530, %v7528
        %vm7574 = vcmp.eq.s32.totalorder %v530, %v7532
        %vm7575 = vcmp.eq.s32.totalorder %v531, %v7528
        %vm7576 = vcmp.eq.s32.totalorder %v531, %v7532
        %vm7577 = vcmp.eq.s32.totalorder %v532, %v7528
        %vm7578 = vcmp.eq.s32.totalorder %v532, %v7532
        %vm7579 = vcmp.eq.s32.totalorder %v533, %v7528
        %vm7580 = vcmp.eq.s32.totalorder %v533, %v7532
        %vm7581 = vcmp.eq.s32.totalorder %v534, %v7528
        %vm7582 = vcmp.eq.s32.totalorder %v534, %v7532
        %vm7583 = vcmp.eq.s32.totalorder %v535, %v7528
        %vm7584 = vcmp.eq.s32.totalorder %v535, %v7532
        %vm7585 = vcmp.eq.s32.totalorder %v536, %v7528
        %vm7586 = vcmp.eq.s32.totalorder %v536, %v7532
        %vm7587 = vcmp.eq.s32.totalorder %v537, %v7528
        %vm7588 = vcmp.eq.s32.totalorder %v537, %v7532
        %vm7589 = vcmp.eq.s32.totalorder %v538, %v7528
        %vm7590 = vcmp.eq.s32.totalorder %v538, %v7532
        %vm7591 = vcmp.eq.s32.totalorder %v539, %v7528
        %vm7592 = vcmp.eq.s32.totalorder %v539, %v7532
        %vm7593 = vcmp.eq.s32.totalorder %v540, %v7528
        %vm7594 = vcmp.eq.s32.totalorder %v540, %v7532
        %vm7595 = vcmp.eq.s32.totalorder %v541, %v7528
        %vm7596 = vcmp.eq.s32.totalorder %v541, %v7532
        %v7597 = vlaneseq
        %v7598 = vshrl.u32 %v7597, 7
        %v7599 = vsub.s32 7, %v7598
        %v7600 = vrot.slane %v505, %v7599
        %v7601 = vlaneseq
        %v7602 = vshrl.u32 %v7601, 7
        %v7603 = vsub.s32 7, %v7602
        %v7604 = vrot.slane %v506, %v7603
        %v7605 = vsel %vm7533, %v7600, 0.0
        %v7606 = vsel %vm7534, %v7604, 0.0
        %v7607 = vsel %vm7535, %v7600, 0.0
        %v7608 = vsel %vm7536, %v7604, 0.0
        %v7609 = vsel %vm7537, %v7600, 0.0
        %v7610 = vsel %vm7538, %v7604, 0.0
        %v7611 = vsel %vm7539, %v7600, 0.0
        %v7612 = vsel %vm7540, %v7604, 0.0
        %v7613 = vsel %vm7541, %v7600, 0.0
        %v7614 = vsel %vm7542, %v7604, 0.0
        %v7615 = vsel %vm7543, %v7600, 0.0
        %v7616 = vsel %vm7544, %v7604, 0.0
        %v7617 = vsel %vm7545, %v7600, 0.0
        %v7618 = vsel %vm7546, %v7604, 0.0
        %v7619 = vsel %vm7547, %v7600, 0.0
        %v7620 = vsel %vm7548, %v7604, 0.0
        %v7621 = vsel %vm7549, %v7600, 0.0
        %v7622 = vsel %vm7550, %v7604, 0.0
        %v7623 = vsel %vm7551, %v7600, 0.0
        %v7624 = vsel %vm7552, %v7604, 0.0
        %v7625 = vsel %vm7553, %v7600, 0.0
        %v7626 = vsel %vm7554, %v7604, 0.0
        %v7627 = vsel %vm7555, %v7600, 0.0
        %v7628 = vsel %vm7556, %v7604, 0.0
        %v7629 = vsel %vm7557, %v7600, 0.0
        %v7630 = vsel %vm7558, %v7604, 0.0
        %v7631 = vsel %vm7559, %v7600, 0.0
        %v7632 = vsel %vm7560, %v7604, 0.0
        %v7633 = vsel %vm7561, %v7600, 0.0
        %v7634 = vsel %vm7562, %v7604, 0.0
        %v7635 = vsel %vm7563, %v7600, 0.0
        %v7636 = vsel %vm7564, %v7604, 0.0
        %v7637 = vsel %vm7565, %v7600, 0.0
        %v7638 = vsel %vm7566, %v7604, 0.0
        %v7639 = vsel %vm7567, %v7600, 0.0
        %v7640 = vsel %vm7568, %v7604, 0.0
        %v7641 = vsel %vm7569, %v7600, 0.0
        %v7642 = vsel %vm7570, %v7604, 0.0
        %v7643 = vsel %vm7571, %v7600, 0.0
        %v7644 = vsel %vm7572, %v7604, 0.0
        %v7645 = vsel %vm7573, %v7600, 0.0
        %v7646 = vsel %vm7574, %v7604, 0.0
        %v7647 = vsel %vm7575, %v7600, 0.0
        %v7648 = vsel %vm7576, %v7604, 0.0
        %v7649 = vsel %vm7577, %v7600, 0.0
        %v7650 = vsel %vm7578, %v7604, 0.0
        %v7651 = vsel %vm7579, %v7600, 0.0
        %v7652 = vsel %vm7580, %v7604, 0.0
        %v7653 = vsel %vm7581, %v7600, 0.0
        %v7654 = vsel %vm7582, %v7604, 0.0
        %v7655 = vsel %vm7583, %v7600, 0.0
        %v7656 = vsel %vm7584, %v7604, 0.0
        %v7657 = vsel %vm7585, %v7600, 0.0
        %v7658 = vsel %vm7586, %v7604, 0.0
        %v7659 = vsel %vm7587, %v7600, 0.0
        %v7660 = vsel %vm7588, %v7604, 0.0
        %v7661 = vsel %vm7589, %v7600, 0.0
        %v7662 = vsel %vm7590, %v7604, 0.0
        %v7663 = vsel %vm7591, %v7600, 0.0
        %v7664 = vsel %vm7592, %v7604, 0.0
        %v7665 = vsel %vm7593, %v7600, 0.0
        %v7666 = vsel %vm7594, %v7604, 0.0
        %v7667 = vsel %vm7595, %v7600, 0.0
        %v7668 = vsel %vm7596, %v7604, 0.0
        %v7669 = vadd.f32 %v7461, %v7605
        %v7670 = vadd.f32 %v7462, %v7606
        %v7671 = vadd.f32 %v7463, %v7607
        %v7672 = vadd.f32 %v7464, %v7608
        %v7673 = vadd.f32 %v7465, %v7609
        %v7674 = vadd.f32 %v7466, %v7610
        %v7675 = vadd.f32 %v7467, %v7611
        %v7676 = vadd.f32 %v7468, %v7612
        %v7677 = vadd.f32 %v7469, %v7613
        %v7678 = vadd.f32 %v7470, %v7614
        %v7679 = vadd.f32 %v7471, %v7615
        %v7680 = vadd.f32 %v7472, %v7616
        %v7681 = vadd.f32 %v7473, %v7617
        %v7682 = vadd.f32 %v7474, %v7618
        %v7683 = vadd.f32 %v7475, %v7619
        %v7684 = vadd.f32 %v7476, %v7620
        %v7685 = vadd.f32 %v7477, %v7621
        %v7686 = vadd.f32 %v7478, %v7622
        %v7687 = vadd.f32 %v7479, %v7623
        %v7688 = vadd.f32 %v7480, %v7624
        %v7689 = vadd.f32 %v7481, %v7625
        %v7690 = vadd.f32 %v7482, %v7626
        %v7691 = vadd.f32 %v7483, %v7627
        %v7692 = vadd.f32 %v7484, %v7628
        %v7693 = vadd.f32 %v7485, %v7629
        %v7694 = vadd.f32 %v7486, %v7630
        %v7695 = vadd.f32 %v7487, %v7631
        %v7696 = vadd.f32 %v7488, %v7632
        %v7697 = vadd.f32 %v7489, %v7633
        %v7698 = vadd.f32 %v7490, %v7634
        %v7699 = vadd.f32 %v7491, %v7635
        %v7700 = vadd.f32 %v7492, %v7636
        %v7701 = vadd.f32 %v7493, %v7637
        %v7702 = vadd.f32 %v7494, %v7638
        %v7703 = vadd.f32 %v7495, %v7639
        %v7704 = vadd.f32 %v7496, %v7640
        %v7705 = vadd.f32 %v7497, %v7641
        %v7706 = vadd.f32 %v7498, %v7642
        %v7707 = vadd.f32 %v7499, %v7643
        %v7708 = vadd.f32 %v7500, %v7644
        %v7709 = vadd.f32 %v7501, %v7645
        %v7710 = vadd.f32 %v7502, %v7646
        %v7711 = vadd.f32 %v7503, %v7647
        %v7712 = vadd.f32 %v7504, %v7648
        %v7713 = vadd.f32 %v7505, %v7649
        %v7714 = vadd.f32 %v7506, %v7650
        %v7715 = vadd.f32 %v7507, %v7651
        %v7716 = vadd.f32 %v7508, %v7652
        %v7717 = vadd.f32 %v7509, %v7653
        %v7718 = vadd.f32 %v7510, %v7654
        %v7719 = vadd.f32 %v7511, %v7655
        %v7720 = vadd.f32 %v7512, %v7656
        %v7721 = vadd.f32 %v7513, %v7657
        %v7722 = vadd.f32 %v7514, %v7658
        %v7723 = vadd.f32 %v7515, %v7659
        %v7724 = vadd.f32 %v7516, %v7660
        %v7725 = vadd.f32 %v7517, %v7661
        %v7726 = vadd.f32 %v7518, %v7662
        %v7727 = vadd.f32 %v7519, %v7663
        %v7728 = vadd.f32 %v7520, %v7664
        %v7729 = vadd.f32 %v7521, %v7665
        %v7730 = vadd.f32 %v7522, %v7666
        %v7731 = vadd.f32 %v7523, %v7667
        %v7732 = vadd.f32 %v7524, %v7668
        %v7733 = vpack.c.bf16 %v465, %v465
        %v7734 = vpack.c.bf16 %v467, %v467
        %v7735 = vpack.c.bf16 %v7671, %v7669
        %v7736 = vpack.c.bf16 %v7672, %v7670
        %v7737 = vpack.c.bf16 %v7675, %v7673
        %v7738 = vpack.c.bf16 %v7676, %v7674
        %v7739 = vpack.c.bf16 %v7679, %v7677
        %v7740 = vpack.c.bf16 %v7680, %v7678
        %v7741 = vpack.c.bf16 %v7683, %v7681
        %v7742 = vpack.c.bf16 %v7684, %v7682
        %v7743 = vpack.c.bf16 %v7687, %v7685
        %v7744 = vpack.c.bf16 %v7688, %v7686
        %v7745 = vpack.c.bf16 %v7691, %v7689
        %v7746 = vpack.c.bf16 %v7692, %v7690
        %v7747 = vpack.c.bf16 %v7695, %v7693
        %v7748 = vpack.c.bf16 %v7696, %v7694
        %v7749 = vpack.c.bf16 %v7699, %v7697
        %v7750 = vpack.c.bf16 %v7700, %v7698
        %v7751 = vpack.c.bf16 %v7703, %v7701
        %v7752 = vpack.c.bf16 %v7704, %v7702
        %v7753 = vpack.c.bf16 %v7707, %v7705
        %v7754 = vpack.c.bf16 %v7708, %v7706
        %v7755 = vpack.c.bf16 %v7711, %v7709
        %v7756 = vpack.c.bf16 %v7712, %v7710
        %v7757 = vpack.c.bf16 %v7715, %v7713
        %v7758 = vpack.c.bf16 %v7716, %v7714
        %v7759 = vpack.c.bf16 %v7719, %v7717
        %v7760 = vpack.c.bf16 %v7720, %v7718
        %v7761 = vpack.c.bf16 %v7723, %v7721
        %v7762 = vpack.c.bf16 %v7724, %v7722
        %v7763 = vpack.c.bf16 %v7727, %v7725
        %v7764 = vpack.c.bf16 %v7728, %v7726
        %v7765 = vpack.c.bf16 %v7731, %v7729
        %v7766 = vpack.c.bf16 %v7732, %v7730
        %7767 = vmatprep.subr.bf16.mxu0 %v7736
        %7768 = vmatpush1.bf16.msra.mxu0 %v7735
        %7769 = vmatprep.subr.bf16.mxu0 %v7738
        %7770 = vmatpush1.bf16.msra.mxu0 %v7737
        %7771 = vmatprep.subr.bf16.mxu0 %v7740
        %7772 = vmatpush1.bf16.msra.mxu0 %v7739
        %7773 = vmatprep.subr.bf16.mxu0 %v7742
        %7774 = vmatpush1.bf16.msra.mxu0 %v7741
        %7775 = vmatprep.subr.bf16.mxu0 %v7744
        %7776 = vmatpush1.bf16.msra.mxu0 %v7743
        %7777 = vmatprep.subr.bf16.mxu0 %v7746
        %7778 = vmatpush1.bf16.msra.mxu0 %v7745
        %7779 = vmatprep.subr.bf16.mxu0 %v7748
        %7780 = vmatpush1.bf16.msra.mxu0 %v7747
        %7781 = vmatprep.subr.bf16.mxu0 %v7750
        %7782 = vmatpush1.bf16.msra.mxu0 %v7749
        %7783 = vmatprep.subr.bf16.mxu0 %v7752
        %7784 = vmatpush1.bf16.msra.mxu0 %v7751
        %7785 = vmatprep.subr.bf16.mxu0 %v7754
        %7786 = vmatpush1.bf16.msra.mxu0 %v7753
        %7787 = vmatprep.subr.bf16.mxu0 %v7756
        %7788 = vmatpush1.bf16.msra.mxu0 %v7755
        %7789 = vmatprep.subr.bf16.mxu0 %v7758
        %7790 = vmatpush1.bf16.msra.mxu0 %v7757
        %7791 = vmatprep.subr.bf16.mxu0 %v7760
        %7792 = vmatpush1.bf16.msra.mxu0 %v7759
        %7793 = vmatprep.subr.bf16.mxu0 %v7762
        %7794 = vmatpush1.bf16.msra.mxu0 %v7761
        %7795 = vmatprep.subr.bf16.mxu0 %v7764
        %7796 = vmatpush1.bf16.msra.mxu0 %v7763
        %7797 = vmatprep.subr.bf16.mxu0 %v7766
        %7798 = vmatpush1.bf16.msra.mxu0 %v7765
        %7799 = vmatprep.mubr.bf16.mxu0 %v7734
        %7800 = vmatmul.mubr.bf16.gmra.mrb[0].mxu0 %v7733
        %v7801 = vpop.f32.mrb[0].mxu0
        %v7802 = vadd.f32 0.0, %v7801
        %v7803 = vpop.f32.mrb[0].mxu0
        %v7804 = vadd.f32 0.0, %v7803
        %v7805 = vpop.f32.mrb[0].mxu0
        %v7806 = vpop.f32.mrb[0].mxu0
        %7807 = vdwg.mxu0
        %v7808 = vadd.f32 %v6899, %v7802
        %v7809 = vadd.f32 %v6900, %v7804
        %v7810 = vlaneseq
        %v7811 = vshrl.u32 %v7810, 7
        %v7812 = vsub.s32 0, %v7811
        %v7813 = vrot.slane %v479, %v7812
        %v7814 = vlaneseq
        %v7815 = vshrl.u32 %v7814, 7
        %v7816 = vsub.s32 0, %v7815
        %v7817 = vrot.slane %v480, %v7816
        %vm7818 = vcmp.eq.s32.totalorder %v510, %v7813
        %vm7819 = vcmp.eq.s32.totalorder %v510, %v7817
        %vm7820 = vcmp.eq.s32.totalorder %v511, %v7813
        %vm7821 = vcmp.eq.s32.totalorder %v511, %v7817
        %vm7822 = vcmp.eq.s32.totalorder %v512, %v7813
        %vm7823 = vcmp.eq.s32.totalorder %v512, %v7817
        %vm7824 = vcmp.eq.s32.totalorder %v513, %v7813
        %vm7825 = vcmp.eq.s32.totalorder %v513, %v7817
        %vm7826 = vcmp.eq.s32.totalorder %v514, %v7813
        %vm7827 = vcmp.eq.s32.totalorder %v514, %v7817
        %vm7828 = vcmp.eq.s32.totalorder %v515, %v7813
        %vm7829 = vcmp.eq.s32.totalorder %v515, %v7817
        %vm7830 = vcmp.eq.s32.totalorder %v516, %v7813
        %vm7831 = vcmp.eq.s32.totalorder %v516, %v7817
        %vm7832 = vcmp.eq.s32.totalorder %v517, %v7813
        %vm7833 = vcmp.eq.s32.totalorder %v517, %v7817
        %vm7834 = vcmp.eq.s32.totalorder %v518, %v7813
        %vm7835 = vcmp.eq.s32.totalorder %v518, %v7817
        %vm7836 = vcmp.eq.s32.totalorder %v519, %v7813
        %vm7837 = vcmp.eq.s32.totalorder %v519, %v7817
        %vm7838 = vcmp.eq.s32.totalorder %v520, %v7813
        %vm7839 = vcmp.eq.s32.totalorder %v520, %v7817
        %vm7840 = vcmp.eq.s32.totalorder %v521, %v7813
        %vm7841 = vcmp.eq.s32.totalorder %v521, %v7817
        %vm7842 = vcmp.eq.s32.totalorder %v522, %v7813
        %vm7843 = vcmp.eq.s32.totalorder %v522, %v7817
        %vm7844 = vcmp.eq.s32.totalorder %v523, %v7813
        %vm7845 = vcmp.eq.s32.totalorder %v523, %v7817
        %vm7846 = vcmp.eq.s32.totalorder %v524, %v7813
        %vm7847 = vcmp.eq.s32.totalorder %v524, %v7817
        %vm7848 = vcmp.eq.s32.totalorder %v525, %v7813
        %vm7849 = vcmp.eq.s32.totalorder %v525, %v7817
        %vm7850 = vcmp.eq.s32.totalorder %v526, %v7813
        %vm7851 = vcmp.eq.s32.totalorder %v526, %v7817
        %vm7852 = vcmp.eq.s32.totalorder %v527, %v7813
        %vm7853 = vcmp.eq.s32.totalorder %v527, %v7817
        %vm7854 = vcmp.eq.s32.totalorder %v528, %v7813
        %vm7855 = vcmp.eq.s32.totalorder %v528, %v7817
        %vm7856 = vcmp.eq.s32.totalorder %v529, %v7813
        %vm7857 = vcmp.eq.s32.totalorder %v529, %v7817
        %vm7858 = vcmp.eq.s32.totalorder %v530, %v7813
        %vm7859 = vcmp.eq.s32.totalorder %v530, %v7817
        %vm7860 = vcmp.eq.s32.totalorder %v531, %v7813
        %vm7861 = vcmp.eq.s32.totalorder %v531, %v7817
        %vm7862 = vcmp.eq.s32.totalorder %v532, %v7813
        %vm7863 = vcmp.eq.s32.totalorder %v532, %v7817
        %vm7864 = vcmp.eq.s32.totalorder %v533, %v7813
        %vm7865 = vcmp.eq.s32.totalorder %v533, %v7817
        %vm7866 = vcmp.eq.s32.totalorder %v534, %v7813
        %vm7867 = vcmp.eq.s32.totalorder %v534, %v7817
        %vm7868 = vcmp.eq.s32.totalorder %v535, %v7813
        %vm7869 = vcmp.eq.s32.totalorder %v535, %v7817
        %vm7870 = vcmp.eq.s32.totalorder %v536, %v7813
        %vm7871 = vcmp.eq.s32.totalorder %v536, %v7817
        %vm7872 = vcmp.eq.s32.totalorder %v537, %v7813
        %vm7873 = vcmp.eq.s32.totalorder %v537, %v7817
        %vm7874 = vcmp.eq.s32.totalorder %v538, %v7813
        %vm7875 = vcmp.eq.s32.totalorder %v538, %v7817
        %vm7876 = vcmp.eq.s32.totalorder %v539, %v7813
        %vm7877 = vcmp.eq.s32.totalorder %v539, %v7817
        %vm7878 = vcmp.eq.s32.totalorder %v540, %v7813
        %vm7879 = vcmp.eq.s32.totalorder %v540, %v7817
        %vm7880 = vcmp.eq.s32.totalorder %v541, %v7813
        %vm7881 = vcmp.eq.s32.totalorder %v541, %v7817
        %v7882 = vlaneseq
        %v7883 = vshrl.u32 %v7882, 7
        %v7884 = vsub.s32 0, %v7883
        %v7885 = vrot.slane %v495, %v7884
        %v7886 = vlaneseq
        %v7887 = vshrl.u32 %v7886, 7
        %v7888 = vsub.s32 0, %v7887
        %v7889 = vrot.slane %v496, %v7888
        %v7890 = vsel %vm7818, %v7885, 0.0
        %v7891 = vsel %vm7819, %v7889, 0.0
        %v7892 = vsel %vm7820, %v7885, 0.0
        %v7893 = vsel %vm7821, %v7889, 0.0
        %v7894 = vsel %vm7822, %v7885, 0.0
        %v7895 = vsel %vm7823, %v7889, 0.0
        %v7896 = vsel %vm7824, %v7885, 0.0
        %v7897 = vsel %vm7825, %v7889, 0.0
        %v7898 = vsel %vm7826, %v7885, 0.0
        %v7899 = vsel %vm7827, %v7889, 0.0
        %v7900 = vsel %vm7828, %v7885, 0.0
        %v7901 = vsel %vm7829, %v7889, 0.0
        %v7902 = vsel %vm7830, %v7885, 0.0
        %v7903 = vsel %vm7831, %v7889, 0.0
        %v7904 = vsel %vm7832, %v7885, 0.0
        %v7905 = vsel %vm7833, %v7889, 0.0
        %v7906 = vsel %vm7834, %v7885, 0.0
        %v7907 = vsel %vm7835, %v7889, 0.0
        %v7908 = vsel %vm7836, %v7885, 0.0
        %v7909 = vsel %vm7837, %v7889, 0.0
        %v7910 = vsel %vm7838, %v7885, 0.0
        %v7911 = vsel %vm7839, %v7889, 0.0
        %v7912 = vsel %vm7840, %v7885, 0.0
        %v7913 = vsel %vm7841, %v7889, 0.0
        %v7914 = vsel %vm7842, %v7885, 0.0
        %v7915 = vsel %vm7843, %v7889, 0.0
        %v7916 = vsel %vm7844, %v7885, 0.0
        %v7917 = vsel %vm7845, %v7889, 0.0
        %v7918 = vsel %vm7846, %v7885, 0.0
        %v7919 = vsel %vm7847, %v7889, 0.0
        %v7920 = vsel %vm7848, %v7885, 0.0
        %v7921 = vsel %vm7849, %v7889, 0.0
        %v7922 = vsel %vm7850, %v7885, 0.0
        %v7923 = vsel %vm7851, %v7889, 0.0
        %v7924 = vsel %vm7852, %v7885, 0.0
        %v7925 = vsel %vm7853, %v7889, 0.0
        %v7926 = vsel %vm7854, %v7885, 0.0
        %v7927 = vsel %vm7855, %v7889, 0.0
        %v7928 = vsel %vm7856, %v7885, 0.0
        %v7929 = vsel %vm7857, %v7889, 0.0
        %v7930 = vsel %vm7858, %v7885, 0.0
        %v7931 = vsel %vm7859, %v7889, 0.0
        %v7932 = vsel %vm7860, %v7885, 0.0
        %v7933 = vsel %vm7861, %v7889, 0.0
        %v7934 = vsel %vm7862, %v7885, 0.0
        %v7935 = vsel %vm7863, %v7889, 0.0
        %v7936 = vsel %vm7864, %v7885, 0.0
        %v7937 = vsel %vm7865, %v7889, 0.0
        %v7938 = vsel %vm7866, %v7885, 0.0
        %v7939 = vsel %vm7867, %v7889, 0.0
        %v7940 = vsel %vm7868, %v7885, 0.0
        %v7941 = vsel %vm7869, %v7889, 0.0
        %v7942 = vsel %vm7870, %v7885, 0.0
        %v7943 = vsel %vm7871, %v7889, 0.0
        %v7944 = vsel %vm7872, %v7885, 0.0
        %v7945 = vsel %vm7873, %v7889, 0.0
        %v7946 = vsel %vm7874, %v7885, 0.0
        %v7947 = vsel %vm7875, %v7889, 0.0
        %v7948 = vsel %vm7876, %v7885, 0.0
        %v7949 = vsel %vm7877, %v7889, 0.0
        %v7950 = vsel %vm7878, %v7885, 0.0
        %v7951 = vsel %vm7879, %v7889, 0.0
        %v7952 = vsel %vm7880, %v7885, 0.0
        %v7953 = vsel %vm7881, %v7889, 0.0
        %v7954 = vadd.f32 %v7890, 0.0
        %v7955 = vadd.f32 %v7891, 0.0
        %v7956 = vadd.f32 %v7892, 0.0
        %v7957 = vadd.f32 %v7893, 0.0
        %v7958 = vadd.f32 %v7894, 0.0
        %v7959 = vadd.f32 %v7895, 0.0
        %v7960 = vadd.f32 %v7896, 0.0
        %v7961 = vadd.f32 %v7897, 0.0
        %v7962 = vadd.f32 %v7898, 0.0
        %v7963 = vadd.f32 %v7899, 0.0
        %v7964 = vadd.f32 %v7900, 0.0
        %v7965 = vadd.f32 %v7901, 0.0
        %v7966 = vadd.f32 %v7902, 0.0
        %v7967 = vadd.f32 %v7903, 0.0
        %v7968 = vadd.f32 %v7904, 0.0
        %v7969 = vadd.f32 %v7905, 0.0
        %v7970 = vadd.f32 %v7906, 0.0
        %v7971 = vadd.f32 %v7907, 0.0
        %v7972 = vadd.f32 %v7908, 0.0
        %v7973 = vadd.f32 %v7909, 0.0
        %v7974 = vadd.f32 %v7910, 0.0
        %v7975 = vadd.f32 %v7911, 0.0
        %v7976 = vadd.f32 %v7912, 0.0
        %v7977 = vadd.f32 %v7913, 0.0
        %v7978 = vadd.f32 %v7914, 0.0
        %v7979 = vadd.f32 %v7915, 0.0
        %v7980 = vadd.f32 %v7916, 0.0
        %v7981 = vadd.f32 %v7917, 0.0
        %v7982 = vadd.f32 %v7918, 0.0
        %v7983 = vadd.f32 %v7919, 0.0
        %v7984 = vadd.f32 %v7920, 0.0
        %v7985 = vadd.f32 %v7921, 0.0
        %v7986 = vadd.f32 %v7922, 0.0
        %v7987 = vadd.f32 %v7923, 0.0
        %v7988 = vadd.f32 %v7924, 0.0
        %v7989 = vadd.f32 %v7925, 0.0
        %v7990 = vadd.f32 %v7926, 0.0
        %v7991 = vadd.f32 %v7927, 0.0
        %v7992 = vadd.f32 %v7928, 0.0
        %v7993 = vadd.f32 %v7929, 0.0
        %v7994 = vadd.f32 %v7930, 0.0
        %v7995 = vadd.f32 %v7931, 0.0
        %v7996 = vadd.f32 %v7932, 0.0
        %v7997 = vadd.f32 %v7933, 0.0
        %v7998 = vadd.f32 %v7934, 0.0
        %v7999 = vadd.f32 %v7935, 0.0
        %v8000 = vadd.f32 %v7936, 0.0
        %v8001 = vadd.f32 %v7937, 0.0
        %v8002 = vadd.f32 %v7938, 0.0
        %v8003 = vadd.f32 %v7939, 0.0
        %v8004 = vadd.f32 %v7940, 0.0
        %v8005 = vadd.f32 %v7941, 0.0
        %v8006 = vadd.f32 %v7942, 0.0
        %v8007 = vadd.f32 %v7943, 0.0
        %v8008 = vadd.f32 %v7944, 0.0
        %v8009 = vadd.f32 %v7945, 0.0
        %v8010 = vadd.f32 %v7946, 0.0
        %v8011 = vadd.f32 %v7947, 0.0
        %v8012 = vadd.f32 %v7948, 0.0
        %v8013 = vadd.f32 %v7949, 0.0
        %v8014 = vadd.f32 %v7950, 0.0
        %v8015 = vadd.f32 %v7951, 0.0
        %v8016 = vadd.f32 %v7952, 0.0
        %v8017 = vadd.f32 %v7953, 0.0
        %v8018 = vlaneseq
        %v8019 = vshrl.u32 %v8018, 7
        %v8020 = vsub.s32 0, %v8019
        %v8021 = vrot.slane %v483, %v8020
        %v8022 = vlaneseq
        %v8023 = vshrl.u32 %v8022, 7
        %v8024 = vsub.s32 0, %v8023
        %v8025 = vrot.slane %v484, %v8024
        %vm8026 = vcmp.eq.s32.totalorder %v510, %v8021
        %vm8027 = vcmp.eq.s32.totalorder %v510, %v8025
        %vm8028 = vcmp.eq.s32.totalorder %v511, %v8021
        %vm8029 = vcmp.eq.s32.totalorder %v511, %v8025
        %vm8030 = vcmp.eq.s32.totalorder %v512, %v8021
        %vm8031 = vcmp.eq.s32.totalorder %v512, %v8025
        %vm8032 = vcmp.eq.s32.totalorder %v513, %v8021
        %vm8033 = vcmp.eq.s32.totalorder %v513, %v8025
        %vm8034 = vcmp.eq.s32.totalorder %v514, %v8021
        %vm8035 = vcmp.eq.s32.totalorder %v514, %v8025
        %vm8036 = vcmp.eq.s32.totalorder %v515, %v8021
        %vm8037 = vcmp.eq.s32.totalorder %v515, %v8025
        %vm8038 = vcmp.eq.s32.totalorder %v516, %v8021
        %vm8039 = vcmp.eq.s32.totalorder %v516, %v8025
        %vm8040 = vcmp.eq.s32.totalorder %v517, %v8021
        %vm8041 = vcmp.eq.s32.totalorder %v517, %v8025
        %vm8042 = vcmp.eq.s32.totalorder %v518, %v8021
        %vm8043 = vcmp.eq.s32.totalorder %v518, %v8025
        %vm8044 = vcmp.eq.s32.totalorder %v519, %v8021
        %vm8045 = vcmp.eq.s32.totalorder %v519, %v8025
        %vm8046 = vcmp.eq.s32.totalorder %v520, %v8021
        %vm8047 = vcmp.eq.s32.totalorder %v520, %v8025
        %vm8048 = vcmp.eq.s32.totalorder %v521, %v8021
        %vm8049 = vcmp.eq.s32.totalorder %v521, %v8025
        %vm8050 = vcmp.eq.s32.totalorder %v522, %v8021
        %vm8051 = vcmp.eq.s32.totalorder %v522, %v8025
        %vm8052 = vcmp.eq.s32.totalorder %v523, %v8021
        %vm8053 = vcmp.eq.s32.totalorder %v523, %v8025
        %vm8054 = vcmp.eq.s32.totalorder %v524, %v8021
        %vm8055 = vcmp.eq.s32.totalorder %v524, %v8025
        %vm8056 = vcmp.eq.s32.totalorder %v525, %v8021
        %vm8057 = vcmp.eq.s32.totalorder %v525, %v8025
        %vm8058 = vcmp.eq.s32.totalorder %v526, %v8021
        %vm8059 = vcmp.eq.s32.totalorder %v526, %v8025
        %vm8060 = vcmp.eq.s32.totalorder %v527, %v8021
        %vm8061 = vcmp.eq.s32.totalorder %v527, %v8025
        %vm8062 = vcmp.eq.s32.totalorder %v528, %v8021
        %vm8063 = vcmp.eq.s32.totalorder %v528, %v8025
        %vm8064 = vcmp.eq.s32.totalorder %v529, %v8021
        %vm8065 = vcmp.eq.s32.totalorder %v529, %v8025
        %vm8066 = vcmp.eq.s32.totalorder %v530, %v8021
        %vm8067 = vcmp.eq.s32.totalorder %v530, %v8025
        %vm8068 = vcmp.eq.s32.totalorder %v531, %v8021
        %vm8069 = vcmp.eq.s32.totalorder %v531, %v8025
        %vm8070 = vcmp.eq.s32.totalorder %v532, %v8021
        %vm8071 = vcmp.eq.s32.totalorder %v532, %v8025
        %vm8072 = vcmp.eq.s32.totalorder %v533, %v8021
        %vm8073 = vcmp.eq.s32.totalorder %v533, %v8025
        %vm8074 = vcmp.eq.s32.totalorder %v534, %v8021
        %vm8075 = vcmp.eq.s32.totalorder %v534, %v8025
        %vm8076 = vcmp.eq.s32.totalorder %v535, %v8021
        %vm8077 = vcmp.eq.s32.totalorder %v535, %v8025
        %vm8078 = vcmp.eq.s32.totalorder %v536, %v8021
        %vm8079 = vcmp.eq.s32.totalorder %v536, %v8025
        %vm8080 = vcmp.eq.s32.totalorder %v537, %v8021
        %vm8081 = vcmp.eq.s32.totalorder %v537, %v8025
        %vm8082 = vcmp.eq.s32.totalorder %v538, %v8021
        %vm8083 = vcmp.eq.s32.totalorder %v538, %v8025
        %vm8084 = vcmp.eq.s32.totalorder %v539, %v8021
        %vm8085 = vcmp.eq.s32.totalorder %v539, %v8025
        %vm8086 = vcmp.eq.s32.totalorder %v540, %v8021
        %vm8087 = vcmp.eq.s32.totalorder %v540, %v8025
        %vm8088 = vcmp.eq.s32.totalorder %v541, %v8021
        %vm8089 = vcmp.eq.s32.totalorder %v541, %v8025
        %v8090 = vlaneseq
        %v8091 = vshrl.u32 %v8090, 7
        %v8092 = vsub.s32 0, %v8091
        %v8093 = vrot.slane %v499, %v8092
        %v8094 = vlaneseq
        %v8095 = vshrl.u32 %v8094, 7
        %v8096 = vsub.s32 0, %v8095
        %v8097 = vrot.slane %v500, %v8096
        %v8098 = vsel %vm8026, %v8093, 0.0
        %v8099 = vsel %vm8027, %v8097, 0.0
        %v8100 = vsel %vm8028, %v8093, 0.0
        %v8101 = vsel %vm8029, %v8097, 0.0
        %v8102 = vsel %vm8030, %v8093, 0.0
        %v8103 = vsel %vm8031, %v8097, 0.0
        %v8104 = vsel %vm8032, %v8093, 0.0
        %v8105 = vsel %vm8033, %v8097, 0.0
        %v8106 = vsel %vm8034, %v8093, 0.0
        %v8107 = vsel %vm8035, %v8097, 0.0
        %v8108 = vsel %vm8036, %v8093, 0.0
        %v8109 = vsel %vm8037, %v8097, 0.0
        %v8110 = vsel %vm8038, %v8093, 0.0
        %v8111 = vsel %vm8039, %v8097, 0.0
        %v8112 = vsel %vm8040, %v8093, 0.0
        %v8113 = vsel %vm8041, %v8097, 0.0
        %v8114 = vsel %vm8042, %v8093, 0.0
        %v8115 = vsel %vm8043, %v8097, 0.0
        %v8116 = vsel %vm8044, %v8093, 0.0
        %v8117 = vsel %vm8045, %v8097, 0.0
        %v8118 = vsel %vm8046, %v8093, 0.0
        %v8119 = vsel %vm8047, %v8097, 0.0
        %v8120 = vsel %vm8048, %v8093, 0.0
        %v8121 = vsel %vm8049, %v8097, 0.0
        %v8122 = vsel %vm8050, %v8093, 0.0
        %v8123 = vsel %vm8051, %v8097, 0.0
        %v8124 = vsel %vm8052, %v8093, 0.0
        %v8125 = vsel %vm8053, %v8097, 0.0
        %v8126 = vsel %vm8054, %v8093, 0.0
        %v8127 = vsel %vm8055, %v8097, 0.0
        %v8128 = vsel %vm8056, %v8093, 0.0
        %v8129 = vsel %vm8057, %v8097, 0.0
        %v8130 = vsel %vm8058, %v8093, 0.0
        %v8131 = vsel %vm8059, %v8097, 0.0
        %v8132 = vsel %vm8060, %v8093, 0.0
        %v8133 = vsel %vm8061, %v8097, 0.0
        %v8134 = vsel %vm8062, %v8093, 0.0
        %v8135 = vsel %vm8063, %v8097, 0.0
        %v8136 = vsel %vm8064, %v8093, 0.0
        %v8137 = vsel %vm8065, %v8097, 0.0
        %v8138 = vsel %vm8066, %v8093, 0.0
        %v8139 = vsel %vm8067, %v8097, 0.0
        %v8140 = vsel %vm8068, %v8093, 0.0
        %v8141 = vsel %vm8069, %v8097, 0.0
        %v8142 = vsel %vm8070, %v8093, 0.0
        %v8143 = vsel %vm8071, %v8097, 0.0
        %v8144 = vsel %vm8072, %v8093, 0.0
        %v8145 = vsel %vm8073, %v8097, 0.0
        %v8146 = vsel %vm8074, %v8093, 0.0
        %v8147 = vsel %vm8075, %v8097, 0.0
        %v8148 = vsel %vm8076, %v8093, 0.0
        %v8149 = vsel %vm8077, %v8097, 0.0
        %v8150 = vsel %vm8078, %v8093, 0.0
        %v8151 = vsel %vm8079, %v8097, 0.0
        %v8152 = vsel %vm8080, %v8093, 0.0
        %v8153 = vsel %vm8081, %v8097, 0.0
        %v8154 = vsel %vm8082, %v8093, 0.0
        %v8155 = vsel %vm8083, %v8097, 0.0
        %v8156 = vsel %vm8084, %v8093, 0.0
        %v8157 = vsel %vm8085, %v8097, 0.0
        %v8158 = vsel %vm8086, %v8093, 0.0
        %v8159 = vsel %vm8087, %v8097, 0.0
        %v8160 = vsel %vm8088, %v8093, 0.0
        %v8161 = vsel %vm8089, %v8097, 0.0
        %v8162 = vadd.f32 %v7954, %v8098
        %v8163 = vadd.f32 %v7955, %v8099
        %v8164 = vadd.f32 %v7956, %v8100
        %v8165 = vadd.f32 %v7957, %v8101
        %v8166 = vadd.f32 %v7958, %v8102
        %v8167 = vadd.f32 %v7959, %v8103
        %v8168 = vadd.f32 %v7960, %v8104
        %v8169 = vadd.f32 %v7961, %v8105
        %v8170 = vadd.f32 %v7962, %v8106
        %v8171 = vadd.f32 %v7963, %v8107
        %v8172 = vadd.f32 %v7964, %v8108
        %v8173 = vadd.f32 %v7965, %v8109
        %v8174 = vadd.f32 %v7966, %v8110
        %v8175 = vadd.f32 %v7967, %v8111
        %v8176 = vadd.f32 %v7968, %v8112
        %v8177 = vadd.f32 %v7969, %v8113
        %v8178 = vadd.f32 %v7970, %v8114
        %v8179 = vadd.f32 %v7971, %v8115
        %v8180 = vadd.f32 %v7972, %v8116
        %v8181 = vadd.f32 %v7973, %v8117
        %v8182 = vadd.f32 %v7974, %v8118
        %v8183 = vadd.f32 %v7975, %v8119
        %v8184 = vadd.f32 %v7976, %v8120
        %v8185 = vadd.f32 %v7977, %v8121
        %v8186 = vadd.f32 %v7978, %v8122
        %v8187 = vadd.f32 %v7979, %v8123
        %v8188 = vadd.f32 %v7980, %v8124
        %v8189 = vadd.f32 %v7981, %v8125
        %v8190 = vadd.f32 %v7982, %v8126
        %v8191 = vadd.f32 %v7983, %v8127
        %v8192 = vadd.f32 %v7984, %v8128
        %v8193 = vadd.f32 %v7985, %v8129
        %v8194 = vadd.f32 %v7986, %v8130
        %v8195 = vadd.f32 %v7987, %v8131
        %v8196 = vadd.f32 %v7988, %v8132
        %v8197 = vadd.f32 %v7989, %v8133
        %v8198 = vadd.f32 %v7990, %v8134
        %v8199 = vadd.f32 %v7991, %v8135
        %v8200 = vadd.f32 %v7992, %v8136
        %v8201 = vadd.f32 %v7993, %v8137
        %v8202 = vadd.f32 %v7994, %v8138
        %v8203 = vadd.f32 %v7995, %v8139
        %v8204 = vadd.f32 %v7996, %v8140
        %v8205 = vadd.f32 %v7997, %v8141
        %v8206 = vadd.f32 %v7998, %v8142
        %v8207 = vadd.f32 %v7999, %v8143
        %v8208 = vadd.f32 %v8000, %v8144
        %v8209 = vadd.f32 %v8001, %v8145
        %v8210 = vadd.f32 %v8002, %v8146
        %v8211 = vadd.f32 %v8003, %v8147
        %v8212 = vadd.f32 %v8004, %v8148
        %v8213 = vadd.f32 %v8005, %v8149
        %v8214 = vadd.f32 %v8006, %v8150
        %v8215 = vadd.f32 %v8007, %v8151
        %v8216 = vadd.f32 %v8008, %v8152
        %v8217 = vadd.f32 %v8009, %v8153
        %v8218 = vadd.f32 %v8010, %v8154
        %v8219 = vadd.f32 %v8011, %v8155
        %v8220 = vadd.f32 %v8012, %v8156
        %v8221 = vadd.f32 %v8013, %v8157
        %v8222 = vadd.f32 %v8014, %v8158
        %v8223 = vadd.f32 %v8015, %v8159
        %v8224 = vadd.f32 %v8016, %v8160
        %v8225 = vadd.f32 %v8017, %v8161
        %v8226 = vlaneseq
        %v8227 = vshrl.u32 %v8226, 7
        %v8228 = vsub.s32 0, %v8227
        %v8229 = vrot.slane %v487, %v8228
        %v8230 = vlaneseq
        %v8231 = vshrl.u32 %v8230, 7
        %v8232 = vsub.s32 0, %v8231
        %v8233 = vrot.slane %v488, %v8232
        %vm8234 = vcmp.eq.s32.totalorder %v510, %v8229
        %vm8235 = vcmp.eq.s32.totalorder %v510, %v8233
        %vm8236 = vcmp.eq.s32.totalorder %v511, %v8229
        %vm8237 = vcmp.eq.s32.totalorder %v511, %v8233
        %vm8238 = vcmp.eq.s32.totalorder %v512, %v8229
        %vm8239 = vcmp.eq.s32.totalorder %v512, %v8233
        %vm8240 = vcmp.eq.s32.totalorder %v513, %v8229
        %vm8241 = vcmp.eq.s32.totalorder %v513, %v8233
        %vm8242 = vcmp.eq.s32.totalorder %v514, %v8229
        %vm8243 = vcmp.eq.s32.totalorder %v514, %v8233
        %vm8244 = vcmp.eq.s32.totalorder %v515, %v8229
        %vm8245 = vcmp.eq.s32.totalorder %v515, %v8233
        %vm8246 = vcmp.eq.s32.totalorder %v516, %v8229
        %vm8247 = vcmp.eq.s32.totalorder %v516, %v8233
        %vm8248 = vcmp.eq.s32.totalorder %v517, %v8229
        %vm8249 = vcmp.eq.s32.totalorder %v517, %v8233
        %vm8250 = vcmp.eq.s32.totalorder %v518, %v8229
        %vm8251 = vcmp.eq.s32.totalorder %v518, %v8233
        %vm8252 = vcmp.eq.s32.totalorder %v519, %v8229
        %vm8253 = vcmp.eq.s32.totalorder %v519, %v8233
        %vm8254 = vcmp.eq.s32.totalorder %v520, %v8229
        %vm8255 = vcmp.eq.s32.totalorder %v520, %v8233
        %vm8256 = vcmp.eq.s32.totalorder %v521, %v8229
        %vm8257 = vcmp.eq.s32.totalorder %v521, %v8233
        %vm8258 = vcmp.eq.s32.totalorder %v522, %v8229
        %vm8259 = vcmp.eq.s32.totalorder %v522, %v8233
        %vm8260 = vcmp.eq.s32.totalorder %v523, %v8229
        %vm8261 = vcmp.eq.s32.totalorder %v523, %v8233
        %vm8262 = vcmp.eq.s32.totalorder %v524, %v8229
        %vm8263 = vcmp.eq.s32.totalorder %v524, %v8233
        %vm8264 = vcmp.eq.s32.totalorder %v525, %v8229
        %vm8265 = vcmp.eq.s32.totalorder %v525, %v8233
        %vm8266 = vcmp.eq.s32.totalorder %v526, %v8229
        %vm8267 = vcmp.eq.s32.totalorder %v526, %v8233
        %vm8268 = vcmp.eq.s32.totalorder %v527, %v8229
        %vm8269 = vcmp.eq.s32.totalorder %v527, %v8233
        %vm8270 = vcmp.eq.s32.totalorder %v528, %v8229
        %vm8271 = vcmp.eq.s32.totalorder %v528, %v8233
        %vm8272 = vcmp.eq.s32.totalorder %v529, %v8229
        %vm8273 = vcmp.eq.s32.totalorder %v529, %v8233
        %vm8274 = vcmp.eq.s32.totalorder %v530, %v8229
        %vm8275 = vcmp.eq.s32.totalorder %v530, %v8233
        %vm8276 = vcmp.eq.s32.totalorder %v531, %v8229
        %vm8277 = vcmp.eq.s32.totalorder %v531, %v8233
        %vm8278 = vcmp.eq.s32.totalorder %v532, %v8229
        %vm8279 = vcmp.eq.s32.totalorder %v532, %v8233
        %vm8280 = vcmp.eq.s32.totalorder %v533, %v8229
        %vm8281 = vcmp.eq.s32.totalorder %v533, %v8233
        %vm8282 = vcmp.eq.s32.totalorder %v534, %v8229
        %vm8283 = vcmp.eq.s32.totalorder %v534, %v8233
        %vm8284 = vcmp.eq.s32.totalorder %v535, %v8229
        %vm8285 = vcmp.eq.s32.totalorder %v535, %v8233
        %vm8286 = vcmp.eq.s32.totalorder %v536, %v8229
        %vm8287 = vcmp.eq.s32.totalorder %v536, %v8233
        %vm8288 = vcmp.eq.s32.totalorder %v537, %v8229
        %vm8289 = vcmp.eq.s32.totalorder %v537, %v8233
        %vm8290 = vcmp.eq.s32.totalorder %v538, %v8229
        %vm8291 = vcmp.eq.s32.totalorder %v538, %v8233
        %vm8292 = vcmp.eq.s32.totalorder %v539, %v8229
        %vm8293 = vcmp.eq.s32.totalorder %v539, %v8233
        %vm8294 = vcmp.eq.s32.totalorder %v540, %v8229
        %vm8295 = vcmp.eq.s32.totalorder %v540, %v8233
        %vm8296 = vcmp.eq.s32.totalorder %v541, %v8229
        %vm8297 = vcmp.eq.s32.totalorder %v541, %v8233
        %v8298 = vlaneseq
        %v8299 = vshrl.u32 %v8298, 7
        %v8300 = vsub.s32 0, %v8299
        %v8301 = vrot.slane %v503, %v8300
        %v8302 = vlaneseq
        %v8303 = vshrl.u32 %v8302, 7
        %v8304 = vsub.s32 0, %v8303
        %v8305 = vrot.slane %v504, %v8304
        %v8306 = vsel %vm8234, %v8301, 0.0
        %v8307 = vsel %vm8235, %v8305, 0.0
        %v8308 = vsel %vm8236, %v8301, 0.0
        %v8309 = vsel %vm8237, %v8305, 0.0
        %v8310 = vsel %vm8238, %v8301, 0.0
        %v8311 = vsel %vm8239, %v8305, 0.0
        %v8312 = vsel %vm8240, %v8301, 0.0
        %v8313 = vsel %vm8241, %v8305, 0.0
        %v8314 = vsel %vm8242, %v8301, 0.0
        %v8315 = vsel %vm8243, %v8305, 0.0
        %v8316 = vsel %vm8244, %v8301, 0.0
        %v8317 = vsel %vm8245, %v8305, 0.0
        %v8318 = vsel %vm8246, %v8301, 0.0
        %v8319 = vsel %vm8247, %v8305, 0.0
        %v8320 = vsel %vm8248, %v8301, 0.0
        %v8321 = vsel %vm8249, %v8305, 0.0
        %v8322 = vsel %vm8250, %v8301, 0.0
        %v8323 = vsel %vm8251, %v8305, 0.0
        %v8324 = vsel %vm8252, %v8301, 0.0
        %v8325 = vsel %vm8253, %v8305, 0.0
        %v8326 = vsel %vm8254, %v8301, 0.0
        %v8327 = vsel %vm8255, %v8305, 0.0
        %v8328 = vsel %vm8256, %v8301, 0.0
        %v8329 = vsel %vm8257, %v8305, 0.0
        %v8330 = vsel %vm8258, %v8301, 0.0
        %v8331 = vsel %vm8259, %v8305, 0.0
        %v8332 = vsel %vm8260, %v8301, 0.0
        %v8333 = vsel %vm8261, %v8305, 0.0
        %v8334 = vsel %vm8262, %v8301, 0.0
        %v8335 = vsel %vm8263, %v8305, 0.0
        %v8336 = vsel %vm8264, %v8301, 0.0
        %v8337 = vsel %vm8265, %v8305, 0.0
        %v8338 = vsel %vm8266, %v8301, 0.0
        %v8339 = vsel %vm8267, %v8305, 0.0
        %v8340 = vsel %vm8268, %v8301, 0.0
        %v8341 = vsel %vm8269, %v8305, 0.0
        %v8342 = vsel %vm8270, %v8301, 0.0
        %v8343 = vsel %vm8271, %v8305, 0.0
        %v8344 = vsel %vm8272, %v8301, 0.0
        %v8345 = vsel %vm8273, %v8305, 0.0
        %v8346 = vsel %vm8274, %v8301, 0.0
        %v8347 = vsel %vm8275, %v8305, 0.0
        %v8348 = vsel %vm8276, %v8301, 0.0
        %v8349 = vsel %vm8277, %v8305, 0.0
        %v8350 = vsel %vm8278, %v8301, 0.0
        %v8351 = vsel %vm8279, %v8305, 0.0
        %v8352 = vsel %vm8280, %v8301, 0.0
        %v8353 = vsel %vm8281, %v8305, 0.0
        %v8354 = vsel %vm8282, %v8301, 0.0
        %v8355 = vsel %vm8283, %v8305, 0.0
        %v8356 = vsel %vm8284, %v8301, 0.0
        %v8357 = vsel %vm8285, %v8305, 0.0
        %v8358 = vsel %vm8286, %v8301, 0.0
        %v8359 = vsel %vm8287, %v8305, 0.0
        %v8360 = vsel %vm8288, %v8301, 0.0
        %v8361 = vsel %vm8289, %v8305, 0.0
        %v8362 = vsel %vm8290, %v8301, 0.0
        %v8363 = vsel %vm8291, %v8305, 0.0
        %v8364 = vsel %vm8292, %v8301, 0.0
        %v8365 = vsel %vm8293, %v8305, 0.0
        %v8366 = vsel %vm8294, %v8301, 0.0
        %v8367 = vsel %vm8295, %v8305, 0.0
        %v8368 = vsel %vm8296, %v8301, 0.0
        %v8369 = vsel %vm8297, %v8305, 0.0
        %v8370 = vadd.f32 %v8162, %v8306
        %v8371 = vadd.f32 %v8163, %v8307
        %v8372 = vadd.f32 %v8164, %v8308
        %v8373 = vadd.f32 %v8165, %v8309
        %v8374 = vadd.f32 %v8166, %v8310
        %v8375 = vadd.f32 %v8167, %v8311
        %v8376 = vadd.f32 %v8168, %v8312
        %v8377 = vadd.f32 %v8169, %v8313
        %v8378 = vadd.f32 %v8170, %v8314
        %v8379 = vadd.f32 %v8171, %v8315
        %v8380 = vadd.f32 %v8172, %v8316
        %v8381 = vadd.f32 %v8173, %v8317
        %v8382 = vadd.f32 %v8174, %v8318
        %v8383 = vadd.f32 %v8175, %v8319
        %v8384 = vadd.f32 %v8176, %v8320
        %v8385 = vadd.f32 %v8177, %v8321
        %v8386 = vadd.f32 %v8178, %v8322
        %v8387 = vadd.f32 %v8179, %v8323
        %v8388 = vadd.f32 %v8180, %v8324
        %v8389 = vadd.f32 %v8181, %v8325
        %v8390 = vadd.f32 %v8182, %v8326
        %v8391 = vadd.f32 %v8183, %v8327
        %v8392 = vadd.f32 %v8184, %v8328
        %v8393 = vadd.f32 %v8185, %v8329
        %v8394 = vadd.f32 %v8186, %v8330
        %v8395 = vadd.f32 %v8187, %v8331
        %v8396 = vadd.f32 %v8188, %v8332
        %v8397 = vadd.f32 %v8189, %v8333
        %v8398 = vadd.f32 %v8190, %v8334
        %v8399 = vadd.f32 %v8191, %v8335
        %v8400 = vadd.f32 %v8192, %v8336
        %v8401 = vadd.f32 %v8193, %v8337
        %v8402 = vadd.f32 %v8194, %v8338
        %v8403 = vadd.f32 %v8195, %v8339
        %v8404 = vadd.f32 %v8196, %v8340
        %v8405 = vadd.f32 %v8197, %v8341
        %v8406 = vadd.f32 %v8198, %v8342
        %v8407 = vadd.f32 %v8199, %v8343
        %v8408 = vadd.f32 %v8200, %v8344
        %v8409 = vadd.f32 %v8201, %v8345
        %v8410 = vadd.f32 %v8202, %v8346
        %v8411 = vadd.f32 %v8203, %v8347
        %v8412 = vadd.f32 %v8204, %v8348
        %v8413 = vadd.f32 %v8205, %v8349
        %v8414 = vadd.f32 %v8206, %v8350
        %v8415 = vadd.f32 %v8207, %v8351
        %v8416 = vadd.f32 %v8208, %v8352
        %v8417 = vadd.f32 %v8209, %v8353
        %v8418 = vadd.f32 %v8210, %v8354
        %v8419 = vadd.f32 %v8211, %v8355
        %v8420 = vadd.f32 %v8212, %v8356
        %v8421 = vadd.f32 %v8213, %v8357
        %v8422 = vadd.f32 %v8214, %v8358
        %v8423 = vadd.f32 %v8215, %v8359
        %v8424 = vadd.f32 %v8216, %v8360
        %v8425 = vadd.f32 %v8217, %v8361
        %v8426 = vadd.f32 %v8218, %v8362
        %v8427 = vadd.f32 %v8219, %v8363
        %v8428 = vadd.f32 %v8220, %v8364
        %v8429 = vadd.f32 %v8221, %v8365
        %v8430 = vadd.f32 %v8222, %v8366
        %v8431 = vadd.f32 %v8223, %v8367
        %v8432 = vadd.f32 %v8224, %v8368
        %v8433 = vadd.f32 %v8225, %v8369
        %v8434 = vlaneseq
        %v8435 = vshrl.u32 %v8434, 7
        %v8436 = vsub.s32 0, %v8435
        %v8437 = vrot.slane %v491, %v8436
        %v8438 = vlaneseq
        %v8439 = vshrl.u32 %v8438, 7
        %v8440 = vsub.s32 0, %v8439
        %v8441 = vrot.slane %v492, %v8440
        %vm8442 = vcmp.eq.s32.totalorder %v510, %v8437
        %vm8443 = vcmp.eq.s32.totalorder %v510, %v8441
        %vm8444 = vcmp.eq.s32.totalorder %v511, %v8437
        %vm8445 = vcmp.eq.s32.totalorder %v511, %v8441
        %vm8446 = vcmp.eq.s32.totalorder %v512, %v8437
        %vm8447 = vcmp.eq.s32.totalorder %v512, %v8441
        %vm8448 = vcmp.eq.s32.totalorder %v513, %v8437
        %vm8449 = vcmp.eq.s32.totalorder %v513, %v8441
        %vm8450 = vcmp.eq.s32.totalorder %v514, %v8437
        %vm8451 = vcmp.eq.s32.totalorder %v514, %v8441
        %vm8452 = vcmp.eq.s32.totalorder %v515, %v8437
        %vm8453 = vcmp.eq.s32.totalorder %v515, %v8441
        %vm8454 = vcmp.eq.s32.totalorder %v516, %v8437
        %vm8455 = vcmp.eq.s32.totalorder %v516, %v8441
        %vm8456 = vcmp.eq.s32.totalorder %v517, %v8437
        %vm8457 = vcmp.eq.s32.totalorder %v517, %v8441
        %vm8458 = vcmp.eq.s32.totalorder %v518, %v8437
        %vm8459 = vcmp.eq.s32.totalorder %v518, %v8441
        %vm8460 = vcmp.eq.s32.totalorder %v519, %v8437
        %vm8461 = vcmp.eq.s32.totalorder %v519, %v8441
        %vm8462 = vcmp.eq.s32.totalorder %v520, %v8437
        %vm8463 = vcmp.eq.s32.totalorder %v520, %v8441
        %vm8464 = vcmp.eq.s32.totalorder %v521, %v8437
        %vm8465 = vcmp.eq.s32.totalorder %v521, %v8441
        %vm8466 = vcmp.eq.s32.totalorder %v522, %v8437
        %vm8467 = vcmp.eq.s32.totalorder %v522, %v8441
        %vm8468 = vcmp.eq.s32.totalorder %v523, %v8437
        %vm8469 = vcmp.eq.s32.totalorder %v523, %v8441
        %vm8470 = vcmp.eq.s32.totalorder %v524, %v8437
        %vm8471 = vcmp.eq.s32.totalorder %v524, %v8441
        %vm8472 = vcmp.eq.s32.totalorder %v525, %v8437
        %vm8473 = vcmp.eq.s32.totalorder %v525, %v8441
        %vm8474 = vcmp.eq.s32.totalorder %v526, %v8437
        %vm8475 = vcmp.eq.s32.totalorder %v526, %v8441
        %vm8476 = vcmp.eq.s32.totalorder %v527, %v8437
        %vm8477 = vcmp.eq.s32.totalorder %v527, %v8441
        %vm8478 = vcmp.eq.s32.totalorder %v528, %v8437
        %vm8479 = vcmp.eq.s32.totalorder %v528, %v8441
        %vm8480 = vcmp.eq.s32.totalorder %v529, %v8437
        %vm8481 = vcmp.eq.s32.totalorder %v529, %v8441
        %vm8482 = vcmp.eq.s32.totalorder %v530, %v8437
        %vm8483 = vcmp.eq.s32.totalorder %v530, %v8441
        %vm8484 = vcmp.eq.s32.totalorder %v531, %v8437
        %vm8485 = vcmp.eq.s32.totalorder %v531, %v8441
        %vm8486 = vcmp.eq.s32.totalorder %v532, %v8437
        %vm8487 = vcmp.eq.s32.totalorder %v532, %v8441
        %vm8488 = vcmp.eq.s32.totalorder %v533, %v8437
        %vm8489 = vcmp.eq.s32.totalorder %v533, %v8441
        %vm8490 = vcmp.eq.s32.totalorder %v534, %v8437
        %vm8491 = vcmp.eq.s32.totalorder %v534, %v8441
        %vm8492 = vcmp.eq.s32.totalorder %v535, %v8437
        %vm8493 = vcmp.eq.s32.totalorder %v535, %v8441
        %vm8494 = vcmp.eq.s32.totalorder %v536, %v8437
        %vm8495 = vcmp.eq.s32.totalorder %v536, %v8441
        %vm8496 = vcmp.eq.s32.totalorder %v537, %v8437
        %vm8497 = vcmp.eq.s32.totalorder %v537, %v8441
        %vm8498 = vcmp.eq.s32.totalorder %v538, %v8437
        %vm8499 = vcmp.eq.s32.totalorder %v538, %v8441
        %vm8500 = vcmp.eq.s32.totalorder %v539, %v8437
        %vm8501 = vcmp.eq.s32.totalorder %v539, %v8441
        %vm8502 = vcmp.eq.s32.totalorder %v540, %v8437
        %vm8503 = vcmp.eq.s32.totalorder %v540, %v8441
        %vm8504 = vcmp.eq.s32.totalorder %v541, %v8437
        %vm8505 = vcmp.eq.s32.totalorder %v541, %v8441
        %v8506 = vlaneseq
        %v8507 = vshrl.u32 %v8506, 7
        %v8508 = vsub.s32 0, %v8507
        %v8509 = vrot.slane %v507, %v8508
        %v8510 = vlaneseq
        %v8511 = vshrl.u32 %v8510, 7
        %v8512 = vsub.s32 0, %v8511
        %v8513 = vrot.slane %v508, %v8512
        %v8514 = vsel %vm8442, %v8509, 0.0
        %v8515 = vsel %vm8443, %v8513, 0.0
        %v8516 = vsel %vm8444, %v8509, 0.0
        %v8517 = vsel %vm8445, %v8513, 0.0
        %v8518 = vsel %vm8446, %v8509, 0.0
        %v8519 = vsel %vm8447, %v8513, 0.0
        %v8520 = vsel %vm8448, %v8509, 0.0
        %v8521 = vsel %vm8449, %v8513, 0.0
        %v8522 = vsel %vm8450, %v8509, 0.0
        %v8523 = vsel %vm8451, %v8513, 0.0
        %v8524 = vsel %vm8452, %v8509, 0.0
        %v8525 = vsel %vm8453, %v8513, 0.0
        %v8526 = vsel %vm8454, %v8509, 0.0
        %v8527 = vsel %vm8455, %v8513, 0.0
        %v8528 = vsel %vm8456, %v8509, 0.0
        %v8529 = vsel %vm8457, %v8513, 0.0
        %v8530 = vsel %vm8458, %v8509, 0.0
        %v8531 = vsel %vm8459, %v8513, 0.0
        %v8532 = vsel %vm8460, %v8509, 0.0
        %v8533 = vsel %vm8461, %v8513, 0.0
        %v8534 = vsel %vm8462, %v8509, 0.0
        %v8535 = vsel %vm8463, %v8513, 0.0
        %v8536 = vsel %vm8464, %v8509, 0.0
        %v8537 = vsel %vm8465, %v8513, 0.0
        %v8538 = vsel %vm8466, %v8509, 0.0
        %v8539 = vsel %vm8467, %v8513, 0.0
        %v8540 = vsel %vm8468, %v8509, 0.0
        %v8541 = vsel %vm8469, %v8513, 0.0
        %v8542 = vsel %vm8470, %v8509, 0.0
        %v8543 = vsel %vm8471, %v8513, 0.0
        %v8544 = vsel %vm8472, %v8509, 0.0
        %v8545 = vsel %vm8473, %v8513, 0.0
        %v8546 = vsel %vm8474, %v8509, 0.0
        %v8547 = vsel %vm8475, %v8513, 0.0
        %v8548 = vsel %vm8476, %v8509, 0.0
        %v8549 = vsel %vm8477, %v8513, 0.0
        %v8550 = vsel %vm8478, %v8509, 0.0
        %v8551 = vsel %vm8479, %v8513, 0.0
        %v8552 = vsel %vm8480, %v8509, 0.0
        %v8553 = vsel %vm8481, %v8513, 0.0
        %v8554 = vsel %vm8482, %v8509, 0.0
        %v8555 = vsel %vm8483, %v8513, 0.0
        %v8556 = vsel %vm8484, %v8509, 0.0
        %v8557 = vsel %vm8485, %v8513, 0.0
        %v8558 = vsel %vm8486, %v8509, 0.0
        %v8559 = vsel %vm8487, %v8513, 0.0
        %v8560 = vsel %vm8488, %v8509, 0.0
        %v8561 = vsel %vm8489, %v8513, 0.0
        %v8562 = vsel %vm8490, %v8509, 0.0
        %v8563 = vsel %vm8491, %v8513, 0.0
        %v8564 = vsel %vm8492, %v8509, 0.0
        %v8565 = vsel %vm8493, %v8513, 0.0
        %v8566 = vsel %vm8494, %v8509, 0.0
        %v8567 = vsel %vm8495, %v8513, 0.0
        %v8568 = vsel %vm8496, %v8509, 0.0
        %v8569 = vsel %vm8497, %v8513, 0.0
        %v8570 = vsel %vm8498, %v8509, 0.0
        %v8571 = vsel %vm8499, %v8513, 0.0
        %v8572 = vsel %vm8500, %v8509, 0.0
        %v8573 = vsel %vm8501, %v8513, 0.0
        %v8574 = vsel %vm8502, %v8509, 0.0
        %v8575 = vsel %vm8503, %v8513, 0.0
        %v8576 = vsel %vm8504, %v8509, 0.0
        %v8577 = vsel %vm8505, %v8513, 0.0
        %v8578 = vadd.f32 %v8370, %v8514
        %v8579 = vadd.f32 %v8371, %v8515
        %v8580 = vadd.f32 %v8372, %v8516
        %v8581 = vadd.f32 %v8373, %v8517
        %v8582 = vadd.f32 %v8374, %v8518
        %v8583 = vadd.f32 %v8375, %v8519
        %v8584 = vadd.f32 %v8376, %v8520
        %v8585 = vadd.f32 %v8377, %v8521
        %v8586 = vadd.f32 %v8378, %v8522
        %v8587 = vadd.f32 %v8379, %v8523
        %v8588 = vadd.f32 %v8380, %v8524
        %v8589 = vadd.f32 %v8381, %v8525
        %v8590 = vadd.f32 %v8382, %v8526
        %v8591 = vadd.f32 %v8383, %v8527
        %v8592 = vadd.f32 %v8384, %v8528
        %v8593 = vadd.f32 %v8385, %v8529
        %v8594 = vadd.f32 %v8386, %v8530
        %v8595 = vadd.f32 %v8387, %v8531
        %v8596 = vadd.f32 %v8388, %v8532
        %v8597 = vadd.f32 %v8389, %v8533
        %v8598 = vadd.f32 %v8390, %v8534
        %v8599 = vadd.f32 %v8391, %v8535
        %v8600 = vadd.f32 %v8392, %v8536
        %v8601 = vadd.f32 %v8393, %v8537
        %v8602 = vadd.f32 %v8394, %v8538
        %v8603 = vadd.f32 %v8395, %v8539
        %v8604 = vadd.f32 %v8396, %v8540
        %v8605 = vadd.f32 %v8397, %v8541
        %v8606 = vadd.f32 %v8398, %v8542
        %v8607 = vadd.f32 %v8399, %v8543
        %v8608 = vadd.f32 %v8400, %v8544
        %v8609 = vadd.f32 %v8401, %v8545
        %v8610 = vadd.f32 %v8402, %v8546
        %v8611 = vadd.f32 %v8403, %v8547
        %v8612 = vadd.f32 %v8404, %v8548
        %v8613 = vadd.f32 %v8405, %v8549
        %v8614 = vadd.f32 %v8406, %v8550
        %v8615 = vadd.f32 %v8407, %v8551
        %v8616 = vadd.f32 %v8408, %v8552
        %v8617 = vadd.f32 %v8409, %v8553
        %v8618 = vadd.f32 %v8410, %v8554
        %v8619 = vadd.f32 %v8411, %v8555
        %v8620 = vadd.f32 %v8412, %v8556
        %v8621 = vadd.f32 %v8413, %v8557
        %v8622 = vadd.f32 %v8414, %v8558
        %v8623 = vadd.f32 %v8415, %v8559
        %v8624 = vadd.f32 %v8416, %v8560
        %v8625 = vadd.f32 %v8417, %v8561
        %v8626 = vadd.f32 %v8418, %v8562
        %v8627 = vadd.f32 %v8419, %v8563
        %v8628 = vadd.f32 %v8420, %v8564
        %v8629 = vadd.f32 %v8421, %v8565
        %v8630 = vadd.f32 %v8422, %v8566
        %v8631 = vadd.f32 %v8423, %v8567
        %v8632 = vadd.f32 %v8424, %v8568
        %v8633 = vadd.f32 %v8425, %v8569
        %v8634 = vadd.f32 %v8426, %v8570
        %v8635 = vadd.f32 %v8427, %v8571
        %v8636 = vadd.f32 %v8428, %v8572
        %v8637 = vadd.f32 %v8429, %v8573
        %v8638 = vadd.f32 %v8430, %v8574
        %v8639 = vadd.f32 %v8431, %v8575
        %v8640 = vadd.f32 %v8432, %v8576
        %v8641 = vadd.f32 %v8433, %v8577
        %v8642 = vpack.c.bf16 %v471, %v471
        %v8643 = vpack.c.bf16 %v473, %v473
        %v8644 = vpack.c.bf16 %v8580, %v8578
        %v8645 = vpack.c.bf16 %v8581, %v8579
        %v8646 = vpack.c.bf16 %v8584, %v8582
        %v8647 = vpack.c.bf16 %v8585, %v8583
        %v8648 = vpack.c.bf16 %v8588, %v8586
        %v8649 = vpack.c.bf16 %v8589, %v8587
        %v8650 = vpack.c.bf16 %v8592, %v8590
        %v8651 = vpack.c.bf16 %v8593, %v8591
        %v8652 = vpack.c.bf16 %v8596, %v8594
        %v8653 = vpack.c.bf16 %v8597, %v8595
        %v8654 = vpack.c.bf16 %v8600, %v8598
        %v8655 = vpack.c.bf16 %v8601, %v8599
        %v8656 = vpack.c.bf16 %v8604, %v8602
        %v8657 = vpack.c.bf16 %v8605, %v8603
        %v8658 = vpack.c.bf16 %v8608, %v8606
        %v8659 = vpack.c.bf16 %v8609, %v8607
        %v8660 = vpack.c.bf16 %v8612, %v8610
        %v8661 = vpack.c.bf16 %v8613, %v8611
        %v8662 = vpack.c.bf16 %v8616, %v8614
        %v8663 = vpack.c.bf16 %v8617, %v8615
        %v8664 = vpack.c.bf16 %v8620, %v8618
        %v8665 = vpack.c.bf16 %v8621, %v8619
        %v8666 = vpack.c.bf16 %v8624, %v8622
        %v8667 = vpack.c.bf16 %v8625, %v8623
        %v8668 = vpack.c.bf16 %v8628, %v8626
        %v8669 = vpack.c.bf16 %v8629, %v8627
        %v8670 = vpack.c.bf16 %v8632, %v8630
        %v8671 = vpack.c.bf16 %v8633, %v8631
        %v8672 = vpack.c.bf16 %v8636, %v8634
        %v8673 = vpack.c.bf16 %v8637, %v8635
        %v8674 = vpack.c.bf16 %v8640, %v8638
        %v8675 = vpack.c.bf16 %v8641, %v8639
        %8676 = vmatprep.subr.bf16.mxu0 %v8645
        %8677 = vmatpush1.bf16.msra.mxu0 %v8644
        %8678 = vmatprep.subr.bf16.mxu0 %v8647
        %8679 = vmatpush1.bf16.msra.mxu0 %v8646
        %8680 = vmatprep.subr.bf16.mxu0 %v8649
        %8681 = vmatpush1.bf16.msra.mxu0 %v8648
        %8682 = vmatprep.subr.bf16.mxu0 %v8651
        %8683 = vmatpush1.bf16.msra.mxu0 %v8650
        %8684 = vmatprep.subr.bf16.mxu0 %v8653
        %8685 = vmatpush1.bf16.msra.mxu0 %v8652
        %8686 = vmatprep.subr.bf16.mxu0 %v8655
        %8687 = vmatpush1.bf16.msra.mxu0 %v8654
        %8688 = vmatprep.subr.bf16.mxu0 %v8657
        %8689 = vmatpush1.bf16.msra.mxu0 %v8656
        %8690 = vmatprep.subr.bf16.mxu0 %v8659
        %8691 = vmatpush1.bf16.msra.mxu0 %v8658
        %8692 = vmatprep.subr.bf16.mxu0 %v8661
        %8693 = vmatpush1.bf16.msra.mxu0 %v8660
        %8694 = vmatprep.subr.bf16.mxu0 %v8663
        %8695 = vmatpush1.bf16.msra.mxu0 %v8662
        %8696 = vmatprep.subr.bf16.mxu0 %v8665
        %8697 = vmatpush1.bf16.msra.mxu0 %v8664
        %8698 = vmatprep.subr.bf16.mxu0 %v8667
        %8699 = vmatpush1.bf16.msra.mxu0 %v8666
        %8700 = vmatprep.subr.bf16.mxu0 %v8669
        %8701 = vmatpush1.bf16.msra.mxu0 %v8668
        %8702 = vmatprep.subr.bf16.mxu0 %v8671
        %8703 = vmatpush1.bf16.msra.mxu0 %v8670
        %8704 = vmatprep.subr.bf16.mxu0 %v8673
        %8705 = vmatpush1.bf16.msra.mxu0 %v8672
        %8706 = vmatprep.subr.bf16.mxu0 %v8675
        %8707 = vmatpush1.bf16.msra.mxu0 %v8674
        %8708 = vmatprep.mubr.bf16.mxu0 %v8643
        %8709 = vmatmul.mubr.bf16.gmra.mrb[0].mxu0 %v8642
        %v8710 = vpop.f32.mrb[0].mxu0
        %v8711 = vadd.f32 0.0, %v8710
        %v8712 = vpop.f32.mrb[0].mxu0
        %v8713 = vadd.f32 0.0, %v8712
        %v8714 = vpop.f32.mrb[0].mxu0
        %v8715 = vpop.f32.mrb[0].mxu0
        %8716 = vdwg.mxu0
        %v8717 = vadd.f32 %v7808, %v8711
        %v8718 = vadd.f32 %v7809, %v8713
        %v8719 = vld [vmem:[#allocation10] sm:$0xff]
        %8721 = vset.pattern.permute.xlu0 0
        %8722 = vperm.xlu0 %8721, %v8719
        %v8723 = vpop.permute.xlu0 %8722
        %v8725 = vadd.f32 %v8717, %v8723
        %v8726 = vadd.f32 %v8718, %v8723
        %8727 = vst [vmem:[%s326] sm:$0xff] %v8725
        %8728 = vst [vmem:[%s326 + $0x8] sm:$0xff] %v8726
        %s8729 = sand.u32 %s166, 1
        %s8730 = scalar_lea.sflag [#allocation4], %s8729
        %s8731 = sand.u32 %s166, 1
        %s8732 = smul.addr %s8731, 16
        %s8733 = scalar_lea.vmem [#allocation11], %s8732
        // Predicated region
        $region61: #{deform_conv2d_sphe.1} parent=39 // pred_check
          %p8734 = pneg %p176
        $region62: #{deform_conv2d_sphe.1} parent=39 // pred_check_branch
          %8736 = sbr.rel (%p8734) target = $region64
        $region63: #{deform_conv2d_sphe.1} parent=39 // pred_region
          %s8737 = smul.u32 2, %s29
          %s8739 = ssub.s32 256, 256
          %8740 = vsyncadd %s8730, %s8739
          %s8741 = smul.addr %s28, 2
          %s8742 = sadd.s32 %s8737, %s8741
          %s8743 = smul.addr %s8742, 128
          %s8744 = scalar_lea.hbm %s5, %s8743
          %s8746 = sshll.u32 %s8733, 4
          %s8747 = int_to_ptr.vmem [resolvable:$true] %s8746
          %8749 = dma.vmem_to_hbm [thread:$0]  %s8747, 256, %s8744, %s8730
        $region64: #{deform_conv2d_sphe.1} parent=39 // pred_fallthru
          _
      $region40: #{deform_conv2d_sphe.1} parent=5 // pred_fallthru
        _
      %p8750 = scmp.le.s32.totalorder 2, %s19
      // Predicated region
      $region65: #{deform_conv2d_sphe.1} parent=5 // pred_check
        %p8751 = pneg %p8750
      $region66: #{deform_conv2d_sphe.1} parent=5 // pred_check_branch
        %8753 = sbr.rel (%p8751) target = $region68
      $region67: #{deform_conv2d_sphe.1} parent=5 // pred_region
        %s8754 = ssub.s32 %s19, 2
        // Predicated region
        $region69: #{deform_conv2d_sphe.1} parent=67 // pred_check
          %p8755 = pneg %p182
        $region70: #{deform_conv2d_sphe.1} parent=67 // pred_check_branch
          %8757 = sbr.rel (%p8755) target = $region72
        $region71: #{deform_conv2d_sphe.1} parent=67 // pred_region
          %s8758 = sand.u32 %s167, 1
          %s8759 = scalar_lea.sflag [#allocation4], %s8758
          %s8760 = sand.u32 %s167, 1
          %s8761 = smul.addr %s8760, 16
          %s8762 = scalar_lea.vmem [#allocation11], %s8761
          %8763 = dma.done %s8759, 256
        $region72: #{deform_conv2d_sphe.1} parent=67 // pred_fallthru
          _
      $region68: #{deform_conv2d_sphe.1} parent=5 // pred_fallthru
        _
    $region6: #{deform_conv2d_sphe.1} parent=1 // loop_footer
      %s23 = sadd.s32 1, %s19
    $region7: #{deform_conv2d_sphe.1} parent=1 // loop_footer_branch
      %18 = sbr.rel target = $region3
    $region8: #{deform_conv2d_sphe.1} parent=1 // loop_exit
      _
    %8764 = vsyncpa [#allocation3], 1
    %s8765 = scalar_lea.sflag [#allocation3], 1
    %8766 = vsyncpa %s8765, 1
    %8767 = vsyncpa [#allocation6], 1
    %8768 = vsyncpa [#allocation9], 1
    %8769 = vsyncpa [#allocation4], 1
    %s8770 = scalar_lea.sflag [#allocation4], 1
    %8771 = vsyncpa %s8770, 1

</llo_original>
